<compile_context>
chip_gen: v7x
topology: tpu7x:2x2x1
jax: 0.10.0
libtpu: 0.0.40
codegen_flags: <defaults>
</compile_context>

<pallas_src>
import jax
import jax.numpy as jnp
import numpy as np
from jax import lax
from jax.experimental import pallas as pl
from jax.experimental.pallas import tpu as pltpu

B, CIN, H, W = 2, 3, 20, 32          # input (NCHW)
C1, C2 = 32, 64                      # conv channels
H1, W1 = H // 2, W // 2              # 10, 16  (after pool1)
H2, W2 = H1 // 2, W1 // 2            # 5, 8    (after pool2)
NPOS1 = H1 * W1                      # 160
NPOS2 = H2 * W2                      # 40
FC1_IN = C2 * NPOS2                  # 2560
FC_H, FC_OUT = 128, 3


# ----------------------------------------------------------------------------
# Fused forward kernel (runs once per batch element).
# ----------------------------------------------------------------------------
def fused_kernel(xcol_ref, w1c_ref, b1_ref, w2_ref, b2_ref,
                 w1r_ref, fb1_ref, fw2_ref, fb2_ref, fw3_ref, fb3_ref,
                 o_ref, pad_sc, pool_sc, p2_sc):
    # ---- conv1: single (640,27)@(27,32) im2col matmul, bias, 2x2 maxpool, ReLU
    a = xcol_ref[0].reshape(4 * NPOS1, 27)                       # (640, 27)
    h = jnp.dot(a, w1c_ref[...], preferred_element_type=jnp.float32)
    h = (h + b1_ref[...]).reshape(4, NPOS1, C1)                  # 4 pool positions lead
    p1 = jnp.maximum(jnp.maximum(h[0], h[1]), jnp.maximum(h[2], h[3]))
    p1 = jnp.maximum(p1, 0.0)                                    # (160, 32), rows = y*16+x

    # ---- conv2: zero-padded VMEM scratch (aligned interior store), 9 tap matmuls
    pad_sc[...] = jnp.zeros_like(pad_sc)                         # (12, 32, 32)
    pad_sc[1:11, 8:24, :] = p1.reshape(H1, W1, C1)               # interior at sublane 8..23
    acc2 = jnp.zeros((NPOS1, C2), dtype=jnp.float32)
    for ky in range(3):
        for kx in range(3):
            tap = pad_sc[ky:ky + H1, kx + 7:kx + 7 + W1, :].reshape(NPOS1, C1)
            acc2 = acc2 + jnp.dot(tap, w2_ref[ky * 3 + kx],
                                  preferred_element_type=jnp.float32)
    h2 = jnp.maximum(acc2 + b2_ref[...], 0.0)                    # (160, 64)

    # ---- 2x2 maxpool: y-pairs in-register, x-pairs via strided ref reads
    h2 = h2.reshape(H2, 2, W1, C2)                               # (5, 2, 16, 64)
    pool_sc[...] = jnp.maximum(h2[:, 0], h2[:, 1])               # (5, 16, 64)
    p2 = jnp.maximum(pool_sc[:, pl.ds(0, W2, 2), :],
                     pool_sc[:, pl.ds(1, W2, 2), :])             # (5, 8, 64)
    p2_sc[...] = p2.reshape(NPOS2, C2)                           # (40, 64)

    # ---- fc1 (weights permuted at init to NHWC order, stored bf16) + ReLU
    acc1 = jnp.zeros((1, FC_H), dtype=jnp.float32)
    for r in range(NPOS2):
        acc1 = acc1 + jnp.dot(p2_sc[r:r + 1, :],
                              w1r_ref[r].astype(jnp.float32),
                              preferred_element_type=jnp.float32)
    f1 = jnp.maximum(acc1 + fb1_ref[...], 0.0)                   # (1, 128)

    # ---- fc2 + ReLU, fc3 (padded to 128 output lanes)
    f2 = jnp.maximum(jnp.dot(f1, fw2_ref[...], preferred_element_type=jnp.float32)
                     + fb2_ref[...], 0.0)
    f3 = jnp.dot(f2, fw3_ref[...], preferred_element_type=jnp.float32) + fb3_ref[...]
    o_ref[...] = f3[:, :FC_OUT].reshape(1, 1, FC_OUT)


# ----------------------------------------------------------------------------
# Wrapper: im2col packing (only runtime glue op) + the single pallas_call.
# ----------------------------------------------------------------------------
def _build_xcol(x):
    """x: (B, 3, 20, 32) NCHW -> (B, 4, 160, 27); axis1 = pool offset (dy,dx),
    axis2 = pooled position yo*16+xo, axis3 = (ky,kx,cin)."""
    b = x.shape[0]
    xp = jnp.pad(x, ((0, 0), (0, 0), (1, 1), (1, 1)))            # (B,3,22,34)
    taps = jnp.stack([xp[:, :, ky:ky + H, kx:kx + W]
                      for ky in range(3) for kx in range(3)], axis=1)  # (B,9,3,20,32)
    t = taps.reshape(b, 9, CIN, H1, 2, W1, 2)                    # (b,t,c,yo,dy,xo,dx)
    return t.transpose(0, 4, 6, 3, 5, 1, 2).reshape(b, 4, NPOS1, 9 * CIN)


@jax.jit
def simple_cnn_forward(x, kp):
    b = x.shape[0]
    xcol = _build_xcol(x)
    out = pl.pallas_call(
        fused_kernel,
        out_shape=jax.ShapeDtypeStruct((b, 1, FC_OUT), jnp.float32),
        grid=(b,),
        in_specs=[
            pl.BlockSpec((1, 4, NPOS1, 9 * CIN), lambda i: (i, 0, 0, 0)),
            pl.BlockSpec((9 * CIN, C1), lambda i: (0, 0)),
            pl.BlockSpec((1, C1), lambda i: (0, 0)),
            pl.BlockSpec((9, C1, C2), lambda i: (0, 0, 0)),
            pl.BlockSpec((1, C2), lambda i: (0, 0)),
            pl.BlockSpec((NPOS2, C2, FC_H), lambda i: (0, 0, 0)),
            pl.BlockSpec((1, FC_H), lambda i: (0, 0)),
            pl.BlockSpec((FC_H, FC_H), lambda i: (0, 0)),
            pl.BlockSpec((1, FC_H), lambda i: (0, 0)),
            pl.BlockSpec((FC_H, FC_H), lambda i: (0, 0)),
            pl.BlockSpec((1, FC_H), lambda i: (0, 0)),
        ],
        out_specs=pl.BlockSpec((1, 1, FC_OUT), lambda i: (i, 0, 0)),
        scratch_shapes=[
            pltpu.VMEM((H1 + 2, 32, C1), jnp.float32),   # padded conv2 input
            pltpu.VMEM((H2, W1, C2), jnp.float32),       # y-pooled conv2 output
            pltpu.VMEM((NPOS2, C2), jnp.float32),        # pooled conv2 output
        ],
        compiler_params=pltpu.CompilerParams(
            dimension_semantics=("parallel",)),
    )(xcol, kp["w1c"], kp["b1"], kp["w2t"], kp["b2"],
      kp["w1r"], kp["fb1"], kp["fw2"], kp["fb2"], kp["fw3"], kp["fb3"])
    return out.reshape(b, FC_OUT)


# ----------------------------------------------------------------------------
# Parameters: PyTorch-style init + one-time packing into kernel layouts.
# ----------------------------------------------------------------------------
def init_params(key):
    ks = jax.random.split(key, 10)

    def dense(k, shape, fan_in):
        return jax.random.normal(k, shape, jnp.float32) / np.sqrt(fan_in)

    return {
        "conv1_w": dense(ks[0], (C1, CIN, 3, 3), CIN * 9),
        "conv1_b": dense(ks[1], (C1,), CIN * 9),
        "conv2_w": dense(ks[2], (C2, C1, 3, 3), C1 * 9),
        "conv2_b": dense(ks[3], (C2,), C1 * 9),
        # fc1 weights stored bf16 (halves the dominant HBM fetch; f32 math in kernel)
        "fw1": dense(ks[4], (FC1_IN, FC_H), FC1_IN).astype(jnp.bfloat16),
        "fb1": dense(ks[5], (FC_H,), FC1_IN),
        "fw2": dense(ks[6], (FC_H, FC_H), FC_H),
        "fb2": dense(ks[7], (FC_H,), FC_H),
        "fw3": dense(ks[8], (FC_H, FC_OUT), FC_H),
        "fb3": dense(ks[9], (FC_OUT,), FC_H),
    }


def pack_kernel_params(p):
    """One-time (init) re-layout of weights for the fused kernel."""
    w1c = jnp.transpose(p["conv1_w"], (2, 3, 1, 0)).reshape(9 * CIN, C1)   # (27, 32)
    w2t = jnp.transpose(p["conv2_w"], (2, 3, 1, 0)).reshape(9, C1, C2)     # (9, 32, 64)
    # fc1: PyTorch flat index = c*40 + (yo*8+xo); kernel contracts row-by-row over r.
    w1r = p["fw1"].reshape(C2, NPOS2, FC_H).transpose(1, 0, 2)             # (40, 64, 128) bf16
    fw3p = jnp.zeros((FC_H, FC_H), jnp.float32).at[:, :FC_OUT].set(p["fw3"])
    fb3p = jnp.zeros((1, FC_H), jnp.float32).at[:, :FC_OUT].set(p["fb3"][None, :])
    return {
        "w1c": w1c, "b1": p["conv1_b"].reshape(1, C1),
        "w2t": w2t, "b2": p["conv2_b"].reshape(1, C2),
        "w1r": w1r, "fb1": p["fb1"].reshape(1, FC_H),
        "fw2": p["fw2"], "fb2": p["fb2"].reshape(1, FC_H),
        "fw3": fw3p, "fb3": fb3p,
    }


# ----------------------------------------------------------------------------
# Plain-JAX reference (uses the same bf16-rounded fc1 weights).
# ----------------------------------------------------------------------------
def simple_cnn_reference(x, p):
    def conv_block(h, w, bias):
        y = lax.conv_general_dilated(h, w, (1, 1), "SAME",
                                     dimension_numbers=("NCHW", "OIHW", "NCHW"))
        y = jnp.maximum(y + bias[None, :, None, None], 0.0)
        return lax.reduce_window(y, -jnp.inf, lax.max,
                                 (1, 1, 2, 2), (1, 1, 2, 2), "VALID")

    h = conv_block(x, p["conv1_w"], p["conv1_b"])
    h = conv_block(h, p["conv2_w"], p["conv2_b"])
    flat = h.reshape(h.shape[0], -1)                             # NCHW flatten
    h = jnp.maximum(flat @ p["fw1"].astype(jnp.float32) + p["fb1"], 0.0)
    h = jnp.maximum(h @ p["fw2"] + p["fb2"], 0.0)
    return h @ p["fw3"] + p["fb3"]


if __name__ == "__main__":
    key = jax.random.PRNGKey(0)
    kx, kp_key = jax.random.split(key)

    x = jax.random.normal(kx, (B, CIN, H, W), jnp.float32)       # PyTorch-style NCHW
    params = init_params(kp_key)
    kparams = pack_kernel_params(params)                         # one-time re-layout

    out = jax.block_until_ready(simple_cnn_forward(x, kparams))
    ref = jax.block_until_ready(simple_cnn_reference(x, params))

    assert out.shape == (B, FC_OUT), out.shape
    max_diff = float(np.max(np.abs(np.asarray(out) - np.asarray(ref))))
    assert np.allclose(np.asarray(out), np.asarray(ref), atol=2e-3, rtol=2e-3), (
        "max abs diff = %g" % max_diff)

    print("KERNEL_OK")
</pallas_src>

<mosaic_0001>
module attributes {stable_mosaic.version = 11 : i64} {
  func.func @fused_kernel(%arg0: i32, %arg1: memref<1x4x160x27xf32, #tpu.memory_space<vmem>>, %arg2: memref<27x32xf32, #tpu.memory_space<vmem>>, %arg3: memref<1x32xf32, #tpu.memory_space<vmem>>, %arg4: memref<9x32x64xf32, #tpu.memory_space<vmem>>, %arg5: memref<1x64xf32, #tpu.memory_space<vmem>>, %arg6: memref<40x64x128xbf16, #tpu.memory_space<vmem>>, %arg7: memref<1x128xf32, #tpu.memory_space<vmem>>, %arg8: memref<128x128xf32, #tpu.memory_space<vmem>>, %arg9: memref<1x128xf32, #tpu.memory_space<vmem>>, %arg10: memref<128x128xf32, #tpu.memory_space<vmem>>, %arg11: memref<1x128xf32, #tpu.memory_space<vmem>>, %arg12: memref<1x1x3xf32, #tpu.memory_space<vmem>>, %arg13: memref<12x32x32xf32, #tpu.memory_space<vmem>>, %arg14: memref<5x16x64xf32, #tpu.memory_space<vmem>>, %arg15: memref<40x64xf32, #tpu.memory_space<vmem>>) attributes {dimension_semantics = [#tpu.dimension_semantics<parallel>], iteration_bounds = array<i64: 2>, scalar_prefetch = 0 : i64, scratch_operands = 3 : i64, tpu.core_type = #tpu.core_type<tc>, window_params = [{transform_indices = @transform_0, window_bounds = array<i64: 1, 4, 160, 27>}, {pipeline_mode = #tpu.pipeline_mode<synchronous>, transform_indices = @transform_1, window_bounds = array<i64: 27, 32>}, {pipeline_mode = #tpu.pipeline_mode<synchronous>, transform_indices = @transform_2, window_bounds = array<i64: 1, 32>}, {pipeline_mode = #tpu.pipeline_mode<synchronous>, transform_indices = @transform_3, window_bounds = array<i64: 9, 32, 64>}, {pipeline_mode = #tpu.pipeline_mode<synchronous>, transform_indices = @transform_4, window_bounds = array<i64: 1, 64>}, {pipeline_mode = #tpu.pipeline_mode<synchronous>, transform_indices = @transform_5, window_bounds = array<i64: 40, 64, 128>}, {pipeline_mode = #tpu.pipeline_mode<synchronous>, transform_indices = @transform_6, window_bounds = array<i64: 1, 128>}, {pipeline_mode = #tpu.pipeline_mode<synchronous>, transform_indices = @transform_7, window_bounds = array<i64: 128, 128>}, {pipeline_mode = #tpu.pipeline_mode<synchronous>, transform_indices = @transform_8, window_bounds = array<i64: 1, 128>}, {pipeline_mode = #tpu.pipeline_mode<synchronous>, transform_indices = @transform_9, window_bounds = array<i64: 128, 128>}, {pipeline_mode = #tpu.pipeline_mode<synchronous>, transform_indices = @transform_10, window_bounds = array<i64: 1, 128>}, {transform_indices = @transform_11, window_bounds = array<i64: 1, 1, 3>}]} {
    %c0 = arith.constant 0 : index
    %c0_0 = arith.constant 0 : index
    %c0_1 = arith.constant 0 : index
    %c0_2 = arith.constant 0 : index
    %0 = vector.load %arg1[%c0, %c0_0, %c0_1, %c0_2] : memref<1x4x160x27xf32, #tpu.memory_space<vmem>>, vector<1x4x160x27xf32>
    %1 = vector.shape_cast %0 : vector<1x4x160x27xf32> to vector<4x160x27xf32>
    %2 = vector.shape_cast %1 : vector<4x160x27xf32> to vector<640x27xf32>
    %c0_3 = arith.constant 0 : index
    %c0_4 = arith.constant 0 : index
    %3 = vector.load %arg2[%c0_3, %c0_4] : memref<27x32xf32, #tpu.memory_space<vmem>>, vector<27x32xf32>
    %cst = arith.constant dense<0.000000e+00> : vector<640x32xf32>
    %4 = tpu.matmul %2, %3, %cst {dimension_numbers = #tpu.dot_dimension_numbers<[1], [0], [0], [1], [0, 0, 1, 1], [], []>} : vector<640x27xf32>, vector<27x32xf32>, vector<640x32xf32> -> vector<640x32xf32>
    %c0_5 = arith.constant 0 : index
    %c0_6 = arith.constant 0 : index
    %5 = vector.load %arg3[%c0_5, %c0_6] : memref<1x32xf32, #tpu.memory_space<vmem>>, vector<1x32xf32>
    %6 = vector.broadcast %5 : vector<1x32xf32> to vector<640x32xf32>
    %7 = arith.addf %4, %6 : vector<640x32xf32>
    %8 = vector.shape_cast %7 : vector<640x32xf32> to vector<4x160x32xf32>
    %9 = vector.extract_strided_slice %8 {offsets = [0, 0, 0], sizes = [1, 160, 32], strides = [1, 1, 1]} : vector<4x160x32xf32> to vector<1x160x32xf32>
    %10 = vector.shape_cast %9 : vector<1x160x32xf32> to vector<160x32xf32>
    %11 = vector.extract_strided_slice %8 {offsets = [1, 0, 0], sizes = [1, 160, 32], strides = [1, 1, 1]} : vector<4x160x32xf32> to vector<1x160x32xf32>
    %12 = vector.shape_cast %11 : vector<1x160x32xf32> to vector<160x32xf32>
    %13 = arith.maximumf %10, %12 : vector<160x32xf32>
    %14 = vector.extract_strided_slice %8 {offsets = [2, 0, 0], sizes = [1, 160, 32], strides = [1, 1, 1]} : vector<4x160x32xf32> to vector<1x160x32xf32>
    %15 = vector.shape_cast %14 : vector<1x160x32xf32> to vector<160x32xf32>
    %16 = vector.extract_strided_slice %8 {offsets = [3, 0, 0], sizes = [1, 160, 32], strides = [1, 1, 1]} : vector<4x160x32xf32> to vector<1x160x32xf32>
    %17 = vector.shape_cast %16 : vector<1x160x32xf32> to vector<160x32xf32>
    %18 = arith.maximumf %15, %17 : vector<160x32xf32>
    %19 = arith.maximumf %13, %18 : vector<160x32xf32>
    %cst_7 = arith.constant 0.000000e+00 : f32
    %20 = vector.broadcast %cst_7 : f32 to vector<160x32xf32>
    %21 = arith.maximumf %19, %20 : vector<160x32xf32>
    %cst_8 = arith.constant 0.000000e+00 : f32
    %22 = vector.broadcast %cst_8 : f32 to vector<12x32x32xf32>
    %c0_9 = arith.constant 0 : index
    %c0_10 = arith.constant 0 : index
    %c0_11 = arith.constant 0 : index
    %23 = vector.load %arg13[%c0_9, %c0_10, %c0_11] : memref<12x32x32xf32, #tpu.memory_space<vmem>>, vector<12x32x32xf32>
    tpu.vector_store %arg13[%c0_9, %c0_10, %c0_11], %22 {strides = array<i32>} : memref<12x32x32xf32, #tpu.memory_space<vmem>>, vector<12x32x32xf32>,
    %24 = vector.shape_cast %21 : vector<160x32xf32> to vector<10x16x32xf32>
    %c1 = arith.constant 1 : index
    %c8 = arith.constant 8 : index
    %c0_12 = arith.constant 0 : index
    %25 = vector.load %arg13[%c1, %c8, %c0_12] : memref<12x32x32xf32, #tpu.memory_space<vmem>>, vector<10x16x32xf32>
    tpu.vector_store %arg13[%c1, %c8, %c0_12], %24 {strides = array<i32>} : memref<12x32x32xf32, #tpu.memory_space<vmem>>, vector<10x16x32xf32>,
    %cst_13 = arith.constant 0.000000e+00 : f32
    %26 = vector.broadcast %cst_13 : f32 to vector<160x64xf32>
    %c0_14 = arith.constant 0 : index
    %c7 = arith.constant 7 : index
    %c0_15 = arith.constant 0 : index
    %27 = vector.load %arg13[%c0_14, %c7, %c0_15] : memref<12x32x32xf32, #tpu.memory_space<vmem>>, vector<10x16x32xf32>
    %28 = vector.shape_cast %27 : vector<10x16x32xf32> to vector<160x32xf32>
    %c0_16 = arith.constant 0 : index
    %c0_17 = arith.constant 0 : index
    %c0_18 = arith.constant 0 : index
    %29 = vector.load %arg4[%c0_16, %c0_17, %c0_18] : memref<9x32x64xf32, #tpu.memory_space<vmem>>, vector<1x32x64xf32>
    %30 = vector.shape_cast %29 : vector<1x32x64xf32> to vector<32x64xf32>
    %cst_19 = arith.constant dense<0.000000e+00> : vector<160x64xf32>
    %31 = tpu.matmul %28, %30, %cst_19 {dimension_numbers = #tpu.dot_dimension_numbers<[1], [0], [0], [1], [0, 0, 1, 1], [], []>} : vector<160x32xf32>, vector<32x64xf32>, vector<160x64xf32> -> vector<160x64xf32>
    %32 = arith.addf %26, %31 : vector<160x64xf32>
    %c0_20 = arith.constant 0 : index
    %c8_21 = arith.constant 8 : index
    %c0_22 = arith.constant 0 : index
    %33 = vector.load %arg13[%c0_20, %c8_21, %c0_22] : memref<12x32x32xf32, #tpu.memory_space<vmem>>, vector<10x16x32xf32>
    %34 = vector.shape_cast %33 : vector<10x16x32xf32> to vector<160x32xf32>
    %c1_23 = arith.constant 1 : index
    %c0_24 = arith.constant 0 : index
    %c0_25 = arith.constant 0 : index
    %35 = vector.load %arg4[%c1_23, %c0_24, %c0_25] : memref<9x32x64xf32, #tpu.memory_space<vmem>>, vector<1x32x64xf32>
    %36 = vector.shape_cast %35 : vector<1x32x64xf32> to vector<32x64xf32>
    %cst_26 = arith.constant dense<0.000000e+00> : vector<160x64xf32>
    %37 = tpu.matmul %34, %36, %cst_26 {dimension_numbers = #tpu.dot_dimension_numbers<[1], [0], [0], [1], [0, 0, 1, 1], [], []>} : vector<160x32xf32>, vector<32x64xf32>, vector<160x64xf32> -> vector<160x64xf32>
    %38 = arith.addf %32, %37 : vector<160x64xf32>
    %c0_27 = arith.constant 0 : index
    %c9 = arith.constant 9 : index
    %c0_28 = arith.constant 0 : index
    %39 = vector.load %arg13[%c0_27, %c9, %c0_28] : memref<12x32x32xf32, #tpu.memory_space<vmem>>, vector<10x16x32xf32>
    %40 = vector.shape_cast %39 : vector<10x16x32xf32> to vector<160x32xf32>
    %c2 = arith.constant 2 : index
    %c0_29 = arith.constant 0 : index
    %c0_30 = arith.constant 0 : index
    %41 = vector.load %arg4[%c2, %c0_29, %c0_30] : memref<9x32x64xf32, #tpu.memory_space<vmem>>, vector<1x32x64xf32>
    %42 = vector.shape_cast %41 : vector<1x32x64xf32> to vector<32x64xf32>
    %cst_31 = arith.constant dense<0.000000e+00> : vector<160x64xf32>
    %43 = tpu.matmul %40, %42, %cst_31 {dimension_numbers = #tpu.dot_dimension_numbers<[1], [0], [0], [1], [0, 0, 1, 1], [], []>} : vector<160x32xf32>, vector<32x64xf32>, vector<160x64xf32> -> vector<160x64xf32>
    %44 = arith.addf %38, %43 : vector<160x64xf32>
    %c1_32 = arith.constant 1 : index
    %c7_33 = arith.constant 7 : index
    %c0_34 = arith.constant 0 : index
    %45 = vector.load %arg13[%c1_32, %c7_33, %c0_34] : memref<12x32x32xf32, #tpu.memory_space<vmem>>, vector<10x16x32xf32>
    %46 = vector.shape_cast %45 : vector<10x16x32xf32> to vector<160x32xf32>
    %c3 = arith.constant 3 : index
    %c0_35 = arith.constant 0 : index
    %c0_36 = arith.constant 0 : index
    %47 = vector.load %arg4[%c3, %c0_35, %c0_36] : memref<9x32x64xf32, #tpu.memory_space<vmem>>, vector<1x32x64xf32>
    %48 = vector.shape_cast %47 : vector<1x32x64xf32> to vector<32x64xf32>
    %cst_37 = arith.constant dense<0.000000e+00> : vector<160x64xf32>
    %49 = tpu.matmul %46, %48, %cst_37 {dimension_numbers = #tpu.dot_dimension_numbers<[1], [0], [0], [1], [0, 0, 1, 1], [], []>} : vector<160x32xf32>, vector<32x64xf32>, vector<160x64xf32> -> vector<160x64xf32>
    %50 = arith.addf %44, %49 : vector<160x64xf32>
    %c1_38 = arith.constant 1 : index
    %c8_39 = arith.constant 8 : index
    %c0_40 = arith.constant 0 : index
    %51 = vector.load %arg13[%c1_38, %c8_39, %c0_40] : memref<12x32x32xf32, #tpu.memory_space<vmem>>, vector<10x16x32xf32>
    %52 = vector.shape_cast %51 : vector<10x16x32xf32> to vector<160x32xf32>
    %c4 = arith.constant 4 : index
    %c0_41 = arith.constant 0 : index
    %c0_42 = arith.constant 0 : index
    %53 = vector.load %arg4[%c4, %c0_41, %c0_42] : memref<9x32x64xf32, #tpu.memory_space<vmem>>, vector<1x32x64xf32>
    %54 = vector.shape_cast %53 : vector<1x32x64xf32> to vector<32x64xf32>
    %cst_43 = arith.constant dense<0.000000e+00> : vector<160x64xf32>
    %55 = tpu.matmul %52, %54, %cst_43 {dimension_numbers = #tpu.dot_dimension_numbers<[1], [0], [0], [1], [0, 0, 1, 1], [], []>} : vector<160x32xf32>, vector<32x64xf32>, vector<160x64xf32> -> vector<160x64xf32>
    %56 = arith.addf %50, %55 : vector<160x64xf32>
    %c1_44 = arith.constant 1 : index
    %c9_45 = arith.constant 9 : index
    %c0_46 = arith.constant 0 : index
    %57 = vector.load %arg13[%c1_44, %c9_45, %c0_46] : memref<12x32x32xf32, #tpu.memory_space<vmem>>, vector<10x16x32xf32>
    %58 = vector.shape_cast %57 : vector<10x16x32xf32> to vector<160x32xf32>
    %c5 = arith.constant 5 : index
    %c0_47 = arith.constant 0 : index
    %c0_48 = arith.constant 0 : index
    %59 = vector.load %arg4[%c5, %c0_47, %c0_48] : memref<9x32x64xf32, #tpu.memory_space<vmem>>, vector<1x32x64xf32>
    %60 = vector.shape_cast %59 : vector<1x32x64xf32> to vector<32x64xf32>
    %cst_49 = arith.constant dense<0.000000e+00> : vector<160x64xf32>
    %61 = tpu.matmul %58, %60, %cst_49 {dimension_numbers = #tpu.dot_dimension_numbers<[1], [0], [0], [1], [0, 0, 1, 1], [], []>} : vector<160x32xf32>, vector<32x64xf32>, vector<160x64xf32> -> vector<160x64xf32>
    %62 = arith.addf %56, %61 : vector<160x64xf32>
    %c2_50 = arith.constant 2 : index
    %c7_51 = arith.constant 7 : index
    %c0_52 = arith.constant 0 : index
    %63 = vector.load %arg13[%c2_50, %c7_51, %c0_52] : memref<12x32x32xf32, #tpu.memory_space<vmem>>, vector<10x16x32xf32>
    %64 = vector.shape_cast %63 : vector<10x16x32xf32> to vector<160x32xf32>
    %c6 = arith.constant 6 : index
    %c0_53 = arith.constant 0 : index
    %c0_54 = arith.constant 0 : index
    %65 = vector.load %arg4[%c6, %c0_53, %c0_54] : memref<9x32x64xf32, #tpu.memory_space<vmem>>, vector<1x32x64xf32>
    %66 = vector.shape_cast %65 : vector<1x32x64xf32> to vector<32x64xf32>
    %cst_55 = arith.constant dense<0.000000e+00> : vector<160x64xf32>
    %67 = tpu.matmul %64, %66, %cst_55 {dimension_numbers = #tpu.dot_dimension_numbers<[1], [0], [0], [1], [0, 0, 1, 1], [], []>} : vector<160x32xf32>, vector<32x64xf32>, vector<160x64xf32> -> vector<160x64xf32>
    %68 = arith.addf %62, %67 : vector<160x64xf32>
    %c2_56 = arith.constant 2 : index
    %c8_57 = arith.constant 8 : index
    %c0_58 = arith.constant 0 : index
    %69 = vector.load %arg13[%c2_56, %c8_57, %c0_58] : memref<12x32x32xf32, #tpu.memory_space<vmem>>, vector<10x16x32xf32>
    %70 = vector.shape_cast %69 : vector<10x16x32xf32> to vector<160x32xf32>
    %c7_59 = arith.constant 7 : index
    %c0_60 = arith.constant 0 : index
    %c0_61 = arith.constant 0 : index
    %71 = vector.load %arg4[%c7_59, %c0_60, %c0_61] : memref<9x32x64xf32, #tpu.memory_space<vmem>>, vector<1x32x64xf32>
    %72 = vector.shape_cast %71 : vector<1x32x64xf32> to vector<32x64xf32>
    %cst_62 = arith.constant dense<0.000000e+00> : vector<160x64xf32>
    %73 = tpu.matmul %70, %72, %cst_62 {dimension_numbers = #tpu.dot_dimension_numbers<[1], [0], [0], [1], [0, 0, 1, 1], [], []>} : vector<160x32xf32>, vector<32x64xf32>, vector<160x64xf32> -> vector<160x64xf32>
    %74 = arith.addf %68, %73 : vector<160x64xf32>
    %c2_63 = arith.constant 2 : index
    %c9_64 = arith.constant 9 : index
    %c0_65 = arith.constant 0 : index
    %75 = vector.load %arg13[%c2_63, %c9_64, %c0_65] : memref<12x32x32xf32, #tpu.memory_space<vmem>>, vector<10x16x32xf32>
    %76 = vector.shape_cast %75 : vector<10x16x32xf32> to vector<160x32xf32>
    %c8_66 = arith.constant 8 : index
    %c0_67 = arith.constant 0 : index
    %c0_68 = arith.constant 0 : index
    %77 = vector.load %arg4[%c8_66, %c0_67, %c0_68] : memref<9x32x64xf32, #tpu.memory_space<vmem>>, vector<1x32x64xf32>
    %78 = vector.shape_cast %77 : vector<1x32x64xf32> to vector<32x64xf32>
    %cst_69 = arith.constant dense<0.000000e+00> : vector<160x64xf32>
    %79 = tpu.matmul %76, %78, %cst_69 {dimension_numbers = #tpu.dot_dimension_numbers<[1], [0], [0], [1], [0, 0, 1, 1], [], []>} : vector<160x32xf32>, vector<32x64xf32>, vector<160x64xf32> -> vector<160x64xf32>
    %80 = arith.addf %74, %79 : vector<160x64xf32>
    %c0_70 = arith.constant 0 : index
    %c0_71 = arith.constant 0 : index
    %81 = vector.load %arg5[%c0_70, %c0_71] : memref<1x64xf32, #tpu.memory_space<vmem>>, vector<1x64xf32>
    %82 = vector.broadcast %81 : vector<1x64xf32> to vector<160x64xf32>
    %83 = arith.addf %80, %82 : vector<160x64xf32>
    %cst_72 = arith.constant 0.000000e+00 : f32
    %84 = vector.broadcast %cst_72 : f32 to vector<160x64xf32>
    %85 = arith.maximumf %83, %84 : vector<160x64xf32>
    %86 = vector.shape_cast %85 : vector<160x64xf32> to vector<5x2x16x64xf32>
    %87 = vector.extract_strided_slice %86 {offsets = [0, 0, 0, 0], sizes = [5, 1, 16, 64], strides = [1, 1, 1, 1]} : vector<5x2x16x64xf32> to vector<5x1x16x64xf32>
    %88 = vector.shape_cast %87 : vector<5x1x16x64xf32> to vector<5x16x64xf32>
    %89 = vector.extract_strided_slice %86 {offsets = [0, 1, 0, 0], sizes = [5, 1, 16, 64], strides = [1, 1, 1, 1]} : vector<5x2x16x64xf32> to vector<5x1x16x64xf32>
    %90 = vector.shape_cast %89 : vector<5x1x16x64xf32> to vector<5x16x64xf32>
    %91 = arith.maximumf %88, %90 : vector<5x16x64xf32>
    %c0_73 = arith.constant 0 : index
    %c0_74 = arith.constant 0 : index
    %c0_75 = arith.constant 0 : index
    %92 = vector.load %arg14[%c0_73, %c0_74, %c0_75] : memref<5x16x64xf32, #tpu.memory_space<vmem>>, vector<5x16x64xf32>
    tpu.vector_store %arg14[%c0_73, %c0_74, %c0_75], %91 {strides = array<i32>} : memref<5x16x64xf32, #tpu.memory_space<vmem>>, vector<5x16x64xf32>,
    %c0_76 = arith.constant 0 : index
    %c0_77 = arith.constant 0 : index
    %c0_78 = arith.constant 0 : index
    %93 = tpu.strided_load %arg14[%c0_76, %c0_77, %c0_78] {strides = array<i32: 1, 2, 1>} : memref<5x16x64xf32, #tpu.memory_space<vmem>>, vector<5x8x64xf32>
    %c0_79 = arith.constant 0 : index
    %c1_80 = arith.constant 1 : index
    %c0_81 = arith.constant 0 : index
    %94 = tpu.strided_load %arg14[%c0_79, %c1_80, %c0_81] {strides = array<i32: 1, 2, 1>} : memref<5x16x64xf32, #tpu.memory_space<vmem>>, vector<5x8x64xf32>
    %95 = arith.maximumf %93, %94 : vector<5x8x64xf32>
    %96 = vector.shape_cast %95 : vector<5x8x64xf32> to vector<40x64xf32>
    %c0_82 = arith.constant 0 : index
    %c0_83 = arith.constant 0 : index
    %97 = vector.load %arg15[%c0_82, %c0_83] : memref<40x64xf32, #tpu.memory_space<vmem>>, vector<40x64xf32>
    tpu.vector_store %arg15[%c0_82, %c0_83], %96 {strides = array<i32>} : memref<40x64xf32, #tpu.memory_space<vmem>>, vector<40x64xf32>,
    %cst_84 = arith.constant 0.000000e+00 : f32
    %98 = vector.broadcast %cst_84 : f32 to vector<1x128xf32>
    %c0_85 = arith.constant 0 : index
    %c0_86 = arith.constant 0 : index
    %99 = vector.load %arg15[%c0_85, %c0_86] : memref<40x64xf32, #tpu.memory_space<vmem>>, vector<1x64xf32>
    %c0_87 = arith.constant 0 : index
    %c0_88 = arith.constant 0 : index
    %c0_89 = arith.constant 0 : index
    %100 = vector.load %arg6[%c0_87, %c0_88, %c0_89] : memref<40x64x128xbf16, #tpu.memory_space<vmem>>, vector<1x64x128xbf16>
    %101 = vector.shape_cast %100 : vector<1x64x128xbf16> to vector<64x128xbf16>
    %102 = arith.extf %101 : vector<64x128xbf16> to vector<64x128xf32>
    %cst_90 = arith.constant dense<0.000000e+00> : vector<1x128xf32>
    %103 = tpu.matmul %99, %102, %cst_90 {dimension_numbers = #tpu.dot_dimension_numbers<[1], [0], [0], [1], [0, 0, 1, 1], [], []>} : vector<1x64xf32>, vector<64x128xf32>, vector<1x128xf32> -> vector<1x128xf32>
    %104 = arith.addf %98, %103 : vector<1x128xf32>
    %c1_91 = arith.constant 1 : index
    %c0_92 = arith.constant 0 : index
    %105 = vector.load %arg15[%c1_91, %c0_92] : memref<40x64xf32, #tpu.memory_space<vmem>>, vector<1x64xf32>
    %c1_93 = arith.constant 1 : index
    %c0_94 = arith.constant 0 : index
    %c0_95 = arith.constant 0 : index
    %106 = vector.load %arg6[%c1_93, %c0_94, %c0_95] : memref<40x64x128xbf16, #tpu.memory_space<vmem>>, vector<1x64x128xbf16>
    %107 = vector.shape_cast %106 : vector<1x64x128xbf16> to vector<64x128xbf16>
    %108 = arith.extf %107 : vector<64x128xbf16> to vector<64x128xf32>
    %cst_96 = arith.constant dense<0.000000e+00> : vector<1x128xf32>
    %109 = tpu.matmul %105, %108, %cst_96 {dimension_numbers = #tpu.dot_dimension_numbers<[1], [0], [0], [1], [0, 0, 1, 1], [], []>} : vector<1x64xf32>, vector<64x128xf32>, vector<1x128xf32> -> vector<1x128xf32>
    %110 = arith.addf %104, %109 : vector<1x128xf32>
    %c2_97 = arith.constant 2 : index
    %c0_98 = arith.constant 0 : index
    %111 = vector.load %arg15[%c2_97, %c0_98] : memref<40x64xf32, #tpu.memory_space<vmem>>, vector<1x64xf32>
    %c2_99 = arith.constant 2 : index
    %c0_100 = arith.constant 0 : index
    %c0_101 = arith.constant 0 : index
    %112 = vector.load %arg6[%c2_99, %c0_100, %c0_101] : memref<40x64x128xbf16, #tpu.memory_space<vmem>>, vector<1x64x128xbf16>
    %113 = vector.shape_cast %112 : vector<1x64x128xbf16> to vector<64x128xbf16>
    %114 = arith.extf %113 : vector<64x128xbf16> to vector<64x128xf32>
    %cst_102 = arith.constant dense<0.000000e+00> : vector<1x128xf32>
    %115 = tpu.matmul %111, %114, %cst_102 {dimension_numbers = #tpu.dot_dimension_numbers<[1], [0], [0], [1], [0, 0, 1, 1], [], []>} : vector<1x64xf32>, vector<64x128xf32>, vector<1x128xf32> -> vector<1x128xf32>
    %116 = arith.addf %110, %115 : vector<1x128xf32>
    %c3_103 = arith.constant 3 : index
    %c0_104 = arith.constant 0 : index
    %117 = vector.load %arg15[%c3_103, %c0_104] : memref<40x64xf32, #tpu.memory_space<vmem>>, vector<1x64xf32>
    %c3_105 = arith.constant 3 : index
    %c0_106 = arith.constant 0 : index
    %c0_107 = arith.constant 0 : index
    %118 = vector.load %arg6[%c3_105, %c0_106, %c0_107] : memref<40x64x128xbf16, #tpu.memory_space<vmem>>, vector<1x64x128xbf16>
    %119 = vector.shape_cast %118 : vector<1x64x128xbf16> to vector<64x128xbf16>
    %120 = arith.extf %119 : vector<64x128xbf16> to vector<64x128xf32>
    %cst_108 = arith.constant dense<0.000000e+00> : vector<1x128xf32>
    %121 = tpu.matmul %117, %120, %cst_108 {dimension_numbers = #tpu.dot_dimension_numbers<[1], [0], [0], [1], [0, 0, 1, 1], [], []>} : vector<1x64xf32>, vector<64x128xf32>, vector<1x128xf32> -> vector<1x128xf32>
    %122 = arith.addf %116, %121 : vector<1x128xf32>
    %c4_109 = arith.constant 4 : index
    %c0_110 = arith.constant 0 : index
    %123 = vector.load %arg15[%c4_109, %c0_110] : memref<40x64xf32, #tpu.memory_space<vmem>>, vector<1x64xf32>
    %c4_111 = arith.constant 4 : index
    %c0_112 = arith.constant 0 : index
    %c0_113 = arith.constant 0 : index
    %124 = vector.load %arg6[%c4_111, %c0_112, %c0_113] : memref<40x64x128xbf16, #tpu.memory_space<vmem>>, vector<1x64x128xbf16>
    %125 = vector.shape_cast %124 : vector<1x64x128xbf16> to vector<64x128xbf16>
    %126 = arith.extf %125 : vector<64x128xbf16> to vector<64x128xf32>
    %cst_114 = arith.constant dense<0.000000e+00> : vector<1x128xf32>
    %127 = tpu.matmul %123, %126, %cst_114 {dimension_numbers = #tpu.dot_dimension_numbers<[1], [0], [0], [1], [0, 0, 1, 1], [], []>} : vector<1x64xf32>, vector<64x128xf32>, vector<1x128xf32> -> vector<1x128xf32>
    %128 = arith.addf %122, %127 : vector<1x128xf32>
    %c5_115 = arith.constant 5 : index
    %c0_116 = arith.constant 0 : index
    %129 = vector.load %arg15[%c5_115, %c0_116] : memref<40x64xf32, #tpu.memory_space<vmem>>, vector<1x64xf32>
    %c5_117 = arith.constant 5 : index
    %c0_118 = arith.constant 0 : index
    %c0_119 = arith.constant 0 : index
    %130 = vector.load %arg6[%c5_117, %c0_118, %c0_119] : memref<40x64x128xbf16, #tpu.memory_space<vmem>>, vector<1x64x128xbf16>
    %131 = vector.shape_cast %130 : vector<1x64x128xbf16> to vector<64x128xbf16>
    %132 = arith.extf %131 : vector<64x128xbf16> to vector<64x128xf32>
    %cst_120 = arith.constant dense<0.000000e+00> : vector<1x128xf32>
    %133 = tpu.matmul %129, %132, %cst_120 {dimension_numbers = #tpu.dot_dimension_numbers<[1], [0], [0], [1], [0, 0, 1, 1], [], []>} : vector<1x64xf32>, vector<64x128xf32>, vector<1x128xf32> -> vector<1x128xf32>
    %134 = arith.addf %128, %133 : vector<1x128xf32>
    %c6_121 = arith.constant 6 : index
    %c0_122 = arith.constant 0 : index
    %135 = vector.load %arg15[%c6_121, %c0_122] : memref<40x64xf32, #tpu.memory_space<vmem>>, vector<1x64xf32>
    %c6_123 = arith.constant 6 : index
    %c0_124 = arith.constant 0 : index
    %c0_125 = arith.constant 0 : index
    %136 = vector.load %arg6[%c6_123, %c0_124, %c0_125] : memref<40x64x128xbf16, #tpu.memory_space<vmem>>, vector<1x64x128xbf16>
    %137 = vector.shape_cast %136 : vector<1x64x128xbf16> to vector<64x128xbf16>
    %138 = arith.extf %137 : vector<64x128xbf16> to vector<64x128xf32>
    %cst_126 = arith.constant dense<0.000000e+00> : vector<1x128xf32>
    %139 = tpu.matmul %135, %138, %cst_126 {dimension_numbers = #tpu.dot_dimension_numbers<[1], [0], [0], [1], [0, 0, 1, 1], [], []>} : vector<1x64xf32>, vector<64x128xf32>, vector<1x128xf32> -> vector<1x128xf32>
    %140 = arith.addf %134, %139 : vector<1x128xf32>
    %c7_127 = arith.constant 7 : index
    %c0_128 = arith.constant 0 : index
    %141 = vector.load %arg15[%c7_127, %c0_128] : memref<40x64xf32, #tpu.memory_space<vmem>>, vector<1x64xf32>
    %c7_129 = arith.constant 7 : index
    %c0_130 = arith.constant 0 : index
    %c0_131 = arith.constant 0 : index
    %142 = vector.load %arg6[%c7_129, %c0_130, %c0_131] : memref<40x64x128xbf16, #tpu.memory_space<vmem>>, vector<1x64x128xbf16>
    %143 = vector.shape_cast %142 : vector<1x64x128xbf16> to vector<64x128xbf16>
    %144 = arith.extf %143 : vector<64x128xbf16> to vector<64x128xf32>
    %cst_132 = arith.constant dense<0.000000e+00> : vector<1x128xf32>
    %145 = tpu.matmul %141, %144, %cst_132 {dimension_numbers = #tpu.dot_dimension_numbers<[1], [0], [0], [1], [0, 0, 1, 1], [], []>} : vector<1x64xf32>, vector<64x128xf32>, vector<1x128xf32> -> vector<1x128xf32>
    %146 = arith.addf %140, %145 : vector<1x128xf32>
    %c8_133 = arith.constant 8 : index
    %c0_134 = arith.constant 0 : index
    %147 = vector.load %arg15[%c8_133, %c0_134] : memref<40x64xf32, #tpu.memory_space<vmem>>, vector<1x64xf32>
    %c8_135 = arith.constant 8 : index
    %c0_136 = arith.constant 0 : index
    %c0_137 = arith.constant 0 : index
    %148 = vector.load %arg6[%c8_135, %c0_136, %c0_137] : memref<40x64x128xbf16, #tpu.memory_space<vmem>>, vector<1x64x128xbf16>
    %149 = vector.shape_cast %148 : vector<1x64x128xbf16> to vector<64x128xbf16>
    %150 = arith.extf %149 : vector<64x128xbf16> to vector<64x128xf32>
    %cst_138 = arith.constant dense<0.000000e+00> : vector<1x128xf32>
    %151 = tpu.matmul %147, %150, %cst_138 {dimension_numbers = #tpu.dot_dimension_numbers<[1], [0], [0], [1], [0, 0, 1, 1], [], []>} : vector<1x64xf32>, vector<64x128xf32>, vector<1x128xf32> -> vector<1x128xf32>
    %152 = arith.addf %146, %151 : vector<1x128xf32>
    %c9_139 = arith.constant 9 : index
    %c0_140 = arith.constant 0 : index
    %153 = vector.load %arg15[%c9_139, %c0_140] : memref<40x64xf32, #tpu.memory_space<vmem>>, vector<1x64xf32>
    %c9_141 = arith.constant 9 : index
    %c0_142 = arith.constant 0 : index
    %c0_143 = arith.constant 0 : index
    %154 = vector.load %arg6[%c9_141, %c0_142, %c0_143] : memref<40x64x128xbf16, #tpu.memory_space<vmem>>, vector<1x64x128xbf16>
    %155 = vector.shape_cast %154 : vector<1x64x128xbf16> to vector<64x128xbf16>
    %156 = arith.extf %155 : vector<64x128xbf16> to vector<64x128xf32>
    %cst_144 = arith.constant dense<0.000000e+00> : vector<1x128xf32>
    %157 = tpu.matmul %153, %156, %cst_144 {dimension_numbers = #tpu.dot_dimension_numbers<[1], [0], [0], [1], [0, 0, 1, 1], [], []>} : vector<1x64xf32>, vector<64x128xf32>, vector<1x128xf32> -> vector<1x128xf32>
    %158 = arith.addf %152, %157 : vector<1x128xf32>
    %c10 = arith.constant 10 : index
    %c0_145 = arith.constant 0 : index
    %159 = vector.load %arg15[%c10, %c0_145] : memref<40x64xf32, #tpu.memory_space<vmem>>, vector<1x64xf32>
    %c10_146 = arith.constant 10 : index
    %c0_147 = arith.constant 0 : index
    %c0_148 = arith.constant 0 : index
    %160 = vector.load %arg6[%c10_146, %c0_147, %c0_148] : memref<40x64x128xbf16, #tpu.memory_space<vmem>>, vector<1x64x128xbf16>
    %161 = vector.shape_cast %160 : vector<1x64x128xbf16> to vector<64x128xbf16>
    %162 = arith.extf %161 : vector<64x128xbf16> to vector<64x128xf32>
    %cst_149 = arith.constant dense<0.000000e+00> : vector<1x128xf32>
    %163 = tpu.matmul %159, %162, %cst_149 {dimension_numbers = #tpu.dot_dimension_numbers<[1], [0], [0], [1], [0, 0, 1, 1], [], []>} : vector<1x64xf32>, vector<64x128xf32>, vector<1x128xf32> -> vector<1x128xf32>
    %164 = arith.addf %158, %163 : vector<1x128xf32>
    %c11 = arith.constant 11 : index
    %c0_150 = arith.constant 0 : index
    %165 = vector.load %arg15[%c11, %c0_150] : memref<40x64xf32, #tpu.memory_space<vmem>>, vector<1x64xf32>
    %c11_151 = arith.constant 11 : index
    %c0_152 = arith.constant 0 : index
    %c0_153 = arith.constant 0 : index
    %166 = vector.load %arg6[%c11_151, %c0_152, %c0_153] : memref<40x64x128xbf16, #tpu.memory_space<vmem>>, vector<1x64x128xbf16>
    %167 = vector.shape_cast %166 : vector<1x64x128xbf16> to vector<64x128xbf16>
    %168 = arith.extf %167 : vector<64x128xbf16> to vector<64x128xf32>
    %cst_154 = arith.constant dense<0.000000e+00> : vector<1x128xf32>
    %169 = tpu.matmul %165, %168, %cst_154 {dimension_numbers = #tpu.dot_dimension_numbers<[1], [0], [0], [1], [0, 0, 1, 1], [], []>} : vector<1x64xf32>, vector<64x128xf32>, vector<1x128xf32> -> vector<1x128xf32>
    %170 = arith.addf %164, %169 : vector<1x128xf32>
    %c12 = arith.constant 12 : index
    %c0_155 = arith.constant 0 : index
    %171 = vector.load %arg15[%c12, %c0_155] : memref<40x64xf32, #tpu.memory_space<vmem>>, vector<1x64xf32>
    %c12_156 = arith.constant 12 : index
    %c0_157 = arith.constant 0 : index
    %c0_158 = arith.constant 0 : index
    %172 = vector.load %arg6[%c12_156, %c0_157, %c0_158] : memref<40x64x128xbf16, #tpu.memory_space<vmem>>, vector<1x64x128xbf16>
    %173 = vector.shape_cast %172 : vector<1x64x128xbf16> to vector<64x128xbf16>
    %174 = arith.extf %173 : vector<64x128xbf16> to vector<64x128xf32>
    %cst_159 = arith.constant dense<0.000000e+00> : vector<1x128xf32>
    %175 = tpu.matmul %171, %174, %cst_159 {dimension_numbers = #tpu.dot_dimension_numbers<[1], [0], [0], [1], [0, 0, 1, 1], [], []>} : vector<1x64xf32>, vector<64x128xf32>, vector<1x128xf32> -> vector<1x128xf32>
    %176 = arith.addf %170, %175 : vector<1x128xf32>
    %c13 = arith.constant 13 : index
    %c0_160 = arith.constant 0 : index
    %177 = vector.load %arg15[%c13, %c0_160] : memref<40x64xf32, #tpu.memory_space<vmem>>, vector<1x64xf32>
    %c13_161 = arith.constant 13 : index
    %c0_162 = arith.constant 0 : index
    %c0_163 = arith.constant 0 : index
    %178 = vector.load %arg6[%c13_161, %c0_162, %c0_163] : memref<40x64x128xbf16, #tpu.memory_space<vmem>>, vector<1x64x128xbf16>
    %179 = vector.shape_cast %178 : vector<1x64x128xbf16> to vector<64x128xbf16>
    %180 = arith.extf %179 : vector<64x128xbf16> to vector<64x128xf32>
    %cst_164 = arith.constant dense<0.000000e+00> : vector<1x128xf32>
    %181 = tpu.matmul %177, %180, %cst_164 {dimension_numbers = #tpu.dot_dimension_numbers<[1], [0], [0], [1], [0, 0, 1, 1], [], []>} : vector<1x64xf32>, vector<64x128xf32>, vector<1x128xf32> -> vector<1x128xf32>
    %182 = arith.addf %176, %181 : vector<1x128xf32>
    %c14 = arith.constant 14 : index
    %c0_165 = arith.constant 0 : index
    %183 = vector.load %arg15[%c14, %c0_165] : memref<40x64xf32, #tpu.memory_space<vmem>>, vector<1x64xf32>
    %c14_166 = arith.constant 14 : index
    %c0_167 = arith.constant 0 : index
    %c0_168 = arith.constant 0 : index
    %184 = vector.load %arg6[%c14_166, %c0_167, %c0_168] : memref<40x64x128xbf16, #tpu.memory_space<vmem>>, vector<1x64x128xbf16>
    %185 = vector.shape_cast %184 : vector<1x64x128xbf16> to vector<64x128xbf16>
    %186 = arith.extf %185 : vector<64x128xbf16> to vector<64x128xf32>
    %cst_169 = arith.constant dense<0.000000e+00> : vector<1x128xf32>
    %187 = tpu.matmul %183, %186, %cst_169 {dimension_numbers = #tpu.dot_dimension_numbers<[1], [0], [0], [1], [0, 0, 1, 1], [], []>} : vector<1x64xf32>, vector<64x128xf32>, vector<1x128xf32> -> vector<1x128xf32>
    %188 = arith.addf %182, %187 : vector<1x128xf32>
    %c15 = arith.constant 15 : index
    %c0_170 = arith.constant 0 : index
    %189 = vector.load %arg15[%c15, %c0_170] : memref<40x64xf32, #tpu.memory_space<vmem>>, vector<1x64xf32>
    %c15_171 = arith.constant 15 : index
    %c0_172 = arith.constant 0 : index
    %c0_173 = arith.constant 0 : index
    %190 = vector.load %arg6[%c15_171, %c0_172, %c0_173] : memref<40x64x128xbf16, #tpu.memory_space<vmem>>, vector<1x64x128xbf16>
    %191 = vector.shape_cast %190 : vector<1x64x128xbf16> to vector<64x128xbf16>
    %192 = arith.extf %191 : vector<64x128xbf16> to vector<64x128xf32>
    %cst_174 = arith.constant dense<0.000000e+00> : vector<1x128xf32>
    %193 = tpu.matmul %189, %192, %cst_174 {dimension_numbers = #tpu.dot_dimension_numbers<[1], [0], [0], [1], [0, 0, 1, 1], [], []>} : vector<1x64xf32>, vector<64x128xf32>, vector<1x128xf32> -> vector<1x128xf32>
    %194 = arith.addf %188, %193 : vector<1x128xf32>
    %c16 = arith.constant 16 : index
    %c0_175 = arith.constant 0 : index
    %195 = vector.load %arg15[%c16, %c0_175] : memref<40x64xf32, #tpu.memory_space<vmem>>, vector<1x64xf32>
    %c16_176 = arith.constant 16 : index
    %c0_177 = arith.constant 0 : index
    %c0_178 = arith.constant 0 : index
    %196 = vector.load %arg6[%c16_176, %c0_177, %c0_178] : memref<40x64x128xbf16, #tpu.memory_space<vmem>>, vector<1x64x128xbf16>
    %197 = vector.shape_cast %196 : vector<1x64x128xbf16> to vector<64x128xbf16>
    %198 = arith.extf %197 : vector<64x128xbf16> to vector<64x128xf32>
    %cst_179 = arith.constant dense<0.000000e+00> : vector<1x128xf32>
    %199 = tpu.matmul %195, %198, %cst_179 {dimension_numbers = #tpu.dot_dimension_numbers<[1], [0], [0], [1], [0, 0, 1, 1], [], []>} : vector<1x64xf32>, vector<64x128xf32>, vector<1x128xf32> -> vector<1x128xf32>
    %200 = arith.addf %194, %199 : vector<1x128xf32>
    %c17 = arith.constant 17 : index
    %c0_180 = arith.constant 0 : index
    %201 = vector.load %arg15[%c17, %c0_180] : memref<40x64xf32, #tpu.memory_space<vmem>>, vector<1x64xf32>
    %c17_181 = arith.constant 17 : index
    %c0_182 = arith.constant 0 : index
    %c0_183 = arith.constant 0 : index
    %202 = vector.load %arg6[%c17_181, %c0_182, %c0_183] : memref<40x64x128xbf16, #tpu.memory_space<vmem>>, vector<1x64x128xbf16>
    %203 = vector.shape_cast %202 : vector<1x64x128xbf16> to vector<64x128xbf16>
    %204 = arith.extf %203 : vector<64x128xbf16> to vector<64x128xf32>
    %cst_184 = arith.constant dense<0.000000e+00> : vector<1x128xf32>
    %205 = tpu.matmul %201, %204, %cst_184 {dimension_numbers = #tpu.dot_dimension_numbers<[1], [0], [0], [1], [0, 0, 1, 1], [], []>} : vector<1x64xf32>, vector<64x128xf32>, vector<1x128xf32> -> vector<1x128xf32>
    %206 = arith.addf %200, %205 : vector<1x128xf32>
    %c18 = arith.constant 18 : index
    %c0_185 = arith.constant 0 : index
    %207 = vector.load %arg15[%c18, %c0_185] : memref<40x64xf32, #tpu.memory_space<vmem>>, vector<1x64xf32>
    %c18_186 = arith.constant 18 : index
    %c0_187 = arith.constant 0 : index
    %c0_188 = arith.constant 0 : index
    %208 = vector.load %arg6[%c18_186, %c0_187, %c0_188] : memref<40x64x128xbf16, #tpu.memory_space<vmem>>, vector<1x64x128xbf16>
    %209 = vector.shape_cast %208 : vector<1x64x128xbf16> to vector<64x128xbf16>
    %210 = arith.extf %209 : vector<64x128xbf16> to vector<64x128xf32>
    %cst_189 = arith.constant dense<0.000000e+00> : vector<1x128xf32>
    %211 = tpu.matmul %207, %210, %cst_189 {dimension_numbers = #tpu.dot_dimension_numbers<[1], [0], [0], [1], [0, 0, 1, 1], [], []>} : vector<1x64xf32>, vector<64x128xf32>, vector<1x128xf32> -> vector<1x128xf32>
    %212 = arith.addf %206, %211 : vector<1x128xf32>
    %c19 = arith.constant 19 : index
    %c0_190 = arith.constant 0 : index
    %213 = vector.load %arg15[%c19, %c0_190] : memref<40x64xf32, #tpu.memory_space<vmem>>, vector<1x64xf32>
    %c19_191 = arith.constant 19 : index
    %c0_192 = arith.constant 0 : index
    %c0_193 = arith.constant 0 : index
    %214 = vector.load %arg6[%c19_191, %c0_192, %c0_193] : memref<40x64x128xbf16, #tpu.memory_space<vmem>>, vector<1x64x128xbf16>
    %215 = vector.shape_cast %214 : vector<1x64x128xbf16> to vector<64x128xbf16>
    %216 = arith.extf %215 : vector<64x128xbf16> to vector<64x128xf32>
    %cst_194 = arith.constant dense<0.000000e+00> : vector<1x128xf32>
    %217 = tpu.matmul %213, %216, %cst_194 {dimension_numbers = #tpu.dot_dimension_numbers<[1], [0], [0], [1], [0, 0, 1, 1], [], []>} : vector<1x64xf32>, vector<64x128xf32>, vector<1x128xf32> -> vector<1x128xf32>
    %218 = arith.addf %212, %217 : vector<1x128xf32>
    %c20 = arith.constant 20 : index
    %c0_195 = arith.constant 0 : index
    %219 = vector.load %arg15[%c20, %c0_195] : memref<40x64xf32, #tpu.memory_space<vmem>>, vector<1x64xf32>
    %c20_196 = arith.constant 20 : index
    %c0_197 = arith.constant 0 : index
    %c0_198 = arith.constant 0 : index
    %220 = vector.load %arg6[%c20_196, %c0_197, %c0_198] : memref<40x64x128xbf16, #tpu.memory_space<vmem>>, vector<1x64x128xbf16>
    %221 = vector.shape_cast %220 : vector<1x64x128xbf16> to vector<64x128xbf16>
    %222 = arith.extf %221 : vector<64x128xbf16> to vector<64x128xf32>
    %cst_199 = arith.constant dense<0.000000e+00> : vector<1x128xf32>
    %223 = tpu.matmul %219, %222, %cst_199 {dimension_numbers = #tpu.dot_dimension_numbers<[1], [0], [0], [1], [0, 0, 1, 1], [], []>} : vector<1x64xf32>, vector<64x128xf32>, vector<1x128xf32> -> vector<1x128xf32>
    %224 = arith.addf %218, %223 : vector<1x128xf32>
    %c21 = arith.constant 21 : index
    %c0_200 = arith.constant 0 : index
    %225 = vector.load %arg15[%c21, %c0_200] : memref<40x64xf32, #tpu.memory_space<vmem>>, vector<1x64xf32>
    %c21_201 = arith.constant 21 : index
    %c0_202 = arith.constant 0 : index
    %c0_203 = arith.constant 0 : index
    %226 = vector.load %arg6[%c21_201, %c0_202, %c0_203] : memref<40x64x128xbf16, #tpu.memory_space<vmem>>, vector<1x64x128xbf16>
    %227 = vector.shape_cast %226 : vector<1x64x128xbf16> to vector<64x128xbf16>
    %228 = arith.extf %227 : vector<64x128xbf16> to vector<64x128xf32>
    %cst_204 = arith.constant dense<0.000000e+00> : vector<1x128xf32>
    %229 = tpu.matmul %225, %228, %cst_204 {dimension_numbers = #tpu.dot_dimension_numbers<[1], [0], [0], [1], [0, 0, 1, 1], [], []>} : vector<1x64xf32>, vector<64x128xf32>, vector<1x128xf32> -> vector<1x128xf32>
    %230 = arith.addf %224, %229 : vector<1x128xf32>
    %c22 = arith.constant 22 : index
    %c0_205 = arith.constant 0 : index
    %231 = vector.load %arg15[%c22, %c0_205] : memref<40x64xf32, #tpu.memory_space<vmem>>, vector<1x64xf32>
    %c22_206 = arith.constant 22 : index
    %c0_207 = arith.constant 0 : index
    %c0_208 = arith.constant 0 : index
    %232 = vector.load %arg6[%c22_206, %c0_207, %c0_208] : memref<40x64x128xbf16, #tpu.memory_space<vmem>>, vector<1x64x128xbf16>
    %233 = vector.shape_cast %232 : vector<1x64x128xbf16> to vector<64x128xbf16>
    %234 = arith.extf %233 : vector<64x128xbf16> to vector<64x128xf32>
    %cst_209 = arith.constant dense<0.000000e+00> : vector<1x128xf32>
    %235 = tpu.matmul %231, %234, %cst_209 {dimension_numbers = #tpu.dot_dimension_numbers<[1], [0], [0], [1], [0, 0, 1, 1], [], []>} : vector<1x64xf32>, vector<64x128xf32>, vector<1x128xf32> -> vector<1x128xf32>
    %236 = arith.addf %230, %235 : vector<1x128xf32>
    %c23 = arith.constant 23 : index
    %c0_210 = arith.constant 0 : index
    %237 = vector.load %arg15[%c23, %c0_210] : memref<40x64xf32, #tpu.memory_space<vmem>>, vector<1x64xf32>
    %c23_211 = arith.constant 23 : index
    %c0_212 = arith.constant 0 : index
    %c0_213 = arith.constant 0 : index
    %238 = vector.load %arg6[%c23_211, %c0_212, %c0_213] : memref<40x64x128xbf16, #tpu.memory_space<vmem>>, vector<1x64x128xbf16>
    %239 = vector.shape_cast %238 : vector<1x64x128xbf16> to vector<64x128xbf16>
    %240 = arith.extf %239 : vector<64x128xbf16> to vector<64x128xf32>
    %cst_214 = arith.constant dense<0.000000e+00> : vector<1x128xf32>
    %241 = tpu.matmul %237, %240, %cst_214 {dimension_numbers = #tpu.dot_dimension_numbers<[1], [0], [0], [1], [0, 0, 1, 1], [], []>} : vector<1x64xf32>, vector<64x128xf32>, vector<1x128xf32> -> vector<1x128xf32>
    %242 = arith.addf %236, %241 : vector<1x128xf32>
    %c24 = arith.constant 24 : index
    %c0_215 = arith.constant 0 : index
    %243 = vector.load %arg15[%c24, %c0_215] : memref<40x64xf32, #tpu.memory_space<vmem>>, vector<1x64xf32>
    %c24_216 = arith.constant 24 : index
    %c0_217 = arith.constant 0 : index
    %c0_218 = arith.constant 0 : index
    %244 = vector.load %arg6[%c24_216, %c0_217, %c0_218] : memref<40x64x128xbf16, #tpu.memory_space<vmem>>, vector<1x64x128xbf16>
    %245 = vector.shape_cast %244 : vector<1x64x128xbf16> to vector<64x128xbf16>
    %246 = arith.extf %245 : vector<64x128xbf16> to vector<64x128xf32>
    %cst_219 = arith.constant dense<0.000000e+00> : vector<1x128xf32>
    %247 = tpu.matmul %243, %246, %cst_219 {dimension_numbers = #tpu.dot_dimension_numbers<[1], [0], [0], [1], [0, 0, 1, 1], [], []>} : vector<1x64xf32>, vector<64x128xf32>, vector<1x128xf32> -> vector<1x128xf32>
    %248 = arith.addf %242, %247 : vector<1x128xf32>
    %c25 = arith.constant 25 : index
    %c0_220 = arith.constant 0 : index
    %249 = vector.load %arg15[%c25, %c0_220] : memref<40x64xf32, #tpu.memory_space<vmem>>, vector<1x64xf32>
    %c25_221 = arith.constant 25 : index
    %c0_222 = arith.constant 0 : index
    %c0_223 = arith.constant 0 : index
    %250 = vector.load %arg6[%c25_221, %c0_222, %c0_223] : memref<40x64x128xbf16, #tpu.memory_space<vmem>>, vector<1x64x128xbf16>
    %251 = vector.shape_cast %250 : vector<1x64x128xbf16> to vector<64x128xbf16>
    %252 = arith.extf %251 : vector<64x128xbf16> to vector<64x128xf32>
    %cst_224 = arith.constant dense<0.000000e+00> : vector<1x128xf32>
    %253 = tpu.matmul %249, %252, %cst_224 {dimension_numbers = #tpu.dot_dimension_numbers<[1], [0], [0], [1], [0, 0, 1, 1], [], []>} : vector<1x64xf32>, vector<64x128xf32>, vector<1x128xf32> -> vector<1x128xf32>
    %254 = arith.addf %248, %253 : vector<1x128xf32>
    %c26 = arith.constant 26 : index
    %c0_225 = arith.constant 0 : index
    %255 = vector.load %arg15[%c26, %c0_225] : memref<40x64xf32, #tpu.memory_space<vmem>>, vector<1x64xf32>
    %c26_226 = arith.constant 26 : index
    %c0_227 = arith.constant 0 : index
    %c0_228 = arith.constant 0 : index
    %256 = vector.load %arg6[%c26_226, %c0_227, %c0_228] : memref<40x64x128xbf16, #tpu.memory_space<vmem>>, vector<1x64x128xbf16>
    %257 = vector.shape_cast %256 : vector<1x64x128xbf16> to vector<64x128xbf16>
    %258 = arith.extf %257 : vector<64x128xbf16> to vector<64x128xf32>
    %cst_229 = arith.constant dense<0.000000e+00> : vector<1x128xf32>
    %259 = tpu.matmul %255, %258, %cst_229 {dimension_numbers = #tpu.dot_dimension_numbers<[1], [0], [0], [1], [0, 0, 1, 1], [], []>} : vector<1x64xf32>, vector<64x128xf32>, vector<1x128xf32> -> vector<1x128xf32>
    %260 = arith.addf %254, %259 : vector<1x128xf32>
    %c27 = arith.constant 27 : index
    %c0_230 = arith.constant 0 : index
    %261 = vector.load %arg15[%c27, %c0_230] : memref<40x64xf32, #tpu.memory_space<vmem>>, vector<1x64xf32>
    %c27_231 = arith.constant 27 : index
    %c0_232 = arith.constant 0 : index
    %c0_233 = arith.constant 0 : index
    %262 = vector.load %arg6[%c27_231, %c0_232, %c0_233] : memref<40x64x128xbf16, #tpu.memory_space<vmem>>, vector<1x64x128xbf16>
    %263 = vector.shape_cast %262 : vector<1x64x128xbf16> to vector<64x128xbf16>
    %264 = arith.extf %263 : vector<64x128xbf16> to vector<64x128xf32>
    %cst_234 = arith.constant dense<0.000000e+00> : vector<1x128xf32>
    %265 = tpu.matmul %261, %264, %cst_234 {dimension_numbers = #tpu.dot_dimension_numbers<[1], [0], [0], [1], [0, 0, 1, 1], [], []>} : vector<1x64xf32>, vector<64x128xf32>, vector<1x128xf32> -> vector<1x128xf32>
    %266 = arith.addf %260, %265 : vector<1x128xf32>
    %c28 = arith.constant 28 : index
    %c0_235 = arith.constant 0 : index
    %267 = vector.load %arg15[%c28, %c0_235] : memref<40x64xf32, #tpu.memory_space<vmem>>, vector<1x64xf32>
    %c28_236 = arith.constant 28 : index
    %c0_237 = arith.constant 0 : index
    %c0_238 = arith.constant 0 : index
    %268 = vector.load %arg6[%c28_236, %c0_237, %c0_238] : memref<40x64x128xbf16, #tpu.memory_space<vmem>>, vector<1x64x128xbf16>
    %269 = vector.shape_cast %268 : vector<1x64x128xbf16> to vector<64x128xbf16>
    %270 = arith.extf %269 : vector<64x128xbf16> to vector<64x128xf32>
    %cst_239 = arith.constant dense<0.000000e+00> : vector<1x128xf32>
    %271 = tpu.matmul %267, %270, %cst_239 {dimension_numbers = #tpu.dot_dimension_numbers<[1], [0], [0], [1], [0, 0, 1, 1], [], []>} : vector<1x64xf32>, vector<64x128xf32>, vector<1x128xf32> -> vector<1x128xf32>
    %272 = arith.addf %266, %271 : vector<1x128xf32>
    %c29 = arith.constant 29 : index
    %c0_240 = arith.constant 0 : index
    %273 = vector.load %arg15[%c29, %c0_240] : memref<40x64xf32, #tpu.memory_space<vmem>>, vector<1x64xf32>
    %c29_241 = arith.constant 29 : index
    %c0_242 = arith.constant 0 : index
    %c0_243 = arith.constant 0 : index
    %274 = vector.load %arg6[%c29_241, %c0_242, %c0_243] : memref<40x64x128xbf16, #tpu.memory_space<vmem>>, vector<1x64x128xbf16>
    %275 = vector.shape_cast %274 : vector<1x64x128xbf16> to vector<64x128xbf16>
    %276 = arith.extf %275 : vector<64x128xbf16> to vector<64x128xf32>
    %cst_244 = arith.constant dense<0.000000e+00> : vector<1x128xf32>
    %277 = tpu.matmul %273, %276, %cst_244 {dimension_numbers = #tpu.dot_dimension_numbers<[1], [0], [0], [1], [0, 0, 1, 1], [], []>} : vector<1x64xf32>, vector<64x128xf32>, vector<1x128xf32> -> vector<1x128xf32>
    %278 = arith.addf %272, %277 : vector<1x128xf32>
    %c30 = arith.constant 30 : index
    %c0_245 = arith.constant 0 : index
    %279 = vector.load %arg15[%c30, %c0_245] : memref<40x64xf32, #tpu.memory_space<vmem>>, vector<1x64xf32>
    %c30_246 = arith.constant 30 : index
    %c0_247 = arith.constant 0 : index
    %c0_248 = arith.constant 0 : index
    %280 = vector.load %arg6[%c30_246, %c0_247, %c0_248] : memref<40x64x128xbf16, #tpu.memory_space<vmem>>, vector<1x64x128xbf16>
    %281 = vector.shape_cast %280 : vector<1x64x128xbf16> to vector<64x128xbf16>
    %282 = arith.extf %281 : vector<64x128xbf16> to vector<64x128xf32>
    %cst_249 = arith.constant dense<0.000000e+00> : vector<1x128xf32>
    %283 = tpu.matmul %279, %282, %cst_249 {dimension_numbers = #tpu.dot_dimension_numbers<[1], [0], [0], [1], [0, 0, 1, 1], [], []>} : vector<1x64xf32>, vector<64x128xf32>, vector<1x128xf32> -> vector<1x128xf32>
    %284 = arith.addf %278, %283 : vector<1x128xf32>
    %c31 = arith.constant 31 : index
    %c0_250 = arith.constant 0 : index
    %285 = vector.load %arg15[%c31, %c0_250] : memref<40x64xf32, #tpu.memory_space<vmem>>, vector<1x64xf32>
    %c31_251 = arith.constant 31 : index
    %c0_252 = arith.constant 0 : index
    %c0_253 = arith.constant 0 : index
    %286 = vector.load %arg6[%c31_251, %c0_252, %c0_253] : memref<40x64x128xbf16, #tpu.memory_space<vmem>>, vector<1x64x128xbf16>
    %287 = vector.shape_cast %286 : vector<1x64x128xbf16> to vector<64x128xbf16>
    %288 = arith.extf %287 : vector<64x128xbf16> to vector<64x128xf32>
    %cst_254 = arith.constant dense<0.000000e+00> : vector<1x128xf32>
    %289 = tpu.matmul %285, %288, %cst_254 {dimension_numbers = #tpu.dot_dimension_numbers<[1], [0], [0], [1], [0, 0, 1, 1], [], []>} : vector<1x64xf32>, vector<64x128xf32>, vector<1x128xf32> -> vector<1x128xf32>
    %290 = arith.addf %284, %289 : vector<1x128xf32>
    %c32 = arith.constant 32 : index
    %c0_255 = arith.constant 0 : index
    %291 = vector.load %arg15[%c32, %c0_255] : memref<40x64xf32, #tpu.memory_space<vmem>>, vector<1x64xf32>
    %c32_256 = arith.constant 32 : index
    %c0_257 = arith.constant 0 : index
    %c0_258 = arith.constant 0 : index
    %292 = vector.load %arg6[%c32_256, %c0_257, %c0_258] : memref<40x64x128xbf16, #tpu.memory_space<vmem>>, vector<1x64x128xbf16>
    %293 = vector.shape_cast %292 : vector<1x64x128xbf16> to vector<64x128xbf16>
    %294 = arith.extf %293 : vector<64x128xbf16> to vector<64x128xf32>
    %cst_259 = arith.constant dense<0.000000e+00> : vector<1x128xf32>
    %295 = tpu.matmul %291, %294, %cst_259 {dimension_numbers = #tpu.dot_dimension_numbers<[1], [0], [0], [1], [0, 0, 1, 1], [], []>} : vector<1x64xf32>, vector<64x128xf32>, vector<1x128xf32> -> vector<1x128xf32>
    %296 = arith.addf %290, %295 : vector<1x128xf32>
    %c33 = arith.constant 33 : index
    %c0_260 = arith.constant 0 : index
    %297 = vector.load %arg15[%c33, %c0_260] : memref<40x64xf32, #tpu.memory_space<vmem>>, vector<1x64xf32>
    %c33_261 = arith.constant 33 : index
    %c0_262 = arith.constant 0 : index
    %c0_263 = arith.constant 0 : index
    %298 = vector.load %arg6[%c33_261, %c0_262, %c0_263] : memref<40x64x128xbf16, #tpu.memory_space<vmem>>, vector<1x64x128xbf16>
    %299 = vector.shape_cast %298 : vector<1x64x128xbf16> to vector<64x128xbf16>
    %300 = arith.extf %299 : vector<64x128xbf16> to vector<64x128xf32>
    %cst_264 = arith.constant dense<0.000000e+00> : vector<1x128xf32>
    %301 = tpu.matmul %297, %300, %cst_264 {dimension_numbers = #tpu.dot_dimension_numbers<[1], [0], [0], [1], [0, 0, 1, 1], [], []>} : vector<1x64xf32>, vector<64x128xf32>, vector<1x128xf32> -> vector<1x128xf32>
    %302 = arith.addf %296, %301 : vector<1x128xf32>
    %c34 = arith.constant 34 : index
    %c0_265 = arith.constant 0 : index
    %303 = vector.load %arg15[%c34, %c0_265] : memref<40x64xf32, #tpu.memory_space<vmem>>, vector<1x64xf32>
    %c34_266 = arith.constant 34 : index
    %c0_267 = arith.constant 0 : index
    %c0_268 = arith.constant 0 : index
    %304 = vector.load %arg6[%c34_266, %c0_267, %c0_268] : memref<40x64x128xbf16, #tpu.memory_space<vmem>>, vector<1x64x128xbf16>
    %305 = vector.shape_cast %304 : vector<1x64x128xbf16> to vector<64x128xbf16>
    %306 = arith.extf %305 : vector<64x128xbf16> to vector<64x128xf32>
    %cst_269 = arith.constant dense<0.000000e+00> : vector<1x128xf32>
    %307 = tpu.matmul %303, %306, %cst_269 {dimension_numbers = #tpu.dot_dimension_numbers<[1], [0], [0], [1], [0, 0, 1, 1], [], []>} : vector<1x64xf32>, vector<64x128xf32>, vector<1x128xf32> -> vector<1x128xf32>
    %308 = arith.addf %302, %307 : vector<1x128xf32>
    %c35 = arith.constant 35 : index
    %c0_270 = arith.constant 0 : index
    %309 = vector.load %arg15[%c35, %c0_270] : memref<40x64xf32, #tpu.memory_space<vmem>>, vector<1x64xf32>
    %c35_271 = arith.constant 35 : index
    %c0_272 = arith.constant 0 : index
    %c0_273 = arith.constant 0 : index
    %310 = vector.load %arg6[%c35_271, %c0_272, %c0_273] : memref<40x64x128xbf16, #tpu.memory_space<vmem>>, vector<1x64x128xbf16>
    %311 = vector.shape_cast %310 : vector<1x64x128xbf16> to vector<64x128xbf16>
    %312 = arith.extf %311 : vector<64x128xbf16> to vector<64x128xf32>
    %cst_274 = arith.constant dense<0.000000e+00> : vector<1x128xf32>
    %313 = tpu.matmul %309, %312, %cst_274 {dimension_numbers = #tpu.dot_dimension_numbers<[1], [0], [0], [1], [0, 0, 1, 1], [], []>} : vector<1x64xf32>, vector<64x128xf32>, vector<1x128xf32> -> vector<1x128xf32>
    %314 = arith.addf %308, %313 : vector<1x128xf32>
    %c36 = arith.constant 36 : index
    %c0_275 = arith.constant 0 : index
    %315 = vector.load %arg15[%c36, %c0_275] : memref<40x64xf32, #tpu.memory_space<vmem>>, vector<1x64xf32>
    %c36_276 = arith.constant 36 : index
    %c0_277 = arith.constant 0 : index
    %c0_278 = arith.constant 0 : index
    %316 = vector.load %arg6[%c36_276, %c0_277, %c0_278] : memref<40x64x128xbf16, #tpu.memory_space<vmem>>, vector<1x64x128xbf16>
    %317 = vector.shape_cast %316 : vector<1x64x128xbf16> to vector<64x128xbf16>
    %318 = arith.extf %317 : vector<64x128xbf16> to vector<64x128xf32>
    %cst_279 = arith.constant dense<0.000000e+00> : vector<1x128xf32>
    %319 = tpu.matmul %315, %318, %cst_279 {dimension_numbers = #tpu.dot_dimension_numbers<[1], [0], [0], [1], [0, 0, 1, 1], [], []>} : vector<1x64xf32>, vector<64x128xf32>, vector<1x128xf32> -> vector<1x128xf32>
    %320 = arith.addf %314, %319 : vector<1x128xf32>
    %c37 = arith.constant 37 : index
    %c0_280 = arith.constant 0 : index
    %321 = vector.load %arg15[%c37, %c0_280] : memref<40x64xf32, #tpu.memory_space<vmem>>, vector<1x64xf32>
    %c37_281 = arith.constant 37 : index
    %c0_282 = arith.constant 0 : index
    %c0_283 = arith.constant 0 : index
    %322 = vector.load %arg6[%c37_281, %c0_282, %c0_283] : memref<40x64x128xbf16, #tpu.memory_space<vmem>>, vector<1x64x128xbf16>
    %323 = vector.shape_cast %322 : vector<1x64x128xbf16> to vector<64x128xbf16>
    %324 = arith.extf %323 : vector<64x128xbf16> to vector<64x128xf32>
    %cst_284 = arith.constant dense<0.000000e+00> : vector<1x128xf32>
    %325 = tpu.matmul %321, %324, %cst_284 {dimension_numbers = #tpu.dot_dimension_numbers<[1], [0], [0], [1], [0, 0, 1, 1], [], []>} : vector<1x64xf32>, vector<64x128xf32>, vector<1x128xf32> -> vector<1x128xf32>
    %326 = arith.addf %320, %325 : vector<1x128xf32>
    %c38 = arith.constant 38 : index
    %c0_285 = arith.constant 0 : index
    %327 = vector.load %arg15[%c38, %c0_285] : memref<40x64xf32, #tpu.memory_space<vmem>>, vector<1x64xf32>
    %c38_286 = arith.constant 38 : index
    %c0_287 = arith.constant 0 : index
    %c0_288 = arith.constant 0 : index
    %328 = vector.load %arg6[%c38_286, %c0_287, %c0_288] : memref<40x64x128xbf16, #tpu.memory_space<vmem>>, vector<1x64x128xbf16>
    %329 = vector.shape_cast %328 : vector<1x64x128xbf16> to vector<64x128xbf16>
    %330 = arith.extf %329 : vector<64x128xbf16> to vector<64x128xf32>
    %cst_289 = arith.constant dense<0.000000e+00> : vector<1x128xf32>
    %331 = tpu.matmul %327, %330, %cst_289 {dimension_numbers = #tpu.dot_dimension_numbers<[1], [0], [0], [1], [0, 0, 1, 1], [], []>} : vector<1x64xf32>, vector<64x128xf32>, vector<1x128xf32> -> vector<1x128xf32>
    %332 = arith.addf %326, %331 : vector<1x128xf32>
    %c39 = arith.constant 39 : index
    %c0_290 = arith.constant 0 : index
    %333 = vector.load %arg15[%c39, %c0_290] : memref<40x64xf32, #tpu.memory_space<vmem>>, vector<1x64xf32>
    %c39_291 = arith.constant 39 : index
    %c0_292 = arith.constant 0 : index
    %c0_293 = arith.constant 0 : index
    %334 = vector.load %arg6[%c39_291, %c0_292, %c0_293] : memref<40x64x128xbf16, #tpu.memory_space<vmem>>, vector<1x64x128xbf16>
    %335 = vector.shape_cast %334 : vector<1x64x128xbf16> to vector<64x128xbf16>
    %336 = arith.extf %335 : vector<64x128xbf16> to vector<64x128xf32>
    %cst_294 = arith.constant dense<0.000000e+00> : vector<1x128xf32>
    %337 = tpu.matmul %333, %336, %cst_294 {dimension_numbers = #tpu.dot_dimension_numbers<[1], [0], [0], [1], [0, 0, 1, 1], [], []>} : vector<1x64xf32>, vector<64x128xf32>, vector<1x128xf32> -> vector<1x128xf32>
    %338 = arith.addf %332, %337 : vector<1x128xf32>
    %c0_295 = arith.constant 0 : index
    %c0_296 = arith.constant 0 : index
    %339 = vector.load %arg7[%c0_295, %c0_296] : memref<1x128xf32, #tpu.memory_space<vmem>>, vector<1x128xf32>
    %340 = arith.addf %338, %339 : vector<1x128xf32>
    %cst_297 = arith.constant 0.000000e+00 : f32
    %341 = vector.broadcast %cst_297 : f32 to vector<1x128xf32>
    %342 = arith.maximumf %340, %341 : vector<1x128xf32>
    %c0_298 = arith.constant 0 : index
    %c0_299 = arith.constant 0 : index
    %343 = vector.load %arg8[%c0_298, %c0_299] : memref<128x128xf32, #tpu.memory_space<vmem>>, vector<128x128xf32>
    %cst_300 = arith.constant dense<0.000000e+00> : vector<1x128xf32>
    %344 = tpu.matmul %342, %343, %cst_300 {dimension_numbers = #tpu.dot_dimension_numbers<[1], [0], [0], [1], [0, 0, 1, 1], [], []>} : vector<1x128xf32>, vector<128x128xf32>, vector<1x128xf32> -> vector<1x128xf32>
    %c0_301 = arith.constant 0 : index
    %c0_302 = arith.constant 0 : index
    %345 = vector.load %arg9[%c0_301, %c0_302] : memref<1x128xf32, #tpu.memory_space<vmem>>, vector<1x128xf32>
    %346 = arith.addf %344, %345 : vector<1x128xf32>
    %cst_303 = arith.constant 0.000000e+00 : f32
    %347 = vector.broadcast %cst_303 : f32 to vector<1x128xf32>
    %348 = arith.maximumf %346, %347 : vector<1x128xf32>
    %c0_304 = arith.constant 0 : index
    %c0_305 = arith.constant 0 : index
    %349 = vector.load %arg10[%c0_304, %c0_305] : memref<128x128xf32, #tpu.memory_space<vmem>>, vector<128x128xf32>
    %cst_306 = arith.constant dense<0.000000e+00> : vector<1x128xf32>
    %350 = tpu.matmul %348, %349, %cst_306 {dimension_numbers = #tpu.dot_dimension_numbers<[1], [0], [0], [1], [0, 0, 1, 1], [], []>} : vector<1x128xf32>, vector<128x128xf32>, vector<1x128xf32> -> vector<1x128xf32>
    %c0_307 = arith.constant 0 : index
    %c0_308 = arith.constant 0 : index
    %351 = vector.load %arg11[%c0_307, %c0_308] : memref<1x128xf32, #tpu.memory_space<vmem>>, vector<1x128xf32>
    %352 = arith.addf %350, %351 : vector<1x128xf32>
    %353 = vector.extract_strided_slice %352 {offsets = [0, 0], sizes = [1, 3], strides = [1, 1]} : vector<1x128xf32> to vector<1x3xf32>
    %354 = vector.shape_cast %353 : vector<1x3xf32> to vector<1x1x3xf32>
    %c0_309 = arith.constant 0 : index
    %c0_310 = arith.constant 0 : index
    %c0_311 = arith.constant 0 : index
    %355 = vector.load %arg12[%c0_309, %c0_310, %c0_311] : memref<1x1x3xf32, #tpu.memory_space<vmem>>, vector<1x1x3xf32>
    tpu.vector_store %arg12[%c0_309, %c0_310, %c0_311], %354 {strides = array<i32>} : memref<1x1x3xf32, #tpu.memory_space<vmem>>, vector<1x1x3xf32>,
    return
  }
  func.func @transform_0(%arg0: i32) -> (i32, i32, i32, i32) {
    %c0_i32 = arith.constant 0 : i32
    %c0_i32_0 = arith.constant 0 : i32
    %c0_i32_1 = arith.constant 0 : i32
    %c0_i32_2 = arith.constant 0 : i32
    return %arg0, %c0_i32, %c0_i32_0, %c0_i32_1 : i32, i32, i32, i32
  }
  func.func @transform_1(%arg0: i32) -> (i32, i32) {
    %c0_i32 = arith.constant 0 : i32
    %c0_i32_0 = arith.constant 0 : i32
    %c0_i32_1 = arith.constant 0 : i32
    return %c0_i32, %c0_i32_0 : i32, i32
  }
  func.func @transform_2(%arg0: i32) -> (i32, i32) {
    %c0_i32 = arith.constant 0 : i32
    %c0_i32_0 = arith.constant 0 : i32
    %c0_i32_1 = arith.constant 0 : i32
    return %c0_i32, %c0_i32_0 : i32, i32
  }
  func.func @transform_3(%arg0: i32) -> (i32, i32, i32) {
    %c0_i32 = arith.constant 0 : i32
    %c0_i32_0 = arith.constant 0 : i32
    %c0_i32_1 = arith.constant 0 : i32
    %c0_i32_2 = arith.constant 0 : i32
    return %c0_i32, %c0_i32_0, %c0_i32_1 : i32, i32, i32
  }
  func.func @transform_4(%arg0: i32) -> (i32, i32) {
    %c0_i32 = arith.constant 0 : i32
    %c0_i32_0 = arith.constant 0 : i32
    %c0_i32_1 = arith.constant 0 : i32
    return %c0_i32, %c0_i32_0 : i32, i32
  }
  func.func @transform_5(%arg0: i32) -> (i32, i32, i32) {
    %c0_i32 = arith.constant 0 : i32
    %c0_i32_0 = arith.constant 0 : i32
    %c0_i32_1 = arith.constant 0 : i32
    %c0_i32_2 = arith.constant 0 : i32
    return %c0_i32, %c0_i32_0, %c0_i32_1 : i32, i32, i32
  }
  func.func @transform_6(%arg0: i32) -> (i32, i32) {
    %c0_i32 = arith.constant 0 : i32
    %c0_i32_0 = arith.constant 0 : i32
    %c0_i32_1 = arith.constant 0 : i32
    return %c0_i32, %c0_i32_0 : i32, i32
  }
  func.func @transform_7(%arg0: i32) -> (i32, i32) {
    %c0_i32 = arith.constant 0 : i32
    %c0_i32_0 = arith.constant 0 : i32
    %c0_i32_1 = arith.constant 0 : i32
    return %c0_i32, %c0_i32_0 : i32, i32
  }
  func.func @transform_8(%arg0: i32) -> (i32, i32) {
    %c0_i32 = arith.constant 0 : i32
    %c0_i32_0 = arith.constant 0 : i32
    %c0_i32_1 = arith.constant 0 : i32
    return %c0_i32, %c0_i32_0 : i32, i32
  }
  func.func @transform_9(%arg0: i32) -> (i32, i32) {
    %c0_i32 = arith.constant 0 : i32
    %c0_i32_0 = arith.constant 0 : i32
    %c0_i32_1 = arith.constant 0 : i32
    return %c0_i32, %c0_i32_0 : i32, i32
  }
  func.func @transform_10(%arg0: i32) -> (i32, i32) {
    %c0_i32 = arith.constant 0 : i32
    %c0_i32_0 = arith.constant 0 : i32
    %c0_i32_1 = arith.constant 0 : i32
    return %c0_i32, %c0_i32_0 : i32, i32
  }
  func.func @transform_11(%arg0: i32) -> (i32, i32, i32) {
    %c0_i32 = arith.constant 0 : i32
    %c0_i32_0 = arith.constant 0 : i32
    %c0_i32_1 = arith.constant 0 : i32
    return %arg0, %c0_i32, %c0_i32_0 : i32, i32, i32
  }
}

</mosaic_0001>

<llo_original>
// kernel: simple_cnn_forward.1
$region0: #{simple_cnn_forward.1}
  #allocation0 [shape = 'u32[]', space=smem, size = 0x4, offset = 0x4, fixed_abs, tag = 'smem constant byte address 0x4 - core index']
  #allocation1 [shape = 'u32[144,128]{1,0:T(1,128)}', space=vmem, size = 0x12000, scoped, tag = 'internal scratch']
  #allocation2 [shape = 'f32[12,32,32]{2,1,0:T(8,128)}', space=vmem, size = 0x30000, scoped, tag = 'scratch operand']
  #allocation3 [shape = 'f32[5,16,64]{2,1,0:T(8,128)}', space=vmem, size = 0xa000, scoped, tag = 'scratch operand']
  #allocation4 [shape = 'f32[40,64]{1,0:T(8,128)}', space=vmem, size = 0x5000, scoped, tag = 'scratch operand']
  %s0 = inlined_call_operand.vmem [shape: f32[2,4,160,27], index: 0, kind: input, shape index: {}]
  %s1 = inlined_call_operand.vmem [shape: f32[27,32], index: 1, kind: input, shape index: {}]
  %s2 = inlined_call_operand.vmem [shape: f32[1,32], index: 2, kind: input, shape index: {}]
  %s3 = inlined_call_operand.vmem [shape: f32[9,32,64], index: 3, kind: input, shape index: {}]
  %s4 = inlined_call_operand.vmem [shape: f32[1,64], index: 4, kind: input, shape index: {}]
  %s5 = inlined_call_operand.vmem [shape: bf16[40,64,128], index: 5, kind: input, shape index: {}]
  %s6 = inlined_call_operand.vmem [shape: f32[1,128], index: 6, kind: input, shape index: {}]
  %s7 = inlined_call_operand.vmem [shape: f32[128,128], index: 7, kind: input, shape index: {}]
  %s8 = inlined_call_operand.vmem [shape: f32[1,128], index: 8, kind: input, shape index: {}]
  %s9 = inlined_call_operand.vmem [shape: f32[128,128], index: 9, kind: input, shape index: {}]
  %s10 = inlined_call_operand.vmem [shape: f32[1,128], index: 10, kind: input, shape index: {}]
  %s11 = inlined_call_operand.hbm [shape: f32[2,1,3], index: 11, kind: output, shape index: {}]
  %s12 = sld [smem:[#allocation0]]
  $region77: #{simple_cnn_forward.1} parent=0
    _
  %s14 = ssub.s32 1, %s12
  %s15 = scalar_select 0, %s14, %s12
  $region1: #{simple_cnn_forward.1} parent=0
    #allocation5 [shape = 'u8[1024]{0}', space=vmem, size = 0x400, scoped, tag = 'output window, operand 0']
    #allocation6 [shape = 's32[2]{0}', space=sflag, size = 0x8, scoped, tag = 'scoped memory for simple_cnn_forward.1']
    %16 = vsyncpa [#allocation6], 0
    %s17 = scalar_lea.sflag [#allocation6], 1
    %18 = vsyncpa %s17, 0
    loop: start=0, step=1, limit=4
    $region2: #{simple_cnn_forward.1} parent=1 // loop_pre_header
      _
    $region3: #{simple_cnn_forward.1} parent=1 // loop_header
      %s20 = sphi 0, %s24
      %p21 = scmp.ge.s32.totalorder %s20, 4
      %s30 = sphi 0, %s32
      %s33 = sphi 0, %s30
      %s34 = sphi 0, %s33
      %s50 = sphi 0, %s34
      %s54 = sphi 0, %s54
      %s56 = sphi 0, %s54
      %s57 = sphi 0, %s56
      %s71 = sphi 0, %s57
      %s75 = sphi 0, %s75
      %s77 = sphi 0, %s75
      %s78 = sphi 0, %s77
      %s92 = sphi 0, %s78
      %s96 = sphi 0, %s96
      %s98 = sphi 0, %s96
      %s99 = sphi 0, %s98
      %s113 = sphi 0, %s99
      %s117 = sphi 0, %s117
      %s119 = sphi 0, %s117
      %s120 = sphi 0, %s119
      %s134 = sphi 0, %s120
      %s138 = sphi 0, %s138
      %s140 = sphi 0, %s138
      %s141 = sphi 0, %s140
      %s155 = sphi 0, %s141
      %s159 = sphi 0, %s159
      %s161 = sphi 0, %s159
      %s162 = sphi 0, %s161
      %s176 = sphi 0, %s162
      %s180 = sphi 0, %s180
      %s182 = sphi 0, %s180
      %s183 = sphi 0, %s182
      %s197 = sphi 0, %s183
      %s201 = sphi 0, %s201
      %s203 = sphi 0, %s201
      %s204 = sphi 0, %s203
      %s218 = sphi 0, %s204
      %s222 = sphi 0, %s222
      %s224 = sphi 0, %s222
      %s225 = sphi 0, %s224
      %s239 = sphi 0, %s225
      %s243 = sphi 0, %s243
      %s245 = sphi 0, %s243
      %s246 = sphi 0, %s245
      %s260 = sphi 0, %s246
      %s266 = sphi 0, %s268
      %s269 = sphi 0, %s266
      %s270 = sphi 0, %s269
      %s286 = sphi 0, %s270
    $region4: #{simple_cnn_forward.1} parent=1 // loop_header_branch
      %23 = sbr.rel (%p21) target = $region8
    $region5: #{simple_cnn_forward.1} parent=1 // loop_body
      %s25 = ssub.s32 %s20, 1
      %s26 = ssub.s32 %s20, 2
      %s27 = sadd.s32 %s20, 1
      %s28 = ssub.s32 %s20, %s27
      %p29 = scmp.eq.s32.totalorder %s28, 0
      %s31 = sadd.s32 %s30, 1
      %s32 = scalar_select %p29, %s30, %s31
      %p35 = pneg %p29
      %p36 = scmp.eq.s32.totalorder %s20, 1
      %p37 = por %p35, %p36
      %p38 = scmp.ne.s32.totalorder %s30, %s33
      %p39 = scmp.eq.s32.totalorder %s20, 0
      %p40 = por %p38, %p39
      %p41 = scmp.ne.s32.totalorder %s30, %s33
      %p42 = scmp.eq.s32.totalorder %s25, 1
      %p43 = por %p41, %p42
      %p44 = scmp.ne.s32.totalorder %s33, %s34
      %p45 = scmp.eq.s32.totalorder %s25, 0
      %p46 = por %p44, %p45
      %p47 = scmp.ne.s32.totalorder %s33, %s34
      %p48 = scmp.eq.s32.totalorder %s26, 1
      %p49 = por %p47, %p48
      %p51 = scmp.ne.s32.totalorder %s34, %s50
      %p52 = scmp.eq.s32.totalorder %s26, 0
      %p53 = por %p51, %p52
      %s55 = sadd.s32 %s54, 1
      %p58 = scmp.eq.s32.totalorder %s20, 1
      %p59 = scmp.ne.s32.totalorder %s54, %s56
      %p60 = scmp.eq.s32.totalorder %s20, 0
      %p61 = por %p59, %p60
      %p62 = scmp.ne.s32.totalorder %s54, %s56
      %p63 = scmp.eq.s32.totalorder %s25, 1
      %p64 = por %p62, %p63
      %p65 = scmp.ne.s32.totalorder %s56, %s57
      %p66 = scmp.eq.s32.totalorder %s25, 0
      %p67 = por %p65, %p66
      %p68 = scmp.ne.s32.totalorder %s56, %s57
      %p69 = scmp.eq.s32.totalorder %s26, 1
      %p70 = por %p68, %p69
      %p72 = scmp.ne.s32.totalorder %s57, %s71
      %p73 = scmp.eq.s32.totalorder %s26, 0
      %p74 = por %p72, %p73
      %s76 = sadd.s32 %s75, 1
      %p79 = scmp.eq.s32.totalorder %s20, 1
      %p80 = scmp.ne.s32.totalorder %s75, %s77
      %p81 = scmp.eq.s32.totalorder %s20, 0
      %p82 = por %p80, %p81
      %p83 = scmp.ne.s32.totalorder %s75, %s77
      %p84 = scmp.eq.s32.totalorder %s25, 1
      %p85 = por %p83, %p84
      %p86 = scmp.ne.s32.totalorder %s77, %s78
      %p87 = scmp.eq.s32.totalorder %s25, 0
      %p88 = por %p86, %p87
      %p89 = scmp.ne.s32.totalorder %s77, %s78
      %p90 = scmp.eq.s32.totalorder %s26, 1
      %p91 = por %p89, %p90
      %p93 = scmp.ne.s32.totalorder %s78, %s92
      %p94 = scmp.eq.s32.totalorder %s26, 0
      %p95 = por %p93, %p94
      %s97 = sadd.s32 %s96, 1
      %p100 = scmp.eq.s32.totalorder %s20, 1
      %p101 = scmp.ne.s32.totalorder %s96, %s98
      %p102 = scmp.eq.s32.totalorder %s20, 0
      %p103 = por %p101, %p102
      %p104 = scmp.ne.s32.totalorder %s96, %s98
      %p105 = scmp.eq.s32.totalorder %s25, 1
      %p106 = por %p104, %p105
      %p107 = scmp.ne.s32.totalorder %s98, %s99
      %p108 = scmp.eq.s32.totalorder %s25, 0
      %p109 = por %p107, %p108
      %p110 = scmp.ne.s32.totalorder %s98, %s99
      %p111 = scmp.eq.s32.totalorder %s26, 1
      %p112 = por %p110, %p111
      %p114 = scmp.ne.s32.totalorder %s99, %s113
      %p115 = scmp.eq.s32.totalorder %s26, 0
      %p116 = por %p114, %p115
      %s118 = sadd.s32 %s117, 1
      %p121 = scmp.eq.s32.totalorder %s20, 1
      %p122 = scmp.ne.s32.totalorder %s117, %s119
      %p123 = scmp.eq.s32.totalorder %s20, 0
      %p124 = por %p122, %p123
      %p125 = scmp.ne.s32.totalorder %s117, %s119
      %p126 = scmp.eq.s32.totalorder %s25, 1
      %p127 = por %p125, %p126
      %p128 = scmp.ne.s32.totalorder %s119, %s120
      %p129 = scmp.eq.s32.totalorder %s25, 0
      %p130 = por %p128, %p129
      %p131 = scmp.ne.s32.totalorder %s119, %s120
      %p132 = scmp.eq.s32.totalorder %s26, 1
      %p133 = por %p131, %p132
      %p135 = scmp.ne.s32.totalorder %s120, %s134
      %p136 = scmp.eq.s32.totalorder %s26, 0
      %p137 = por %p135, %p136
      %s139 = sadd.s32 %s138, 1
      %p142 = scmp.eq.s32.totalorder %s20, 1
      %p143 = scmp.ne.s32.totalorder %s138, %s140
      %p144 = scmp.eq.s32.totalorder %s20, 0
      %p145 = por %p143, %p144
      %p146 = scmp.ne.s32.totalorder %s138, %s140
      %p147 = scmp.eq.s32.totalorder %s25, 1
      %p148 = por %p146, %p147
      %p149 = scmp.ne.s32.totalorder %s140, %s141
      %p150 = scmp.eq.s32.totalorder %s25, 0
      %p151 = por %p149, %p150
      %p152 = scmp.ne.s32.totalorder %s140, %s141
      %p153 = scmp.eq.s32.totalorder %s26, 1
      %p154 = por %p152, %p153
      %p156 = scmp.ne.s32.totalorder %s141, %s155
      %p157 = scmp.eq.s32.totalorder %s26, 0
      %p158 = por %p156, %p157
      %s160 = sadd.s32 %s159, 1
      %p163 = scmp.eq.s32.totalorder %s20, 1
      %p164 = scmp.ne.s32.totalorder %s159, %s161
      %p165 = scmp.eq.s32.totalorder %s20, 0
      %p166 = por %p164, %p165
      %p167 = scmp.ne.s32.totalorder %s159, %s161
      %p168 = scmp.eq.s32.totalorder %s25, 1
      %p169 = por %p167, %p168
      %p170 = scmp.ne.s32.totalorder %s161, %s162
      %p171 = scmp.eq.s32.totalorder %s25, 0
      %p172 = por %p170, %p171
      %p173 = scmp.ne.s32.totalorder %s161, %s162
      %p174 = scmp.eq.s32.totalorder %s26, 1
      %p175 = por %p173, %p174
      %p177 = scmp.ne.s32.totalorder %s162, %s176
      %p178 = scmp.eq.s32.totalorder %s26, 0
      %p179 = por %p177, %p178
      %s181 = sadd.s32 %s180, 1
      %p184 = scmp.eq.s32.totalorder %s20, 1
      %p185 = scmp.ne.s32.totalorder %s180, %s182
      %p186 = scmp.eq.s32.totalorder %s20, 0
      %p187 = por %p185, %p186
      %p188 = scmp.ne.s32.totalorder %s180, %s182
      %p189 = scmp.eq.s32.totalorder %s25, 1
      %p190 = por %p188, %p189
      %p191 = scmp.ne.s32.totalorder %s182, %s183
      %p192 = scmp.eq.s32.totalorder %s25, 0
      %p193 = por %p191, %p192
      %p194 = scmp.ne.s32.totalorder %s182, %s183
      %p195 = scmp.eq.s32.totalorder %s26, 1
      %p196 = por %p194, %p195
      %p198 = scmp.ne.s32.totalorder %s183, %s197
      %p199 = scmp.eq.s32.totalorder %s26, 0
      %p200 = por %p198, %p199
      %s202 = sadd.s32 %s201, 1
      %p205 = scmp.eq.s32.totalorder %s20, 1
      %p206 = scmp.ne.s32.totalorder %s201, %s203
      %p207 = scmp.eq.s32.totalorder %s20, 0
      %p208 = por %p206, %p207
      %p209 = scmp.ne.s32.totalorder %s201, %s203
      %p210 = scmp.eq.s32.totalorder %s25, 1
      %p211 = por %p209, %p210
      %p212 = scmp.ne.s32.totalorder %s203, %s204
      %p213 = scmp.eq.s32.totalorder %s25, 0
      %p214 = por %p212, %p213
      %p215 = scmp.ne.s32.totalorder %s203, %s204
      %p216 = scmp.eq.s32.totalorder %s26, 1
      %p217 = por %p215, %p216
      %p219 = scmp.ne.s32.totalorder %s204, %s218
      %p220 = scmp.eq.s32.totalorder %s26, 0
      %p221 = por %p219, %p220
      %s223 = sadd.s32 %s222, 1
      %p226 = scmp.eq.s32.totalorder %s20, 1
      %p227 = scmp.ne.s32.totalorder %s222, %s224
      %p228 = scmp.eq.s32.totalorder %s20, 0
      %p229 = por %p227, %p228
      %p230 = scmp.ne.s32.totalorder %s222, %s224
      %p231 = scmp.eq.s32.totalorder %s25, 1
      %p232 = por %p230, %p231
      %p233 = scmp.ne.s32.totalorder %s224, %s225
      %p234 = scmp.eq.s32.totalorder %s25, 0
      %p235 = por %p233, %p234
      %p236 = scmp.ne.s32.totalorder %s224, %s225
      %p237 = scmp.eq.s32.totalorder %s26, 1
      %p238 = por %p236, %p237
      %p240 = scmp.ne.s32.totalorder %s225, %s239
      %p241 = scmp.eq.s32.totalorder %s26, 0
      %p242 = por %p240, %p241
      %s244 = sadd.s32 %s243, 1
      %p247 = scmp.eq.s32.totalorder %s20, 1
      %p248 = scmp.ne.s32.totalorder %s243, %s245
      %p249 = scmp.eq.s32.totalorder %s20, 0
      %p250 = por %p248, %p249
      %p251 = scmp.ne.s32.totalorder %s243, %s245
      %p252 = scmp.eq.s32.totalorder %s25, 1
      %p253 = por %p251, %p252
      %p254 = scmp.ne.s32.totalorder %s245, %s246
      %p255 = scmp.eq.s32.totalorder %s25, 0
      %p256 = por %p254, %p255
      %p257 = scmp.ne.s32.totalorder %s245, %s246
      %p258 = scmp.eq.s32.totalorder %s26, 1
      %p259 = por %p257, %p258
      %p261 = scmp.ne.s32.totalorder %s246, %s260
      %p262 = scmp.eq.s32.totalorder %s26, 0
      %p263 = por %p261, %p262
      %s264 = ssub.s32 %s20, %s27
      %p265 = scmp.eq.s32.totalorder %s264, 0
      %s267 = sadd.s32 %s266, 1
      %s268 = scalar_select %p265, %s266, %s267
      %p271 = pneg %p265
      %p272 = scmp.eq.s32.totalorder %s20, 1
      %p273 = por %p271, %p272
      %p274 = scmp.ne.s32.totalorder %s266, %s269
      %p275 = scmp.eq.s32.totalorder %s20, 0
      %p276 = por %p274, %p275
      %p277 = scmp.ne.s32.totalorder %s266, %s269
      %p278 = scmp.eq.s32.totalorder %s25, 1
      %p279 = por %p277, %p278
      %p280 = scmp.ne.s32.totalorder %s269, %s270
      %p281 = scmp.eq.s32.totalorder %s25, 0
      %p282 = por %p280, %p281
      %p283 = scmp.ne.s32.totalorder %s269, %s270
      %p284 = scmp.eq.s32.totalorder %s26, 1
      %p285 = por %p283, %p284
      %p287 = scmp.ne.s32.totalorder %s270, %s286
      %p288 = scmp.eq.s32.totalorder %s26, 0
      %p289 = por %p287, %p288
      %p290 = scmp.le.s32.totalorder 1, %s20
      %p291 = scmp.lt.s32.totalorder %s20, 3
      %p292 = pnand %p290, %p291
      %p293 = pneg %p292
      // Predicated region
      $region9: #{simple_cnn_forward.1} parent=5 // pred_check
        _
      $region10: #{simple_cnn_forward.1} parent=5 // pred_check_branch
        %295 = sbr.rel (%p292) target = $region12
      $region11: #{simple_cnn_forward.1} parent=5 // pred_region
        %s296 = ssub.s32 %s20, 1
        // Predicated region
        $region13: #{simple_cnn_forward.1} parent=11 // pred_check
          %p297 = pneg %p67
        $region14: #{simple_cnn_forward.1} parent=11 // pred_check_branch
          %299 = sbr.rel (%p297) target = $region16
        $region15: #{simple_cnn_forward.1} parent=11 // pred_region
          _
        $region16: #{simple_cnn_forward.1} parent=11 // pred_fallthru
          _
        // Predicated region
        $region17: #{simple_cnn_forward.1} parent=11 // pred_check
          %p300 = pneg %p88
        $region18: #{simple_cnn_forward.1} parent=11 // pred_check_branch
          %302 = sbr.rel (%p300) target = $region20
        $region19: #{simple_cnn_forward.1} parent=11 // pred_region
          _
        $region20: #{simple_cnn_forward.1} parent=11 // pred_fallthru
          _
        // Predicated region
        $region21: #{simple_cnn_forward.1} parent=11 // pred_check
          %p303 = pneg %p109
        $region22: #{simple_cnn_forward.1} parent=11 // pred_check_branch
          %305 = sbr.rel (%p303) target = $region24
        $region23: #{simple_cnn_forward.1} parent=11 // pred_region
          _
        $region24: #{simple_cnn_forward.1} parent=11 // pred_fallthru
          _
        // Predicated region
        $region25: #{simple_cnn_forward.1} parent=11 // pred_check
          %p306 = pneg %p130
        $region26: #{simple_cnn_forward.1} parent=11 // pred_check_branch
          %308 = sbr.rel (%p306) target = $region28
        $region27: #{simple_cnn_forward.1} parent=11 // pred_region
          _
        $region28: #{simple_cnn_forward.1} parent=11 // pred_fallthru
          _
        // Predicated region
        $region29: #{simple_cnn_forward.1} parent=11 // pred_check
          %p309 = pneg %p151
        $region30: #{simple_cnn_forward.1} parent=11 // pred_check_branch
          %311 = sbr.rel (%p309) target = $region32
        $region31: #{simple_cnn_forward.1} parent=11 // pred_region
          _
        $region32: #{simple_cnn_forward.1} parent=11 // pred_fallthru
          _
        // Predicated region
        $region33: #{simple_cnn_forward.1} parent=11 // pred_check
          %p312 = pneg %p172
        $region34: #{simple_cnn_forward.1} parent=11 // pred_check_branch
          %314 = sbr.rel (%p312) target = $region36
        $region35: #{simple_cnn_forward.1} parent=11 // pred_region
          _
        $region36: #{simple_cnn_forward.1} parent=11 // pred_fallthru
          _
        // Predicated region
        $region37: #{simple_cnn_forward.1} parent=11 // pred_check
          %p315 = pneg %p193
        $region38: #{simple_cnn_forward.1} parent=11 // pred_check_branch
          %317 = sbr.rel (%p315) target = $region40
        $region39: #{simple_cnn_forward.1} parent=11 // pred_region
          _
        $region40: #{simple_cnn_forward.1} parent=11 // pred_fallthru
          _
        // Predicated region
        $region41: #{simple_cnn_forward.1} parent=11 // pred_check
          %p318 = pneg %p214
        $region42: #{simple_cnn_forward.1} parent=11 // pred_check_branch
          %320 = sbr.rel (%p318) target = $region44
        $region43: #{simple_cnn_forward.1} parent=11 // pred_region
          _
        $region44: #{simple_cnn_forward.1} parent=11 // pred_fallthru
          _
        // Predicated region
        $region45: #{simple_cnn_forward.1} parent=11 // pred_check
          %p321 = pneg %p235
        $region46: #{simple_cnn_forward.1} parent=11 // pred_check_branch
          %323 = sbr.rel (%p321) target = $region48
        $region47: #{simple_cnn_forward.1} parent=11 // pred_region
          _
        $region48: #{simple_cnn_forward.1} parent=11 // pred_fallthru
          _
        // Predicated region
        $region49: #{simple_cnn_forward.1} parent=11 // pred_check
          %p324 = pneg %p256
        $region50: #{simple_cnn_forward.1} parent=11 // pred_check_branch
          %326 = sbr.rel (%p324) target = $region52
        $region51: #{simple_cnn_forward.1} parent=11 // pred_region
          _
        $region52: #{simple_cnn_forward.1} parent=11 // pred_fallthru
          _
      $region12: #{simple_cnn_forward.1} parent=5 // pred_fallthru
        _
      %p327 = scmp.lt.s32.totalorder %s20, 2
      // Predicated region
      $region53: #{simple_cnn_forward.1} parent=5 // pred_check
        %p328 = pneg %p327
      $region54: #{simple_cnn_forward.1} parent=5 // pred_check_branch
        %330 = sbr.rel (%p328) target = $region56
      $region55: #{simple_cnn_forward.1} parent=5 // pred_region
        // Predicated region
        $region57: #{simple_cnn_forward.1} parent=55 // pred_check
          %p331 = pneg %p40
        $region58: #{simple_cnn_forward.1} parent=55 // pred_check_branch
          %333 = sbr.rel (%p331) target = $region60
        $region59: #{simple_cnn_forward.1} parent=55 // pred_region
          %p334 = scmp.lt.s32.totalorder %s20, 1
          %s335 = scalar_select %p334, %s20, 1
          %s336 = smul.addr %s335, 80
          %s337 = smul.addr %s336, 8
          %s338 = scalar_lea.vmem %s0, %s337
        $region60: #{simple_cnn_forward.1} parent=55 // pred_fallthru
          _
      $region56: #{simple_cnn_forward.1} parent=5 // pred_fallthru
        _
      %p339 = scmp.le.s32.totalorder 1, %s20
      %p340 = scmp.lt.s32.totalorder %s20, 3
      %p341 = pnand %p339, %p340
      %p342 = pneg %p341
      // Predicated region
      $region61: #{simple_cnn_forward.1} parent=5 // pred_check
        _
      $region62: #{simple_cnn_forward.1} parent=5 // pred_check_branch
        %344 = sbr.rel (%p341) target = $region64
      $region63: #{simple_cnn_forward.1} parent=5 // pred_region
        %s345 = ssub.s32 %s20, 1
        %p346 = scmp.lt.s32.totalorder %s25, 1
        %s347 = scalar_select %p346, %s25, 1
        %s348 = smul.addr %s347, 80
        %s349 = smul.addr %s348, 8
        %s350 = scalar_lea.vmem %s0, %s349
        %p351 = pneg %p46
        %p352 = pneg %p43
        %p353 = pneg %p67
        %p354 = pneg %p64
        %p355 = pneg %p88
        %p356 = pneg %p85
        %p357 = pneg %p109
        %p358 = pneg %p106
        %p359 = pneg %p130
        %p360 = pneg %p127
        %p361 = pneg %p151
        %p362 = pneg %p148
        %p363 = pneg %p172
        %p364 = pneg %p169
        %p365 = pneg %p193
        %p366 = pneg %p190
        %p367 = pneg %p214
        %p368 = pneg %p211
        %p369 = pneg %p235
        %p370 = pneg %p232
        %p371 = pneg %p256
        %p372 = pneg %p253
        %p373 = pneg %p282
        %p374 = pneg %p279
        %s375 = sand.u32 %s269, 1
        %s376 = scalar_lea.sflag [#allocation6], %s375
        %s377 = sand.u32 %s269, 1
        %s378 = scalar_lea.vmem [#allocation5], %s377
        %p379 = scmp.lt.s32.totalorder %s25, 1
        %s380 = scalar_select %p379, %s25, 1
        %s381 = smul.addr %s380, 80
        %s382 = smul.addr %s381, 8
        %s383 = scalar_lea.vmem %s0, %s382
        %v384 = vld [vmem:[%s383] sm:$0xff]
        %v385 = vld [vmem:[%s383 + $0x8] sm:$0xff]
        %v386 = vld [vmem:[%s383 + $0x10] sm:$0xff]
        %v387 = vld [vmem:[%s383 + $0x18] sm:$0xff]
        %v388 = vld [vmem:[%s383 + $0x20] sm:$0xff]
        %v389 = vld [vmem:[%s383 + $0x28] sm:$0xff]
        %v390 = vld [vmem:[%s383 + $0x30] sm:$0xff]
        %v391 = vld [vmem:[%s383 + $0x38] sm:$0xff]
        %v392 = vld [vmem:[%s383 + $0x40] sm:$0xff]
        %v393 = vld [vmem:[%s383 + $0x48] sm:$0xff]
        %v394 = vld [vmem:[%s383 + $0x50] sm:$0xff]
        %v395 = vld [vmem:[%s383 + $0x58] sm:$0xff]
        %v396 = vld [vmem:[%s383 + $0x60] sm:$0xff]
        %v397 = vld [vmem:[%s383 + $0x68] sm:$0xff]
        %v398 = vld [vmem:[%s383 + $0x70] sm:$0xff]
        %v399 = vld [vmem:[%s383 + $0x78] sm:$0xff]
        %v400 = vld [vmem:[%s383 + $0x80] sm:$0xff]
        %v401 = vld [vmem:[%s383 + $0x88] sm:$0xff]
        %v402 = vld [vmem:[%s383 + $0x90] sm:$0xff]
        %v403 = vld [vmem:[%s383 + $0x98] sm:$0xff]
        %v404 = vld [vmem:[%s383 + $0xa0] sm:$0xff]
        %v405 = vld [vmem:[%s383 + $0xa8] sm:$0xff]
        %v406 = vld [vmem:[%s383 + $0xb0] sm:$0xff]
        %v407 = vld [vmem:[%s383 + $0xb8] sm:$0xff]
        %v408 = vld [vmem:[%s383 + $0xc0] sm:$0xff]
        %v409 = vld [vmem:[%s383 + $0xc8] sm:$0xff]
        %v410 = vld [vmem:[%s383 + $0xd0] sm:$0xff]
        %v411 = vld [vmem:[%s383 + $0xd8] sm:$0xff]
        %v412 = vld [vmem:[%s383 + $0xe0] sm:$0xff]
        %v413 = vld [vmem:[%s383 + $0xe8] sm:$0xff]
        %v414 = vld [vmem:[%s383 + $0xf0] sm:$0xff]
        %v415 = vld [vmem:[%s383 + $0xf8] sm:$0xff]
        %v416 = vld [vmem:[%s383 + $0x100] sm:$0xff]
        %v417 = vld [vmem:[%s383 + $0x108] sm:$0xff]
        %v418 = vld [vmem:[%s383 + $0x110] sm:$0xff]
        %v419 = vld [vmem:[%s383 + $0x118] sm:$0xff]
        %v420 = vld [vmem:[%s383 + $0x120] sm:$0xff]
        %v421 = vld [vmem:[%s383 + $0x128] sm:$0xff]
        %v422 = vld [vmem:[%s383 + $0x130] sm:$0xff]
        %v423 = vld [vmem:[%s383 + $0x138] sm:$0xff]
        %v424 = vld [vmem:[%s383 + $0x140] sm:$0xff]
        %v425 = vld [vmem:[%s383 + $0x148] sm:$0xff]
        %v426 = vld [vmem:[%s383 + $0x150] sm:$0xff]
        %v427 = vld [vmem:[%s383 + $0x158] sm:$0xff]
        %v428 = vld [vmem:[%s383 + $0x160] sm:$0xff]
        %v429 = vld [vmem:[%s383 + $0x168] sm:$0xff]
        %v430 = vld [vmem:[%s383 + $0x170] sm:$0xff]
        %v431 = vld [vmem:[%s383 + $0x178] sm:$0xff]
        %v432 = vld [vmem:[%s383 + $0x180] sm:$0xff]
        %v433 = vld [vmem:[%s383 + $0x188] sm:$0xff]
        %v434 = vld [vmem:[%s383 + $0x190] sm:$0xff]
        %v435 = vld [vmem:[%s383 + $0x198] sm:$0xff]
        %v436 = vld [vmem:[%s383 + $0x1a0] sm:$0xff]
        %v437 = vld [vmem:[%s383 + $0x1a8] sm:$0xff]
        %v438 = vld [vmem:[%s383 + $0x1b0] sm:$0xff]
        %v439 = vld [vmem:[%s383 + $0x1b8] sm:$0xff]
        %v440 = vld [vmem:[%s383 + $0x1c0] sm:$0xff]
        %v441 = vld [vmem:[%s383 + $0x1c8] sm:$0xff]
        %v442 = vld [vmem:[%s383 + $0x1d0] sm:$0xff]
        %v443 = vld [vmem:[%s383 + $0x1d8] sm:$0xff]
        %v444 = vld [vmem:[%s383 + $0x1e0] sm:$0xff]
        %v445 = vld [vmem:[%s383 + $0x1e8] sm:$0xff]
        %v446 = vld [vmem:[%s383 + $0x1f0] sm:$0xff]
        %v447 = vld [vmem:[%s383 + $0x1f8] sm:$0xff]
        %v448 = vld [vmem:[%s383 + $0x200] sm:$0xff]
        %v449 = vld [vmem:[%s383 + $0x208] sm:$0xff]
        %v450 = vld [vmem:[%s383 + $0x210] sm:$0xff]
        %v451 = vld [vmem:[%s383 + $0x218] sm:$0xff]
        %v452 = vld [vmem:[%s383 + $0x220] sm:$0xff]
        %v453 = vld [vmem:[%s383 + $0x228] sm:$0xff]
        %v454 = vld [vmem:[%s383 + $0x230] sm:$0xff]
        %v455 = vld [vmem:[%s383 + $0x238] sm:$0xff]
        %v456 = vld [vmem:[%s383 + $0x240] sm:$0xff]
        %v457 = vld [vmem:[%s383 + $0x248] sm:$0xff]
        %v458 = vld [vmem:[%s383 + $0x250] sm:$0xff]
        %v459 = vld [vmem:[%s383 + $0x258] sm:$0xff]
        %v460 = vld [vmem:[%s383 + $0x260] sm:$0xff]
        %v461 = vld [vmem:[%s383 + $0x268] sm:$0xff]
        %v462 = vld [vmem:[%s383 + $0x270] sm:$0xff]
        %v463 = vld [vmem:[%s383 + $0x278] sm:$0xff]
        %v464 = vld [vmem:[%s1] sm:$0xff]
        %v465 = vld [vmem:[%s1 + $0x8] sm:$0xff]
        %v466 = vld [vmem:[%s1 + $0x10] sm:$0xff]
        %v467 = vld [vmem:[%s1 + $0x18] sm:$0x7]
        %v468 = vld [vmem:[%s2] sm:$0x1]
        %v470 = vlaneseq
        %v471 = vshrl.u32 %v470, 7
        %v472 = vsub.s32 0, %v471
        %v473 = vrot.slane %v468, %v472
        %vm475 = vcmask 220160
        %v477 = vsel %vm475, %v384, 0
        %v480 = vsel %vm475, %v385, 0
        %v483 = vsel %vm475, %v386, 0
        %v486 = vsel %vm475, %v387, 0
        %v489 = vsel %vm475, %v388, 0
        %v492 = vsel %vm475, %v389, 0
        %v495 = vsel %vm475, %v390, 0
        %v498 = vsel %vm475, %v391, 0
        %v501 = vsel %vm475, %v392, 0
        %v504 = vsel %vm475, %v393, 0
        %v507 = vsel %vm475, %v394, 0
        %v510 = vsel %vm475, %v395, 0
        %v513 = vsel %vm475, %v396, 0
        %v516 = vsel %vm475, %v397, 0
        %v519 = vsel %vm475, %v398, 0
        %v522 = vsel %vm475, %v399, 0
        %v525 = vsel %vm475, %v400, 0
        %v528 = vsel %vm475, %v401, 0
        %v531 = vsel %vm475, %v402, 0
        %v534 = vsel %vm475, %v403, 0
        %v537 = vsel %vm475, %v404, 0
        %v540 = vsel %vm475, %v405, 0
        %v543 = vsel %vm475, %v406, 0
        %v546 = vsel %vm475, %v407, 0
        %v549 = vsel %vm475, %v408, 0
        %v552 = vsel %vm475, %v409, 0
        %v555 = vsel %vm475, %v410, 0
        %v558 = vsel %vm475, %v411, 0
        %v561 = vsel %vm475, %v412, 0
        %v564 = vsel %vm475, %v413, 0
        %v567 = vsel %vm475, %v414, 0
        %v570 = vsel %vm475, %v415, 0
        %v573 = vsel %vm475, %v416, 0
        %v576 = vsel %vm475, %v417, 0
        %v579 = vsel %vm475, %v418, 0
        %v582 = vsel %vm475, %v419, 0
        %v585 = vsel %vm475, %v420, 0
        %v588 = vsel %vm475, %v421, 0
        %v591 = vsel %vm475, %v422, 0
        %v594 = vsel %vm475, %v423, 0
        %v597 = vsel %vm475, %v424, 0
        %v600 = vsel %vm475, %v425, 0
        %v603 = vsel %vm475, %v426, 0
        %v606 = vsel %vm475, %v427, 0
        %v609 = vsel %vm475, %v428, 0
        %v612 = vsel %vm475, %v429, 0
        %v615 = vsel %vm475, %v430, 0
        %v618 = vsel %vm475, %v431, 0
        %v621 = vsel %vm475, %v432, 0
        %v624 = vsel %vm475, %v433, 0
        %v627 = vsel %vm475, %v434, 0
        %v630 = vsel %vm475, %v435, 0
        %v633 = vsel %vm475, %v436, 0
        %v636 = vsel %vm475, %v437, 0
        %v639 = vsel %vm475, %v438, 0
        %v642 = vsel %vm475, %v439, 0
        %v645 = vsel %vm475, %v440, 0
        %v648 = vsel %vm475, %v441, 0
        %v651 = vsel %vm475, %v442, 0
        %v654 = vsel %vm475, %v443, 0
        %v657 = vsel %vm475, %v444, 0
        %v660 = vsel %vm475, %v445, 0
        %v663 = vsel %vm475, %v446, 0
        %v666 = vsel %vm475, %v447, 0
        %v669 = vsel %vm475, %v448, 0
        %v672 = vsel %vm475, %v449, 0
        %v675 = vsel %vm475, %v450, 0
        %v678 = vsel %vm475, %v451, 0
        %v681 = vsel %vm475, %v452, 0
        %v684 = vsel %vm475, %v453, 0
        %v687 = vsel %vm475, %v454, 0
        %v690 = vsel %vm475, %v455, 0
        %v693 = vsel %vm475, %v456, 0
        %v696 = vsel %vm475, %v457, 0
        %v699 = vsel %vm475, %v458, 0
        %v702 = vsel %vm475, %v459, 0
        %v705 = vsel %vm475, %v460, 0
        %v708 = vsel %vm475, %v461, 0
        %v711 = vsel %vm475, %v462, 0
        %v714 = vsel %vm475, %v463, 0
        %vm716 = vcmask 1042432
        %v718 = vsel %vm716, %v467, 0
        %720 = vmatprep.subr.mxu0 0.0
        %721 = vmatpush1.msra.mxu0 %v464
        %722 = vmatprep.subr.mxu0 0.0
        %723 = vmatpush1.msra.mxu0 %v465
        %724 = vmatprep.subr.mxu0 0.0
        %725 = vmatpush1.msra.mxu0 %v466
        %726 = vmatprep.subr.mxu0 0.0
        %727 = vmatpush1.msra.mxu0 %v718
        %728 = vmatprep.subr.mxu0 0.0
        %729 = vmatpush1.msra.mxu0 0.0
        %730 = vmatprep.subr.mxu0 0.0
        %731 = vmatpush1.msra.mxu0 0.0
        %732 = vmatprep.subr.mxu0 0.0
        %733 = vmatpush1.msra.mxu0 0.0
        %734 = vmatprep.subr.mxu0 0.0
        %735 = vmatpush1.msra.mxu0 0.0
        %736 = vmatprep.subr.mxu0 0.0
        %737 = vmatpush1.msra.mxu0 0.0
        %738 = vmatprep.subr.mxu0 0.0
        %739 = vmatpush1.msra.mxu0 0.0
        %740 = vmatprep.subr.mxu0 0.0
        %741 = vmatpush1.msra.mxu0 0.0
        %742 = vmatprep.subr.mxu0 0.0
        %743 = vmatpush1.msra.mxu0 0.0
        %744 = vmatprep.subr.mxu0 0.0
        %745 = vmatpush1.msra.mxu0 0.0
        %746 = vmatprep.subr.mxu0 0.0
        %747 = vmatpush1.msra.mxu0 0.0
        %748 = vmatprep.subr.mxu0 0.0
        %749 = vmatpush1.msra.mxu0 0.0
        %750 = vmatprep.subr.mxu0 0.0
        %751 = vmatpush1.msra.mxu0 0.0
        %752 = vmatprep.subr.mxu0 0.0
        %753 = vmatpush1.msra.mxu0 0.0
        %754 = vmatprep.subr.mxu0 0.0
        %755 = vmatpush1.msra.mxu0 0.0
        %756 = vmatprep.subr.mxu0 0.0
        %757 = vmatpush1.msra.mxu0 0.0
        %758 = vmatprep.subr.mxu0 0.0
        %759 = vmatpush1.msra.mxu0 0.0
        %760 = vmatprep.subr.mxu0 0.0
        %761 = vmatpush1.msra.mxu0 0.0
        %762 = vmatprep.subr.mxu0 0.0
        %763 = vmatpush1.msra.mxu0 0.0
        %764 = vmatprep.subr.mxu0 0.0
        %765 = vmatpush1.msra.mxu0 0.0
        %766 = vmatprep.subr.mxu0 0.0
        %767 = vmatpush1.msra.mxu0 0.0
        %768 = vmatprep.subr.mxu0 0.0
        %769 = vmatpush1.msra.mxu0 0.0
        %770 = vmatprep.subr.mxu0 0.0
        %771 = vmatpush1.msra.mxu0 0.0
        %772 = vmatprep.subr.mxu0 0.0
        %773 = vmatpush1.msra.mxu0 0.0
        %774 = vmatprep.subr.mxu0 0.0
        %775 = vmatpush1.msra.mxu0 0.0
        %776 = vmatprep.subr.mxu0 0.0
        %777 = vmatpush1.msra.mxu0 0.0
        %778 = vmatprep.subr.mxu0 0.0
        %779 = vmatpush1.msra.mxu0 0.0
        %780 = vmatprep.subr.mxu0 0.0
        %781 = vmatpush1.msra.mxu0 0.0
        %782 = vmatprep.subr.mxu0 0.0
        %783 = vmatpush1.msra.mxu0 0.0
        %784 = vmatprep.mubr.f32.mxu0 0.0
        %785 = vmatmul.mubr.f32.gmra.mrb[0].mxu0 %v477
        %v786 = vpop.f32.mrb[0].mxu0
        %v787 = vadd.f32 %v473, %v786
        %v788 = vpop.f32.mrb[0].mxu0
        %789 = vmatprep.mubr.f32.mxu0 0.0
        %790 = vmatmul.mubr.f32.gmra.mrb[0].mxu0 %v480
        %v791 = vpop.f32.mrb[0].mxu0
        %v792 = vadd.f32 %v473, %v791
        %v793 = vpop.f32.mrb[0].mxu0
        %794 = vmatprep.mubr.f32.mxu0 0.0
        %795 = vmatmul.mubr.f32.gmra.mrb[0].mxu0 %v483
        %v796 = vpop.f32.mrb[0].mxu0
        %v797 = vadd.f32 %v473, %v796
        %v798 = vpop.f32.mrb[0].mxu0
        %799 = vmatprep.mubr.f32.mxu0 0.0
        %800 = vmatmul.mubr.f32.gmra.mrb[0].mxu0 %v486
        %v801 = vpop.f32.mrb[0].mxu0
        %v802 = vadd.f32 %v473, %v801
        %v803 = vpop.f32.mrb[0].mxu0
        %804 = vmatprep.mubr.f32.mxu0 0.0
        %805 = vmatmul.mubr.f32.gmra.mrb[0].mxu0 %v489
        %v806 = vpop.f32.mrb[0].mxu0
        %v807 = vadd.f32 %v473, %v806
        %v808 = vpop.f32.mrb[0].mxu0
        %809 = vmatprep.mubr.f32.mxu0 0.0
        %810 = vmatmul.mubr.f32.gmra.mrb[0].mxu0 %v492
        %v811 = vpop.f32.mrb[0].mxu0
        %v812 = vadd.f32 %v473, %v811
        %v813 = vpop.f32.mrb[0].mxu0
        %814 = vmatprep.mubr.f32.mxu0 0.0
        %815 = vmatmul.mubr.f32.gmra.mrb[0].mxu0 %v495
        %v816 = vpop.f32.mrb[0].mxu0
        %v817 = vadd.f32 %v473, %v816
        %v818 = vpop.f32.mrb[0].mxu0
        %819 = vmatprep.mubr.f32.mxu0 0.0
        %820 = vmatmul.mubr.f32.gmra.mrb[0].mxu0 %v498
        %v821 = vpop.f32.mrb[0].mxu0
        %v822 = vadd.f32 %v473, %v821
        %v823 = vpop.f32.mrb[0].mxu0
        %824 = vmatprep.mubr.f32.mxu0 0.0
        %825 = vmatmul.mubr.f32.gmra.mrb[0].mxu0 %v501
        %v826 = vpop.f32.mrb[0].mxu0
        %v827 = vadd.f32 %v473, %v826
        %v828 = vpop.f32.mrb[0].mxu0
        %829 = vmatprep.mubr.f32.mxu0 0.0
        %830 = vmatmul.mubr.f32.gmra.mrb[0].mxu0 %v504
        %v831 = vpop.f32.mrb[0].mxu0
        %v832 = vadd.f32 %v473, %v831
        %v833 = vpop.f32.mrb[0].mxu0
        %834 = vmatprep.mubr.f32.mxu0 0.0
        %835 = vmatmul.mubr.f32.gmra.mrb[0].mxu0 %v507
        %v836 = vpop.f32.mrb[0].mxu0
        %v837 = vadd.f32 %v473, %v836
        %v838 = vpop.f32.mrb[0].mxu0
        %839 = vmatprep.mubr.f32.mxu0 0.0
        %840 = vmatmul.mubr.f32.gmra.mrb[0].mxu0 %v510
        %v841 = vpop.f32.mrb[0].mxu0
        %v842 = vadd.f32 %v473, %v841
        %v843 = vpop.f32.mrb[0].mxu0
        %844 = vmatprep.mubr.f32.mxu0 0.0
        %845 = vmatmul.mubr.f32.gmra.mrb[0].mxu0 %v513
        %v846 = vpop.f32.mrb[0].mxu0
        %v847 = vadd.f32 %v473, %v846
        %v848 = vpop.f32.mrb[0].mxu0
        %849 = vmatprep.mubr.f32.mxu0 0.0
        %850 = vmatmul.mubr.f32.gmra.mrb[0].mxu0 %v516
        %v851 = vpop.f32.mrb[0].mxu0
        %v852 = vadd.f32 %v473, %v851
        %v853 = vpop.f32.mrb[0].mxu0
        %854 = vmatprep.mubr.f32.mxu0 0.0
        %855 = vmatmul.mubr.f32.gmra.mrb[0].mxu0 %v519
        %v856 = vpop.f32.mrb[0].mxu0
        %v857 = vadd.f32 %v473, %v856
        %v858 = vpop.f32.mrb[0].mxu0
        %859 = vmatprep.mubr.f32.mxu0 0.0
        %860 = vmatmul.mubr.f32.gmra.mrb[0].mxu0 %v522
        %v861 = vpop.f32.mrb[0].mxu0
        %v862 = vadd.f32 %v473, %v861
        %v863 = vpop.f32.mrb[0].mxu0
        %864 = vmatprep.mubr.f32.mxu0 0.0
        %865 = vmatmul.mubr.f32.gmra.mrb[0].mxu0 %v525
        %v866 = vpop.f32.mrb[0].mxu0
        %v867 = vadd.f32 %v473, %v866
        %v868 = vpop.f32.mrb[0].mxu0
        %869 = vmatprep.mubr.f32.mxu0 0.0
        %870 = vmatmul.mubr.f32.gmra.mrb[0].mxu0 %v528
        %v871 = vpop.f32.mrb[0].mxu0
        %v872 = vadd.f32 %v473, %v871
        %v873 = vpop.f32.mrb[0].mxu0
        %874 = vmatprep.mubr.f32.mxu0 0.0
        %875 = vmatmul.mubr.f32.gmra.mrb[0].mxu0 %v531
        %v876 = vpop.f32.mrb[0].mxu0
        %v877 = vadd.f32 %v473, %v876
        %v878 = vpop.f32.mrb[0].mxu0
        %879 = vmatprep.mubr.f32.mxu0 0.0
        %880 = vmatmul.mubr.f32.gmra.mrb[0].mxu0 %v534
        %v881 = vpop.f32.mrb[0].mxu0
        %v882 = vadd.f32 %v473, %v881
        %v883 = vpop.f32.mrb[0].mxu0
        %884 = vmatprep.mubr.f32.mxu0 0.0
        %885 = vmatmul.mubr.f32.gmra.mrb[0].mxu0 %v537
        %v886 = vpop.f32.mrb[0].mxu0
        %v887 = vadd.f32 %v473, %v886
        %v888 = vpop.f32.mrb[0].mxu0
        %889 = vmatprep.mubr.f32.mxu0 0.0
        %890 = vmatmul.mubr.f32.gmra.mrb[0].mxu0 %v540
        %v891 = vpop.f32.mrb[0].mxu0
        %v892 = vadd.f32 %v473, %v891
        %v893 = vpop.f32.mrb[0].mxu0
        %894 = vmatprep.mubr.f32.mxu0 0.0
        %895 = vmatmul.mubr.f32.gmra.mrb[0].mxu0 %v543
        %v896 = vpop.f32.mrb[0].mxu0
        %v897 = vadd.f32 %v473, %v896
        %v898 = vpop.f32.mrb[0].mxu0
        %899 = vmatprep.mubr.f32.mxu0 0.0
        %900 = vmatmul.mubr.f32.gmra.mrb[0].mxu0 %v546
        %v901 = vpop.f32.mrb[0].mxu0
        %v902 = vadd.f32 %v473, %v901
        %v903 = vpop.f32.mrb[0].mxu0
        %904 = vmatprep.mubr.f32.mxu0 0.0
        %905 = vmatmul.mubr.f32.gmra.mrb[0].mxu0 %v549
        %v906 = vpop.f32.mrb[0].mxu0
        %v907 = vadd.f32 %v473, %v906
        %v908 = vpop.f32.mrb[0].mxu0
        %909 = vmatprep.mubr.f32.mxu0 0.0
        %910 = vmatmul.mubr.f32.gmra.mrb[0].mxu0 %v552
        %v911 = vpop.f32.mrb[0].mxu0
        %v912 = vadd.f32 %v473, %v911
        %v913 = vpop.f32.mrb[0].mxu0
        %914 = vmatprep.mubr.f32.mxu0 0.0
        %915 = vmatmul.mubr.f32.gmra.mrb[0].mxu0 %v555
        %v916 = vpop.f32.mrb[0].mxu0
        %v917 = vadd.f32 %v473, %v916
        %v918 = vpop.f32.mrb[0].mxu0
        %919 = vmatprep.mubr.f32.mxu0 0.0
        %920 = vmatmul.mubr.f32.gmra.mrb[0].mxu0 %v558
        %v921 = vpop.f32.mrb[0].mxu0
        %v922 = vadd.f32 %v473, %v921
        %v923 = vpop.f32.mrb[0].mxu0
        %924 = vmatprep.mubr.f32.mxu0 0.0
        %925 = vmatmul.mubr.f32.gmra.mrb[0].mxu0 %v561
        %v926 = vpop.f32.mrb[0].mxu0
        %v927 = vadd.f32 %v473, %v926
        %v928 = vpop.f32.mrb[0].mxu0
        %929 = vmatprep.mubr.f32.mxu0 0.0
        %930 = vmatmul.mubr.f32.gmra.mrb[0].mxu0 %v564
        %v931 = vpop.f32.mrb[0].mxu0
        %v932 = vadd.f32 %v473, %v931
        %v933 = vpop.f32.mrb[0].mxu0
        %934 = vmatprep.mubr.f32.mxu0 0.0
        %935 = vmatmul.mubr.f32.gmra.mrb[0].mxu0 %v567
        %v936 = vpop.f32.mrb[0].mxu0
        %v937 = vadd.f32 %v473, %v936
        %v938 = vpop.f32.mrb[0].mxu0
        %939 = vmatprep.mubr.f32.mxu0 0.0
        %940 = vmatmul.mubr.f32.gmra.mrb[0].mxu0 %v570
        %v941 = vpop.f32.mrb[0].mxu0
        %v942 = vadd.f32 %v473, %v941
        %v943 = vpop.f32.mrb[0].mxu0
        %944 = vmatprep.mubr.f32.mxu0 0.0
        %945 = vmatmul.mubr.f32.gmra.mrb[0].mxu0 %v573
        %v946 = vpop.f32.mrb[0].mxu0
        %v947 = vadd.f32 %v473, %v946
        %v948 = vpop.f32.mrb[0].mxu0
        %949 = vmatprep.mubr.f32.mxu0 0.0
        %950 = vmatmul.mubr.f32.gmra.mrb[0].mxu0 %v576
        %v951 = vpop.f32.mrb[0].mxu0
        %v952 = vadd.f32 %v473, %v951
        %v953 = vpop.f32.mrb[0].mxu0
        %954 = vmatprep.mubr.f32.mxu0 0.0
        %955 = vmatmul.mubr.f32.gmra.mrb[0].mxu0 %v579
        %v956 = vpop.f32.mrb[0].mxu0
        %v957 = vadd.f32 %v473, %v956
        %v958 = vpop.f32.mrb[0].mxu0
        %959 = vmatprep.mubr.f32.mxu0 0.0
        %960 = vmatmul.mubr.f32.gmra.mrb[0].mxu0 %v582
        %v961 = vpop.f32.mrb[0].mxu0
        %v962 = vadd.f32 %v473, %v961
        %v963 = vpop.f32.mrb[0].mxu0
        %964 = vmatprep.mubr.f32.mxu0 0.0
        %965 = vmatmul.mubr.f32.gmra.mrb[0].mxu0 %v585
        %v966 = vpop.f32.mrb[0].mxu0
        %v967 = vadd.f32 %v473, %v966
        %v968 = vpop.f32.mrb[0].mxu0
        %969 = vmatprep.mubr.f32.mxu0 0.0
        %970 = vmatmul.mubr.f32.gmra.mrb[0].mxu0 %v588
        %v971 = vpop.f32.mrb[0].mxu0
        %v972 = vadd.f32 %v473, %v971
        %v973 = vpop.f32.mrb[0].mxu0
        %974 = vmatprep.mubr.f32.mxu0 0.0
        %975 = vmatmul.mubr.f32.gmra.mrb[0].mxu0 %v591
        %v976 = vpop.f32.mrb[0].mxu0
        %v977 = vadd.f32 %v473, %v976
        %v978 = vpop.f32.mrb[0].mxu0
        %979 = vmatprep.mubr.f32.mxu0 0.0
        %980 = vmatmul.mubr.f32.gmra.mrb[0].mxu0 %v594
        %v981 = vpop.f32.mrb[0].mxu0
        %v982 = vadd.f32 %v473, %v981
        %v983 = vpop.f32.mrb[0].mxu0
        %984 = vmatprep.mubr.f32.mxu0 0.0
        %985 = vmatmul.mubr.f32.gmra.mrb[0].mxu0 %v597
        %v986 = vpop.f32.mrb[0].mxu0
        %v987 = vadd.f32 %v473, %v986
        %v988 = vpop.f32.mrb[0].mxu0
        %989 = vmatprep.mubr.f32.mxu0 0.0
        %990 = vmatmul.mubr.f32.gmra.mrb[0].mxu0 %v600
        %v991 = vpop.f32.mrb[0].mxu0
        %v992 = vadd.f32 %v473, %v991
        %v993 = vpop.f32.mrb[0].mxu0
        %994 = vmatprep.mubr.f32.mxu0 0.0
        %995 = vmatmul.mubr.f32.gmra.mrb[0].mxu0 %v603
        %v996 = vpop.f32.mrb[0].mxu0
        %v997 = vadd.f32 %v473, %v996
        %v998 = vpop.f32.mrb[0].mxu0
        %999 = vmatprep.mubr.f32.mxu0 0.0
        %1000 = vmatmul.mubr.f32.gmra.mrb[0].mxu0 %v606
        %v1001 = vpop.f32.mrb[0].mxu0
        %v1002 = vadd.f32 %v473, %v1001
        %v1003 = vpop.f32.mrb[0].mxu0
        %1004 = vmatprep.mubr.f32.mxu0 0.0
        %1005 = vmatmul.mubr.f32.gmra.mrb[0].mxu0 %v609
        %v1006 = vpop.f32.mrb[0].mxu0
        %v1007 = vadd.f32 %v473, %v1006
        %v1008 = vpop.f32.mrb[0].mxu0
        %1009 = vmatprep.mubr.f32.mxu0 0.0
        %1010 = vmatmul.mubr.f32.gmra.mrb[0].mxu0 %v612
        %v1011 = vpop.f32.mrb[0].mxu0
        %v1012 = vadd.f32 %v473, %v1011
        %v1013 = vpop.f32.mrb[0].mxu0
        %1014 = vmatprep.mubr.f32.mxu0 0.0
        %1015 = vmatmul.mubr.f32.gmra.mrb[0].mxu0 %v615
        %v1016 = vpop.f32.mrb[0].mxu0
        %v1017 = vadd.f32 %v473, %v1016
        %v1018 = vpop.f32.mrb[0].mxu0
        %1019 = vmatprep.mubr.f32.mxu0 0.0
        %1020 = vmatmul.mubr.f32.gmra.mrb[0].mxu0 %v618
        %v1021 = vpop.f32.mrb[0].mxu0
        %v1022 = vadd.f32 %v473, %v1021
        %v1023 = vpop.f32.mrb[0].mxu0
        %1024 = vmatprep.mubr.f32.mxu0 0.0
        %1025 = vmatmul.mubr.f32.gmra.mrb[0].mxu0 %v621
        %v1026 = vpop.f32.mrb[0].mxu0
        %v1027 = vadd.f32 %v473, %v1026
        %v1028 = vpop.f32.mrb[0].mxu0
        %1029 = vmatprep.mubr.f32.mxu0 0.0
        %1030 = vmatmul.mubr.f32.gmra.mrb[0].mxu0 %v624
        %v1031 = vpop.f32.mrb[0].mxu0
        %v1032 = vadd.f32 %v473, %v1031
        %v1033 = vpop.f32.mrb[0].mxu0
        %1034 = vmatprep.mubr.f32.mxu0 0.0
        %1035 = vmatmul.mubr.f32.gmra.mrb[0].mxu0 %v627
        %v1036 = vpop.f32.mrb[0].mxu0
        %v1037 = vadd.f32 %v473, %v1036
        %v1038 = vpop.f32.mrb[0].mxu0
        %1039 = vmatprep.mubr.f32.mxu0 0.0
        %1040 = vmatmul.mubr.f32.gmra.mrb[0].mxu0 %v630
        %v1041 = vpop.f32.mrb[0].mxu0
        %v1042 = vadd.f32 %v473, %v1041
        %v1043 = vpop.f32.mrb[0].mxu0
        %1044 = vmatprep.mubr.f32.mxu0 0.0
        %1045 = vmatmul.mubr.f32.gmra.mrb[0].mxu0 %v633
        %v1046 = vpop.f32.mrb[0].mxu0
        %v1047 = vadd.f32 %v473, %v1046
        %v1048 = vpop.f32.mrb[0].mxu0
        %1049 = vmatprep.mubr.f32.mxu0 0.0
        %1050 = vmatmul.mubr.f32.gmra.mrb[0].mxu0 %v636
        %v1051 = vpop.f32.mrb[0].mxu0
        %v1052 = vadd.f32 %v473, %v1051
        %v1053 = vpop.f32.mrb[0].mxu0
        %1054 = vmatprep.mubr.f32.mxu0 0.0
        %1055 = vmatmul.mubr.f32.gmra.mrb[0].mxu0 %v639
        %v1056 = vpop.f32.mrb[0].mxu0
        %v1057 = vadd.f32 %v473, %v1056
        %v1058 = vpop.f32.mrb[0].mxu0
        %1059 = vmatprep.mubr.f32.mxu0 0.0
        %1060 = vmatmul.mubr.f32.gmra.mrb[0].mxu0 %v642
        %v1061 = vpop.f32.mrb[0].mxu0
        %v1062 = vadd.f32 %v473, %v1061
        %v1063 = vpop.f32.mrb[0].mxu0
        %1064 = vmatprep.mubr.f32.mxu0 0.0
        %1065 = vmatmul.mubr.f32.gmra.mrb[0].mxu0 %v645
        %v1066 = vpop.f32.mrb[0].mxu0
        %v1067 = vadd.f32 %v473, %v1066
        %v1068 = vpop.f32.mrb[0].mxu0
        %1069 = vmatprep.mubr.f32.mxu0 0.0
        %1070 = vmatmul.mubr.f32.gmra.mrb[0].mxu0 %v648
        %v1071 = vpop.f32.mrb[0].mxu0
        %v1072 = vadd.f32 %v473, %v1071
        %v1073 = vpop.f32.mrb[0].mxu0
        %1074 = vmatprep.mubr.f32.mxu0 0.0
        %1075 = vmatmul.mubr.f32.gmra.mrb[0].mxu0 %v651
        %v1076 = vpop.f32.mrb[0].mxu0
        %v1077 = vadd.f32 %v473, %v1076
        %v1078 = vpop.f32.mrb[0].mxu0
        %1079 = vmatprep.mubr.f32.mxu0 0.0
        %1080 = vmatmul.mubr.f32.gmra.mrb[0].mxu0 %v654
        %v1081 = vpop.f32.mrb[0].mxu0
        %v1082 = vadd.f32 %v473, %v1081
        %v1083 = vpop.f32.mrb[0].mxu0
        %1084 = vmatprep.mubr.f32.mxu0 0.0
        %1085 = vmatmul.mubr.f32.gmra.mrb[0].mxu0 %v657
        %v1086 = vpop.f32.mrb[0].mxu0
        %v1087 = vadd.f32 %v473, %v1086
        %v1088 = vpop.f32.mrb[0].mxu0
        %1089 = vmatprep.mubr.f32.mxu0 0.0
        %1090 = vmatmul.mubr.f32.gmra.mrb[0].mxu0 %v660
        %v1091 = vpop.f32.mrb[0].mxu0
        %v1092 = vadd.f32 %v473, %v1091
        %v1093 = vpop.f32.mrb[0].mxu0
        %1094 = vmatprep.mubr.f32.mxu0 0.0
        %1095 = vmatmul.mubr.f32.gmra.mrb[0].mxu0 %v663
        %v1096 = vpop.f32.mrb[0].mxu0
        %v1097 = vadd.f32 %v473, %v1096
        %v1098 = vpop.f32.mrb[0].mxu0
        %1099 = vmatprep.mubr.f32.mxu0 0.0
        %1100 = vmatmul.mubr.f32.gmra.mrb[0].mxu0 %v666
        %v1101 = vpop.f32.mrb[0].mxu0
        %v1102 = vadd.f32 %v473, %v1101
        %v1103 = vpop.f32.mrb[0].mxu0
        %1104 = vmatprep.mubr.f32.mxu0 0.0
        %1105 = vmatmul.mubr.f32.gmra.mrb[0].mxu0 %v669
        %v1106 = vpop.f32.mrb[0].mxu0
        %v1107 = vadd.f32 %v473, %v1106
        %v1108 = vpop.f32.mrb[0].mxu0
        %1109 = vmatprep.mubr.f32.mxu0 0.0
        %1110 = vmatmul.mubr.f32.gmra.mrb[0].mxu0 %v672
        %v1111 = vpop.f32.mrb[0].mxu0
        %v1112 = vadd.f32 %v473, %v1111
        %v1113 = vpop.f32.mrb[0].mxu0
        %1114 = vmatprep.mubr.f32.mxu0 0.0
        %1115 = vmatmul.mubr.f32.gmra.mrb[0].mxu0 %v675
        %v1116 = vpop.f32.mrb[0].mxu0
        %v1117 = vadd.f32 %v473, %v1116
        %v1118 = vpop.f32.mrb[0].mxu0
        %1119 = vmatprep.mubr.f32.mxu0 0.0
        %1120 = vmatmul.mubr.f32.gmra.mrb[0].mxu0 %v678
        %v1121 = vpop.f32.mrb[0].mxu0
        %v1122 = vadd.f32 %v473, %v1121
        %v1123 = vpop.f32.mrb[0].mxu0
        %1124 = vmatprep.mubr.f32.mxu0 0.0
        %1125 = vmatmul.mubr.f32.gmra.mrb[0].mxu0 %v681
        %v1126 = vpop.f32.mrb[0].mxu0
        %v1127 = vadd.f32 %v473, %v1126
        %v1128 = vpop.f32.mrb[0].mxu0
        %1129 = vmatprep.mubr.f32.mxu0 0.0
        %1130 = vmatmul.mubr.f32.gmra.mrb[0].mxu0 %v684
        %v1131 = vpop.f32.mrb[0].mxu0
        %v1132 = vadd.f32 %v473, %v1131
        %v1133 = vpop.f32.mrb[0].mxu0
        %1134 = vmatprep.mubr.f32.mxu0 0.0
        %1135 = vmatmul.mubr.f32.gmra.mrb[0].mxu0 %v687
        %v1136 = vpop.f32.mrb[0].mxu0
        %v1137 = vadd.f32 %v473, %v1136
        %v1138 = vpop.f32.mrb[0].mxu0
        %1139 = vmatprep.mubr.f32.mxu0 0.0
        %1140 = vmatmul.mubr.f32.gmra.mrb[0].mxu0 %v690
        %v1141 = vpop.f32.mrb[0].mxu0
        %v1142 = vadd.f32 %v473, %v1141
        %v1143 = vpop.f32.mrb[0].mxu0
        %1144 = vmatprep.mubr.f32.mxu0 0.0
        %1145 = vmatmul.mubr.f32.gmra.mrb[0].mxu0 %v693
        %v1146 = vpop.f32.mrb[0].mxu0
        %v1147 = vadd.f32 %v473, %v1146
        %v1148 = vpop.f32.mrb[0].mxu0
        %1149 = vmatprep.mubr.f32.mxu0 0.0
        %1150 = vmatmul.mubr.f32.gmra.mrb[0].mxu0 %v696
        %v1151 = vpop.f32.mrb[0].mxu0
        %v1152 = vadd.f32 %v473, %v1151
        %v1153 = vpop.f32.mrb[0].mxu0
        %1154 = vmatprep.mubr.f32.mxu0 0.0
        %1155 = vmatmul.mubr.f32.gmra.mrb[0].mxu0 %v699
        %v1156 = vpop.f32.mrb[0].mxu0
        %v1157 = vadd.f32 %v473, %v1156
        %v1158 = vpop.f32.mrb[0].mxu0
        %1159 = vmatprep.mubr.f32.mxu0 0.0
        %1160 = vmatmul.mubr.f32.gmra.mrb[0].mxu0 %v702
        %v1161 = vpop.f32.mrb[0].mxu0
        %v1162 = vadd.f32 %v473, %v1161
        %v1163 = vpop.f32.mrb[0].mxu0
        %1164 = vmatprep.mubr.f32.mxu0 0.0
        %1165 = vmatmul.mubr.f32.gmra.mrb[0].mxu0 %v705
        %v1166 = vpop.f32.mrb[0].mxu0
        %v1167 = vadd.f32 %v473, %v1166
        %v1168 = vpop.f32.mrb[0].mxu0
        %1169 = vmatprep.mubr.f32.mxu0 0.0
        %1170 = vmatmul.mubr.f32.gmra.mrb[0].mxu0 %v708
        %v1171 = vpop.f32.mrb[0].mxu0
        %v1172 = vadd.f32 %v473, %v1171
        %v1173 = vpop.f32.mrb[0].mxu0
        %1174 = vmatprep.mubr.f32.mxu0 0.0
        %1175 = vmatmul.mubr.f32.gmra.mrb[0].mxu0 %v711
        %v1176 = vpop.f32.mrb[0].mxu0
        %v1177 = vadd.f32 %v473, %v1176
        %v1178 = vpop.f32.mrb[0].mxu0
        %1179 = vmatprep.mubr.f32.mxu0 0.0
        %1180 = vmatmul.mubr.f32.gmra.mrb[0].mxu0 %v714
        %v1181 = vpop.f32.mrb[0].mxu0
        %v1182 = vadd.f32 %v473, %v1181
        %v1183 = vpop.f32.mrb[0].mxu0
        %1184 = vdwg.mxu0
        %v1185 = vmax.f32 %v787, %v887
        %v1186 = vmax.f32 %v792, %v892
        %v1187 = vmax.f32 %v797, %v897
        %v1188 = vmax.f32 %v802, %v902
        %v1189 = vmax.f32 %v807, %v907
        %v1190 = vmax.f32 %v812, %v912
        %v1191 = vmax.f32 %v817, %v917
        %v1192 = vmax.f32 %v822, %v922
        %v1193 = vmax.f32 %v827, %v927
        %v1194 = vmax.f32 %v832, %v932
        %v1195 = vmax.f32 %v837, %v937
        %v1196 = vmax.f32 %v842, %v942
        %v1197 = vmax.f32 %v847, %v947
        %v1198 = vmax.f32 %v852, %v952
        %v1199 = vmax.f32 %v857, %v957
        %v1200 = vmax.f32 %v862, %v962
        %v1201 = vmax.f32 %v867, %v967
        %v1202 = vmax.f32 %v872, %v972
        %v1203 = vmax.f32 %v877, %v977
        %v1204 = vmax.f32 %v882, %v982
        %v1205 = vmax.f32 %v987, %v1087
        %v1206 = vmax.f32 %v992, %v1092
        %v1207 = vmax.f32 %v997, %v1097
        %v1208 = vmax.f32 %v1002, %v1102
        %v1209 = vmax.f32 %v1007, %v1107
        %v1210 = vmax.f32 %v1012, %v1112
        %v1211 = vmax.f32 %v1017, %v1117
        %v1212 = vmax.f32 %v1022, %v1122
        %v1213 = vmax.f32 %v1027, %v1127
        %v1214 = vmax.f32 %v1032, %v1132
        %v1215 = vmax.f32 %v1037, %v1137
        %v1216 = vmax.f32 %v1042, %v1142
        %v1217 = vmax.f32 %v1047, %v1147
        %v1218 = vmax.f32 %v1052, %v1152
        %v1219 = vmax.f32 %v1057, %v1157
        %v1220 = vmax.f32 %v1062, %v1162
        %v1221 = vmax.f32 %v1067, %v1167
        %v1222 = vmax.f32 %v1072, %v1172
        %v1223 = vmax.f32 %v1077, %v1177
        %v1224 = vmax.f32 %v1082, %v1182
        %v1225 = vmax.f32 %v1185, %v1205
        %v1226 = vmax.f32 %v1186, %v1206
        %v1227 = vmax.f32 %v1187, %v1207
        %v1228 = vmax.f32 %v1188, %v1208
        %v1229 = vmax.f32 %v1189, %v1209
        %v1230 = vmax.f32 %v1190, %v1210
        %v1231 = vmax.f32 %v1191, %v1211
        %v1232 = vmax.f32 %v1192, %v1212
        %v1233 = vmax.f32 %v1193, %v1213
        %v1234 = vmax.f32 %v1194, %v1214
        %v1235 = vmax.f32 %v1195, %v1215
        %v1236 = vmax.f32 %v1196, %v1216
        %v1237 = vmax.f32 %v1197, %v1217
        %v1238 = vmax.f32 %v1198, %v1218
        %v1239 = vmax.f32 %v1199, %v1219
        %v1240 = vmax.f32 %v1200, %v1220
        %v1241 = vmax.f32 %v1201, %v1221
        %v1242 = vmax.f32 %v1202, %v1222
        %v1243 = vmax.f32 %v1203, %v1223
        %v1244 = vmax.f32 %v1204, %v1224
        %v1245 = vmax.f32 %v1225, 0.0
        %v1246 = vmax.f32 %v1226, 0.0
        %v1247 = vmax.f32 %v1227, 0.0
        %v1248 = vmax.f32 %v1228, 0.0
        %v1249 = vmax.f32 %v1229, 0.0
        %v1250 = vmax.f32 %v1230, 0.0
        %v1251 = vmax.f32 %v1231, 0.0
        %v1252 = vmax.f32 %v1232, 0.0
        %v1253 = vmax.f32 %v1233, 0.0
        %v1254 = vmax.f32 %v1234, 0.0
        %v1255 = vmax.f32 %v1235, 0.0
        %v1256 = vmax.f32 %v1236, 0.0
        %v1257 = vmax.f32 %v1237, 0.0
        %v1258 = vmax.f32 %v1238, 0.0
        %v1259 = vmax.f32 %v1239, 0.0
        %v1260 = vmax.f32 %v1240, 0.0
        %v1261 = vmax.f32 %v1241, 0.0
        %v1262 = vmax.f32 %v1242, 0.0
        %v1263 = vmax.f32 %v1243, 0.0
        %v1264 = vmax.f32 %v1244, 0.0
        %vm1265 = vcmask 261120
        %1266 = vst.msk [vmem:[#allocation2] sm:$0xff] %vm1265, 0.0
        %1267 = vst.msk [vmem:[#allocation2 + $0x8] sm:$0xff] %vm1265, 0.0
        %1268 = vst.msk [vmem:[#allocation2 + $0x10] sm:$0xff] %vm1265, 0.0
        %1269 = vst.msk [vmem:[#allocation2 + $0x18] sm:$0xff] %vm1265, 0.0
        %1270 = vst.msk [vmem:[#allocation2 + $0x20] sm:$0xff] %vm1265, 0.0
        %1271 = vst.msk [vmem:[#allocation2 + $0x28] sm:$0xff] %vm1265, 0.0
        %1272 = vst.msk [vmem:[#allocation2 + $0x30] sm:$0xff] %vm1265, 0.0
        %1273 = vst.msk [vmem:[#allocation2 + $0x38] sm:$0xff] %vm1265, 0.0
        %1274 = vst.msk [vmem:[#allocation2 + $0x40] sm:$0xff] %vm1265, 0.0
        %1275 = vst.msk [vmem:[#allocation2 + $0x48] sm:$0xff] %vm1265, 0.0
        %1276 = vst.msk [vmem:[#allocation2 + $0x50] sm:$0xff] %vm1265, 0.0
        %1277 = vst.msk [vmem:[#allocation2 + $0x58] sm:$0xff] %vm1265, 0.0
        %1278 = vst.msk [vmem:[#allocation2 + $0x60] sm:$0xff] %vm1265, 0.0
        %1279 = vst.msk [vmem:[#allocation2 + $0x68] sm:$0xff] %vm1265, 0.0
        %1280 = vst.msk [vmem:[#allocation2 + $0x70] sm:$0xff] %vm1265, 0.0
        %1281 = vst.msk [vmem:[#allocation2 + $0x78] sm:$0xff] %vm1265, 0.0
        %1282 = vst.msk [vmem:[#allocation2 + $0x80] sm:$0xff] %vm1265, 0.0
        %1283 = vst.msk [vmem:[#allocation2 + $0x88] sm:$0xff] %vm1265, 0.0
        %1284 = vst.msk [vmem:[#allocation2 + $0x90] sm:$0xff] %vm1265, 0.0
        %1285 = vst.msk [vmem:[#allocation2 + $0x98] sm:$0xff] %vm1265, 0.0
        %1286 = vst.msk [vmem:[#allocation2 + $0xa0] sm:$0xff] %vm1265, 0.0
        %1287 = vst.msk [vmem:[#allocation2 + $0xa8] sm:$0xff] %vm1265, 0.0
        %1288 = vst.msk [vmem:[#allocation2 + $0xb0] sm:$0xff] %vm1265, 0.0
        %1289 = vst.msk [vmem:[#allocation2 + $0xb8] sm:$0xff] %vm1265, 0.0
        %1290 = vst.msk [vmem:[#allocation2 + $0xc0] sm:$0xff] %vm1265, 0.0
        %1291 = vst.msk [vmem:[#allocation2 + $0xc8] sm:$0xff] %vm1265, 0.0
        %1292 = vst.msk [vmem:[#allocation2 + $0xd0] sm:$0xff] %vm1265, 0.0
        %1293 = vst.msk [vmem:[#allocation2 + $0xd8] sm:$0xff] %vm1265, 0.0
        %1294 = vst.msk [vmem:[#allocation2 + $0xe0] sm:$0xff] %vm1265, 0.0
        %1295 = vst.msk [vmem:[#allocation2 + $0xe8] sm:$0xff] %vm1265, 0.0
        %1296 = vst.msk [vmem:[#allocation2 + $0xf0] sm:$0xff] %vm1265, 0.0
        %1297 = vst.msk [vmem:[#allocation2 + $0xf8] sm:$0xff] %vm1265, 0.0
        %1298 = vst.msk [vmem:[#allocation2 + $0x100] sm:$0xff] %vm1265, 0.0
        %1299 = vst.msk [vmem:[#allocation2 + $0x108] sm:$0xff] %vm1265, 0.0
        %1300 = vst.msk [vmem:[#allocation2 + $0x110] sm:$0xff] %vm1265, 0.0
        %1301 = vst.msk [vmem:[#allocation2 + $0x118] sm:$0xff] %vm1265, 0.0
        %1302 = vst.msk [vmem:[#allocation2 + $0x120] sm:$0xff] %vm1265, 0.0
        %1303 = vst.msk [vmem:[#allocation2 + $0x128] sm:$0xff] %vm1265, 0.0
        %1304 = vst.msk [vmem:[#allocation2 + $0x130] sm:$0xff] %vm1265, 0.0
        %1305 = vst.msk [vmem:[#allocation2 + $0x138] sm:$0xff] %vm1265, 0.0
        %1306 = vst.msk [vmem:[#allocation2 + $0x140] sm:$0xff] %vm1265, 0.0
        %1307 = vst.msk [vmem:[#allocation2 + $0x148] sm:$0xff] %vm1265, 0.0
        %1308 = vst.msk [vmem:[#allocation2 + $0x150] sm:$0xff] %vm1265, 0.0
        %1309 = vst.msk [vmem:[#allocation2 + $0x158] sm:$0xff] %vm1265, 0.0
        %1310 = vst.msk [vmem:[#allocation2 + $0x160] sm:$0xff] %vm1265, 0.0
        %1311 = vst.msk [vmem:[#allocation2 + $0x168] sm:$0xff] %vm1265, 0.0
        %1312 = vst.msk [vmem:[#allocation2 + $0x170] sm:$0xff] %vm1265, 0.0
        %1313 = vst.msk [vmem:[#allocation2 + $0x178] sm:$0xff] %vm1265, 0.0
        %s1314 = scalar_lea.vmem [#allocation2], 32
        %1315 = vst.msk [vmem:[%s1314 + $0x8] sm:$0xff] %vm1265, %v1245
        %1316 = vst.msk [vmem:[%s1314 + $0x10] sm:$0xff] %vm1265, %v1246
        %1317 = vst.msk [vmem:[%s1314 + $0x28] sm:$0xff] %vm1265, %v1247
        %1318 = vst.msk [vmem:[%s1314 + $0x30] sm:$0xff] %vm1265, %v1248
        %1319 = vst.msk [vmem:[%s1314 + $0x48] sm:$0xff] %vm1265, %v1249
        %1320 = vst.msk [vmem:[%s1314 + $0x50] sm:$0xff] %vm1265, %v1250
        %1321 = vst.msk [vmem:[%s1314 + $0x68] sm:$0xff] %vm1265, %v1251
        %1322 = vst.msk [vmem:[%s1314 + $0x70] sm:$0xff] %vm1265, %v1252
        %1323 = vst.msk [vmem:[%s1314 + $0x88] sm:$0xff] %vm1265, %v1253
        %1324 = vst.msk [vmem:[%s1314 + $0x90] sm:$0xff] %vm1265, %v1254
        %1325 = vst.msk [vmem:[%s1314 + $0xa8] sm:$0xff] %vm1265, %v1255
        %1326 = vst.msk [vmem:[%s1314 + $0xb0] sm:$0xff] %vm1265, %v1256
        %1327 = vst.msk [vmem:[%s1314 + $0xc8] sm:$0xff] %vm1265, %v1257
        %1328 = vst.msk [vmem:[%s1314 + $0xd0] sm:$0xff] %vm1265, %v1258
        %1329 = vst.msk [vmem:[%s1314 + $0xe8] sm:$0xff] %vm1265, %v1259
        %1330 = vst.msk [vmem:[%s1314 + $0xf0] sm:$0xff] %vm1265, %v1260
        %1331 = vst.msk [vmem:[%s1314 + $0x108] sm:$0xff] %vm1265, %v1261
        %1332 = vst.msk [vmem:[%s1314 + $0x110] sm:$0xff] %vm1265, %v1262
        %1333 = vst.msk [vmem:[%s1314 + $0x128] sm:$0xff] %vm1265, %v1263
        %1334 = vst.msk [vmem:[%s1314 + $0x130] sm:$0xff] %vm1265, %v1264
        %v1335 = vld [vmem:[#allocation2 + $0x7] sm:$0xff]
        %v1336 = vld [vmem:[#allocation2 + $0xf] sm:$0xff]
        %v1337 = vld [vmem:[#allocation2 + $0x27] sm:$0xff]
        %v1338 = vld [vmem:[#allocation2 + $0x2f] sm:$0xff]
        %v1339 = vld [vmem:[#allocation2 + $0x47] sm:$0xff]
        %v1340 = vld [vmem:[#allocation2 + $0x4f] sm:$0xff]
        %v1341 = vld [vmem:[#allocation2 + $0x67] sm:$0xff]
        %v1342 = vld [vmem:[#allocation2 + $0x6f] sm:$0xff]
        %v1343 = vld [vmem:[#allocation2 + $0x87] sm:$0xff]
        %v1344 = vld [vmem:[#allocation2 + $0x8f] sm:$0xff]
        %v1345 = vld [vmem:[#allocation2 + $0xa7] sm:$0xff]
        %v1346 = vld [vmem:[#allocation2 + $0xaf] sm:$0xff]
        %v1347 = vld [vmem:[#allocation2 + $0xc7] sm:$0xff]
        %v1348 = vld [vmem:[#allocation2 + $0xcf] sm:$0xff]
        %v1349 = vld [vmem:[#allocation2 + $0xe7] sm:$0xff]
        %v1350 = vld [vmem:[#allocation2 + $0xef] sm:$0xff]
        %v1351 = vld [vmem:[#allocation2 + $0x107] sm:$0xff]
        %v1352 = vld [vmem:[#allocation2 + $0x10f] sm:$0xff]
        %v1353 = vld [vmem:[#allocation2 + $0x127] sm:$0xff]
        %v1354 = vld [vmem:[#allocation2 + $0x12f] sm:$0xff]
        %v1355 = vld [vmem:[%s3] sm:$0xff]
        %v1356 = vld [vmem:[%s3 + $0x8] sm:$0xff]
        %v1357 = vld [vmem:[%s3 + $0x10] sm:$0xff]
        %v1358 = vld [vmem:[%s3 + $0x18] sm:$0xff]
        %v1359 = vld [vmem:[#allocation2 + $0x8] sm:$0xff]
        %v1360 = vld [vmem:[#allocation2 + $0x10] sm:$0xff]
        %v1361 = vld [vmem:[#allocation2 + $0x28] sm:$0xff]
        %v1362 = vld [vmem:[#allocation2 + $0x30] sm:$0xff]
        %v1363 = vld [vmem:[#allocation2 + $0x48] sm:$0xff]
        %v1364 = vld [vmem:[#allocation2 + $0x50] sm:$0xff]
        %v1365 = vld [vmem:[#allocation2 + $0x68] sm:$0xff]
        %v1366 = vld [vmem:[#allocation2 + $0x70] sm:$0xff]
        %v1367 = vld [vmem:[#allocation2 + $0x88] sm:$0xff]
        %v1368 = vld [vmem:[#allocation2 + $0x90] sm:$0xff]
        %v1369 = vld [vmem:[#allocation2 + $0xa8] sm:$0xff]
        %v1370 = vld [vmem:[#allocation2 + $0xb0] sm:$0xff]
        %v1371 = vld [vmem:[#allocation2 + $0xc8] sm:$0xff]
        %v1372 = vld [vmem:[#allocation2 + $0xd0] sm:$0xff]
        %v1373 = vld [vmem:[#allocation2 + $0xe8] sm:$0xff]
        %v1374 = vld [vmem:[#allocation2 + $0xf0] sm:$0xff]
        %v1375 = vld [vmem:[#allocation2 + $0x108] sm:$0xff]
        %v1376 = vld [vmem:[#allocation2 + $0x110] sm:$0xff]
        %v1377 = vld [vmem:[#allocation2 + $0x128] sm:$0xff]
        %v1378 = vld [vmem:[#allocation2 + $0x130] sm:$0xff]
        %s1379 = scalar_lea.vmem %s3, 32
        %v1380 = vld [vmem:[%s1379] sm:$0xff]
        %v1381 = vld [vmem:[%s1379 + $0x8] sm:$0xff]
        %v1382 = vld [vmem:[%s1379 + $0x10] sm:$0xff]
        %v1383 = vld [vmem:[%s1379 + $0x18] sm:$0xff]
        %v1385 = vsel %vm1265, %v1359, 0
        %v1388 = vsel %vm1265, %v1360, 0
        %v1391 = vsel %vm1265, %v1361, 0
        %v1394 = vsel %vm1265, %v1362, 0
        %v1397 = vsel %vm1265, %v1363, 0
        %v1400 = vsel %vm1265, %v1364, 0
        %v1403 = vsel %vm1265, %v1365, 0
        %v1406 = vsel %vm1265, %v1366, 0
        %v1409 = vsel %vm1265, %v1367, 0
        %v1412 = vsel %vm1265, %v1368, 0
        %v1415 = vsel %vm1265, %v1369, 0
        %v1418 = vsel %vm1265, %v1370, 0
        %v1421 = vsel %vm1265, %v1371, 0
        %v1424 = vsel %vm1265, %v1372, 0
        %v1427 = vsel %vm1265, %v1373, 0
        %v1430 = vsel %vm1265, %v1374, 0
        %v1433 = vsel %vm1265, %v1375, 0
        %v1436 = vsel %vm1265, %v1376, 0
        %v1439 = vsel %vm1265, %v1377, 0
        %v1442 = vsel %vm1265, %v1378, 0
        %1444 = vmatprep.subr.mxu0 0.0
        %1445 = vmatpush1.msra.mxu0 %v1380
        %1446 = vmatprep.subr.mxu0 0.0
        %1447 = vmatpush1.msra.mxu0 %v1381
        %1448 = vmatprep.subr.mxu0 0.0
        %1449 = vmatpush1.msra.mxu0 %v1382
        %1450 = vmatprep.subr.mxu0 0.0
        %1451 = vmatpush1.msra.mxu0 %v1383
        %1452 = vmatprep.subr.mxu0 0.0
        %1453 = vmatpush1.msra.mxu0 0.0
        %1454 = vmatprep.subr.mxu0 0.0
        %1455 = vmatpush1.msra.mxu0 0.0
        %1456 = vmatprep.subr.mxu0 0.0
        %1457 = vmatpush1.msra.mxu0 0.0
        %1458 = vmatprep.subr.mxu0 0.0
        %1459 = vmatpush1.msra.mxu0 0.0
        %1460 = vmatprep.subr.mxu0 0.0
        %1461 = vmatpush1.msra.mxu0 0.0
        %1462 = vmatprep.subr.mxu0 0.0
        %1463 = vmatpush1.msra.mxu0 0.0
        %1464 = vmatprep.subr.mxu0 0.0
        %1465 = vmatpush1.msra.mxu0 0.0
        %1466 = vmatprep.subr.mxu0 0.0
        %1467 = vmatpush1.msra.mxu0 0.0
        %1468 = vmatprep.subr.mxu0 0.0
        %1469 = vmatpush1.msra.mxu0 0.0
        %1470 = vmatprep.subr.mxu0 0.0
        %1471 = vmatpush1.msra.mxu0 0.0
        %1472 = vmatprep.subr.mxu0 0.0
        %1473 = vmatpush1.msra.mxu0 0.0
        %1474 = vmatprep.subr.mxu0 0.0
        %1475 = vmatpush1.msra.mxu0 0.0
        %1476 = vmatprep.subr.mxu0 0.0
        %1477 = vmatpush1.msra.mxu0 0.0
        %1478 = vmatprep.subr.mxu0 0.0
        %1479 = vmatpush1.msra.mxu0 0.0
        %1480 = vmatprep.subr.mxu0 0.0
        %1481 = vmatpush1.msra.mxu0 0.0
        %1482 = vmatprep.subr.mxu0 0.0
        %1483 = vmatpush1.msra.mxu0 0.0
        %1484 = vmatprep.subr.mxu0 0.0
        %1485 = vmatpush1.msra.mxu0 0.0
        %1486 = vmatprep.subr.mxu0 0.0
        %1487 = vmatpush1.msra.mxu0 0.0
        %1488 = vmatprep.subr.mxu0 0.0
        %1489 = vmatpush1.msra.mxu0 0.0
        %1490 = vmatprep.subr.mxu0 0.0
        %1491 = vmatpush1.msra.mxu0 0.0
        %1492 = vmatprep.subr.mxu0 0.0
        %1493 = vmatpush1.msra.mxu0 0.0
        %1494 = vmatprep.subr.mxu0 0.0
        %1495 = vmatpush1.msra.mxu0 0.0
        %1496 = vmatprep.subr.mxu0 0.0
        %1497 = vmatpush1.msra.mxu0 0.0
        %1498 = vmatprep.subr.mxu0 0.0
        %1499 = vmatpush1.msra.mxu0 0.0
        %1500 = vmatprep.subr.mxu0 0.0
        %1501 = vmatpush1.msra.mxu0 0.0
        %1502 = vmatprep.subr.mxu0 0.0
        %1503 = vmatpush1.msra.mxu0 0.0
        %1504 = vmatprep.subr.mxu0 0.0
        %1505 = vmatpush1.msra.mxu0 0.0
        %1506 = vmatprep.subr.mxu0 0.0
        %1507 = vmatpush1.msra.mxu0 0.0
        %1508 = vmatprep.mubr.f32.mxu0 0.0
        %1509 = vmatmul.mubr.f32.gmra.mrb[0].mxu0 %v1385
        %v1510 = vpop.f32.mrb[0].mxu0
        %v1511 = vadd.f32 0.0, %v1510
        %v1512 = vpop.f32.mrb[0].mxu0
        %1513 = vmatprep.mubr.f32.mxu0 0.0
        %1514 = vmatmul.mubr.f32.gmra.mrb[0].mxu0 %v1388
        %v1515 = vpop.f32.mrb[0].mxu0
        %v1516 = vadd.f32 0.0, %v1515
        %v1517 = vpop.f32.mrb[0].mxu0
        %1518 = vmatprep.mubr.f32.mxu0 0.0
        %1519 = vmatmul.mubr.f32.gmra.mrb[0].mxu0 %v1391
        %v1520 = vpop.f32.mrb[0].mxu0
        %v1521 = vadd.f32 0.0, %v1520
        %v1522 = vpop.f32.mrb[0].mxu0
        %1523 = vmatprep.mubr.f32.mxu0 0.0
        %1524 = vmatmul.mubr.f32.gmra.mrb[0].mxu0 %v1394
        %v1525 = vpop.f32.mrb[0].mxu0
        %v1526 = vadd.f32 0.0, %v1525
        %v1527 = vpop.f32.mrb[0].mxu0
        %1528 = vmatprep.mubr.f32.mxu0 0.0
        %1529 = vmatmul.mubr.f32.gmra.mrb[0].mxu0 %v1397
        %v1530 = vpop.f32.mrb[0].mxu0
        %v1531 = vadd.f32 0.0, %v1530
        %v1532 = vpop.f32.mrb[0].mxu0
        %1533 = vmatprep.mubr.f32.mxu0 0.0
        %1534 = vmatmul.mubr.f32.gmra.mrb[0].mxu0 %v1400
        %v1535 = vpop.f32.mrb[0].mxu0
        %v1536 = vadd.f32 0.0, %v1535
        %v1537 = vpop.f32.mrb[0].mxu0
        %1538 = vmatprep.mubr.f32.mxu0 0.0
        %1539 = vmatmul.mubr.f32.gmra.mrb[0].mxu0 %v1403
        %v1540 = vpop.f32.mrb[0].mxu0
        %v1541 = vadd.f32 0.0, %v1540
        %v1542 = vpop.f32.mrb[0].mxu0
        %1543 = vmatprep.mubr.f32.mxu0 0.0
        %1544 = vmatmul.mubr.f32.gmra.mrb[0].mxu0 %v1406
        %v1545 = vpop.f32.mrb[0].mxu0
        %v1546 = vadd.f32 0.0, %v1545
        %v1547 = vpop.f32.mrb[0].mxu0
        %1548 = vmatprep.mubr.f32.mxu0 0.0
        %1549 = vmatmul.mubr.f32.gmra.mrb[0].mxu0 %v1409
        %v1550 = vpop.f32.mrb[0].mxu0
        %v1551 = vadd.f32 0.0, %v1550
        %v1552 = vpop.f32.mrb[0].mxu0
        %1553 = vmatprep.mubr.f32.mxu0 0.0
        %1554 = vmatmul.mubr.f32.gmra.mrb[0].mxu0 %v1412
        %v1555 = vpop.f32.mrb[0].mxu0
        %v1556 = vadd.f32 0.0, %v1555
        %v1557 = vpop.f32.mrb[0].mxu0
        %1558 = vmatprep.mubr.f32.mxu0 0.0
        %1559 = vmatmul.mubr.f32.gmra.mrb[0].mxu0 %v1415
        %v1560 = vpop.f32.mrb[0].mxu0
        %v1561 = vadd.f32 0.0, %v1560
        %v1562 = vpop.f32.mrb[0].mxu0
        %1563 = vmatprep.mubr.f32.mxu0 0.0
        %1564 = vmatmul.mubr.f32.gmra.mrb[0].mxu0 %v1418
        %v1565 = vpop.f32.mrb[0].mxu0
        %v1566 = vadd.f32 0.0, %v1565
        %v1567 = vpop.f32.mrb[0].mxu0
        %1568 = vmatprep.mubr.f32.mxu0 0.0
        %1569 = vmatmul.mubr.f32.gmra.mrb[0].mxu0 %v1421
        %v1570 = vpop.f32.mrb[0].mxu0
        %v1571 = vadd.f32 0.0, %v1570
        %v1572 = vpop.f32.mrb[0].mxu0
        %1573 = vmatprep.mubr.f32.mxu0 0.0
        %1574 = vmatmul.mubr.f32.gmra.mrb[0].mxu0 %v1424
        %v1575 = vpop.f32.mrb[0].mxu0
        %v1576 = vadd.f32 0.0, %v1575
        %v1577 = vpop.f32.mrb[0].mxu0
        %1578 = vmatprep.mubr.f32.mxu0 0.0
        %1579 = vmatmul.mubr.f32.gmra.mrb[0].mxu0 %v1427
        %v1580 = vpop.f32.mrb[0].mxu0
        %v1581 = vadd.f32 0.0, %v1580
        %v1582 = vpop.f32.mrb[0].mxu0
        %1583 = vmatprep.mubr.f32.mxu0 0.0
        %1584 = vmatmul.mubr.f32.gmra.mrb[0].mxu0 %v1430
        %v1585 = vpop.f32.mrb[0].mxu0
        %v1586 = vadd.f32 0.0, %v1585
        %v1587 = vpop.f32.mrb[0].mxu0
        %1588 = vmatprep.mubr.f32.mxu0 0.0
        %1589 = vmatmul.mubr.f32.gmra.mrb[0].mxu0 %v1433
        %v1590 = vpop.f32.mrb[0].mxu0
        %v1591 = vadd.f32 0.0, %v1590
        %v1592 = vpop.f32.mrb[0].mxu0
        %1593 = vmatprep.mubr.f32.mxu0 0.0
        %1594 = vmatmul.mubr.f32.gmra.mrb[0].mxu0 %v1436
        %v1595 = vpop.f32.mrb[0].mxu0
        %v1596 = vadd.f32 0.0, %v1595
        %v1597 = vpop.f32.mrb[0].mxu0
        %1598 = vmatprep.mubr.f32.mxu0 0.0
        %1599 = vmatmul.mubr.f32.gmra.mrb[0].mxu0 %v1439
        %v1600 = vpop.f32.mrb[0].mxu0
        %v1601 = vadd.f32 0.0, %v1600
        %v1602 = vpop.f32.mrb[0].mxu0
        %1603 = vmatprep.mubr.f32.mxu0 0.0
        %1604 = vmatmul.mubr.f32.gmra.mrb[0].mxu0 %v1442
        %v1605 = vpop.f32.mrb[0].mxu0
        %v1606 = vadd.f32 0.0, %v1605
        %v1607 = vpop.f32.mrb[0].mxu0
        %1608 = vdwg.mxu0
        %v1610 = vsel %vm1265, %v1335, 0
        %v1613 = vsel %vm1265, %v1336, 0
        %v1616 = vsel %vm1265, %v1337, 0
        %v1619 = vsel %vm1265, %v1338, 0
        %v1622 = vsel %vm1265, %v1339, 0
        %v1625 = vsel %vm1265, %v1340, 0
        %v1628 = vsel %vm1265, %v1341, 0
        %v1631 = vsel %vm1265, %v1342, 0
        %v1634 = vsel %vm1265, %v1343, 0
        %v1637 = vsel %vm1265, %v1344, 0
        %v1640 = vsel %vm1265, %v1345, 0
        %v1643 = vsel %vm1265, %v1346, 0
        %v1646 = vsel %vm1265, %v1347, 0
        %v1649 = vsel %vm1265, %v1348, 0
        %v1652 = vsel %vm1265, %v1349, 0
        %v1655 = vsel %vm1265, %v1350, 0
        %v1658 = vsel %vm1265, %v1351, 0
        %v1661 = vsel %vm1265, %v1352, 0
        %v1664 = vsel %vm1265, %v1353, 0
        %v1667 = vsel %vm1265, %v1354, 0
        %1669 = vmatprep.subr.mxu0 0.0
        %1670 = vmatpush1.msra.mxu0 %v1355
        %1671 = vmatprep.subr.mxu0 0.0
        %1672 = vmatpush1.msra.mxu0 %v1356
        %1673 = vmatprep.subr.mxu0 0.0
        %1674 = vmatpush1.msra.mxu0 %v1357
        %1675 = vmatprep.subr.mxu0 0.0
        %1676 = vmatpush1.msra.mxu0 %v1358
        %1677 = vmatprep.subr.mxu0 0.0
        %1678 = vmatpush1.msra.mxu0 0.0
        %1679 = vmatprep.subr.mxu0 0.0
        %1680 = vmatpush1.msra.mxu0 0.0
        %1681 = vmatprep.subr.mxu0 0.0
        %1682 = vmatpush1.msra.mxu0 0.0
        %1683 = vmatprep.subr.mxu0 0.0
        %1684 = vmatpush1.msra.mxu0 0.0
        %1685 = vmatprep.subr.mxu0 0.0
        %1686 = vmatpush1.msra.mxu0 0.0
        %1687 = vmatprep.subr.mxu0 0.0
        %1688 = vmatpush1.msra.mxu0 0.0
        %1689 = vmatprep.subr.mxu0 0.0
        %1690 = vmatpush1.msra.mxu0 0.0
        %1691 = vmatprep.subr.mxu0 0.0
        %1692 = vmatpush1.msra.mxu0 0.0
        %1693 = vmatprep.subr.mxu0 0.0
        %1694 = vmatpush1.msra.mxu0 0.0
        %1695 = vmatprep.subr.mxu0 0.0
        %1696 = vmatpush1.msra.mxu0 0.0
        %1697 = vmatprep.subr.mxu0 0.0
        %1698 = vmatpush1.msra.mxu0 0.0
        %1699 = vmatprep.subr.mxu0 0.0
        %1700 = vmatpush1.msra.mxu0 0.0
        %1701 = vmatprep.subr.mxu0 0.0
        %1702 = vmatpush1.msra.mxu0 0.0
        %1703 = vmatprep.subr.mxu0 0.0
        %1704 = vmatpush1.msra.mxu0 0.0
        %1705 = vmatprep.subr.mxu0 0.0
        %1706 = vmatpush1.msra.mxu0 0.0
        %1707 = vmatprep.subr.mxu0 0.0
        %1708 = vmatpush1.msra.mxu0 0.0
        %1709 = vmatprep.subr.mxu0 0.0
        %1710 = vmatpush1.msra.mxu0 0.0
        %1711 = vmatprep.subr.mxu0 0.0
        %1712 = vmatpush1.msra.mxu0 0.0
        %1713 = vmatprep.subr.mxu0 0.0
        %1714 = vmatpush1.msra.mxu0 0.0
        %1715 = vmatprep.subr.mxu0 0.0
        %1716 = vmatpush1.msra.mxu0 0.0
        %1717 = vmatprep.subr.mxu0 0.0
        %1718 = vmatpush1.msra.mxu0 0.0
        %1719 = vmatprep.subr.mxu0 0.0
        %1720 = vmatpush1.msra.mxu0 0.0
        %1721 = vmatprep.subr.mxu0 0.0
        %1722 = vmatpush1.msra.mxu0 0.0
        %1723 = vmatprep.subr.mxu0 0.0
        %1724 = vmatpush1.msra.mxu0 0.0
        %1725 = vmatprep.subr.mxu0 0.0
        %1726 = vmatpush1.msra.mxu0 0.0
        %1727 = vmatprep.subr.mxu0 0.0
        %1728 = vmatpush1.msra.mxu0 0.0
        %1729 = vmatprep.subr.mxu0 0.0
        %1730 = vmatpush1.msra.mxu0 0.0
        %1731 = vmatprep.subr.mxu0 0.0
        %1732 = vmatpush1.msra.mxu0 0.0
        %1733 = vmatprep.mubr.f32.mxu0 0.0
        %1734 = vmatmul.mubr.f32.gmra.mrb[0].mxu0 %v1610
        %v1735 = vpop.f32.mrb[0].mxu0
        %v1736 = vadd.f32 %v1511, %v1735
        %v1737 = vpop.f32.mrb[0].mxu0
        %1738 = vmatprep.mubr.f32.mxu0 0.0
        %1739 = vmatmul.mubr.f32.gmra.mrb[0].mxu0 %v1613
        %v1740 = vpop.f32.mrb[0].mxu0
        %v1741 = vadd.f32 %v1516, %v1740
        %v1742 = vpop.f32.mrb[0].mxu0
        %1743 = vmatprep.mubr.f32.mxu0 0.0
        %1744 = vmatmul.mubr.f32.gmra.mrb[0].mxu0 %v1616
        %v1745 = vpop.f32.mrb[0].mxu0
        %v1746 = vadd.f32 %v1521, %v1745
        %v1747 = vpop.f32.mrb[0].mxu0
        %1748 = vmatprep.mubr.f32.mxu0 0.0
        %1749 = vmatmul.mubr.f32.gmra.mrb[0].mxu0 %v1619
        %v1750 = vpop.f32.mrb[0].mxu0
        %v1751 = vadd.f32 %v1526, %v1750
        %v1752 = vpop.f32.mrb[0].mxu0
        %1753 = vmatprep.mubr.f32.mxu0 0.0
        %1754 = vmatmul.mubr.f32.gmra.mrb[0].mxu0 %v1622
        %v1755 = vpop.f32.mrb[0].mxu0
        %v1756 = vadd.f32 %v1531, %v1755
        %v1757 = vpop.f32.mrb[0].mxu0
        %1758 = vmatprep.mubr.f32.mxu0 0.0
        %1759 = vmatmul.mubr.f32.gmra.mrb[0].mxu0 %v1625
        %v1760 = vpop.f32.mrb[0].mxu0
        %v1761 = vadd.f32 %v1536, %v1760
        %v1762 = vpop.f32.mrb[0].mxu0
        %1763 = vmatprep.mubr.f32.mxu0 0.0
        %1764 = vmatmul.mubr.f32.gmra.mrb[0].mxu0 %v1628
        %v1765 = vpop.f32.mrb[0].mxu0
        %v1766 = vadd.f32 %v1541, %v1765
        %v1767 = vpop.f32.mrb[0].mxu0
        %1768 = vmatprep.mubr.f32.mxu0 0.0
        %1769 = vmatmul.mubr.f32.gmra.mrb[0].mxu0 %v1631
        %v1770 = vpop.f32.mrb[0].mxu0
        %v1771 = vadd.f32 %v1546, %v1770
        %v1772 = vpop.f32.mrb[0].mxu0
        %1773 = vmatprep.mubr.f32.mxu0 0.0
        %1774 = vmatmul.mubr.f32.gmra.mrb[0].mxu0 %v1634
        %v1775 = vpop.f32.mrb[0].mxu0
        %v1776 = vadd.f32 %v1551, %v1775
        %v1777 = vpop.f32.mrb[0].mxu0
        %1778 = vmatprep.mubr.f32.mxu0 0.0
        %1779 = vmatmul.mubr.f32.gmra.mrb[0].mxu0 %v1637
        %v1780 = vpop.f32.mrb[0].mxu0
        %v1781 = vadd.f32 %v1556, %v1780
        %v1782 = vpop.f32.mrb[0].mxu0
        %1783 = vmatprep.mubr.f32.mxu0 0.0
        %1784 = vmatmul.mubr.f32.gmra.mrb[0].mxu0 %v1640
        %v1785 = vpop.f32.mrb[0].mxu0
        %v1786 = vadd.f32 %v1561, %v1785
        %v1787 = vpop.f32.mrb[0].mxu0
        %1788 = vmatprep.mubr.f32.mxu0 0.0
        %1789 = vmatmul.mubr.f32.gmra.mrb[0].mxu0 %v1643
        %v1790 = vpop.f32.mrb[0].mxu0
        %v1791 = vadd.f32 %v1566, %v1790
        %v1792 = vpop.f32.mrb[0].mxu0
        %1793 = vmatprep.mubr.f32.mxu0 0.0
        %1794 = vmatmul.mubr.f32.gmra.mrb[0].mxu0 %v1646
        %v1795 = vpop.f32.mrb[0].mxu0
        %v1796 = vadd.f32 %v1571, %v1795
        %v1797 = vpop.f32.mrb[0].mxu0
        %1798 = vmatprep.mubr.f32.mxu0 0.0
        %1799 = vmatmul.mubr.f32.gmra.mrb[0].mxu0 %v1649
        %v1800 = vpop.f32.mrb[0].mxu0
        %v1801 = vadd.f32 %v1576, %v1800
        %v1802 = vpop.f32.mrb[0].mxu0
        %1803 = vmatprep.mubr.f32.mxu0 0.0
        %1804 = vmatmul.mubr.f32.gmra.mrb[0].mxu0 %v1652
        %v1805 = vpop.f32.mrb[0].mxu0
        %v1806 = vadd.f32 %v1581, %v1805
        %v1807 = vpop.f32.mrb[0].mxu0
        %1808 = vmatprep.mubr.f32.mxu0 0.0
        %1809 = vmatmul.mubr.f32.gmra.mrb[0].mxu0 %v1655
        %v1810 = vpop.f32.mrb[0].mxu0
        %v1811 = vadd.f32 %v1586, %v1810
        %v1812 = vpop.f32.mrb[0].mxu0
        %1813 = vmatprep.mubr.f32.mxu0 0.0
        %1814 = vmatmul.mubr.f32.gmra.mrb[0].mxu0 %v1658
        %v1815 = vpop.f32.mrb[0].mxu0
        %v1816 = vadd.f32 %v1591, %v1815
        %v1817 = vpop.f32.mrb[0].mxu0
        %1818 = vmatprep.mubr.f32.mxu0 0.0
        %1819 = vmatmul.mubr.f32.gmra.mrb[0].mxu0 %v1661
        %v1820 = vpop.f32.mrb[0].mxu0
        %v1821 = vadd.f32 %v1596, %v1820
        %v1822 = vpop.f32.mrb[0].mxu0
        %1823 = vmatprep.mubr.f32.mxu0 0.0
        %1824 = vmatmul.mubr.f32.gmra.mrb[0].mxu0 %v1664
        %v1825 = vpop.f32.mrb[0].mxu0
        %v1826 = vadd.f32 %v1601, %v1825
        %v1827 = vpop.f32.mrb[0].mxu0
        %1828 = vmatprep.mubr.f32.mxu0 0.0
        %1829 = vmatmul.mubr.f32.gmra.mrb[0].mxu0 %v1667
        %v1830 = vpop.f32.mrb[0].mxu0
        %v1831 = vadd.f32 %v1606, %v1830
        %v1832 = vpop.f32.mrb[0].mxu0
        %1833 = vdwg.mxu0
        %v1834 = vld [vmem:[#allocation2 + $0x9] sm:$0xff]
        %v1835 = vld [vmem:[#allocation2 + $0x11] sm:$0xff]
        %v1836 = vld [vmem:[#allocation2 + $0x29] sm:$0xff]
        %v1837 = vld [vmem:[#allocation2 + $0x31] sm:$0xff]
        %v1838 = vld [vmem:[#allocation2 + $0x49] sm:$0xff]
        %v1839 = vld [vmem:[#allocation2 + $0x51] sm:$0xff]
        %v1840 = vld [vmem:[#allocation2 + $0x69] sm:$0xff]
        %v1841 = vld [vmem:[#allocation2 + $0x71] sm:$0xff]
        %v1842 = vld [vmem:[#allocation2 + $0x89] sm:$0xff]
        %v1843 = vld [vmem:[#allocation2 + $0x91] sm:$0xff]
        %v1844 = vld [vmem:[#allocation2 + $0xa9] sm:$0xff]
        %v1845 = vld [vmem:[#allocation2 + $0xb1] sm:$0xff]
        %v1846 = vld [vmem:[#allocation2 + $0xc9] sm:$0xff]
        %v1847 = vld [vmem:[#allocation2 + $0xd1] sm:$0xff]
        %v1848 = vld [vmem:[#allocation2 + $0xe9] sm:$0xff]
        %v1849 = vld [vmem:[#allocation2 + $0xf1] sm:$0xff]
        %v1850 = vld [vmem:[#allocation2 + $0x109] sm:$0xff]
        %v1851 = vld [vmem:[#allocation2 + $0x111] sm:$0xff]
        %v1852 = vld [vmem:[#allocation2 + $0x129] sm:$0xff]
        %v1853 = vld [vmem:[#allocation2 + $0x131] sm:$0xff]
        %s1854 = scalar_lea.vmem %s3, 64
        %v1855 = vld [vmem:[%s1854] sm:$0xff]
        %v1856 = vld [vmem:[%s1854 + $0x8] sm:$0xff]
        %v1857 = vld [vmem:[%s1854 + $0x10] sm:$0xff]
        %v1858 = vld [vmem:[%s1854 + $0x18] sm:$0xff]
        %v1860 = vsel %vm1265, %v1834, 0
        %v1863 = vsel %vm1265, %v1835, 0
        %v1866 = vsel %vm1265, %v1836, 0
        %v1869 = vsel %vm1265, %v1837, 0
        %v1872 = vsel %vm1265, %v1838, 0
        %v1875 = vsel %vm1265, %v1839, 0
        %v1878 = vsel %vm1265, %v1840, 0
        %v1881 = vsel %vm1265, %v1841, 0
        %v1884 = vsel %vm1265, %v1842, 0
        %v1887 = vsel %vm1265, %v1843, 0
        %v1890 = vsel %vm1265, %v1844, 0
        %v1893 = vsel %vm1265, %v1845, 0
        %v1896 = vsel %vm1265, %v1846, 0
        %v1899 = vsel %vm1265, %v1847, 0
        %v1902 = vsel %vm1265, %v1848, 0
        %v1905 = vsel %vm1265, %v1849, 0
        %v1908 = vsel %vm1265, %v1850, 0
        %v1911 = vsel %vm1265, %v1851, 0
        %v1914 = vsel %vm1265, %v1852, 0
        %v1917 = vsel %vm1265, %v1853, 0
        %1919 = vmatprep.subr.mxu0 0.0
        %1920 = vmatpush1.msra.mxu0 %v1855
        %1921 = vmatprep.subr.mxu0 0.0
        %1922 = vmatpush1.msra.mxu0 %v1856
        %1923 = vmatprep.subr.mxu0 0.0
        %1924 = vmatpush1.msra.mxu0 %v1857
        %1925 = vmatprep.subr.mxu0 0.0
        %1926 = vmatpush1.msra.mxu0 %v1858
        %1927 = vmatprep.subr.mxu0 0.0
        %1928 = vmatpush1.msra.mxu0 0.0
        %1929 = vmatprep.subr.mxu0 0.0
        %1930 = vmatpush1.msra.mxu0 0.0
        %1931 = vmatprep.subr.mxu0 0.0
        %1932 = vmatpush1.msra.mxu0 0.0
        %1933 = vmatprep.subr.mxu0 0.0
        %1934 = vmatpush1.msra.mxu0 0.0
        %1935 = vmatprep.subr.mxu0 0.0
        %1936 = vmatpush1.msra.mxu0 0.0
        %1937 = vmatprep.subr.mxu0 0.0
        %1938 = vmatpush1.msra.mxu0 0.0
        %1939 = vmatprep.subr.mxu0 0.0
        %1940 = vmatpush1.msra.mxu0 0.0
        %1941 = vmatprep.subr.mxu0 0.0
        %1942 = vmatpush1.msra.mxu0 0.0
        %1943 = vmatprep.subr.mxu0 0.0
        %1944 = vmatpush1.msra.mxu0 0.0
        %1945 = vmatprep.subr.mxu0 0.0
        %1946 = vmatpush1.msra.mxu0 0.0
        %1947 = vmatprep.subr.mxu0 0.0
        %1948 = vmatpush1.msra.mxu0 0.0
        %1949 = vmatprep.subr.mxu0 0.0
        %1950 = vmatpush1.msra.mxu0 0.0
        %1951 = vmatprep.subr.mxu0 0.0
        %1952 = vmatpush1.msra.mxu0 0.0
        %1953 = vmatprep.subr.mxu0 0.0
        %1954 = vmatpush1.msra.mxu0 0.0
        %1955 = vmatprep.subr.mxu0 0.0
        %1956 = vmatpush1.msra.mxu0 0.0
        %1957 = vmatprep.subr.mxu0 0.0
        %1958 = vmatpush1.msra.mxu0 0.0
        %1959 = vmatprep.subr.mxu0 0.0
        %1960 = vmatpush1.msra.mxu0 0.0
        %1961 = vmatprep.subr.mxu0 0.0
        %1962 = vmatpush1.msra.mxu0 0.0
        %1963 = vmatprep.subr.mxu0 0.0
        %1964 = vmatpush1.msra.mxu0 0.0
        %1965 = vmatprep.subr.mxu0 0.0
        %1966 = vmatpush1.msra.mxu0 0.0
        %1967 = vmatprep.subr.mxu0 0.0
        %1968 = vmatpush1.msra.mxu0 0.0
        %1969 = vmatprep.subr.mxu0 0.0
        %1970 = vmatpush1.msra.mxu0 0.0
        %1971 = vmatprep.subr.mxu0 0.0
        %1972 = vmatpush1.msra.mxu0 0.0
        %1973 = vmatprep.subr.mxu0 0.0
        %1974 = vmatpush1.msra.mxu0 0.0
        %1975 = vmatprep.subr.mxu0 0.0
        %1976 = vmatpush1.msra.mxu0 0.0
        %1977 = vmatprep.subr.mxu0 0.0
        %1978 = vmatpush1.msra.mxu0 0.0
        %1979 = vmatprep.subr.mxu0 0.0
        %1980 = vmatpush1.msra.mxu0 0.0
        %1981 = vmatprep.subr.mxu0 0.0
        %1982 = vmatpush1.msra.mxu0 0.0
        %1983 = vmatprep.mubr.f32.mxu0 0.0
        %1984 = vmatmul.mubr.f32.gmra.mrb[0].mxu0 %v1860
        %v1985 = vpop.f32.mrb[0].mxu0
        %v1986 = vadd.f32 0.0, %v1985
        %v1987 = vpop.f32.mrb[0].mxu0
        %1988 = vmatprep.mubr.f32.mxu0 0.0
        %1989 = vmatmul.mubr.f32.gmra.mrb[0].mxu0 %v1863
        %v1990 = vpop.f32.mrb[0].mxu0
        %v1991 = vadd.f32 0.0, %v1990
        %v1992 = vpop.f32.mrb[0].mxu0
        %1993 = vmatprep.mubr.f32.mxu0 0.0
        %1994 = vmatmul.mubr.f32.gmra.mrb[0].mxu0 %v1866
        %v1995 = vpop.f32.mrb[0].mxu0
        %v1996 = vadd.f32 0.0, %v1995
        %v1997 = vpop.f32.mrb[0].mxu0
        %1998 = vmatprep.mubr.f32.mxu0 0.0
        %1999 = vmatmul.mubr.f32.gmra.mrb[0].mxu0 %v1869
        %v2000 = vpop.f32.mrb[0].mxu0
        %v2001 = vadd.f32 0.0, %v2000
        %v2002 = vpop.f32.mrb[0].mxu0
        %2003 = vmatprep.mubr.f32.mxu0 0.0
        %2004 = vmatmul.mubr.f32.gmra.mrb[0].mxu0 %v1872
        %v2005 = vpop.f32.mrb[0].mxu0
        %v2006 = vadd.f32 0.0, %v2005
        %v2007 = vpop.f32.mrb[0].mxu0
        %2008 = vmatprep.mubr.f32.mxu0 0.0
        %2009 = vmatmul.mubr.f32.gmra.mrb[0].mxu0 %v1875
        %v2010 = vpop.f32.mrb[0].mxu0
        %v2011 = vadd.f32 0.0, %v2010
        %v2012 = vpop.f32.mrb[0].mxu0
        %2013 = vmatprep.mubr.f32.mxu0 0.0
        %2014 = vmatmul.mubr.f32.gmra.mrb[0].mxu0 %v1878
        %v2015 = vpop.f32.mrb[0].mxu0
        %v2016 = vadd.f32 0.0, %v2015
        %v2017 = vpop.f32.mrb[0].mxu0
        %2018 = vmatprep.mubr.f32.mxu0 0.0
        %2019 = vmatmul.mubr.f32.gmra.mrb[0].mxu0 %v1881
        %v2020 = vpop.f32.mrb[0].mxu0
        %v2021 = vadd.f32 0.0, %v2020
        %v2022 = vpop.f32.mrb[0].mxu0
        %2023 = vmatprep.mubr.f32.mxu0 0.0
        %2024 = vmatmul.mubr.f32.gmra.mrb[0].mxu0 %v1884
        %v2025 = vpop.f32.mrb[0].mxu0
        %v2026 = vadd.f32 0.0, %v2025
        %v2027 = vpop.f32.mrb[0].mxu0
        %2028 = vmatprep.mubr.f32.mxu0 0.0
        %2029 = vmatmul.mubr.f32.gmra.mrb[0].mxu0 %v1887
        %v2030 = vpop.f32.mrb[0].mxu0
        %v2031 = vadd.f32 0.0, %v2030
        %v2032 = vpop.f32.mrb[0].mxu0
        %2033 = vmatprep.mubr.f32.mxu0 0.0
        %2034 = vmatmul.mubr.f32.gmra.mrb[0].mxu0 %v1890
        %v2035 = vpop.f32.mrb[0].mxu0
        %v2036 = vadd.f32 0.0, %v2035
        %v2037 = vpop.f32.mrb[0].mxu0
        %2038 = vmatprep.mubr.f32.mxu0 0.0
        %2039 = vmatmul.mubr.f32.gmra.mrb[0].mxu0 %v1893
        %v2040 = vpop.f32.mrb[0].mxu0
        %v2041 = vadd.f32 0.0, %v2040
        %v2042 = vpop.f32.mrb[0].mxu0
        %2043 = vmatprep.mubr.f32.mxu0 0.0
        %2044 = vmatmul.mubr.f32.gmra.mrb[0].mxu0 %v1896
        %v2045 = vpop.f32.mrb[0].mxu0
        %v2046 = vadd.f32 0.0, %v2045
        %v2047 = vpop.f32.mrb[0].mxu0
        %2048 = vmatprep.mubr.f32.mxu0 0.0
        %2049 = vmatmul.mubr.f32.gmra.mrb[0].mxu0 %v1899
        %v2050 = vpop.f32.mrb[0].mxu0
        %v2051 = vadd.f32 0.0, %v2050
        %v2052 = vpop.f32.mrb[0].mxu0
        %2053 = vmatprep.mubr.f32.mxu0 0.0
        %2054 = vmatmul.mubr.f32.gmra.mrb[0].mxu0 %v1902
        %v2055 = vpop.f32.mrb[0].mxu0
        %v2056 = vadd.f32 0.0, %v2055
        %v2057 = vpop.f32.mrb[0].mxu0
        %2058 = vmatprep.mubr.f32.mxu0 0.0
        %2059 = vmatmul.mubr.f32.gmra.mrb[0].mxu0 %v1905
        %v2060 = vpop.f32.mrb[0].mxu0
        %v2061 = vadd.f32 0.0, %v2060
        %v2062 = vpop.f32.mrb[0].mxu0
        %2063 = vmatprep.mubr.f32.mxu0 0.0
        %2064 = vmatmul.mubr.f32.gmra.mrb[0].mxu0 %v1908
        %v2065 = vpop.f32.mrb[0].mxu0
        %v2066 = vadd.f32 0.0, %v2065
        %v2067 = vpop.f32.mrb[0].mxu0
        %2068 = vmatprep.mubr.f32.mxu0 0.0
        %2069 = vmatmul.mubr.f32.gmra.mrb[0].mxu0 %v1911
        %v2070 = vpop.f32.mrb[0].mxu0
        %v2071 = vadd.f32 0.0, %v2070
        %v2072 = vpop.f32.mrb[0].mxu0
        %2073 = vmatprep.mubr.f32.mxu0 0.0
        %2074 = vmatmul.mubr.f32.gmra.mrb[0].mxu0 %v1914
        %v2075 = vpop.f32.mrb[0].mxu0
        %v2076 = vadd.f32 0.0, %v2075
        %v2077 = vpop.f32.mrb[0].mxu0
        %2078 = vmatprep.mubr.f32.mxu0 0.0
        %2079 = vmatmul.mubr.f32.gmra.mrb[0].mxu0 %v1917
        %v2080 = vpop.f32.mrb[0].mxu0
        %v2081 = vadd.f32 0.0, %v2080
        %v2082 = vpop.f32.mrb[0].mxu0
        %2083 = vdwg.mxu0
        %v2084 = vadd.f32 %v1736, %v1986
        %v2085 = vadd.f32 %v1741, %v1991
        %v2086 = vadd.f32 %v1746, %v1996
        %v2087 = vadd.f32 %v1751, %v2001
        %v2088 = vadd.f32 %v1756, %v2006
        %v2089 = vadd.f32 %v1761, %v2011
        %v2090 = vadd.f32 %v1766, %v2016
        %v2091 = vadd.f32 %v1771, %v2021
        %v2092 = vadd.f32 %v1776, %v2026
        %v2093 = vadd.f32 %v1781, %v2031
        %v2094 = vadd.f32 %v1786, %v2036
        %v2095 = vadd.f32 %v1791, %v2041
        %v2096 = vadd.f32 %v1796, %v2046
        %v2097 = vadd.f32 %v1801, %v2051
        %v2098 = vadd.f32 %v1806, %v2056
        %v2099 = vadd.f32 %v1811, %v2061
        %v2100 = vadd.f32 %v1816, %v2066
        %v2101 = vadd.f32 %v1821, %v2071
        %v2102 = vadd.f32 %v1826, %v2076
        %v2103 = vadd.f32 %v1831, %v2081
        %v2104 = vld [vmem:[%s1314 + $0x7] sm:$0xff]
        %v2105 = vld [vmem:[%s1314 + $0xf] sm:$0xff]
        %v2106 = vld [vmem:[%s1314 + $0x27] sm:$0xff]
        %v2107 = vld [vmem:[%s1314 + $0x2f] sm:$0xff]
        %v2108 = vld [vmem:[%s1314 + $0x47] sm:$0xff]
        %v2109 = vld [vmem:[%s1314 + $0x4f] sm:$0xff]
        %v2110 = vld [vmem:[%s1314 + $0x67] sm:$0xff]
        %v2111 = vld [vmem:[%s1314 + $0x6f] sm:$0xff]
        %v2112 = vld [vmem:[%s1314 + $0x87] sm:$0xff]
        %v2113 = vld [vmem:[%s1314 + $0x8f] sm:$0xff]
        %v2114 = vld [vmem:[%s1314 + $0xa7] sm:$0xff]
        %v2115 = vld [vmem:[%s1314 + $0xaf] sm:$0xff]
        %v2116 = vld [vmem:[%s1314 + $0xc7] sm:$0xff]
        %v2117 = vld [vmem:[%s1314 + $0xcf] sm:$0xff]
        %v2118 = vld [vmem:[%s1314 + $0xe7] sm:$0xff]
        %v2119 = vld [vmem:[%s1314 + $0xef] sm:$0xff]
        %v2120 = vld [vmem:[%s1314 + $0x107] sm:$0xff]
        %v2121 = vld [vmem:[%s1314 + $0x10f] sm:$0xff]
        %v2122 = vld [vmem:[%s1314 + $0x127] sm:$0xff]
        %v2123 = vld [vmem:[%s1314 + $0x12f] sm:$0xff]
        %s2124 = scalar_lea.vmem %s3, 96
        %v2125 = vld [vmem:[%s2124] sm:$0xff]
        %v2126 = vld [vmem:[%s2124 + $0x8] sm:$0xff]
        %v2127 = vld [vmem:[%s2124 + $0x10] sm:$0xff]
        %v2128 = vld [vmem:[%s2124 + $0x18] sm:$0xff]
        %v2130 = vsel %vm1265, %v2104, 0
        %v2133 = vsel %vm1265, %v2105, 0
        %v2136 = vsel %vm1265, %v2106, 0
        %v2139 = vsel %vm1265, %v2107, 0
        %v2142 = vsel %vm1265, %v2108, 0
        %v2145 = vsel %vm1265, %v2109, 0
        %v2148 = vsel %vm1265, %v2110, 0
        %v2151 = vsel %vm1265, %v2111, 0
        %v2154 = vsel %vm1265, %v2112, 0
        %v2157 = vsel %vm1265, %v2113, 0
        %v2160 = vsel %vm1265, %v2114, 0
        %v2163 = vsel %vm1265, %v2115, 0
        %v2166 = vsel %vm1265, %v2116, 0
        %v2169 = vsel %vm1265, %v2117, 0
        %v2172 = vsel %vm1265, %v2118, 0
        %v2175 = vsel %vm1265, %v2119, 0
        %v2178 = vsel %vm1265, %v2120, 0
        %v2181 = vsel %vm1265, %v2121, 0
        %v2184 = vsel %vm1265, %v2122, 0
        %v2187 = vsel %vm1265, %v2123, 0
        %2189 = vmatprep.subr.mxu0 0.0
        %2190 = vmatpush1.msra.mxu0 %v2125
        %2191 = vmatprep.subr.mxu0 0.0
        %2192 = vmatpush1.msra.mxu0 %v2126
        %2193 = vmatprep.subr.mxu0 0.0
        %2194 = vmatpush1.msra.mxu0 %v2127
        %2195 = vmatprep.subr.mxu0 0.0
        %2196 = vmatpush1.msra.mxu0 %v2128
        %2197 = vmatprep.subr.mxu0 0.0
        %2198 = vmatpush1.msra.mxu0 0.0
        %2199 = vmatprep.subr.mxu0 0.0
        %2200 = vmatpush1.msra.mxu0 0.0
        %2201 = vmatprep.subr.mxu0 0.0
        %2202 = vmatpush1.msra.mxu0 0.0
        %2203 = vmatprep.subr.mxu0 0.0
        %2204 = vmatpush1.msra.mxu0 0.0
        %2205 = vmatprep.subr.mxu0 0.0
        %2206 = vmatpush1.msra.mxu0 0.0
        %2207 = vmatprep.subr.mxu0 0.0
        %2208 = vmatpush1.msra.mxu0 0.0
        %2209 = vmatprep.subr.mxu0 0.0
        %2210 = vmatpush1.msra.mxu0 0.0
        %2211 = vmatprep.subr.mxu0 0.0
        %2212 = vmatpush1.msra.mxu0 0.0
        %2213 = vmatprep.subr.mxu0 0.0
        %2214 = vmatpush1.msra.mxu0 0.0
        %2215 = vmatprep.subr.mxu0 0.0
        %2216 = vmatpush1.msra.mxu0 0.0
        %2217 = vmatprep.subr.mxu0 0.0
        %2218 = vmatpush1.msra.mxu0 0.0
        %2219 = vmatprep.subr.mxu0 0.0
        %2220 = vmatpush1.msra.mxu0 0.0
        %2221 = vmatprep.subr.mxu0 0.0
        %2222 = vmatpush1.msra.mxu0 0.0
        %2223 = vmatprep.subr.mxu0 0.0
        %2224 = vmatpush1.msra.mxu0 0.0
        %2225 = vmatprep.subr.mxu0 0.0
        %2226 = vmatpush1.msra.mxu0 0.0
        %2227 = vmatprep.subr.mxu0 0.0
        %2228 = vmatpush1.msra.mxu0 0.0
        %2229 = vmatprep.subr.mxu0 0.0
        %2230 = vmatpush1.msra.mxu0 0.0
        %2231 = vmatprep.subr.mxu0 0.0
        %2232 = vmatpush1.msra.mxu0 0.0
        %2233 = vmatprep.subr.mxu0 0.0
        %2234 = vmatpush1.msra.mxu0 0.0
        %2235 = vmatprep.subr.mxu0 0.0
        %2236 = vmatpush1.msra.mxu0 0.0
        %2237 = vmatprep.subr.mxu0 0.0
        %2238 = vmatpush1.msra.mxu0 0.0
        %2239 = vmatprep.subr.mxu0 0.0
        %2240 = vmatpush1.msra.mxu0 0.0
        %2241 = vmatprep.subr.mxu0 0.0
        %2242 = vmatpush1.msra.mxu0 0.0
        %2243 = vmatprep.subr.mxu0 0.0
        %2244 = vmatpush1.msra.mxu0 0.0
        %2245 = vmatprep.subr.mxu0 0.0
        %2246 = vmatpush1.msra.mxu0 0.0
        %2247 = vmatprep.subr.mxu0 0.0
        %2248 = vmatpush1.msra.mxu0 0.0
        %2249 = vmatprep.subr.mxu0 0.0
        %2250 = vmatpush1.msra.mxu0 0.0
        %2251 = vmatprep.subr.mxu0 0.0
        %2252 = vmatpush1.msra.mxu0 0.0
        %2253 = vmatprep.mubr.f32.mxu0 0.0
        %2254 = vmatmul.mubr.f32.gmra.mrb[0].mxu0 %v2130
        %v2255 = vpop.f32.mrb[0].mxu0
        %v2256 = vadd.f32 0.0, %v2255
        %v2257 = vpop.f32.mrb[0].mxu0
        %2258 = vmatprep.mubr.f32.mxu0 0.0
        %2259 = vmatmul.mubr.f32.gmra.mrb[0].mxu0 %v2133
        %v2260 = vpop.f32.mrb[0].mxu0
        %v2261 = vadd.f32 0.0, %v2260
        %v2262 = vpop.f32.mrb[0].mxu0
        %2263 = vmatprep.mubr.f32.mxu0 0.0
        %2264 = vmatmul.mubr.f32.gmra.mrb[0].mxu0 %v2136
        %v2265 = vpop.f32.mrb[0].mxu0
        %v2266 = vadd.f32 0.0, %v2265
        %v2267 = vpop.f32.mrb[0].mxu0
        %2268 = vmatprep.mubr.f32.mxu0 0.0
        %2269 = vmatmul.mubr.f32.gmra.mrb[0].mxu0 %v2139
        %v2270 = vpop.f32.mrb[0].mxu0
        %v2271 = vadd.f32 0.0, %v2270
        %v2272 = vpop.f32.mrb[0].mxu0
        %2273 = vmatprep.mubr.f32.mxu0 0.0
        %2274 = vmatmul.mubr.f32.gmra.mrb[0].mxu0 %v2142
        %v2275 = vpop.f32.mrb[0].mxu0
        %v2276 = vadd.f32 0.0, %v2275
        %v2277 = vpop.f32.mrb[0].mxu0
        %2278 = vmatprep.mubr.f32.mxu0 0.0
        %2279 = vmatmul.mubr.f32.gmra.mrb[0].mxu0 %v2145
        %v2280 = vpop.f32.mrb[0].mxu0
        %v2281 = vadd.f32 0.0, %v2280
        %v2282 = vpop.f32.mrb[0].mxu0
        %2283 = vmatprep.mubr.f32.mxu0 0.0
        %2284 = vmatmul.mubr.f32.gmra.mrb[0].mxu0 %v2148
        %v2285 = vpop.f32.mrb[0].mxu0
        %v2286 = vadd.f32 0.0, %v2285
        %v2287 = vpop.f32.mrb[0].mxu0
        %2288 = vmatprep.mubr.f32.mxu0 0.0
        %2289 = vmatmul.mubr.f32.gmra.mrb[0].mxu0 %v2151
        %v2290 = vpop.f32.mrb[0].mxu0
        %v2291 = vadd.f32 0.0, %v2290
        %v2292 = vpop.f32.mrb[0].mxu0
        %2293 = vmatprep.mubr.f32.mxu0 0.0
        %2294 = vmatmul.mubr.f32.gmra.mrb[0].mxu0 %v2154
        %v2295 = vpop.f32.mrb[0].mxu0
        %v2296 = vadd.f32 0.0, %v2295
        %v2297 = vpop.f32.mrb[0].mxu0
        %2298 = vmatprep.mubr.f32.mxu0 0.0
        %2299 = vmatmul.mubr.f32.gmra.mrb[0].mxu0 %v2157
        %v2300 = vpop.f32.mrb[0].mxu0
        %v2301 = vadd.f32 0.0, %v2300
        %v2302 = vpop.f32.mrb[0].mxu0
        %2303 = vmatprep.mubr.f32.mxu0 0.0
        %2304 = vmatmul.mubr.f32.gmra.mrb[0].mxu0 %v2160
        %v2305 = vpop.f32.mrb[0].mxu0
        %v2306 = vadd.f32 0.0, %v2305
        %v2307 = vpop.f32.mrb[0].mxu0
        %2308 = vmatprep.mubr.f32.mxu0 0.0
        %2309 = vmatmul.mubr.f32.gmra.mrb[0].mxu0 %v2163
        %v2310 = vpop.f32.mrb[0].mxu0
        %v2311 = vadd.f32 0.0, %v2310
        %v2312 = vpop.f32.mrb[0].mxu0
        %2313 = vmatprep.mubr.f32.mxu0 0.0
        %2314 = vmatmul.mubr.f32.gmra.mrb[0].mxu0 %v2166
        %v2315 = vpop.f32.mrb[0].mxu0
        %v2316 = vadd.f32 0.0, %v2315
        %v2317 = vpop.f32.mrb[0].mxu0
        %2318 = vmatprep.mubr.f32.mxu0 0.0
        %2319 = vmatmul.mubr.f32.gmra.mrb[0].mxu0 %v2169
        %v2320 = vpop.f32.mrb[0].mxu0
        %v2321 = vadd.f32 0.0, %v2320
        %v2322 = vpop.f32.mrb[0].mxu0
        %2323 = vmatprep.mubr.f32.mxu0 0.0
        %2324 = vmatmul.mubr.f32.gmra.mrb[0].mxu0 %v2172
        %v2325 = vpop.f32.mrb[0].mxu0
        %v2326 = vadd.f32 0.0, %v2325
        %v2327 = vpop.f32.mrb[0].mxu0
        %2328 = vmatprep.mubr.f32.mxu0 0.0
        %2329 = vmatmul.mubr.f32.gmra.mrb[0].mxu0 %v2175
        %v2330 = vpop.f32.mrb[0].mxu0
        %v2331 = vadd.f32 0.0, %v2330
        %v2332 = vpop.f32.mrb[0].mxu0
        %2333 = vmatprep.mubr.f32.mxu0 0.0
        %2334 = vmatmul.mubr.f32.gmra.mrb[0].mxu0 %v2178
        %v2335 = vpop.f32.mrb[0].mxu0
        %v2336 = vadd.f32 0.0, %v2335
        %v2337 = vpop.f32.mrb[0].mxu0
        %2338 = vmatprep.mubr.f32.mxu0 0.0
        %2339 = vmatmul.mubr.f32.gmra.mrb[0].mxu0 %v2181
        %v2340 = vpop.f32.mrb[0].mxu0
        %v2341 = vadd.f32 0.0, %v2340
        %v2342 = vpop.f32.mrb[0].mxu0
        %2343 = vmatprep.mubr.f32.mxu0 0.0
        %2344 = vmatmul.mubr.f32.gmra.mrb[0].mxu0 %v2184
        %v2345 = vpop.f32.mrb[0].mxu0
        %v2346 = vadd.f32 0.0, %v2345
        %v2347 = vpop.f32.mrb[0].mxu0
        %2348 = vmatprep.mubr.f32.mxu0 0.0
        %2349 = vmatmul.mubr.f32.gmra.mrb[0].mxu0 %v2187
        %v2350 = vpop.f32.mrb[0].mxu0
        %v2351 = vadd.f32 0.0, %v2350
        %v2352 = vpop.f32.mrb[0].mxu0
        %2353 = vdwg.mxu0
        %v2354 = vadd.f32 %v2084, %v2256
        %v2355 = vadd.f32 %v2085, %v2261
        %v2356 = vadd.f32 %v2086, %v2266
        %v2357 = vadd.f32 %v2087, %v2271
        %v2358 = vadd.f32 %v2088, %v2276
        %v2359 = vadd.f32 %v2089, %v2281
        %v2360 = vadd.f32 %v2090, %v2286
        %v2361 = vadd.f32 %v2091, %v2291
        %v2362 = vadd.f32 %v2092, %v2296
        %v2363 = vadd.f32 %v2093, %v2301
        %v2364 = vadd.f32 %v2094, %v2306
        %v2365 = vadd.f32 %v2095, %v2311
        %v2366 = vadd.f32 %v2096, %v2316
        %v2367 = vadd.f32 %v2097, %v2321
        %v2368 = vadd.f32 %v2098, %v2326
        %v2369 = vadd.f32 %v2099, %v2331
        %v2370 = vadd.f32 %v2100, %v2336
        %v2371 = vadd.f32 %v2101, %v2341
        %v2372 = vadd.f32 %v2102, %v2346
        %v2373 = vadd.f32 %v2103, %v2351
        %v2374 = vld [vmem:[%s1314 + $0x8] sm:$0xff]
        %v2375 = vld [vmem:[%s1314 + $0x10] sm:$0xff]
        %v2376 = vld [vmem:[%s1314 + $0x28] sm:$0xff]
        %v2377 = vld [vmem:[%s1314 + $0x30] sm:$0xff]
        %v2378 = vld [vmem:[%s1314 + $0x48] sm:$0xff]
        %v2379 = vld [vmem:[%s1314 + $0x50] sm:$0xff]
        %v2380 = vld [vmem:[%s1314 + $0x68] sm:$0xff]
        %v2381 = vld [vmem:[%s1314 + $0x70] sm:$0xff]
        %v2382 = vld [vmem:[%s1314 + $0x88] sm:$0xff]
        %v2383 = vld [vmem:[%s1314 + $0x90] sm:$0xff]
        %v2384 = vld [vmem:[%s1314 + $0xa8] sm:$0xff]
        %v2385 = vld [vmem:[%s1314 + $0xb0] sm:$0xff]
        %v2386 = vld [vmem:[%s1314 + $0xc8] sm:$0xff]
        %v2387 = vld [vmem:[%s1314 + $0xd0] sm:$0xff]
        %v2388 = vld [vmem:[%s1314 + $0xe8] sm:$0xff]
        %v2389 = vld [vmem:[%s1314 + $0xf0] sm:$0xff]
        %v2390 = vld [vmem:[%s1314 + $0x108] sm:$0xff]
        %v2391 = vld [vmem:[%s1314 + $0x110] sm:$0xff]
        %v2392 = vld [vmem:[%s1314 + $0x128] sm:$0xff]
        %v2393 = vld [vmem:[%s1314 + $0x130] sm:$0xff]
        %s2394 = scalar_lea.vmem %s3, 128
        %v2395 = vld [vmem:[%s2394] sm:$0xff]
        %v2396 = vld [vmem:[%s2394 + $0x8] sm:$0xff]
        %v2397 = vld [vmem:[%s2394 + $0x10] sm:$0xff]
        %v2398 = vld [vmem:[%s2394 + $0x18] sm:$0xff]
        %v2400 = vsel %vm1265, %v2374, 0
        %v2403 = vsel %vm1265, %v2375, 0
        %v2406 = vsel %vm1265, %v2376, 0
        %v2409 = vsel %vm1265, %v2377, 0
        %v2412 = vsel %vm1265, %v2378, 0
        %v2415 = vsel %vm1265, %v2379, 0
        %v2418 = vsel %vm1265, %v2380, 0
        %v2421 = vsel %vm1265, %v2381, 0
        %v2424 = vsel %vm1265, %v2382, 0
        %v2427 = vsel %vm1265, %v2383, 0
        %v2430 = vsel %vm1265, %v2384, 0
        %v2433 = vsel %vm1265, %v2385, 0
        %v2436 = vsel %vm1265, %v2386, 0
        %v2439 = vsel %vm1265, %v2387, 0
        %v2442 = vsel %vm1265, %v2388, 0
        %v2445 = vsel %vm1265, %v2389, 0
        %v2448 = vsel %vm1265, %v2390, 0
        %v2451 = vsel %vm1265, %v2391, 0
        %v2454 = vsel %vm1265, %v2392, 0
        %v2457 = vsel %vm1265, %v2393, 0
        %2459 = vmatprep.subr.mxu0 0.0
        %2460 = vmatpush1.msra.mxu0 %v2395
        %2461 = vmatprep.subr.mxu0 0.0
        %2462 = vmatpush1.msra.mxu0 %v2396
        %2463 = vmatprep.subr.mxu0 0.0
        %2464 = vmatpush1.msra.mxu0 %v2397
        %2465 = vmatprep.subr.mxu0 0.0
        %2466 = vmatpush1.msra.mxu0 %v2398
        %2467 = vmatprep.subr.mxu0 0.0
        %2468 = vmatpush1.msra.mxu0 0.0
        %2469 = vmatprep.subr.mxu0 0.0
        %2470 = vmatpush1.msra.mxu0 0.0
        %2471 = vmatprep.subr.mxu0 0.0
        %2472 = vmatpush1.msra.mxu0 0.0
        %2473 = vmatprep.subr.mxu0 0.0
        %2474 = vmatpush1.msra.mxu0 0.0
        %2475 = vmatprep.subr.mxu0 0.0
        %2476 = vmatpush1.msra.mxu0 0.0
        %2477 = vmatprep.subr.mxu0 0.0
        %2478 = vmatpush1.msra.mxu0 0.0
        %2479 = vmatprep.subr.mxu0 0.0
        %2480 = vmatpush1.msra.mxu0 0.0
        %2481 = vmatprep.subr.mxu0 0.0
        %2482 = vmatpush1.msra.mxu0 0.0
        %2483 = vmatprep.subr.mxu0 0.0
        %2484 = vmatpush1.msra.mxu0 0.0
        %2485 = vmatprep.subr.mxu0 0.0
        %2486 = vmatpush1.msra.mxu0 0.0
        %2487 = vmatprep.subr.mxu0 0.0
        %2488 = vmatpush1.msra.mxu0 0.0
        %2489 = vmatprep.subr.mxu0 0.0
        %2490 = vmatpush1.msra.mxu0 0.0
        %2491 = vmatprep.subr.mxu0 0.0
        %2492 = vmatpush1.msra.mxu0 0.0
        %2493 = vmatprep.subr.mxu0 0.0
        %2494 = vmatpush1.msra.mxu0 0.0
        %2495 = vmatprep.subr.mxu0 0.0
        %2496 = vmatpush1.msra.mxu0 0.0
        %2497 = vmatprep.subr.mxu0 0.0
        %2498 = vmatpush1.msra.mxu0 0.0
        %2499 = vmatprep.subr.mxu0 0.0
        %2500 = vmatpush1.msra.mxu0 0.0
        %2501 = vmatprep.subr.mxu0 0.0
        %2502 = vmatpush1.msra.mxu0 0.0
        %2503 = vmatprep.subr.mxu0 0.0
        %2504 = vmatpush1.msra.mxu0 0.0
        %2505 = vmatprep.subr.mxu0 0.0
        %2506 = vmatpush1.msra.mxu0 0.0
        %2507 = vmatprep.subr.mxu0 0.0
        %2508 = vmatpush1.msra.mxu0 0.0
        %2509 = vmatprep.subr.mxu0 0.0
        %2510 = vmatpush1.msra.mxu0 0.0
        %2511 = vmatprep.subr.mxu0 0.0
        %2512 = vmatpush1.msra.mxu0 0.0
        %2513 = vmatprep.subr.mxu0 0.0
        %2514 = vmatpush1.msra.mxu0 0.0
        %2515 = vmatprep.subr.mxu0 0.0
        %2516 = vmatpush1.msra.mxu0 0.0
        %2517 = vmatprep.subr.mxu0 0.0
        %2518 = vmatpush1.msra.mxu0 0.0
        %2519 = vmatprep.subr.mxu0 0.0
        %2520 = vmatpush1.msra.mxu0 0.0
        %2521 = vmatprep.subr.mxu0 0.0
        %2522 = vmatpush1.msra.mxu0 0.0
        %2523 = vmatprep.mubr.f32.mxu0 0.0
        %2524 = vmatmul.mubr.f32.gmra.mrb[0].mxu0 %v2400
        %v2525 = vpop.f32.mrb[0].mxu0
        %v2526 = vadd.f32 0.0, %v2525
        %v2527 = vpop.f32.mrb[0].mxu0
        %2528 = vmatprep.mubr.f32.mxu0 0.0
        %2529 = vmatmul.mubr.f32.gmra.mrb[0].mxu0 %v2403
        %v2530 = vpop.f32.mrb[0].mxu0
        %v2531 = vadd.f32 0.0, %v2530
        %v2532 = vpop.f32.mrb[0].mxu0
        %2533 = vmatprep.mubr.f32.mxu0 0.0
        %2534 = vmatmul.mubr.f32.gmra.mrb[0].mxu0 %v2406
        %v2535 = vpop.f32.mrb[0].mxu0
        %v2536 = vadd.f32 0.0, %v2535
        %v2537 = vpop.f32.mrb[0].mxu0
        %2538 = vmatprep.mubr.f32.mxu0 0.0
        %2539 = vmatmul.mubr.f32.gmra.mrb[0].mxu0 %v2409
        %v2540 = vpop.f32.mrb[0].mxu0
        %v2541 = vadd.f32 0.0, %v2540
        %v2542 = vpop.f32.mrb[0].mxu0
        %2543 = vmatprep.mubr.f32.mxu0 0.0
        %2544 = vmatmul.mubr.f32.gmra.mrb[0].mxu0 %v2412
        %v2545 = vpop.f32.mrb[0].mxu0
        %v2546 = vadd.f32 0.0, %v2545
        %v2547 = vpop.f32.mrb[0].mxu0
        %2548 = vmatprep.mubr.f32.mxu0 0.0
        %2549 = vmatmul.mubr.f32.gmra.mrb[0].mxu0 %v2415
        %v2550 = vpop.f32.mrb[0].mxu0
        %v2551 = vadd.f32 0.0, %v2550
        %v2552 = vpop.f32.mrb[0].mxu0
        %2553 = vmatprep.mubr.f32.mxu0 0.0
        %2554 = vmatmul.mubr.f32.gmra.mrb[0].mxu0 %v2418
        %v2555 = vpop.f32.mrb[0].mxu0
        %v2556 = vadd.f32 0.0, %v2555
        %v2557 = vpop.f32.mrb[0].mxu0
        %2558 = vmatprep.mubr.f32.mxu0 0.0
        %2559 = vmatmul.mubr.f32.gmra.mrb[0].mxu0 %v2421
        %v2560 = vpop.f32.mrb[0].mxu0
        %v2561 = vadd.f32 0.0, %v2560
        %v2562 = vpop.f32.mrb[0].mxu0
        %2563 = vmatprep.mubr.f32.mxu0 0.0
        %2564 = vmatmul.mubr.f32.gmra.mrb[0].mxu0 %v2424
        %v2565 = vpop.f32.mrb[0].mxu0
        %v2566 = vadd.f32 0.0, %v2565
        %v2567 = vpop.f32.mrb[0].mxu0
        %2568 = vmatprep.mubr.f32.mxu0 0.0
        %2569 = vmatmul.mubr.f32.gmra.mrb[0].mxu0 %v2427
        %v2570 = vpop.f32.mrb[0].mxu0
        %v2571 = vadd.f32 0.0, %v2570
        %v2572 = vpop.f32.mrb[0].mxu0
        %2573 = vmatprep.mubr.f32.mxu0 0.0
        %2574 = vmatmul.mubr.f32.gmra.mrb[0].mxu0 %v2430
        %v2575 = vpop.f32.mrb[0].mxu0
        %v2576 = vadd.f32 0.0, %v2575
        %v2577 = vpop.f32.mrb[0].mxu0
        %2578 = vmatprep.mubr.f32.mxu0 0.0
        %2579 = vmatmul.mubr.f32.gmra.mrb[0].mxu0 %v2433
        %v2580 = vpop.f32.mrb[0].mxu0
        %v2581 = vadd.f32 0.0, %v2580
        %v2582 = vpop.f32.mrb[0].mxu0
        %2583 = vmatprep.mubr.f32.mxu0 0.0
        %2584 = vmatmul.mubr.f32.gmra.mrb[0].mxu0 %v2436
        %v2585 = vpop.f32.mrb[0].mxu0
        %v2586 = vadd.f32 0.0, %v2585
        %v2587 = vpop.f32.mrb[0].mxu0
        %2588 = vmatprep.mubr.f32.mxu0 0.0
        %2589 = vmatmul.mubr.f32.gmra.mrb[0].mxu0 %v2439
        %v2590 = vpop.f32.mrb[0].mxu0
        %v2591 = vadd.f32 0.0, %v2590
        %v2592 = vpop.f32.mrb[0].mxu0
        %2593 = vmatprep.mubr.f32.mxu0 0.0
        %2594 = vmatmul.mubr.f32.gmra.mrb[0].mxu0 %v2442
        %v2595 = vpop.f32.mrb[0].mxu0
        %v2596 = vadd.f32 0.0, %v2595
        %v2597 = vpop.f32.mrb[0].mxu0
        %2598 = vmatprep.mubr.f32.mxu0 0.0
        %2599 = vmatmul.mubr.f32.gmra.mrb[0].mxu0 %v2445
        %v2600 = vpop.f32.mrb[0].mxu0
        %v2601 = vadd.f32 0.0, %v2600
        %v2602 = vpop.f32.mrb[0].mxu0
        %2603 = vmatprep.mubr.f32.mxu0 0.0
        %2604 = vmatmul.mubr.f32.gmra.mrb[0].mxu0 %v2448
        %v2605 = vpop.f32.mrb[0].mxu0
        %v2606 = vadd.f32 0.0, %v2605
        %v2607 = vpop.f32.mrb[0].mxu0
        %2608 = vmatprep.mubr.f32.mxu0 0.0
        %2609 = vmatmul.mubr.f32.gmra.mrb[0].mxu0 %v2451
        %v2610 = vpop.f32.mrb[0].mxu0
        %v2611 = vadd.f32 0.0, %v2610
        %v2612 = vpop.f32.mrb[0].mxu0
        %2613 = vmatprep.mubr.f32.mxu0 0.0
        %2614 = vmatmul.mubr.f32.gmra.mrb[0].mxu0 %v2454
        %v2615 = vpop.f32.mrb[0].mxu0
        %v2616 = vadd.f32 0.0, %v2615
        %v2617 = vpop.f32.mrb[0].mxu0
        %2618 = vmatprep.mubr.f32.mxu0 0.0
        %2619 = vmatmul.mubr.f32.gmra.mrb[0].mxu0 %v2457
        %v2620 = vpop.f32.mrb[0].mxu0
        %v2621 = vadd.f32 0.0, %v2620
        %v2622 = vpop.f32.mrb[0].mxu0
        %2623 = vdwg.mxu0
        %v2624 = vadd.f32 %v2354, %v2526
        %v2625 = vadd.f32 %v2355, %v2531
        %v2626 = vadd.f32 %v2356, %v2536
        %v2627 = vadd.f32 %v2357, %v2541
        %v2628 = vadd.f32 %v2358, %v2546
        %v2629 = vadd.f32 %v2359, %v2551
        %v2630 = vadd.f32 %v2360, %v2556
        %v2631 = vadd.f32 %v2361, %v2561
        %v2632 = vadd.f32 %v2362, %v2566
        %v2633 = vadd.f32 %v2363, %v2571
        %v2634 = vadd.f32 %v2364, %v2576
        %v2635 = vadd.f32 %v2365, %v2581
        %v2636 = vadd.f32 %v2366, %v2586
        %v2637 = vadd.f32 %v2367, %v2591
        %v2638 = vadd.f32 %v2368, %v2596
        %v2639 = vadd.f32 %v2369, %v2601
        %v2640 = vadd.f32 %v2370, %v2606
        %v2641 = vadd.f32 %v2371, %v2611
        %v2642 = vadd.f32 %v2372, %v2616
        %v2643 = vadd.f32 %v2373, %v2621
        %v2644 = vld [vmem:[%s1314 + $0x9] sm:$0xff]
        %v2645 = vld [vmem:[%s1314 + $0x11] sm:$0xff]
        %v2646 = vld [vmem:[%s1314 + $0x29] sm:$0xff]
        %v2647 = vld [vmem:[%s1314 + $0x31] sm:$0xff]
        %v2648 = vld [vmem:[%s1314 + $0x49] sm:$0xff]
        %v2649 = vld [vmem:[%s1314 + $0x51] sm:$0xff]
        %v2650 = vld [vmem:[%s1314 + $0x69] sm:$0xff]
        %v2651 = vld [vmem:[%s1314 + $0x71] sm:$0xff]
        %v2652 = vld [vmem:[%s1314 + $0x89] sm:$0xff]
        %v2653 = vld [vmem:[%s1314 + $0x91] sm:$0xff]
        %v2654 = vld [vmem:[%s1314 + $0xa9] sm:$0xff]
        %v2655 = vld [vmem:[%s1314 + $0xb1] sm:$0xff]
        %v2656 = vld [vmem:[%s1314 + $0xc9] sm:$0xff]
        %v2657 = vld [vmem:[%s1314 + $0xd1] sm:$0xff]
        %v2658 = vld [vmem:[%s1314 + $0xe9] sm:$0xff]
        %v2659 = vld [vmem:[%s1314 + $0xf1] sm:$0xff]
        %v2660 = vld [vmem:[%s1314 + $0x109] sm:$0xff]
        %v2661 = vld [vmem:[%s1314 + $0x111] sm:$0xff]
        %v2662 = vld [vmem:[%s1314 + $0x129] sm:$0xff]
        %v2663 = vld [vmem:[%s1314 + $0x131] sm:$0xff]
        %s2664 = scalar_lea.vmem %s3, 160
        %v2665 = vld [vmem:[%s2664] sm:$0xff]
        %v2666 = vld [vmem:[%s2664 + $0x8] sm:$0xff]
        %v2667 = vld [vmem:[%s2664 + $0x10] sm:$0xff]
        %v2668 = vld [vmem:[%s2664 + $0x18] sm:$0xff]
        %v2670 = vsel %vm1265, %v2644, 0
        %v2673 = vsel %vm1265, %v2645, 0
        %v2676 = vsel %vm1265, %v2646, 0
        %v2679 = vsel %vm1265, %v2647, 0
        %v2682 = vsel %vm1265, %v2648, 0
        %v2685 = vsel %vm1265, %v2649, 0
        %v2688 = vsel %vm1265, %v2650, 0
        %v2691 = vsel %vm1265, %v2651, 0
        %v2694 = vsel %vm1265, %v2652, 0
        %v2697 = vsel %vm1265, %v2653, 0
        %v2700 = vsel %vm1265, %v2654, 0
        %v2703 = vsel %vm1265, %v2655, 0
        %v2706 = vsel %vm1265, %v2656, 0
        %v2709 = vsel %vm1265, %v2657, 0
        %v2712 = vsel %vm1265, %v2658, 0
        %v2715 = vsel %vm1265, %v2659, 0
        %v2718 = vsel %vm1265, %v2660, 0
        %v2721 = vsel %vm1265, %v2661, 0
        %v2724 = vsel %vm1265, %v2662, 0
        %v2727 = vsel %vm1265, %v2663, 0
        %2729 = vmatprep.subr.mxu0 0.0
        %2730 = vmatpush1.msra.mxu0 %v2665
        %2731 = vmatprep.subr.mxu0 0.0
        %2732 = vmatpush1.msra.mxu0 %v2666
        %2733 = vmatprep.subr.mxu0 0.0
        %2734 = vmatpush1.msra.mxu0 %v2667
        %2735 = vmatprep.subr.mxu0 0.0
        %2736 = vmatpush1.msra.mxu0 %v2668
        %2737 = vmatprep.subr.mxu0 0.0
        %2738 = vmatpush1.msra.mxu0 0.0
        %2739 = vmatprep.subr.mxu0 0.0
        %2740 = vmatpush1.msra.mxu0 0.0
        %2741 = vmatprep.subr.mxu0 0.0
        %2742 = vmatpush1.msra.mxu0 0.0
        %2743 = vmatprep.subr.mxu0 0.0
        %2744 = vmatpush1.msra.mxu0 0.0
        %2745 = vmatprep.subr.mxu0 0.0
        %2746 = vmatpush1.msra.mxu0 0.0
        %2747 = vmatprep.subr.mxu0 0.0
        %2748 = vmatpush1.msra.mxu0 0.0
        %2749 = vmatprep.subr.mxu0 0.0
        %2750 = vmatpush1.msra.mxu0 0.0
        %2751 = vmatprep.subr.mxu0 0.0
        %2752 = vmatpush1.msra.mxu0 0.0
        %2753 = vmatprep.subr.mxu0 0.0
        %2754 = vmatpush1.msra.mxu0 0.0
        %2755 = vmatprep.subr.mxu0 0.0
        %2756 = vmatpush1.msra.mxu0 0.0
        %2757 = vmatprep.subr.mxu0 0.0
        %2758 = vmatpush1.msra.mxu0 0.0
        %2759 = vmatprep.subr.mxu0 0.0
        %2760 = vmatpush1.msra.mxu0 0.0
        %2761 = vmatprep.subr.mxu0 0.0
        %2762 = vmatpush1.msra.mxu0 0.0
        %2763 = vmatprep.subr.mxu0 0.0
        %2764 = vmatpush1.msra.mxu0 0.0
        %2765 = vmatprep.subr.mxu0 0.0
        %2766 = vmatpush1.msra.mxu0 0.0
        %2767 = vmatprep.subr.mxu0 0.0
        %2768 = vmatpush1.msra.mxu0 0.0
        %2769 = vmatprep.subr.mxu0 0.0
        %2770 = vmatpush1.msra.mxu0 0.0
        %2771 = vmatprep.subr.mxu0 0.0
        %2772 = vmatpush1.msra.mxu0 0.0
        %2773 = vmatprep.subr.mxu0 0.0
        %2774 = vmatpush1.msra.mxu0 0.0
        %2775 = vmatprep.subr.mxu0 0.0
        %2776 = vmatpush1.msra.mxu0 0.0
        %2777 = vmatprep.subr.mxu0 0.0
        %2778 = vmatpush1.msra.mxu0 0.0
        %2779 = vmatprep.subr.mxu0 0.0
        %2780 = vmatpush1.msra.mxu0 0.0
        %2781 = vmatprep.subr.mxu0 0.0
        %2782 = vmatpush1.msra.mxu0 0.0
        %2783 = vmatprep.subr.mxu0 0.0
        %2784 = vmatpush1.msra.mxu0 0.0
        %2785 = vmatprep.subr.mxu0 0.0
        %2786 = vmatpush1.msra.mxu0 0.0
        %2787 = vmatprep.subr.mxu0 0.0
        %2788 = vmatpush1.msra.mxu0 0.0
        %2789 = vmatprep.subr.mxu0 0.0
        %2790 = vmatpush1.msra.mxu0 0.0
        %2791 = vmatprep.subr.mxu0 0.0
        %2792 = vmatpush1.msra.mxu0 0.0
        %2793 = vmatprep.mubr.f32.mxu0 0.0
        %2794 = vmatmul.mubr.f32.gmra.mrb[0].mxu0 %v2670
        %v2795 = vpop.f32.mrb[0].mxu0
        %v2796 = vadd.f32 0.0, %v2795
        %v2797 = vpop.f32.mrb[0].mxu0
        %2798 = vmatprep.mubr.f32.mxu0 0.0
        %2799 = vmatmul.mubr.f32.gmra.mrb[0].mxu0 %v2673
        %v2800 = vpop.f32.mrb[0].mxu0
        %v2801 = vadd.f32 0.0, %v2800
        %v2802 = vpop.f32.mrb[0].mxu0
        %2803 = vmatprep.mubr.f32.mxu0 0.0
        %2804 = vmatmul.mubr.f32.gmra.mrb[0].mxu0 %v2676
        %v2805 = vpop.f32.mrb[0].mxu0
        %v2806 = vadd.f32 0.0, %v2805
        %v2807 = vpop.f32.mrb[0].mxu0
        %2808 = vmatprep.mubr.f32.mxu0 0.0
        %2809 = vmatmul.mubr.f32.gmra.mrb[0].mxu0 %v2679
        %v2810 = vpop.f32.mrb[0].mxu0
        %v2811 = vadd.f32 0.0, %v2810
        %v2812 = vpop.f32.mrb[0].mxu0
        %2813 = vmatprep.mubr.f32.mxu0 0.0
        %2814 = vmatmul.mubr.f32.gmra.mrb[0].mxu0 %v2682
        %v2815 = vpop.f32.mrb[0].mxu0
        %v2816 = vadd.f32 0.0, %v2815
        %v2817 = vpop.f32.mrb[0].mxu0
        %2818 = vmatprep.mubr.f32.mxu0 0.0
        %2819 = vmatmul.mubr.f32.gmra.mrb[0].mxu0 %v2685
        %v2820 = vpop.f32.mrb[0].mxu0
        %v2821 = vadd.f32 0.0, %v2820
        %v2822 = vpop.f32.mrb[0].mxu0
        %2823 = vmatprep.mubr.f32.mxu0 0.0
        %2824 = vmatmul.mubr.f32.gmra.mrb[0].mxu0 %v2688
        %v2825 = vpop.f32.mrb[0].mxu0
        %v2826 = vadd.f32 0.0, %v2825
        %v2827 = vpop.f32.mrb[0].mxu0
        %2828 = vmatprep.mubr.f32.mxu0 0.0
        %2829 = vmatmul.mubr.f32.gmra.mrb[0].mxu0 %v2691
        %v2830 = vpop.f32.mrb[0].mxu0
        %v2831 = vadd.f32 0.0, %v2830
        %v2832 = vpop.f32.mrb[0].mxu0
        %2833 = vmatprep.mubr.f32.mxu0 0.0
        %2834 = vmatmul.mubr.f32.gmra.mrb[0].mxu0 %v2694
        %v2835 = vpop.f32.mrb[0].mxu0
        %v2836 = vadd.f32 0.0, %v2835
        %v2837 = vpop.f32.mrb[0].mxu0
        %2838 = vmatprep.mubr.f32.mxu0 0.0
        %2839 = vmatmul.mubr.f32.gmra.mrb[0].mxu0 %v2697
        %v2840 = vpop.f32.mrb[0].mxu0
        %v2841 = vadd.f32 0.0, %v2840
        %v2842 = vpop.f32.mrb[0].mxu0
        %2843 = vmatprep.mubr.f32.mxu0 0.0
        %2844 = vmatmul.mubr.f32.gmra.mrb[0].mxu0 %v2700
        %v2845 = vpop.f32.mrb[0].mxu0
        %v2846 = vadd.f32 0.0, %v2845
        %v2847 = vpop.f32.mrb[0].mxu0
        %2848 = vmatprep.mubr.f32.mxu0 0.0
        %2849 = vmatmul.mubr.f32.gmra.mrb[0].mxu0 %v2703
        %v2850 = vpop.f32.mrb[0].mxu0
        %v2851 = vadd.f32 0.0, %v2850
        %v2852 = vpop.f32.mrb[0].mxu0
        %2853 = vmatprep.mubr.f32.mxu0 0.0
        %2854 = vmatmul.mubr.f32.gmra.mrb[0].mxu0 %v2706
        %v2855 = vpop.f32.mrb[0].mxu0
        %v2856 = vadd.f32 0.0, %v2855
        %v2857 = vpop.f32.mrb[0].mxu0
        %2858 = vmatprep.mubr.f32.mxu0 0.0
        %2859 = vmatmul.mubr.f32.gmra.mrb[0].mxu0 %v2709
        %v2860 = vpop.f32.mrb[0].mxu0
        %v2861 = vadd.f32 0.0, %v2860
        %v2862 = vpop.f32.mrb[0].mxu0
        %2863 = vmatprep.mubr.f32.mxu0 0.0
        %2864 = vmatmul.mubr.f32.gmra.mrb[0].mxu0 %v2712
        %v2865 = vpop.f32.mrb[0].mxu0
        %v2866 = vadd.f32 0.0, %v2865
        %v2867 = vpop.f32.mrb[0].mxu0
        %2868 = vmatprep.mubr.f32.mxu0 0.0
        %2869 = vmatmul.mubr.f32.gmra.mrb[0].mxu0 %v2715
        %v2870 = vpop.f32.mrb[0].mxu0
        %v2871 = vadd.f32 0.0, %v2870
        %v2872 = vpop.f32.mrb[0].mxu0
        %2873 = vmatprep.mubr.f32.mxu0 0.0
        %2874 = vmatmul.mubr.f32.gmra.mrb[0].mxu0 %v2718
        %v2875 = vpop.f32.mrb[0].mxu0
        %v2876 = vadd.f32 0.0, %v2875
        %v2877 = vpop.f32.mrb[0].mxu0
        %2878 = vmatprep.mubr.f32.mxu0 0.0
        %2879 = vmatmul.mubr.f32.gmra.mrb[0].mxu0 %v2721
        %v2880 = vpop.f32.mrb[0].mxu0
        %v2881 = vadd.f32 0.0, %v2880
        %v2882 = vpop.f32.mrb[0].mxu0
        %2883 = vmatprep.mubr.f32.mxu0 0.0
        %2884 = vmatmul.mubr.f32.gmra.mrb[0].mxu0 %v2724
        %v2885 = vpop.f32.mrb[0].mxu0
        %v2886 = vadd.f32 0.0, %v2885
        %v2887 = vpop.f32.mrb[0].mxu0
        %2888 = vmatprep.mubr.f32.mxu0 0.0
        %2889 = vmatmul.mubr.f32.gmra.mrb[0].mxu0 %v2727
        %v2890 = vpop.f32.mrb[0].mxu0
        %v2891 = vadd.f32 0.0, %v2890
        %v2892 = vpop.f32.mrb[0].mxu0
        %2893 = vdwg.mxu0
        %v2894 = vadd.f32 %v2624, %v2796
        %v2895 = vadd.f32 %v2625, %v2801
        %v2896 = vadd.f32 %v2626, %v2806
        %v2897 = vadd.f32 %v2627, %v2811
        %v2898 = vadd.f32 %v2628, %v2816
        %v2899 = vadd.f32 %v2629, %v2821
        %v2900 = vadd.f32 %v2630, %v2826
        %v2901 = vadd.f32 %v2631, %v2831
        %v2902 = vadd.f32 %v2632, %v2836
        %v2903 = vadd.f32 %v2633, %v2841
        %v2904 = vadd.f32 %v2634, %v2846
        %v2905 = vadd.f32 %v2635, %v2851
        %v2906 = vadd.f32 %v2636, %v2856
        %v2907 = vadd.f32 %v2637, %v2861
        %v2908 = vadd.f32 %v2638, %v2866
        %v2909 = vadd.f32 %v2639, %v2871
        %v2910 = vadd.f32 %v2640, %v2876
        %v2911 = vadd.f32 %v2641, %v2881
        %v2912 = vadd.f32 %v2642, %v2886
        %v2913 = vadd.f32 %v2643, %v2891
        %s2914 = scalar_lea.vmem [#allocation2], 64
        %v2915 = vld [vmem:[%s2914 + $0x7] sm:$0xff]
        %v2916 = vld [vmem:[%s2914 + $0xf] sm:$0xff]
        %v2917 = vld [vmem:[%s2914 + $0x27] sm:$0xff]
        %v2918 = vld [vmem:[%s2914 + $0x2f] sm:$0xff]
        %v2919 = vld [vmem:[%s2914 + $0x47] sm:$0xff]
        %v2920 = vld [vmem:[%s2914 + $0x4f] sm:$0xff]
        %v2921 = vld [vmem:[%s2914 + $0x67] sm:$0xff]
        %v2922 = vld [vmem:[%s2914 + $0x6f] sm:$0xff]
        %v2923 = vld [vmem:[%s2914 + $0x87] sm:$0xff]
        %v2924 = vld [vmem:[%s2914 + $0x8f] sm:$0xff]
        %v2925 = vld [vmem:[%s2914 + $0xa7] sm:$0xff]
        %v2926 = vld [vmem:[%s2914 + $0xaf] sm:$0xff]
        %v2927 = vld [vmem:[%s2914 + $0xc7] sm:$0xff]
        %v2928 = vld [vmem:[%s2914 + $0xcf] sm:$0xff]
        %v2929 = vld [vmem:[%s2914 + $0xe7] sm:$0xff]
        %v2930 = vld [vmem:[%s2914 + $0xef] sm:$0xff]
        %v2931 = vld [vmem:[%s2914 + $0x107] sm:$0xff]
        %v2932 = vld [vmem:[%s2914 + $0x10f] sm:$0xff]
        %v2933 = vld [vmem:[%s2914 + $0x127] sm:$0xff]
        %v2934 = vld [vmem:[%s2914 + $0x12f] sm:$0xff]
        %s2935 = scalar_lea.vmem %s3, 192
        %v2936 = vld [vmem:[%s2935] sm:$0xff]
        %v2937 = vld [vmem:[%s2935 + $0x8] sm:$0xff]
        %v2938 = vld [vmem:[%s2935 + $0x10] sm:$0xff]
        %v2939 = vld [vmem:[%s2935 + $0x18] sm:$0xff]
        %v2941 = vsel %vm1265, %v2915, 0
        %v2944 = vsel %vm1265, %v2916, 0
        %v2947 = vsel %vm1265, %v2917, 0
        %v2950 = vsel %vm1265, %v2918, 0
        %v2953 = vsel %vm1265, %v2919, 0
        %v2956 = vsel %vm1265, %v2920, 0
        %v2959 = vsel %vm1265, %v2921, 0
        %v2962 = vsel %vm1265, %v2922, 0
        %v2965 = vsel %vm1265, %v2923, 0
        %v2968 = vsel %vm1265, %v2924, 0
        %v2971 = vsel %vm1265, %v2925, 0
        %v2974 = vsel %vm1265, %v2926, 0
        %v2977 = vsel %vm1265, %v2927, 0
        %v2980 = vsel %vm1265, %v2928, 0
        %v2983 = vsel %vm1265, %v2929, 0
        %v2986 = vsel %vm1265, %v2930, 0
        %v2989 = vsel %vm1265, %v2931, 0
        %v2992 = vsel %vm1265, %v2932, 0
        %v2995 = vsel %vm1265, %v2933, 0
        %v2998 = vsel %vm1265, %v2934, 0
        %3000 = vmatprep.subr.mxu0 0.0
        %3001 = vmatpush1.msra.mxu0 %v2936
        %3002 = vmatprep.subr.mxu0 0.0
        %3003 = vmatpush1.msra.mxu0 %v2937
        %3004 = vmatprep.subr.mxu0 0.0
        %3005 = vmatpush1.msra.mxu0 %v2938
        %3006 = vmatprep.subr.mxu0 0.0
        %3007 = vmatpush1.msra.mxu0 %v2939
        %3008 = vmatprep.subr.mxu0 0.0
        %3009 = vmatpush1.msra.mxu0 0.0
        %3010 = vmatprep.subr.mxu0 0.0
        %3011 = vmatpush1.msra.mxu0 0.0
        %3012 = vmatprep.subr.mxu0 0.0
        %3013 = vmatpush1.msra.mxu0 0.0
        %3014 = vmatprep.subr.mxu0 0.0
        %3015 = vmatpush1.msra.mxu0 0.0
        %3016 = vmatprep.subr.mxu0 0.0
        %3017 = vmatpush1.msra.mxu0 0.0
        %3018 = vmatprep.subr.mxu0 0.0
        %3019 = vmatpush1.msra.mxu0 0.0
        %3020 = vmatprep.subr.mxu0 0.0
        %3021 = vmatpush1.msra.mxu0 0.0
        %3022 = vmatprep.subr.mxu0 0.0
        %3023 = vmatpush1.msra.mxu0 0.0
        %3024 = vmatprep.subr.mxu0 0.0
        %3025 = vmatpush1.msra.mxu0 0.0
        %3026 = vmatprep.subr.mxu0 0.0
        %3027 = vmatpush1.msra.mxu0 0.0
        %3028 = vmatprep.subr.mxu0 0.0
        %3029 = vmatpush1.msra.mxu0 0.0
        %3030 = vmatprep.subr.mxu0 0.0
        %3031 = vmatpush1.msra.mxu0 0.0
        %3032 = vmatprep.subr.mxu0 0.0
        %3033 = vmatpush1.msra.mxu0 0.0
        %3034 = vmatprep.subr.mxu0 0.0
        %3035 = vmatpush1.msra.mxu0 0.0
        %3036 = vmatprep.subr.mxu0 0.0
        %3037 = vmatpush1.msra.mxu0 0.0
        %3038 = vmatprep.subr.mxu0 0.0
        %3039 = vmatpush1.msra.mxu0 0.0
        %3040 = vmatprep.subr.mxu0 0.0
        %3041 = vmatpush1.msra.mxu0 0.0
        %3042 = vmatprep.subr.mxu0 0.0
        %3043 = vmatpush1.msra.mxu0 0.0
        %3044 = vmatprep.subr.mxu0 0.0
        %3045 = vmatpush1.msra.mxu0 0.0
        %3046 = vmatprep.subr.mxu0 0.0
        %3047 = vmatpush1.msra.mxu0 0.0
        %3048 = vmatprep.subr.mxu0 0.0
        %3049 = vmatpush1.msra.mxu0 0.0
        %3050 = vmatprep.subr.mxu0 0.0
        %3051 = vmatpush1.msra.mxu0 0.0
        %3052 = vmatprep.subr.mxu0 0.0
        %3053 = vmatpush1.msra.mxu0 0.0
        %3054 = vmatprep.subr.mxu0 0.0
        %3055 = vmatpush1.msra.mxu0 0.0
        %3056 = vmatprep.subr.mxu0 0.0
        %3057 = vmatpush1.msra.mxu0 0.0
        %3058 = vmatprep.subr.mxu0 0.0
        %3059 = vmatpush1.msra.mxu0 0.0
        %3060 = vmatprep.subr.mxu0 0.0
        %3061 = vmatpush1.msra.mxu0 0.0
        %3062 = vmatprep.subr.mxu0 0.0
        %3063 = vmatpush1.msra.mxu0 0.0
        %3064 = vmatprep.mubr.f32.mxu0 0.0
        %3065 = vmatmul.mubr.f32.gmra.mrb[0].mxu0 %v2941
        %v3066 = vpop.f32.mrb[0].mxu0
        %v3067 = vadd.f32 0.0, %v3066
        %v3068 = vpop.f32.mrb[0].mxu0
        %3069 = vmatprep.mubr.f32.mxu0 0.0
        %3070 = vmatmul.mubr.f32.gmra.mrb[0].mxu0 %v2944
        %v3071 = vpop.f32.mrb[0].mxu0
        %v3072 = vadd.f32 0.0, %v3071
        %v3073 = vpop.f32.mrb[0].mxu0
        %3074 = vmatprep.mubr.f32.mxu0 0.0
        %3075 = vmatmul.mubr.f32.gmra.mrb[0].mxu0 %v2947
        %v3076 = vpop.f32.mrb[0].mxu0
        %v3077 = vadd.f32 0.0, %v3076
        %v3078 = vpop.f32.mrb[0].mxu0
        %3079 = vmatprep.mubr.f32.mxu0 0.0
        %3080 = vmatmul.mubr.f32.gmra.mrb[0].mxu0 %v2950
        %v3081 = vpop.f32.mrb[0].mxu0
        %v3082 = vadd.f32 0.0, %v3081
        %v3083 = vpop.f32.mrb[0].mxu0
        %3084 = vmatprep.mubr.f32.mxu0 0.0
        %3085 = vmatmul.mubr.f32.gmra.mrb[0].mxu0 %v2953
        %v3086 = vpop.f32.mrb[0].mxu0
        %v3087 = vadd.f32 0.0, %v3086
        %v3088 = vpop.f32.mrb[0].mxu0
        %3089 = vmatprep.mubr.f32.mxu0 0.0
        %3090 = vmatmul.mubr.f32.gmra.mrb[0].mxu0 %v2956
        %v3091 = vpop.f32.mrb[0].mxu0
        %v3092 = vadd.f32 0.0, %v3091
        %v3093 = vpop.f32.mrb[0].mxu0
        %3094 = vmatprep.mubr.f32.mxu0 0.0
        %3095 = vmatmul.mubr.f32.gmra.mrb[0].mxu0 %v2959
        %v3096 = vpop.f32.mrb[0].mxu0
        %v3097 = vadd.f32 0.0, %v3096
        %v3098 = vpop.f32.mrb[0].mxu0
        %3099 = vmatprep.mubr.f32.mxu0 0.0
        %3100 = vmatmul.mubr.f32.gmra.mrb[0].mxu0 %v2962
        %v3101 = vpop.f32.mrb[0].mxu0
        %v3102 = vadd.f32 0.0, %v3101
        %v3103 = vpop.f32.mrb[0].mxu0
        %3104 = vmatprep.mubr.f32.mxu0 0.0
        %3105 = vmatmul.mubr.f32.gmra.mrb[0].mxu0 %v2965
        %v3106 = vpop.f32.mrb[0].mxu0
        %v3107 = vadd.f32 0.0, %v3106
        %v3108 = vpop.f32.mrb[0].mxu0
        %3109 = vmatprep.mubr.f32.mxu0 0.0
        %3110 = vmatmul.mubr.f32.gmra.mrb[0].mxu0 %v2968
        %v3111 = vpop.f32.mrb[0].mxu0
        %v3112 = vadd.f32 0.0, %v3111
        %v3113 = vpop.f32.mrb[0].mxu0
        %3114 = vmatprep.mubr.f32.mxu0 0.0
        %3115 = vmatmul.mubr.f32.gmra.mrb[0].mxu0 %v2971
        %v3116 = vpop.f32.mrb[0].mxu0
        %v3117 = vadd.f32 0.0, %v3116
        %v3118 = vpop.f32.mrb[0].mxu0
        %3119 = vmatprep.mubr.f32.mxu0 0.0
        %3120 = vmatmul.mubr.f32.gmra.mrb[0].mxu0 %v2974
        %v3121 = vpop.f32.mrb[0].mxu0
        %v3122 = vadd.f32 0.0, %v3121
        %v3123 = vpop.f32.mrb[0].mxu0
        %3124 = vmatprep.mubr.f32.mxu0 0.0
        %3125 = vmatmul.mubr.f32.gmra.mrb[0].mxu0 %v2977
        %v3126 = vpop.f32.mrb[0].mxu0
        %v3127 = vadd.f32 0.0, %v3126
        %v3128 = vpop.f32.mrb[0].mxu0
        %3129 = vmatprep.mubr.f32.mxu0 0.0
        %3130 = vmatmul.mubr.f32.gmra.mrb[0].mxu0 %v2980
        %v3131 = vpop.f32.mrb[0].mxu0
        %v3132 = vadd.f32 0.0, %v3131
        %v3133 = vpop.f32.mrb[0].mxu0
        %3134 = vmatprep.mubr.f32.mxu0 0.0
        %3135 = vmatmul.mubr.f32.gmra.mrb[0].mxu0 %v2983
        %v3136 = vpop.f32.mrb[0].mxu0
        %v3137 = vadd.f32 0.0, %v3136
        %v3138 = vpop.f32.mrb[0].mxu0
        %3139 = vmatprep.mubr.f32.mxu0 0.0
        %3140 = vmatmul.mubr.f32.gmra.mrb[0].mxu0 %v2986
        %v3141 = vpop.f32.mrb[0].mxu0
        %v3142 = vadd.f32 0.0, %v3141
        %v3143 = vpop.f32.mrb[0].mxu0
        %3144 = vmatprep.mubr.f32.mxu0 0.0
        %3145 = vmatmul.mubr.f32.gmra.mrb[0].mxu0 %v2989
        %v3146 = vpop.f32.mrb[0].mxu0
        %v3147 = vadd.f32 0.0, %v3146
        %v3148 = vpop.f32.mrb[0].mxu0
        %3149 = vmatprep.mubr.f32.mxu0 0.0
        %3150 = vmatmul.mubr.f32.gmra.mrb[0].mxu0 %v2992
        %v3151 = vpop.f32.mrb[0].mxu0
        %v3152 = vadd.f32 0.0, %v3151
        %v3153 = vpop.f32.mrb[0].mxu0
        %3154 = vmatprep.mubr.f32.mxu0 0.0
        %3155 = vmatmul.mubr.f32.gmra.mrb[0].mxu0 %v2995
        %v3156 = vpop.f32.mrb[0].mxu0
        %v3157 = vadd.f32 0.0, %v3156
        %v3158 = vpop.f32.mrb[0].mxu0
        %3159 = vmatprep.mubr.f32.mxu0 0.0
        %3160 = vmatmul.mubr.f32.gmra.mrb[0].mxu0 %v2998
        %v3161 = vpop.f32.mrb[0].mxu0
        %v3162 = vadd.f32 0.0, %v3161
        %v3163 = vpop.f32.mrb[0].mxu0
        %3164 = vdwg.mxu0
        %v3165 = vadd.f32 %v2894, %v3067
        %v3166 = vadd.f32 %v2895, %v3072
        %v3167 = vadd.f32 %v2896, %v3077
        %v3168 = vadd.f32 %v2897, %v3082
        %v3169 = vadd.f32 %v2898, %v3087
        %v3170 = vadd.f32 %v2899, %v3092
        %v3171 = vadd.f32 %v2900, %v3097
        %v3172 = vadd.f32 %v2901, %v3102
        %v3173 = vadd.f32 %v2902, %v3107
        %v3174 = vadd.f32 %v2903, %v3112
        %v3175 = vadd.f32 %v2904, %v3117
        %v3176 = vadd.f32 %v2905, %v3122
        %v3177 = vadd.f32 %v2906, %v3127
        %v3178 = vadd.f32 %v2907, %v3132
        %v3179 = vadd.f32 %v2908, %v3137
        %v3180 = vadd.f32 %v2909, %v3142
        %v3181 = vadd.f32 %v2910, %v3147
        %v3182 = vadd.f32 %v2911, %v3152
        %v3183 = vadd.f32 %v2912, %v3157
        %v3184 = vadd.f32 %v2913, %v3162
        %v3185 = vld [vmem:[%s2914 + $0x8] sm:$0xff]
        %v3186 = vld [vmem:[%s2914 + $0x10] sm:$0xff]
        %v3187 = vld [vmem:[%s2914 + $0x28] sm:$0xff]
        %v3188 = vld [vmem:[%s2914 + $0x30] sm:$0xff]
        %v3189 = vld [vmem:[%s2914 + $0x48] sm:$0xff]
        %v3190 = vld [vmem:[%s2914 + $0x50] sm:$0xff]
        %v3191 = vld [vmem:[%s2914 + $0x68] sm:$0xff]
        %v3192 = vld [vmem:[%s2914 + $0x70] sm:$0xff]
        %v3193 = vld [vmem:[%s2914 + $0x88] sm:$0xff]
        %v3194 = vld [vmem:[%s2914 + $0x90] sm:$0xff]
        %v3195 = vld [vmem:[%s2914 + $0xa8] sm:$0xff]
        %v3196 = vld [vmem:[%s2914 + $0xb0] sm:$0xff]
        %v3197 = vld [vmem:[%s2914 + $0xc8] sm:$0xff]
        %v3198 = vld [vmem:[%s2914 + $0xd0] sm:$0xff]
        %v3199 = vld [vmem:[%s2914 + $0xe8] sm:$0xff]
        %v3200 = vld [vmem:[%s2914 + $0xf0] sm:$0xff]
        %v3201 = vld [vmem:[%s2914 + $0x108] sm:$0xff]
        %v3202 = vld [vmem:[%s2914 + $0x110] sm:$0xff]
        %v3203 = vld [vmem:[%s2914 + $0x128] sm:$0xff]
        %v3204 = vld [vmem:[%s2914 + $0x130] sm:$0xff]
        %s3205 = scalar_lea.vmem %s3, 224
        %v3206 = vld [vmem:[%s3205] sm:$0xff]
        %v3207 = vld [vmem:[%s3205 + $0x8] sm:$0xff]
        %v3208 = vld [vmem:[%s3205 + $0x10] sm:$0xff]
        %v3209 = vld [vmem:[%s3205 + $0x18] sm:$0xff]
        %v3211 = vsel %vm1265, %v3185, 0
        %v3214 = vsel %vm1265, %v3186, 0
        %v3217 = vsel %vm1265, %v3187, 0
        %v3220 = vsel %vm1265, %v3188, 0
        %v3223 = vsel %vm1265, %v3189, 0
        %v3226 = vsel %vm1265, %v3190, 0
        %v3229 = vsel %vm1265, %v3191, 0
        %v3232 = vsel %vm1265, %v3192, 0
        %v3235 = vsel %vm1265, %v3193, 0
        %v3238 = vsel %vm1265, %v3194, 0
        %v3241 = vsel %vm1265, %v3195, 0
        %v3244 = vsel %vm1265, %v3196, 0
        %v3247 = vsel %vm1265, %v3197, 0
        %v3250 = vsel %vm1265, %v3198, 0
        %v3253 = vsel %vm1265, %v3199, 0
        %v3256 = vsel %vm1265, %v3200, 0
        %v3259 = vsel %vm1265, %v3201, 0
        %v3262 = vsel %vm1265, %v3202, 0
        %v3265 = vsel %vm1265, %v3203, 0
        %v3268 = vsel %vm1265, %v3204, 0
        %3270 = vmatprep.subr.mxu0 0.0
        %3271 = vmatpush1.msra.mxu0 %v3206
        %3272 = vmatprep.subr.mxu0 0.0
        %3273 = vmatpush1.msra.mxu0 %v3207
        %3274 = vmatprep.subr.mxu0 0.0
        %3275 = vmatpush1.msra.mxu0 %v3208
        %3276 = vmatprep.subr.mxu0 0.0
        %3277 = vmatpush1.msra.mxu0 %v3209
        %3278 = vmatprep.subr.mxu0 0.0
        %3279 = vmatpush1.msra.mxu0 0.0
        %3280 = vmatprep.subr.mxu0 0.0
        %3281 = vmatpush1.msra.mxu0 0.0
        %3282 = vmatprep.subr.mxu0 0.0
        %3283 = vmatpush1.msra.mxu0 0.0
        %3284 = vmatprep.subr.mxu0 0.0
        %3285 = vmatpush1.msra.mxu0 0.0
        %3286 = vmatprep.subr.mxu0 0.0
        %3287 = vmatpush1.msra.mxu0 0.0
        %3288 = vmatprep.subr.mxu0 0.0
        %3289 = vmatpush1.msra.mxu0 0.0
        %3290 = vmatprep.subr.mxu0 0.0
        %3291 = vmatpush1.msra.mxu0 0.0
        %3292 = vmatprep.subr.mxu0 0.0
        %3293 = vmatpush1.msra.mxu0 0.0
        %3294 = vmatprep.subr.mxu0 0.0
        %3295 = vmatpush1.msra.mxu0 0.0
        %3296 = vmatprep.subr.mxu0 0.0
        %3297 = vmatpush1.msra.mxu0 0.0
        %3298 = vmatprep.subr.mxu0 0.0
        %3299 = vmatpush1.msra.mxu0 0.0
        %3300 = vmatprep.subr.mxu0 0.0
        %3301 = vmatpush1.msra.mxu0 0.0
        %3302 = vmatprep.subr.mxu0 0.0
        %3303 = vmatpush1.msra.mxu0 0.0
        %3304 = vmatprep.subr.mxu0 0.0
        %3305 = vmatpush1.msra.mxu0 0.0
        %3306 = vmatprep.subr.mxu0 0.0
        %3307 = vmatpush1.msra.mxu0 0.0
        %3308 = vmatprep.subr.mxu0 0.0
        %3309 = vmatpush1.msra.mxu0 0.0
        %3310 = vmatprep.subr.mxu0 0.0
        %3311 = vmatpush1.msra.mxu0 0.0
        %3312 = vmatprep.subr.mxu0 0.0
        %3313 = vmatpush1.msra.mxu0 0.0
        %3314 = vmatprep.subr.mxu0 0.0
        %3315 = vmatpush1.msra.mxu0 0.0
        %3316 = vmatprep.subr.mxu0 0.0
        %3317 = vmatpush1.msra.mxu0 0.0
        %3318 = vmatprep.subr.mxu0 0.0
        %3319 = vmatpush1.msra.mxu0 0.0
        %3320 = vmatprep.subr.mxu0 0.0
        %3321 = vmatpush1.msra.mxu0 0.0
        %3322 = vmatprep.subr.mxu0 0.0
        %3323 = vmatpush1.msra.mxu0 0.0
        %3324 = vmatprep.subr.mxu0 0.0
        %3325 = vmatpush1.msra.mxu0 0.0
        %3326 = vmatprep.subr.mxu0 0.0
        %3327 = vmatpush1.msra.mxu0 0.0
        %3328 = vmatprep.subr.mxu0 0.0
        %3329 = vmatpush1.msra.mxu0 0.0
        %3330 = vmatprep.subr.mxu0 0.0
        %3331 = vmatpush1.msra.mxu0 0.0
        %3332 = vmatprep.subr.mxu0 0.0
        %3333 = vmatpush1.msra.mxu0 0.0
        %3334 = vmatprep.mubr.f32.mxu0 0.0
        %3335 = vmatmul.mubr.f32.gmra.mrb[0].mxu0 %v3211
        %v3336 = vpop.f32.mrb[0].mxu0
        %v3337 = vadd.f32 0.0, %v3336
        %v3338 = vpop.f32.mrb[0].mxu0
        %3339 = vmatprep.mubr.f32.mxu0 0.0
        %3340 = vmatmul.mubr.f32.gmra.mrb[0].mxu0 %v3214
        %v3341 = vpop.f32.mrb[0].mxu0
        %v3342 = vadd.f32 0.0, %v3341
        %v3343 = vpop.f32.mrb[0].mxu0
        %3344 = vmatprep.mubr.f32.mxu0 0.0
        %3345 = vmatmul.mubr.f32.gmra.mrb[0].mxu0 %v3217
        %v3346 = vpop.f32.mrb[0].mxu0
        %v3347 = vadd.f32 0.0, %v3346
        %v3348 = vpop.f32.mrb[0].mxu0
        %3349 = vmatprep.mubr.f32.mxu0 0.0
        %3350 = vmatmul.mubr.f32.gmra.mrb[0].mxu0 %v3220
        %v3351 = vpop.f32.mrb[0].mxu0
        %v3352 = vadd.f32 0.0, %v3351
        %v3353 = vpop.f32.mrb[0].mxu0
        %3354 = vmatprep.mubr.f32.mxu0 0.0
        %3355 = vmatmul.mubr.f32.gmra.mrb[0].mxu0 %v3223
        %v3356 = vpop.f32.mrb[0].mxu0
        %v3357 = vadd.f32 0.0, %v3356
        %v3358 = vpop.f32.mrb[0].mxu0
        %3359 = vmatprep.mubr.f32.mxu0 0.0
        %3360 = vmatmul.mubr.f32.gmra.mrb[0].mxu0 %v3226
        %v3361 = vpop.f32.mrb[0].mxu0
        %v3362 = vadd.f32 0.0, %v3361
        %v3363 = vpop.f32.mrb[0].mxu0
        %3364 = vmatprep.mubr.f32.mxu0 0.0
        %3365 = vmatmul.mubr.f32.gmra.mrb[0].mxu0 %v3229
        %v3366 = vpop.f32.mrb[0].mxu0
        %v3367 = vadd.f32 0.0, %v3366
        %v3368 = vpop.f32.mrb[0].mxu0
        %3369 = vmatprep.mubr.f32.mxu0 0.0
        %3370 = vmatmul.mubr.f32.gmra.mrb[0].mxu0 %v3232
        %v3371 = vpop.f32.mrb[0].mxu0
        %v3372 = vadd.f32 0.0, %v3371
        %v3373 = vpop.f32.mrb[0].mxu0
        %3374 = vmatprep.mubr.f32.mxu0 0.0
        %3375 = vmatmul.mubr.f32.gmra.mrb[0].mxu0 %v3235
        %v3376 = vpop.f32.mrb[0].mxu0
        %v3377 = vadd.f32 0.0, %v3376
        %v3378 = vpop.f32.mrb[0].mxu0
        %3379 = vmatprep.mubr.f32.mxu0 0.0
        %3380 = vmatmul.mubr.f32.gmra.mrb[0].mxu0 %v3238
        %v3381 = vpop.f32.mrb[0].mxu0
        %v3382 = vadd.f32 0.0, %v3381
        %v3383 = vpop.f32.mrb[0].mxu0
        %3384 = vmatprep.mubr.f32.mxu0 0.0
        %3385 = vmatmul.mubr.f32.gmra.mrb[0].mxu0 %v3241
        %v3386 = vpop.f32.mrb[0].mxu0
        %v3387 = vadd.f32 0.0, %v3386
        %v3388 = vpop.f32.mrb[0].mxu0
        %3389 = vmatprep.mubr.f32.mxu0 0.0
        %3390 = vmatmul.mubr.f32.gmra.mrb[0].mxu0 %v3244
        %v3391 = vpop.f32.mrb[0].mxu0
        %v3392 = vadd.f32 0.0, %v3391
        %v3393 = vpop.f32.mrb[0].mxu0
        %3394 = vmatprep.mubr.f32.mxu0 0.0
        %3395 = vmatmul.mubr.f32.gmra.mrb[0].mxu0 %v3247
        %v3396 = vpop.f32.mrb[0].mxu0
        %v3397 = vadd.f32 0.0, %v3396
        %v3398 = vpop.f32.mrb[0].mxu0
        %3399 = vmatprep.mubr.f32.mxu0 0.0
        %3400 = vmatmul.mubr.f32.gmra.mrb[0].mxu0 %v3250
        %v3401 = vpop.f32.mrb[0].mxu0
        %v3402 = vadd.f32 0.0, %v3401
        %v3403 = vpop.f32.mrb[0].mxu0
        %3404 = vmatprep.mubr.f32.mxu0 0.0
        %3405 = vmatmul.mubr.f32.gmra.mrb[0].mxu0 %v3253
        %v3406 = vpop.f32.mrb[0].mxu0
        %v3407 = vadd.f32 0.0, %v3406
        %v3408 = vpop.f32.mrb[0].mxu0
        %3409 = vmatprep.mubr.f32.mxu0 0.0
        %3410 = vmatmul.mubr.f32.gmra.mrb[0].mxu0 %v3256
        %v3411 = vpop.f32.mrb[0].mxu0
        %v3412 = vadd.f32 0.0, %v3411
        %v3413 = vpop.f32.mrb[0].mxu0
        %3414 = vmatprep.mubr.f32.mxu0 0.0
        %3415 = vmatmul.mubr.f32.gmra.mrb[0].mxu0 %v3259
        %v3416 = vpop.f32.mrb[0].mxu0
        %v3417 = vadd.f32 0.0, %v3416
        %v3418 = vpop.f32.mrb[0].mxu0
        %3419 = vmatprep.mubr.f32.mxu0 0.0
        %3420 = vmatmul.mubr.f32.gmra.mrb[0].mxu0 %v3262
        %v3421 = vpop.f32.mrb[0].mxu0
        %v3422 = vadd.f32 0.0, %v3421
        %v3423 = vpop.f32.mrb[0].mxu0
        %3424 = vmatprep.mubr.f32.mxu0 0.0
        %3425 = vmatmul.mubr.f32.gmra.mrb[0].mxu0 %v3265
        %v3426 = vpop.f32.mrb[0].mxu0
        %v3427 = vadd.f32 0.0, %v3426
        %v3428 = vpop.f32.mrb[0].mxu0
        %3429 = vmatprep.mubr.f32.mxu0 0.0
        %3430 = vmatmul.mubr.f32.gmra.mrb[0].mxu0 %v3268
        %v3431 = vpop.f32.mrb[0].mxu0
        %v3432 = vadd.f32 0.0, %v3431
        %v3433 = vpop.f32.mrb[0].mxu0
        %3434 = vdwg.mxu0
        %v3435 = vadd.f32 %v3165, %v3337
        %v3436 = vadd.f32 %v3166, %v3342
        %v3437 = vadd.f32 %v3167, %v3347
        %v3438 = vadd.f32 %v3168, %v3352
        %v3439 = vadd.f32 %v3169, %v3357
        %v3440 = vadd.f32 %v3170, %v3362
        %v3441 = vadd.f32 %v3171, %v3367
        %v3442 = vadd.f32 %v3172, %v3372
        %v3443 = vadd.f32 %v3173, %v3377
        %v3444 = vadd.f32 %v3174, %v3382
        %v3445 = vadd.f32 %v3175, %v3387
        %v3446 = vadd.f32 %v3176, %v3392
        %v3447 = vadd.f32 %v3177, %v3397
        %v3448 = vadd.f32 %v3178, %v3402
        %v3449 = vadd.f32 %v3179, %v3407
        %v3450 = vadd.f32 %v3180, %v3412
        %v3451 = vadd.f32 %v3181, %v3417
        %v3452 = vadd.f32 %v3182, %v3422
        %v3453 = vadd.f32 %v3183, %v3427
        %v3454 = vadd.f32 %v3184, %v3432
        %v3455 = vld [vmem:[%s2914 + $0x9] sm:$0xff]
        %v3456 = vld [vmem:[%s2914 + $0x11] sm:$0xff]
        %v3457 = vld [vmem:[%s2914 + $0x29] sm:$0xff]
        %v3458 = vld [vmem:[%s2914 + $0x31] sm:$0xff]
        %v3459 = vld [vmem:[%s2914 + $0x49] sm:$0xff]
        %v3460 = vld [vmem:[%s2914 + $0x51] sm:$0xff]
        %v3461 = vld [vmem:[%s2914 + $0x69] sm:$0xff]
        %v3462 = vld [vmem:[%s2914 + $0x71] sm:$0xff]
        %v3463 = vld [vmem:[%s2914 + $0x89] sm:$0xff]
        %v3464 = vld [vmem:[%s2914 + $0x91] sm:$0xff]
        %v3465 = vld [vmem:[%s2914 + $0xa9] sm:$0xff]
        %v3466 = vld [vmem:[%s2914 + $0xb1] sm:$0xff]
        %v3467 = vld [vmem:[%s2914 + $0xc9] sm:$0xff]
        %v3468 = vld [vmem:[%s2914 + $0xd1] sm:$0xff]
        %v3469 = vld [vmem:[%s2914 + $0xe9] sm:$0xff]
        %v3470 = vld [vmem:[%s2914 + $0xf1] sm:$0xff]
        %v3471 = vld [vmem:[%s2914 + $0x109] sm:$0xff]
        %v3472 = vld [vmem:[%s2914 + $0x111] sm:$0xff]
        %v3473 = vld [vmem:[%s2914 + $0x129] sm:$0xff]
        %v3474 = vld [vmem:[%s2914 + $0x131] sm:$0xff]
        %s3475 = scalar_lea.vmem %s3, 256
        %v3476 = vld [vmem:[%s3475] sm:$0xff]
        %v3477 = vld [vmem:[%s3475 + $0x8] sm:$0xff]
        %v3478 = vld [vmem:[%s3475 + $0x10] sm:$0xff]
        %v3479 = vld [vmem:[%s3475 + $0x18] sm:$0xff]
        %v3481 = vsel %vm1265, %v3455, 0
        %v3484 = vsel %vm1265, %v3456, 0
        %v3487 = vsel %vm1265, %v3457, 0
        %v3490 = vsel %vm1265, %v3458, 0
        %v3493 = vsel %vm1265, %v3459, 0
        %v3496 = vsel %vm1265, %v3460, 0
        %v3499 = vsel %vm1265, %v3461, 0
        %v3502 = vsel %vm1265, %v3462, 0
        %v3505 = vsel %vm1265, %v3463, 0
        %v3508 = vsel %vm1265, %v3464, 0
        %v3511 = vsel %vm1265, %v3465, 0
        %v3514 = vsel %vm1265, %v3466, 0
        %v3517 = vsel %vm1265, %v3467, 0
        %v3520 = vsel %vm1265, %v3468, 0
        %v3523 = vsel %vm1265, %v3469, 0
        %v3526 = vsel %vm1265, %v3470, 0
        %v3529 = vsel %vm1265, %v3471, 0
        %v3532 = vsel %vm1265, %v3472, 0
        %v3535 = vsel %vm1265, %v3473, 0
        %v3538 = vsel %vm1265, %v3474, 0
        %3540 = vmatprep.subr.mxu0 0.0
        %3541 = vmatpush1.msra.mxu0 %v3476
        %3542 = vmatprep.subr.mxu0 0.0
        %3543 = vmatpush1.msra.mxu0 %v3477
        %3544 = vmatprep.subr.mxu0 0.0
        %3545 = vmatpush1.msra.mxu0 %v3478
        %3546 = vmatprep.subr.mxu0 0.0
        %3547 = vmatpush1.msra.mxu0 %v3479
        %3548 = vmatprep.subr.mxu0 0.0
        %3549 = vmatpush1.msra.mxu0 0.0
        %3550 = vmatprep.subr.mxu0 0.0
        %3551 = vmatpush1.msra.mxu0 0.0
        %3552 = vmatprep.subr.mxu0 0.0
        %3553 = vmatpush1.msra.mxu0 0.0
        %3554 = vmatprep.subr.mxu0 0.0
        %3555 = vmatpush1.msra.mxu0 0.0
        %3556 = vmatprep.subr.mxu0 0.0
        %3557 = vmatpush1.msra.mxu0 0.0
        %3558 = vmatprep.subr.mxu0 0.0
        %3559 = vmatpush1.msra.mxu0 0.0
        %3560 = vmatprep.subr.mxu0 0.0
        %3561 = vmatpush1.msra.mxu0 0.0
        %3562 = vmatprep.subr.mxu0 0.0
        %3563 = vmatpush1.msra.mxu0 0.0
        %3564 = vmatprep.subr.mxu0 0.0
        %3565 = vmatpush1.msra.mxu0 0.0
        %3566 = vmatprep.subr.mxu0 0.0
        %3567 = vmatpush1.msra.mxu0 0.0
        %3568 = vmatprep.subr.mxu0 0.0
        %3569 = vmatpush1.msra.mxu0 0.0
        %3570 = vmatprep.subr.mxu0 0.0
        %3571 = vmatpush1.msra.mxu0 0.0
        %3572 = vmatprep.subr.mxu0 0.0
        %3573 = vmatpush1.msra.mxu0 0.0
        %3574 = vmatprep.subr.mxu0 0.0
        %3575 = vmatpush1.msra.mxu0 0.0
        %3576 = vmatprep.subr.mxu0 0.0
        %3577 = vmatpush1.msra.mxu0 0.0
        %3578 = vmatprep.subr.mxu0 0.0
        %3579 = vmatpush1.msra.mxu0 0.0
        %3580 = vmatprep.subr.mxu0 0.0
        %3581 = vmatpush1.msra.mxu0 0.0
        %3582 = vmatprep.subr.mxu0 0.0
        %3583 = vmatpush1.msra.mxu0 0.0
        %3584 = vmatprep.subr.mxu0 0.0
        %3585 = vmatpush1.msra.mxu0 0.0
        %3586 = vmatprep.subr.mxu0 0.0
        %3587 = vmatpush1.msra.mxu0 0.0
        %3588 = vmatprep.subr.mxu0 0.0
        %3589 = vmatpush1.msra.mxu0 0.0
        %3590 = vmatprep.subr.mxu0 0.0
        %3591 = vmatpush1.msra.mxu0 0.0
        %3592 = vmatprep.subr.mxu0 0.0
        %3593 = vmatpush1.msra.mxu0 0.0
        %3594 = vmatprep.subr.mxu0 0.0
        %3595 = vmatpush1.msra.mxu0 0.0
        %3596 = vmatprep.subr.mxu0 0.0
        %3597 = vmatpush1.msra.mxu0 0.0
        %3598 = vmatprep.subr.mxu0 0.0
        %3599 = vmatpush1.msra.mxu0 0.0
        %3600 = vmatprep.subr.mxu0 0.0
        %3601 = vmatpush1.msra.mxu0 0.0
        %3602 = vmatprep.subr.mxu0 0.0
        %3603 = vmatpush1.msra.mxu0 0.0
        %3604 = vmatprep.mubr.f32.mxu0 0.0
        %3605 = vmatmul.mubr.f32.gmra.mrb[0].mxu0 %v3481
        %v3606 = vpop.f32.mrb[0].mxu0
        %v3607 = vadd.f32 0.0, %v3606
        %v3608 = vpop.f32.mrb[0].mxu0
        %3609 = vmatprep.mubr.f32.mxu0 0.0
        %3610 = vmatmul.mubr.f32.gmra.mrb[0].mxu0 %v3484
        %v3611 = vpop.f32.mrb[0].mxu0
        %v3612 = vadd.f32 0.0, %v3611
        %v3613 = vpop.f32.mrb[0].mxu0
        %3614 = vmatprep.mubr.f32.mxu0 0.0
        %3615 = vmatmul.mubr.f32.gmra.mrb[0].mxu0 %v3487
        %v3616 = vpop.f32.mrb[0].mxu0
        %v3617 = vadd.f32 0.0, %v3616
        %v3618 = vpop.f32.mrb[0].mxu0
        %3619 = vmatprep.mubr.f32.mxu0 0.0
        %3620 = vmatmul.mubr.f32.gmra.mrb[0].mxu0 %v3490
        %v3621 = vpop.f32.mrb[0].mxu0
        %v3622 = vadd.f32 0.0, %v3621
        %v3623 = vpop.f32.mrb[0].mxu0
        %3624 = vmatprep.mubr.f32.mxu0 0.0
        %3625 = vmatmul.mubr.f32.gmra.mrb[0].mxu0 %v3493
        %v3626 = vpop.f32.mrb[0].mxu0
        %v3627 = vadd.f32 0.0, %v3626
        %v3628 = vpop.f32.mrb[0].mxu0
        %3629 = vmatprep.mubr.f32.mxu0 0.0
        %3630 = vmatmul.mubr.f32.gmra.mrb[0].mxu0 %v3496
        %v3631 = vpop.f32.mrb[0].mxu0
        %v3632 = vadd.f32 0.0, %v3631
        %v3633 = vpop.f32.mrb[0].mxu0
        %3634 = vmatprep.mubr.f32.mxu0 0.0
        %3635 = vmatmul.mubr.f32.gmra.mrb[0].mxu0 %v3499
        %v3636 = vpop.f32.mrb[0].mxu0
        %v3637 = vadd.f32 0.0, %v3636
        %v3638 = vpop.f32.mrb[0].mxu0
        %3639 = vmatprep.mubr.f32.mxu0 0.0
        %3640 = vmatmul.mubr.f32.gmra.mrb[0].mxu0 %v3502
        %v3641 = vpop.f32.mrb[0].mxu0
        %v3642 = vadd.f32 0.0, %v3641
        %v3643 = vpop.f32.mrb[0].mxu0
        %3644 = vmatprep.mubr.f32.mxu0 0.0
        %3645 = vmatmul.mubr.f32.gmra.mrb[0].mxu0 %v3505
        %v3646 = vpop.f32.mrb[0].mxu0
        %v3647 = vadd.f32 0.0, %v3646
        %v3648 = vpop.f32.mrb[0].mxu0
        %3649 = vmatprep.mubr.f32.mxu0 0.0
        %3650 = vmatmul.mubr.f32.gmra.mrb[0].mxu0 %v3508
        %v3651 = vpop.f32.mrb[0].mxu0
        %v3652 = vadd.f32 0.0, %v3651
        %v3653 = vpop.f32.mrb[0].mxu0
        %3654 = vmatprep.mubr.f32.mxu0 0.0
        %3655 = vmatmul.mubr.f32.gmra.mrb[0].mxu0 %v3511
        %v3656 = vpop.f32.mrb[0].mxu0
        %v3657 = vadd.f32 0.0, %v3656
        %v3658 = vpop.f32.mrb[0].mxu0
        %3659 = vmatprep.mubr.f32.mxu0 0.0
        %3660 = vmatmul.mubr.f32.gmra.mrb[0].mxu0 %v3514
        %v3661 = vpop.f32.mrb[0].mxu0
        %v3662 = vadd.f32 0.0, %v3661
        %v3663 = vpop.f32.mrb[0].mxu0
        %3664 = vmatprep.mubr.f32.mxu0 0.0
        %3665 = vmatmul.mubr.f32.gmra.mrb[0].mxu0 %v3517
        %v3666 = vpop.f32.mrb[0].mxu0
        %v3667 = vadd.f32 0.0, %v3666
        %v3668 = vpop.f32.mrb[0].mxu0
        %3669 = vmatprep.mubr.f32.mxu0 0.0
        %3670 = vmatmul.mubr.f32.gmra.mrb[0].mxu0 %v3520
        %v3671 = vpop.f32.mrb[0].mxu0
        %v3672 = vadd.f32 0.0, %v3671
        %v3673 = vpop.f32.mrb[0].mxu0
        %3674 = vmatprep.mubr.f32.mxu0 0.0
        %3675 = vmatmul.mubr.f32.gmra.mrb[0].mxu0 %v3523
        %v3676 = vpop.f32.mrb[0].mxu0
        %v3677 = vadd.f32 0.0, %v3676
        %v3678 = vpop.f32.mrb[0].mxu0
        %3679 = vmatprep.mubr.f32.mxu0 0.0
        %3680 = vmatmul.mubr.f32.gmra.mrb[0].mxu0 %v3526
        %v3681 = vpop.f32.mrb[0].mxu0
        %v3682 = vadd.f32 0.0, %v3681
        %v3683 = vpop.f32.mrb[0].mxu0
        %3684 = vmatprep.mubr.f32.mxu0 0.0
        %3685 = vmatmul.mubr.f32.gmra.mrb[0].mxu0 %v3529
        %v3686 = vpop.f32.mrb[0].mxu0
        %v3687 = vadd.f32 0.0, %v3686
        %v3688 = vpop.f32.mrb[0].mxu0
        %3689 = vmatprep.mubr.f32.mxu0 0.0
        %3690 = vmatmul.mubr.f32.gmra.mrb[0].mxu0 %v3532
        %v3691 = vpop.f32.mrb[0].mxu0
        %v3692 = vadd.f32 0.0, %v3691
        %v3693 = vpop.f32.mrb[0].mxu0
        %3694 = vmatprep.mubr.f32.mxu0 0.0
        %3695 = vmatmul.mubr.f32.gmra.mrb[0].mxu0 %v3535
        %v3696 = vpop.f32.mrb[0].mxu0
        %v3697 = vadd.f32 0.0, %v3696
        %v3698 = vpop.f32.mrb[0].mxu0
        %3699 = vmatprep.mubr.f32.mxu0 0.0
        %3700 = vmatmul.mubr.f32.gmra.mrb[0].mxu0 %v3538
        %v3701 = vpop.f32.mrb[0].mxu0
        %v3702 = vadd.f32 0.0, %v3701
        %v3703 = vpop.f32.mrb[0].mxu0
        %3704 = vdwg.mxu0
        %v3705 = vadd.f32 %v3435, %v3607
        %v3706 = vadd.f32 %v3436, %v3612
        %v3707 = vadd.f32 %v3437, %v3617
        %v3708 = vadd.f32 %v3438, %v3622
        %v3709 = vadd.f32 %v3439, %v3627
        %v3710 = vadd.f32 %v3440, %v3632
        %v3711 = vadd.f32 %v3441, %v3637
        %v3712 = vadd.f32 %v3442, %v3642
        %v3713 = vadd.f32 %v3443, %v3647
        %v3714 = vadd.f32 %v3444, %v3652
        %v3715 = vadd.f32 %v3445, %v3657
        %v3716 = vadd.f32 %v3446, %v3662
        %v3717 = vadd.f32 %v3447, %v3667
        %v3718 = vadd.f32 %v3448, %v3672
        %v3719 = vadd.f32 %v3449, %v3677
        %v3720 = vadd.f32 %v3450, %v3682
        %v3721 = vadd.f32 %v3451, %v3687
        %v3722 = vadd.f32 %v3452, %v3692
        %v3723 = vadd.f32 %v3453, %v3697
        %v3724 = vadd.f32 %v3454, %v3702
        %v3725 = vld [vmem:[%s4] sm:$0x1]
        %v3727 = vlaneseq
        %v3728 = vshrl.u32 %v3727, 7
        %v3729 = vsub.s32 0, %v3728
        %v3730 = vrot.slane %v3725, %v3729
        %v3732 = vadd.f32 %v3705, %v3730
        %v3733 = vadd.f32 %v3706, %v3730
        %v3734 = vadd.f32 %v3707, %v3730
        %v3735 = vadd.f32 %v3708, %v3730
        %v3736 = vadd.f32 %v3709, %v3730
        %v3737 = vadd.f32 %v3710, %v3730
        %v3738 = vadd.f32 %v3711, %v3730
        %v3739 = vadd.f32 %v3712, %v3730
        %v3740 = vadd.f32 %v3713, %v3730
        %v3741 = vadd.f32 %v3714, %v3730
        %v3742 = vadd.f32 %v3715, %v3730
        %v3743 = vadd.f32 %v3716, %v3730
        %v3744 = vadd.f32 %v3717, %v3730
        %v3745 = vadd.f32 %v3718, %v3730
        %v3746 = vadd.f32 %v3719, %v3730
        %v3747 = vadd.f32 %v3720, %v3730
        %v3748 = vadd.f32 %v3721, %v3730
        %v3749 = vadd.f32 %v3722, %v3730
        %v3750 = vadd.f32 %v3723, %v3730
        %v3751 = vadd.f32 %v3724, %v3730
        %v3752 = vmax.f32 %v3732, 0.0
        %v3753 = vmax.f32 %v3733, 0.0
        %v3754 = vmax.f32 %v3734, 0.0
        %v3755 = vmax.f32 %v3735, 0.0
        %v3756 = vmax.f32 %v3736, 0.0
        %v3757 = vmax.f32 %v3737, 0.0
        %v3758 = vmax.f32 %v3738, 0.0
        %v3759 = vmax.f32 %v3739, 0.0
        %v3760 = vmax.f32 %v3740, 0.0
        %v3761 = vmax.f32 %v3741, 0.0
        %v3762 = vmax.f32 %v3742, 0.0
        %v3763 = vmax.f32 %v3743, 0.0
        %v3764 = vmax.f32 %v3744, 0.0
        %v3765 = vmax.f32 %v3745, 0.0
        %v3766 = vmax.f32 %v3746, 0.0
        %v3767 = vmax.f32 %v3747, 0.0
        %v3768 = vmax.f32 %v3748, 0.0
        %v3769 = vmax.f32 %v3749, 0.0
        %v3770 = vmax.f32 %v3750, 0.0
        %v3771 = vmax.f32 %v3751, 0.0
        %v3772 = vmax.f32 %v3752, %v3754
        %v3773 = vmax.f32 %v3753, %v3755
        %v3774 = vmax.f32 %v3756, %v3758
        %v3775 = vmax.f32 %v3757, %v3759
        %v3776 = vmax.f32 %v3760, %v3762
        %v3777 = vmax.f32 %v3761, %v3763
        %v3778 = vmax.f32 %v3764, %v3766
        %v3779 = vmax.f32 %v3765, %v3767
        %v3780 = vmax.f32 %v3768, %v3770
        %v3781 = vmax.f32 %v3769, %v3771
        %vm3782 = vcmask 523264
        %3783 = vst.msk [vmem:[#allocation3] sm:$0xff] %vm3782, %v3772
        %3784 = vst.msk [vmem:[#allocation3 + $0x8] sm:$0xff] %vm3782, %v3773
        %3785 = vst.msk [vmem:[#allocation3 + $0x10] sm:$0xff] %vm3782, %v3774
        %3786 = vst.msk [vmem:[#allocation3 + $0x18] sm:$0xff] %vm3782, %v3775
        %3787 = vst.msk [vmem:[#allocation3 + $0x20] sm:$0xff] %vm3782, %v3776
        %3788 = vst.msk [vmem:[#allocation3 + $0x28] sm:$0xff] %vm3782, %v3777
        %3789 = vst.msk [vmem:[#allocation3 + $0x30] sm:$0xff] %vm3782, %v3778
        %3790 = vst.msk [vmem:[#allocation3 + $0x38] sm:$0xff] %vm3782, %v3779
        %3791 = vst.msk [vmem:[#allocation3 + $0x40] sm:$0xff] %vm3782, %v3780
        %3792 = vst.msk [vmem:[#allocation3 + $0x48] sm:$0xff] %vm3782, %v3781
        %v3793 = vld [vmem:[#allocation3] ss:$2 sm:$0xff]
        %s3794 = scalar_lea.vmem [#allocation3], 16
        %v3795 = vld [vmem:[%s3794] ss:$2 sm:$0xff]
        %s3796 = scalar_lea.vmem [#allocation3], 32
        %v3797 = vld [vmem:[%s3796] ss:$2 sm:$0xff]
        %s3798 = scalar_lea.vmem [#allocation3], 48
        %v3799 = vld [vmem:[%s3798] ss:$2 sm:$0xff]
        %s3800 = scalar_lea.vmem [#allocation3], 64
        %v3801 = vld [vmem:[%s3800] ss:$2 sm:$0xff]
        %s3802 = scalar_lea.vmem [#allocation3], 1
        %v3803 = vld [vmem:[%s3802] ss:$2 sm:$0xff]
        %s3804 = scalar_lea.vmem [#allocation3], 17
        %v3805 = vld [vmem:[%s3804] ss:$2 sm:$0xff]
        %s3806 = scalar_lea.vmem [#allocation3], 33
        %v3807 = vld [vmem:[%s3806] ss:$2 sm:$0xff]
        %s3808 = scalar_lea.vmem [#allocation3], 49
        %v3809 = vld [vmem:[%s3808] ss:$2 sm:$0xff]
        %s3810 = scalar_lea.vmem [#allocation3], 65
        %v3811 = vld [vmem:[%s3810] ss:$2 sm:$0xff]
        %v3812 = vmax.f32 %v3793, %v3803
        %v3813 = vmax.f32 %v3795, %v3805
        %v3814 = vmax.f32 %v3797, %v3807
        %v3815 = vmax.f32 %v3799, %v3809
        %v3816 = vmax.f32 %v3801, %v3811
        %3817 = vst.msk [vmem:[#allocation4] sm:$0xff] %vm3782, %v3812
        %3818 = vst.msk [vmem:[#allocation4 + $0x8] sm:$0xff] %vm3782, %v3813
        %3819 = vst.msk [vmem:[#allocation4 + $0x10] sm:$0xff] %vm3782, %v3814
        %3820 = vst.msk [vmem:[#allocation4 + $0x18] sm:$0xff] %vm3782, %v3815
        %3821 = vst.msk [vmem:[#allocation4 + $0x20] sm:$0xff] %vm3782, %v3816
        %v3822 = vld [vmem:[#allocation4] sm:$0x1]
        %v3823 = vld [vmem:[%s5] sm:$0xf]
        %v3824 = vld [vmem:[%s5 + $0x4] sm:$0xf]
        %v3825 = vld [vmem:[%s5 + $0x8] sm:$0xf]
        %v3826 = vld [vmem:[%s5 + $0xc] sm:$0xf]
        %v3827 = vld [vmem:[%s5 + $0x10] sm:$0xf]
        %v3828 = vld [vmem:[%s5 + $0x14] sm:$0xf]
        %v3829 = vld [vmem:[%s5 + $0x18] sm:$0xf]
        %v3830 = vld [vmem:[%s5 + $0x1c] sm:$0xf]
        %v3831 = vunpack.c.l.bf16 %v3823
        %v3832 = vunpack.c.l.bf16 %v3824
        %v3833 = vunpack.c.l.bf16 %v3825
        %v3834 = vunpack.c.l.bf16 %v3826
        %v3835 = vunpack.c.l.bf16 %v3827
        %v3836 = vunpack.c.l.bf16 %v3828
        %v3837 = vunpack.c.l.bf16 %v3829
        %v3838 = vunpack.c.l.bf16 %v3830
        %v3839 = vld [vmem:[#allocation4 + $0x1] sm:$0x1]
        %s3840 = scalar_lea.vmem %s5, 32
        %v3841 = vld [vmem:[%s3840] sm:$0xf]
        %v3842 = vld [vmem:[%s3840 + $0x4] sm:$0xf]
        %v3843 = vld [vmem:[%s3840 + $0x8] sm:$0xf]
        %v3844 = vld [vmem:[%s3840 + $0xc] sm:$0xf]
        %v3845 = vld [vmem:[%s3840 + $0x10] sm:$0xf]
        %v3846 = vld [vmem:[%s3840 + $0x14] sm:$0xf]
        %v3847 = vld [vmem:[%s3840 + $0x18] sm:$0xf]
        %v3848 = vld [vmem:[%s3840 + $0x1c] sm:$0xf]
        %v3849 = vunpack.c.l.bf16 %v3841
        %v3850 = vunpack.c.l.bf16 %v3842
        %v3851 = vunpack.c.l.bf16 %v3843
        %v3852 = vunpack.c.l.bf16 %v3844
        %v3853 = vunpack.c.l.bf16 %v3845
        %v3854 = vunpack.c.l.bf16 %v3846
        %v3855 = vunpack.c.l.bf16 %v3847
        %v3856 = vunpack.c.l.bf16 %v3848
        %v3858 = vsel %vm3782, %v3839, 0
        %3860 = vmatprep.subr.mxu0 0.0
        %3861 = vmatpush1.msra.mxu0 %v3849
        %3862 = vmatprep.subr.mxu0 0.0
        %3863 = vmatpush1.msra.mxu0 %v3850
        %3864 = vmatprep.subr.mxu0 0.0
        %3865 = vmatpush1.msra.mxu0 %v3851
        %3866 = vmatprep.subr.mxu0 0.0
        %3867 = vmatpush1.msra.mxu0 %v3852
        %3868 = vmatprep.subr.mxu0 0.0
        %3869 = vmatpush1.msra.mxu0 %v3853
        %3870 = vmatprep.subr.mxu0 0.0
        %3871 = vmatpush1.msra.mxu0 %v3854
        %3872 = vmatprep.subr.mxu0 0.0
        %3873 = vmatpush1.msra.mxu0 %v3855
        %3874 = vmatprep.subr.mxu0 0.0
        %3875 = vmatpush1.msra.mxu0 %v3856
        %3876 = vmatprep.subr.mxu0 0.0
        %3877 = vmatpush1.msra.mxu0 0.0
        %3878 = vmatprep.subr.mxu0 0.0
        %3879 = vmatpush1.msra.mxu0 0.0
        %3880 = vmatprep.subr.mxu0 0.0
        %3881 = vmatpush1.msra.mxu0 0.0
        %3882 = vmatprep.subr.mxu0 0.0
        %3883 = vmatpush1.msra.mxu0 0.0
        %3884 = vmatprep.subr.mxu0 0.0
        %3885 = vmatpush1.msra.mxu0 0.0
        %3886 = vmatprep.subr.mxu0 0.0
        %3887 = vmatpush1.msra.mxu0 0.0
        %3888 = vmatprep.subr.mxu0 0.0
        %3889 = vmatpush1.msra.mxu0 0.0
        %3890 = vmatprep.subr.mxu0 0.0
        %3891 = vmatpush1.msra.mxu0 0.0
        %3892 = vmatprep.subr.mxu0 0.0
        %3893 = vmatpush1.msra.mxu0 0.0
        %3894 = vmatprep.subr.mxu0 0.0
        %3895 = vmatpush1.msra.mxu0 0.0
        %3896 = vmatprep.subr.mxu0 0.0
        %3897 = vmatpush1.msra.mxu0 0.0
        %3898 = vmatprep.subr.mxu0 0.0
        %3899 = vmatpush1.msra.mxu0 0.0
        %3900 = vmatprep.subr.mxu0 0.0
        %3901 = vmatpush1.msra.mxu0 0.0
        %3902 = vmatprep.subr.mxu0 0.0
        %3903 = vmatpush1.msra.mxu0 0.0
        %3904 = vmatprep.subr.mxu0 0.0
        %3905 = vmatpush1.msra.mxu0 0.0
        %3906 = vmatprep.subr.mxu0 0.0
        %3907 = vmatpush1.msra.mxu0 0.0
        %3908 = vmatprep.subr.mxu0 0.0
        %3909 = vmatpush1.msra.mxu0 0.0
        %3910 = vmatprep.subr.mxu0 0.0
        %3911 = vmatpush1.msra.mxu0 0.0
        %3912 = vmatprep.subr.mxu0 0.0
        %3913 = vmatpush1.msra.mxu0 0.0
        %3914 = vmatprep.subr.mxu0 0.0
        %3915 = vmatpush1.msra.mxu0 0.0
        %3916 = vmatprep.subr.mxu0 0.0
        %3917 = vmatpush1.msra.mxu0 0.0
        %3918 = vmatprep.subr.mxu0 0.0
        %3919 = vmatpush1.msra.mxu0 0.0
        %3920 = vmatprep.subr.mxu0 0.0
        %3921 = vmatpush1.msra.mxu0 0.0
        %3922 = vmatprep.subr.mxu0 0.0
        %3923 = vmatpush1.msra.mxu0 0.0
        %3924 = vmatprep.mubr.f32.mxu0 0.0
        %3925 = vmatmul.mubr.f32.gmra.mrb[0].mxu0 %v3858
        %v3926 = vpop.f32.mrb[0].mxu0
        %v3927 = vadd.f32 0.0, %v3926
        %v3928 = vpop.f32.mrb[0].mxu0
        %3929 = vdwg.mxu0
        %v3931 = vsel %vm3782, %v3822, 0
        %3933 = vmatprep.subr.mxu0 0.0
        %3934 = vmatpush1.msra.mxu0 %v3831
        %3935 = vmatprep.subr.mxu0 0.0
        %3936 = vmatpush1.msra.mxu0 %v3832
        %3937 = vmatprep.subr.mxu0 0.0
        %3938 = vmatpush1.msra.mxu0 %v3833
        %3939 = vmatprep.subr.mxu0 0.0
        %3940 = vmatpush1.msra.mxu0 %v3834
        %3941 = vmatprep.subr.mxu0 0.0
        %3942 = vmatpush1.msra.mxu0 %v3835
        %3943 = vmatprep.subr.mxu0 0.0
        %3944 = vmatpush1.msra.mxu0 %v3836
        %3945 = vmatprep.subr.mxu0 0.0
        %3946 = vmatpush1.msra.mxu0 %v3837
        %3947 = vmatprep.subr.mxu0 0.0
        %3948 = vmatpush1.msra.mxu0 %v3838
        %3949 = vmatprep.subr.mxu0 0.0
        %3950 = vmatpush1.msra.mxu0 0.0
        %3951 = vmatprep.subr.mxu0 0.0
        %3952 = vmatpush1.msra.mxu0 0.0
        %3953 = vmatprep.subr.mxu0 0.0
        %3954 = vmatpush1.msra.mxu0 0.0
        %3955 = vmatprep.subr.mxu0 0.0
        %3956 = vmatpush1.msra.mxu0 0.0
        %3957 = vmatprep.subr.mxu0 0.0
        %3958 = vmatpush1.msra.mxu0 0.0
        %3959 = vmatprep.subr.mxu0 0.0
        %3960 = vmatpush1.msra.mxu0 0.0
        %3961 = vmatprep.subr.mxu0 0.0
        %3962 = vmatpush1.msra.mxu0 0.0
        %3963 = vmatprep.subr.mxu0 0.0
        %3964 = vmatpush1.msra.mxu0 0.0
        %3965 = vmatprep.subr.mxu0 0.0
        %3966 = vmatpush1.msra.mxu0 0.0
        %3967 = vmatprep.subr.mxu0 0.0
        %3968 = vmatpush1.msra.mxu0 0.0
        %3969 = vmatprep.subr.mxu0 0.0
        %3970 = vmatpush1.msra.mxu0 0.0
        %3971 = vmatprep.subr.mxu0 0.0
        %3972 = vmatpush1.msra.mxu0 0.0
        %3973 = vmatprep.subr.mxu0 0.0
        %3974 = vmatpush1.msra.mxu0 0.0
        %3975 = vmatprep.subr.mxu0 0.0
        %3976 = vmatpush1.msra.mxu0 0.0
        %3977 = vmatprep.subr.mxu0 0.0
        %3978 = vmatpush1.msra.mxu0 0.0
        %3979 = vmatprep.subr.mxu0 0.0
        %3980 = vmatpush1.msra.mxu0 0.0
        %3981 = vmatprep.subr.mxu0 0.0
        %3982 = vmatpush1.msra.mxu0 0.0
        %3983 = vmatprep.subr.mxu0 0.0
        %3984 = vmatpush1.msra.mxu0 0.0
        %3985 = vmatprep.subr.mxu0 0.0
        %3986 = vmatpush1.msra.mxu0 0.0
        %3987 = vmatprep.subr.mxu0 0.0
        %3988 = vmatpush1.msra.mxu0 0.0
        %3989 = vmatprep.subr.mxu0 0.0
        %3990 = vmatpush1.msra.mxu0 0.0
        %3991 = vmatprep.subr.mxu0 0.0
        %3992 = vmatpush1.msra.mxu0 0.0
        %3993 = vmatprep.subr.mxu0 0.0
        %3994 = vmatpush1.msra.mxu0 0.0
        %3995 = vmatprep.subr.mxu0 0.0
        %3996 = vmatpush1.msra.mxu0 0.0
        %3997 = vmatprep.mubr.f32.mxu0 0.0
        %3998 = vmatmul.mubr.f32.gmra.mrb[0].mxu0 %v3931
        %v3999 = vpop.f32.mrb[0].mxu0
        %v4000 = vadd.f32 %v3927, %v3999
        %v4001 = vpop.f32.mrb[0].mxu0
        %4002 = vdwg.mxu0
        %v4003 = vld [vmem:[#allocation4 + $0x2] sm:$0x1]
        %s4004 = scalar_lea.vmem %s5, 64
        %v4005 = vld [vmem:[%s4004] sm:$0xf]
        %v4006 = vld [vmem:[%s4004 + $0x4] sm:$0xf]
        %v4007 = vld [vmem:[%s4004 + $0x8] sm:$0xf]
        %v4008 = vld [vmem:[%s4004 + $0xc] sm:$0xf]
        %v4009 = vld [vmem:[%s4004 + $0x10] sm:$0xf]
        %v4010 = vld [vmem:[%s4004 + $0x14] sm:$0xf]
        %v4011 = vld [vmem:[%s4004 + $0x18] sm:$0xf]
        %v4012 = vld [vmem:[%s4004 + $0x1c] sm:$0xf]
        %v4013 = vunpack.c.l.bf16 %v4005
        %v4014 = vunpack.c.l.bf16 %v4006
        %v4015 = vunpack.c.l.bf16 %v4007
        %v4016 = vunpack.c.l.bf16 %v4008
        %v4017 = vunpack.c.l.bf16 %v4009
        %v4018 = vunpack.c.l.bf16 %v4010
        %v4019 = vunpack.c.l.bf16 %v4011
        %v4020 = vunpack.c.l.bf16 %v4012
        %v4022 = vsel %vm3782, %v4003, 0
        %4024 = vmatprep.subr.mxu0 0.0
        %4025 = vmatpush1.msra.mxu0 %v4013
        %4026 = vmatprep.subr.mxu0 0.0
        %4027 = vmatpush1.msra.mxu0 %v4014
        %4028 = vmatprep.subr.mxu0 0.0
        %4029 = vmatpush1.msra.mxu0 %v4015
        %4030 = vmatprep.subr.mxu0 0.0
        %4031 = vmatpush1.msra.mxu0 %v4016
        %4032 = vmatprep.subr.mxu0 0.0
        %4033 = vmatpush1.msra.mxu0 %v4017
        %4034 = vmatprep.subr.mxu0 0.0
        %4035 = vmatpush1.msra.mxu0 %v4018
        %4036 = vmatprep.subr.mxu0 0.0
        %4037 = vmatpush1.msra.mxu0 %v4019
        %4038 = vmatprep.subr.mxu0 0.0
        %4039 = vmatpush1.msra.mxu0 %v4020
        %4040 = vmatprep.subr.mxu0 0.0
        %4041 = vmatpush1.msra.mxu0 0.0
        %4042 = vmatprep.subr.mxu0 0.0
        %4043 = vmatpush1.msra.mxu0 0.0
        %4044 = vmatprep.subr.mxu0 0.0
        %4045 = vmatpush1.msra.mxu0 0.0
        %4046 = vmatprep.subr.mxu0 0.0
        %4047 = vmatpush1.msra.mxu0 0.0
        %4048 = vmatprep.subr.mxu0 0.0
        %4049 = vmatpush1.msra.mxu0 0.0
        %4050 = vmatprep.subr.mxu0 0.0
        %4051 = vmatpush1.msra.mxu0 0.0
        %4052 = vmatprep.subr.mxu0 0.0
        %4053 = vmatpush1.msra.mxu0 0.0
        %4054 = vmatprep.subr.mxu0 0.0
        %4055 = vmatpush1.msra.mxu0 0.0
        %4056 = vmatprep.subr.mxu0 0.0
        %4057 = vmatpush1.msra.mxu0 0.0
        %4058 = vmatprep.subr.mxu0 0.0
        %4059 = vmatpush1.msra.mxu0 0.0
        %4060 = vmatprep.subr.mxu0 0.0
        %4061 = vmatpush1.msra.mxu0 0.0
        %4062 = vmatprep.subr.mxu0 0.0
        %4063 = vmatpush1.msra.mxu0 0.0
        %4064 = vmatprep.subr.mxu0 0.0
        %4065 = vmatpush1.msra.mxu0 0.0
        %4066 = vmatprep.subr.mxu0 0.0
        %4067 = vmatpush1.msra.mxu0 0.0
        %4068 = vmatprep.subr.mxu0 0.0
        %4069 = vmatpush1.msra.mxu0 0.0
        %4070 = vmatprep.subr.mxu0 0.0
        %4071 = vmatpush1.msra.mxu0 0.0
        %4072 = vmatprep.subr.mxu0 0.0
        %4073 = vmatpush1.msra.mxu0 0.0
        %4074 = vmatprep.subr.mxu0 0.0
        %4075 = vmatpush1.msra.mxu0 0.0
        %4076 = vmatprep.subr.mxu0 0.0
        %4077 = vmatpush1.msra.mxu0 0.0
        %4078 = vmatprep.subr.mxu0 0.0
        %4079 = vmatpush1.msra.mxu0 0.0
        %4080 = vmatprep.subr.mxu0 0.0
        %4081 = vmatpush1.msra.mxu0 0.0
        %4082 = vmatprep.subr.mxu0 0.0
        %4083 = vmatpush1.msra.mxu0 0.0
        %4084 = vmatprep.subr.mxu0 0.0
        %4085 = vmatpush1.msra.mxu0 0.0
        %4086 = vmatprep.subr.mxu0 0.0
        %4087 = vmatpush1.msra.mxu0 0.0
        %4088 = vmatprep.mubr.f32.mxu0 0.0
        %4089 = vmatmul.mubr.f32.gmra.mrb[0].mxu0 %v4022
        %v4090 = vpop.f32.mrb[0].mxu0
        %v4091 = vadd.f32 0.0, %v4090
        %v4092 = vpop.f32.mrb[0].mxu0
        %4093 = vdwg.mxu0
        %v4094 = vadd.f32 %v4000, %v4091
        %v4095 = vld [vmem:[#allocation4 + $0x3] sm:$0x1]
        %s4096 = scalar_lea.vmem %s5, 96
        %v4097 = vld [vmem:[%s4096] sm:$0xf]
        %v4098 = vld [vmem:[%s4096 + $0x4] sm:$0xf]
        %v4099 = vld [vmem:[%s4096 + $0x8] sm:$0xf]
        %v4100 = vld [vmem:[%s4096 + $0xc] sm:$0xf]
        %v4101 = vld [vmem:[%s4096 + $0x10] sm:$0xf]
        %v4102 = vld [vmem:[%s4096 + $0x14] sm:$0xf]
        %v4103 = vld [vmem:[%s4096 + $0x18] sm:$0xf]
        %v4104 = vld [vmem:[%s4096 + $0x1c] sm:$0xf]
        %v4105 = vunpack.c.l.bf16 %v4097
        %v4106 = vunpack.c.l.bf16 %v4098
        %v4107 = vunpack.c.l.bf16 %v4099
        %v4108 = vunpack.c.l.bf16 %v4100
        %v4109 = vunpack.c.l.bf16 %v4101
        %v4110 = vunpack.c.l.bf16 %v4102
        %v4111 = vunpack.c.l.bf16 %v4103
        %v4112 = vunpack.c.l.bf16 %v4104
        %v4114 = vsel %vm3782, %v4095, 0
        %4116 = vmatprep.subr.mxu0 0.0
        %4117 = vmatpush1.msra.mxu0 %v4105
        %4118 = vmatprep.subr.mxu0 0.0
        %4119 = vmatpush1.msra.mxu0 %v4106
        %4120 = vmatprep.subr.mxu0 0.0
        %4121 = vmatpush1.msra.mxu0 %v4107
        %4122 = vmatprep.subr.mxu0 0.0
        %4123 = vmatpush1.msra.mxu0 %v4108
        %4124 = vmatprep.subr.mxu0 0.0
        %4125 = vmatpush1.msra.mxu0 %v4109
        %4126 = vmatprep.subr.mxu0 0.0
        %4127 = vmatpush1.msra.mxu0 %v4110
        %4128 = vmatprep.subr.mxu0 0.0
        %4129 = vmatpush1.msra.mxu0 %v4111
        %4130 = vmatprep.subr.mxu0 0.0
        %4131 = vmatpush1.msra.mxu0 %v4112
        %4132 = vmatprep.subr.mxu0 0.0
        %4133 = vmatpush1.msra.mxu0 0.0
        %4134 = vmatprep.subr.mxu0 0.0
        %4135 = vmatpush1.msra.mxu0 0.0
        %4136 = vmatprep.subr.mxu0 0.0
        %4137 = vmatpush1.msra.mxu0 0.0
        %4138 = vmatprep.subr.mxu0 0.0
        %4139 = vmatpush1.msra.mxu0 0.0
        %4140 = vmatprep.subr.mxu0 0.0
        %4141 = vmatpush1.msra.mxu0 0.0
        %4142 = vmatprep.subr.mxu0 0.0
        %4143 = vmatpush1.msra.mxu0 0.0
        %4144 = vmatprep.subr.mxu0 0.0
        %4145 = vmatpush1.msra.mxu0 0.0
        %4146 = vmatprep.subr.mxu0 0.0
        %4147 = vmatpush1.msra.mxu0 0.0
        %4148 = vmatprep.subr.mxu0 0.0
        %4149 = vmatpush1.msra.mxu0 0.0
        %4150 = vmatprep.subr.mxu0 0.0
        %4151 = vmatpush1.msra.mxu0 0.0
        %4152 = vmatprep.subr.mxu0 0.0
        %4153 = vmatpush1.msra.mxu0 0.0
        %4154 = vmatprep.subr.mxu0 0.0
        %4155 = vmatpush1.msra.mxu0 0.0
        %4156 = vmatprep.subr.mxu0 0.0
        %4157 = vmatpush1.msra.mxu0 0.0
        %4158 = vmatprep.subr.mxu0 0.0
        %4159 = vmatpush1.msra.mxu0 0.0
        %4160 = vmatprep.subr.mxu0 0.0
        %4161 = vmatpush1.msra.mxu0 0.0
        %4162 = vmatprep.subr.mxu0 0.0
        %4163 = vmatpush1.msra.mxu0 0.0
        %4164 = vmatprep.subr.mxu0 0.0
        %4165 = vmatpush1.msra.mxu0 0.0
        %4166 = vmatprep.subr.mxu0 0.0
        %4167 = vmatpush1.msra.mxu0 0.0
        %4168 = vmatprep.subr.mxu0 0.0
        %4169 = vmatpush1.msra.mxu0 0.0
        %4170 = vmatprep.subr.mxu0 0.0
        %4171 = vmatpush1.msra.mxu0 0.0
        %4172 = vmatprep.subr.mxu0 0.0
        %4173 = vmatpush1.msra.mxu0 0.0
        %4174 = vmatprep.subr.mxu0 0.0
        %4175 = vmatpush1.msra.mxu0 0.0
        %4176 = vmatprep.subr.mxu0 0.0
        %4177 = vmatpush1.msra.mxu0 0.0
        %4178 = vmatprep.subr.mxu0 0.0
        %4179 = vmatpush1.msra.mxu0 0.0
        %4180 = vmatprep.mubr.f32.mxu0 0.0
        %4181 = vmatmul.mubr.f32.gmra.mrb[0].mxu0 %v4114
        %v4182 = vpop.f32.mrb[0].mxu0
        %v4183 = vadd.f32 0.0, %v4182
        %v4184 = vpop.f32.mrb[0].mxu0
        %4185 = vdwg.mxu0
        %v4186 = vadd.f32 %v4094, %v4183
        %v4187 = vld [vmem:[#allocation4 + $0x4] sm:$0x1]
        %s4188 = scalar_lea.vmem %s5, 128
        %v4189 = vld [vmem:[%s4188] sm:$0xf]
        %v4190 = vld [vmem:[%s4188 + $0x4] sm:$0xf]
        %v4191 = vld [vmem:[%s4188 + $0x8] sm:$0xf]
        %v4192 = vld [vmem:[%s4188 + $0xc] sm:$0xf]
        %v4193 = vld [vmem:[%s4188 + $0x10] sm:$0xf]
        %v4194 = vld [vmem:[%s4188 + $0x14] sm:$0xf]
        %v4195 = vld [vmem:[%s4188 + $0x18] sm:$0xf]
        %v4196 = vld [vmem:[%s4188 + $0x1c] sm:$0xf]
        %v4197 = vunpack.c.l.bf16 %v4189
        %v4198 = vunpack.c.l.bf16 %v4190
        %v4199 = vunpack.c.l.bf16 %v4191
        %v4200 = vunpack.c.l.bf16 %v4192
        %v4201 = vunpack.c.l.bf16 %v4193
        %v4202 = vunpack.c.l.bf16 %v4194
        %v4203 = vunpack.c.l.bf16 %v4195
        %v4204 = vunpack.c.l.bf16 %v4196
        %v4206 = vsel %vm3782, %v4187, 0
        %4208 = vmatprep.subr.mxu0 0.0
        %4209 = vmatpush1.msra.mxu0 %v4197
        %4210 = vmatprep.subr.mxu0 0.0
        %4211 = vmatpush1.msra.mxu0 %v4198
        %4212 = vmatprep.subr.mxu0 0.0
        %4213 = vmatpush1.msra.mxu0 %v4199
        %4214 = vmatprep.subr.mxu0 0.0
        %4215 = vmatpush1.msra.mxu0 %v4200
        %4216 = vmatprep.subr.mxu0 0.0
        %4217 = vmatpush1.msra.mxu0 %v4201
        %4218 = vmatprep.subr.mxu0 0.0
        %4219 = vmatpush1.msra.mxu0 %v4202
        %4220 = vmatprep.subr.mxu0 0.0
        %4221 = vmatpush1.msra.mxu0 %v4203
        %4222 = vmatprep.subr.mxu0 0.0
        %4223 = vmatpush1.msra.mxu0 %v4204
        %4224 = vmatprep.subr.mxu0 0.0
        %4225 = vmatpush1.msra.mxu0 0.0
        %4226 = vmatprep.subr.mxu0 0.0
        %4227 = vmatpush1.msra.mxu0 0.0
        %4228 = vmatprep.subr.mxu0 0.0
        %4229 = vmatpush1.msra.mxu0 0.0
        %4230 = vmatprep.subr.mxu0 0.0
        %4231 = vmatpush1.msra.mxu0 0.0
        %4232 = vmatprep.subr.mxu0 0.0
        %4233 = vmatpush1.msra.mxu0 0.0
        %4234 = vmatprep.subr.mxu0 0.0
        %4235 = vmatpush1.msra.mxu0 0.0
        %4236 = vmatprep.subr.mxu0 0.0
        %4237 = vmatpush1.msra.mxu0 0.0
        %4238 = vmatprep.subr.mxu0 0.0
        %4239 = vmatpush1.msra.mxu0 0.0
        %4240 = vmatprep.subr.mxu0 0.0
        %4241 = vmatpush1.msra.mxu0 0.0
        %4242 = vmatprep.subr.mxu0 0.0
        %4243 = vmatpush1.msra.mxu0 0.0
        %4244 = vmatprep.subr.mxu0 0.0
        %4245 = vmatpush1.msra.mxu0 0.0
        %4246 = vmatprep.subr.mxu0 0.0
        %4247 = vmatpush1.msra.mxu0 0.0
        %4248 = vmatprep.subr.mxu0 0.0
        %4249 = vmatpush1.msra.mxu0 0.0
        %4250 = vmatprep.subr.mxu0 0.0
        %4251 = vmatpush1.msra.mxu0 0.0
        %4252 = vmatprep.subr.mxu0 0.0
        %4253 = vmatpush1.msra.mxu0 0.0
        %4254 = vmatprep.subr.mxu0 0.0
        %4255 = vmatpush1.msra.mxu0 0.0
        %4256 = vmatprep.subr.mxu0 0.0
        %4257 = vmatpush1.msra.mxu0 0.0
        %4258 = vmatprep.subr.mxu0 0.0
        %4259 = vmatpush1.msra.mxu0 0.0
        %4260 = vmatprep.subr.mxu0 0.0
        %4261 = vmatpush1.msra.mxu0 0.0
        %4262 = vmatprep.subr.mxu0 0.0
        %4263 = vmatpush1.msra.mxu0 0.0
        %4264 = vmatprep.subr.mxu0 0.0
        %4265 = vmatpush1.msra.mxu0 0.0
        %4266 = vmatprep.subr.mxu0 0.0
        %4267 = vmatpush1.msra.mxu0 0.0
        %4268 = vmatprep.subr.mxu0 0.0
        %4269 = vmatpush1.msra.mxu0 0.0
        %4270 = vmatprep.subr.mxu0 0.0
        %4271 = vmatpush1.msra.mxu0 0.0
        %4272 = vmatprep.mubr.f32.mxu0 0.0
        %4273 = vmatmul.mubr.f32.gmra.mrb[0].mxu0 %v4206
        %v4274 = vpop.f32.mrb[0].mxu0
        %v4275 = vadd.f32 0.0, %v4274
        %v4276 = vpop.f32.mrb[0].mxu0
        %4277 = vdwg.mxu0
        %v4278 = vadd.f32 %v4186, %v4275
        %v4279 = vld [vmem:[#allocation4 + $0x5] sm:$0x1]
        %s4280 = scalar_lea.vmem %s5, 160
        %v4281 = vld [vmem:[%s4280] sm:$0xf]
        %v4282 = vld [vmem:[%s4280 + $0x4] sm:$0xf]
        %v4283 = vld [vmem:[%s4280 + $0x8] sm:$0xf]
        %v4284 = vld [vmem:[%s4280 + $0xc] sm:$0xf]
        %v4285 = vld [vmem:[%s4280 + $0x10] sm:$0xf]
        %v4286 = vld [vmem:[%s4280 + $0x14] sm:$0xf]
        %v4287 = vld [vmem:[%s4280 + $0x18] sm:$0xf]
        %v4288 = vld [vmem:[%s4280 + $0x1c] sm:$0xf]
        %v4289 = vunpack.c.l.bf16 %v4281
        %v4290 = vunpack.c.l.bf16 %v4282
        %v4291 = vunpack.c.l.bf16 %v4283
        %v4292 = vunpack.c.l.bf16 %v4284
        %v4293 = vunpack.c.l.bf16 %v4285
        %v4294 = vunpack.c.l.bf16 %v4286
        %v4295 = vunpack.c.l.bf16 %v4287
        %v4296 = vunpack.c.l.bf16 %v4288
        %v4298 = vsel %vm3782, %v4279, 0
        %4300 = vmatprep.subr.mxu0 0.0
        %4301 = vmatpush1.msra.mxu0 %v4289
        %4302 = vmatprep.subr.mxu0 0.0
        %4303 = vmatpush1.msra.mxu0 %v4290
        %4304 = vmatprep.subr.mxu0 0.0
        %4305 = vmatpush1.msra.mxu0 %v4291
        %4306 = vmatprep.subr.mxu0 0.0
        %4307 = vmatpush1.msra.mxu0 %v4292
        %4308 = vmatprep.subr.mxu0 0.0
        %4309 = vmatpush1.msra.mxu0 %v4293
        %4310 = vmatprep.subr.mxu0 0.0
        %4311 = vmatpush1.msra.mxu0 %v4294
        %4312 = vmatprep.subr.mxu0 0.0
        %4313 = vmatpush1.msra.mxu0 %v4295
        %4314 = vmatprep.subr.mxu0 0.0
        %4315 = vmatpush1.msra.mxu0 %v4296
        %4316 = vmatprep.subr.mxu0 0.0
        %4317 = vmatpush1.msra.mxu0 0.0
        %4318 = vmatprep.subr.mxu0 0.0
        %4319 = vmatpush1.msra.mxu0 0.0
        %4320 = vmatprep.subr.mxu0 0.0
        %4321 = vmatpush1.msra.mxu0 0.0
        %4322 = vmatprep.subr.mxu0 0.0
        %4323 = vmatpush1.msra.mxu0 0.0
        %4324 = vmatprep.subr.mxu0 0.0
        %4325 = vmatpush1.msra.mxu0 0.0
        %4326 = vmatprep.subr.mxu0 0.0
        %4327 = vmatpush1.msra.mxu0 0.0
        %4328 = vmatprep.subr.mxu0 0.0
        %4329 = vmatpush1.msra.mxu0 0.0
        %4330 = vmatprep.subr.mxu0 0.0
        %4331 = vmatpush1.msra.mxu0 0.0
        %4332 = vmatprep.subr.mxu0 0.0
        %4333 = vmatpush1.msra.mxu0 0.0
        %4334 = vmatprep.subr.mxu0 0.0
        %4335 = vmatpush1.msra.mxu0 0.0
        %4336 = vmatprep.subr.mxu0 0.0
        %4337 = vmatpush1.msra.mxu0 0.0
        %4338 = vmatprep.subr.mxu0 0.0
        %4339 = vmatpush1.msra.mxu0 0.0
        %4340 = vmatprep.subr.mxu0 0.0
        %4341 = vmatpush1.msra.mxu0 0.0
        %4342 = vmatprep.subr.mxu0 0.0
        %4343 = vmatpush1.msra.mxu0 0.0
        %4344 = vmatprep.subr.mxu0 0.0
        %4345 = vmatpush1.msra.mxu0 0.0
        %4346 = vmatprep.subr.mxu0 0.0
        %4347 = vmatpush1.msra.mxu0 0.0
        %4348 = vmatprep.subr.mxu0 0.0
        %4349 = vmatpush1.msra.mxu0 0.0
        %4350 = vmatprep.subr.mxu0 0.0
        %4351 = vmatpush1.msra.mxu0 0.0
        %4352 = vmatprep.subr.mxu0 0.0
        %4353 = vmatpush1.msra.mxu0 0.0
        %4354 = vmatprep.subr.mxu0 0.0
        %4355 = vmatpush1.msra.mxu0 0.0
        %4356 = vmatprep.subr.mxu0 0.0
        %4357 = vmatpush1.msra.mxu0 0.0
        %4358 = vmatprep.subr.mxu0 0.0
        %4359 = vmatpush1.msra.mxu0 0.0
        %4360 = vmatprep.subr.mxu0 0.0
        %4361 = vmatpush1.msra.mxu0 0.0
        %4362 = vmatprep.subr.mxu0 0.0
        %4363 = vmatpush1.msra.mxu0 0.0
        %4364 = vmatprep.mubr.f32.mxu0 0.0
        %4365 = vmatmul.mubr.f32.gmra.mrb[0].mxu0 %v4298
        %v4366 = vpop.f32.mrb[0].mxu0
        %v4367 = vadd.f32 0.0, %v4366
        %v4368 = vpop.f32.mrb[0].mxu0
        %4369 = vdwg.mxu0
        %v4370 = vadd.f32 %v4278, %v4367
        %v4371 = vld [vmem:[#allocation4 + $0x6] sm:$0x1]
        %s4372 = scalar_lea.vmem %s5, 192
        %v4373 = vld [vmem:[%s4372] sm:$0xf]
        %v4374 = vld [vmem:[%s4372 + $0x4] sm:$0xf]
        %v4375 = vld [vmem:[%s4372 + $0x8] sm:$0xf]
        %v4376 = vld [vmem:[%s4372 + $0xc] sm:$0xf]
        %v4377 = vld [vmem:[%s4372 + $0x10] sm:$0xf]
        %v4378 = vld [vmem:[%s4372 + $0x14] sm:$0xf]
        %v4379 = vld [vmem:[%s4372 + $0x18] sm:$0xf]
        %v4380 = vld [vmem:[%s4372 + $0x1c] sm:$0xf]
        %v4381 = vunpack.c.l.bf16 %v4373
        %v4382 = vunpack.c.l.bf16 %v4374
        %v4383 = vunpack.c.l.bf16 %v4375
        %v4384 = vunpack.c.l.bf16 %v4376
        %v4385 = vunpack.c.l.bf16 %v4377
        %v4386 = vunpack.c.l.bf16 %v4378
        %v4387 = vunpack.c.l.bf16 %v4379
        %v4388 = vunpack.c.l.bf16 %v4380
        %v4390 = vsel %vm3782, %v4371, 0
        %4392 = vmatprep.subr.mxu0 0.0
        %4393 = vmatpush1.msra.mxu0 %v4381
        %4394 = vmatprep.subr.mxu0 0.0
        %4395 = vmatpush1.msra.mxu0 %v4382
        %4396 = vmatprep.subr.mxu0 0.0
        %4397 = vmatpush1.msra.mxu0 %v4383
        %4398 = vmatprep.subr.mxu0 0.0
        %4399 = vmatpush1.msra.mxu0 %v4384
        %4400 = vmatprep.subr.mxu0 0.0
        %4401 = vmatpush1.msra.mxu0 %v4385
        %4402 = vmatprep.subr.mxu0 0.0
        %4403 = vmatpush1.msra.mxu0 %v4386
        %4404 = vmatprep.subr.mxu0 0.0
        %4405 = vmatpush1.msra.mxu0 %v4387
        %4406 = vmatprep.subr.mxu0 0.0
        %4407 = vmatpush1.msra.mxu0 %v4388
        %4408 = vmatprep.subr.mxu0 0.0
        %4409 = vmatpush1.msra.mxu0 0.0
        %4410 = vmatprep.subr.mxu0 0.0
        %4411 = vmatpush1.msra.mxu0 0.0
        %4412 = vmatprep.subr.mxu0 0.0
        %4413 = vmatpush1.msra.mxu0 0.0
        %4414 = vmatprep.subr.mxu0 0.0
        %4415 = vmatpush1.msra.mxu0 0.0
        %4416 = vmatprep.subr.mxu0 0.0
        %4417 = vmatpush1.msra.mxu0 0.0
        %4418 = vmatprep.subr.mxu0 0.0
        %4419 = vmatpush1.msra.mxu0 0.0
        %4420 = vmatprep.subr.mxu0 0.0
        %4421 = vmatpush1.msra.mxu0 0.0
        %4422 = vmatprep.subr.mxu0 0.0
        %4423 = vmatpush1.msra.mxu0 0.0
        %4424 = vmatprep.subr.mxu0 0.0
        %4425 = vmatpush1.msra.mxu0 0.0
        %4426 = vmatprep.subr.mxu0 0.0
        %4427 = vmatpush1.msra.mxu0 0.0
        %4428 = vmatprep.subr.mxu0 0.0
        %4429 = vmatpush1.msra.mxu0 0.0
        %4430 = vmatprep.subr.mxu0 0.0
        %4431 = vmatpush1.msra.mxu0 0.0
        %4432 = vmatprep.subr.mxu0 0.0
        %4433 = vmatpush1.msra.mxu0 0.0
        %4434 = vmatprep.subr.mxu0 0.0
        %4435 = vmatpush1.msra.mxu0 0.0
        %4436 = vmatprep.subr.mxu0 0.0
        %4437 = vmatpush1.msra.mxu0 0.0
        %4438 = vmatprep.subr.mxu0 0.0
        %4439 = vmatpush1.msra.mxu0 0.0
        %4440 = vmatprep.subr.mxu0 0.0
        %4441 = vmatpush1.msra.mxu0 0.0
        %4442 = vmatprep.subr.mxu0 0.0
        %4443 = vmatpush1.msra.mxu0 0.0
        %4444 = vmatprep.subr.mxu0 0.0
        %4445 = vmatpush1.msra.mxu0 0.0
        %4446 = vmatprep.subr.mxu0 0.0
        %4447 = vmatpush1.msra.mxu0 0.0
        %4448 = vmatprep.subr.mxu0 0.0
        %4449 = vmatpush1.msra.mxu0 0.0
        %4450 = vmatprep.subr.mxu0 0.0
        %4451 = vmatpush1.msra.mxu0 0.0
        %4452 = vmatprep.subr.mxu0 0.0
        %4453 = vmatpush1.msra.mxu0 0.0
        %4454 = vmatprep.subr.mxu0 0.0
        %4455 = vmatpush1.msra.mxu0 0.0
        %4456 = vmatprep.mubr.f32.mxu0 0.0
        %4457 = vmatmul.mubr.f32.gmra.mrb[0].mxu0 %v4390
        %v4458 = vpop.f32.mrb[0].mxu0
        %v4459 = vadd.f32 0.0, %v4458
        %v4460 = vpop.f32.mrb[0].mxu0
        %4461 = vdwg.mxu0
        %v4462 = vadd.f32 %v4370, %v4459
        %v4463 = vld [vmem:[#allocation4 + $0x7] sm:$0x1]
        %s4464 = scalar_lea.vmem %s5, 224
        %v4465 = vld [vmem:[%s4464] sm:$0xf]
        %v4466 = vld [vmem:[%s4464 + $0x4] sm:$0xf]
        %v4467 = vld [vmem:[%s4464 + $0x8] sm:$0xf]
        %v4468 = vld [vmem:[%s4464 + $0xc] sm:$0xf]
        %v4469 = vld [vmem:[%s4464 + $0x10] sm:$0xf]
        %v4470 = vld [vmem:[%s4464 + $0x14] sm:$0xf]
        %v4471 = vld [vmem:[%s4464 + $0x18] sm:$0xf]
        %v4472 = vld [vmem:[%s4464 + $0x1c] sm:$0xf]
        %v4473 = vunpack.c.l.bf16 %v4465
        %v4474 = vunpack.c.l.bf16 %v4466
        %v4475 = vunpack.c.l.bf16 %v4467
        %v4476 = vunpack.c.l.bf16 %v4468
        %v4477 = vunpack.c.l.bf16 %v4469
        %v4478 = vunpack.c.l.bf16 %v4470
        %v4479 = vunpack.c.l.bf16 %v4471
        %v4480 = vunpack.c.l.bf16 %v4472
        %v4482 = vsel %vm3782, %v4463, 0
        %4484 = vmatprep.subr.mxu0 0.0
        %4485 = vmatpush1.msra.mxu0 %v4473
        %4486 = vmatprep.subr.mxu0 0.0
        %4487 = vmatpush1.msra.mxu0 %v4474
        %4488 = vmatprep.subr.mxu0 0.0
        %4489 = vmatpush1.msra.mxu0 %v4475
        %4490 = vmatprep.subr.mxu0 0.0
        %4491 = vmatpush1.msra.mxu0 %v4476
        %4492 = vmatprep.subr.mxu0 0.0
        %4493 = vmatpush1.msra.mxu0 %v4477
        %4494 = vmatprep.subr.mxu0 0.0
        %4495 = vmatpush1.msra.mxu0 %v4478
        %4496 = vmatprep.subr.mxu0 0.0
        %4497 = vmatpush1.msra.mxu0 %v4479
        %4498 = vmatprep.subr.mxu0 0.0
        %4499 = vmatpush1.msra.mxu0 %v4480
        %4500 = vmatprep.subr.mxu0 0.0
        %4501 = vmatpush1.msra.mxu0 0.0
        %4502 = vmatprep.subr.mxu0 0.0
        %4503 = vmatpush1.msra.mxu0 0.0
        %4504 = vmatprep.subr.mxu0 0.0
        %4505 = vmatpush1.msra.mxu0 0.0
        %4506 = vmatprep.subr.mxu0 0.0
        %4507 = vmatpush1.msra.mxu0 0.0
        %4508 = vmatprep.subr.mxu0 0.0
        %4509 = vmatpush1.msra.mxu0 0.0
        %4510 = vmatprep.subr.mxu0 0.0
        %4511 = vmatpush1.msra.mxu0 0.0
        %4512 = vmatprep.subr.mxu0 0.0
        %4513 = vmatpush1.msra.mxu0 0.0
        %4514 = vmatprep.subr.mxu0 0.0
        %4515 = vmatpush1.msra.mxu0 0.0
        %4516 = vmatprep.subr.mxu0 0.0
        %4517 = vmatpush1.msra.mxu0 0.0
        %4518 = vmatprep.subr.mxu0 0.0
        %4519 = vmatpush1.msra.mxu0 0.0
        %4520 = vmatprep.subr.mxu0 0.0
        %4521 = vmatpush1.msra.mxu0 0.0
        %4522 = vmatprep.subr.mxu0 0.0
        %4523 = vmatpush1.msra.mxu0 0.0
        %4524 = vmatprep.subr.mxu0 0.0
        %4525 = vmatpush1.msra.mxu0 0.0
        %4526 = vmatprep.subr.mxu0 0.0
        %4527 = vmatpush1.msra.mxu0 0.0
        %4528 = vmatprep.subr.mxu0 0.0
        %4529 = vmatpush1.msra.mxu0 0.0
        %4530 = vmatprep.subr.mxu0 0.0
        %4531 = vmatpush1.msra.mxu0 0.0
        %4532 = vmatprep.subr.mxu0 0.0
        %4533 = vmatpush1.msra.mxu0 0.0
        %4534 = vmatprep.subr.mxu0 0.0
        %4535 = vmatpush1.msra.mxu0 0.0
        %4536 = vmatprep.subr.mxu0 0.0
        %4537 = vmatpush1.msra.mxu0 0.0
        %4538 = vmatprep.subr.mxu0 0.0
        %4539 = vmatpush1.msra.mxu0 0.0
        %4540 = vmatprep.subr.mxu0 0.0
        %4541 = vmatpush1.msra.mxu0 0.0
        %4542 = vmatprep.subr.mxu0 0.0
        %4543 = vmatpush1.msra.mxu0 0.0
        %4544 = vmatprep.subr.mxu0 0.0
        %4545 = vmatpush1.msra.mxu0 0.0
        %4546 = vmatprep.subr.mxu0 0.0
        %4547 = vmatpush1.msra.mxu0 0.0
        %4548 = vmatprep.mubr.f32.mxu0 0.0
        %4549 = vmatmul.mubr.f32.gmra.mrb[0].mxu0 %v4482
        %v4550 = vpop.f32.mrb[0].mxu0
        %v4551 = vadd.f32 0.0, %v4550
        %v4552 = vpop.f32.mrb[0].mxu0
        %4553 = vdwg.mxu0
        %v4554 = vadd.f32 %v4462, %v4551
        %v4555 = vld [vmem:[#allocation4 + $0x8] sm:$0x1]
        %s4556 = scalar_lea.vmem %s5, 256
        %v4557 = vld [vmem:[%s4556] sm:$0xf]
        %v4558 = vld [vmem:[%s4556 + $0x4] sm:$0xf]
        %v4559 = vld [vmem:[%s4556 + $0x8] sm:$0xf]
        %v4560 = vld [vmem:[%s4556 + $0xc] sm:$0xf]
        %v4561 = vld [vmem:[%s4556 + $0x10] sm:$0xf]
        %v4562 = vld [vmem:[%s4556 + $0x14] sm:$0xf]
        %v4563 = vld [vmem:[%s4556 + $0x18] sm:$0xf]
        %v4564 = vld [vmem:[%s4556 + $0x1c] sm:$0xf]
        %v4565 = vunpack.c.l.bf16 %v4557
        %v4566 = vunpack.c.l.bf16 %v4558
        %v4567 = vunpack.c.l.bf16 %v4559
        %v4568 = vunpack.c.l.bf16 %v4560
        %v4569 = vunpack.c.l.bf16 %v4561
        %v4570 = vunpack.c.l.bf16 %v4562
        %v4571 = vunpack.c.l.bf16 %v4563
        %v4572 = vunpack.c.l.bf16 %v4564
        %v4574 = vsel %vm3782, %v4555, 0
        %4576 = vmatprep.subr.mxu0 0.0
        %4577 = vmatpush1.msra.mxu0 %v4565
        %4578 = vmatprep.subr.mxu0 0.0
        %4579 = vmatpush1.msra.mxu0 %v4566
        %4580 = vmatprep.subr.mxu0 0.0
        %4581 = vmatpush1.msra.mxu0 %v4567
        %4582 = vmatprep.subr.mxu0 0.0
        %4583 = vmatpush1.msra.mxu0 %v4568
        %4584 = vmatprep.subr.mxu0 0.0
        %4585 = vmatpush1.msra.mxu0 %v4569
        %4586 = vmatprep.subr.mxu0 0.0
        %4587 = vmatpush1.msra.mxu0 %v4570
        %4588 = vmatprep.subr.mxu0 0.0
        %4589 = vmatpush1.msra.mxu0 %v4571
        %4590 = vmatprep.subr.mxu0 0.0
        %4591 = vmatpush1.msra.mxu0 %v4572
        %4592 = vmatprep.subr.mxu0 0.0
        %4593 = vmatpush1.msra.mxu0 0.0
        %4594 = vmatprep.subr.mxu0 0.0
        %4595 = vmatpush1.msra.mxu0 0.0
        %4596 = vmatprep.subr.mxu0 0.0
        %4597 = vmatpush1.msra.mxu0 0.0
        %4598 = vmatprep.subr.mxu0 0.0
        %4599 = vmatpush1.msra.mxu0 0.0
        %4600 = vmatprep.subr.mxu0 0.0
        %4601 = vmatpush1.msra.mxu0 0.0
        %4602 = vmatprep.subr.mxu0 0.0
        %4603 = vmatpush1.msra.mxu0 0.0
        %4604 = vmatprep.subr.mxu0 0.0
        %4605 = vmatpush1.msra.mxu0 0.0
        %4606 = vmatprep.subr.mxu0 0.0
        %4607 = vmatpush1.msra.mxu0 0.0
        %4608 = vmatprep.subr.mxu0 0.0
        %4609 = vmatpush1.msra.mxu0 0.0
        %4610 = vmatprep.subr.mxu0 0.0
        %4611 = vmatpush1.msra.mxu0 0.0
        %4612 = vmatprep.subr.mxu0 0.0
        %4613 = vmatpush1.msra.mxu0 0.0
        %4614 = vmatprep.subr.mxu0 0.0
        %4615 = vmatpush1.msra.mxu0 0.0
        %4616 = vmatprep.subr.mxu0 0.0
        %4617 = vmatpush1.msra.mxu0 0.0
        %4618 = vmatprep.subr.mxu0 0.0
        %4619 = vmatpush1.msra.mxu0 0.0
        %4620 = vmatprep.subr.mxu0 0.0
        %4621 = vmatpush1.msra.mxu0 0.0
        %4622 = vmatprep.subr.mxu0 0.0
        %4623 = vmatpush1.msra.mxu0 0.0
        %4624 = vmatprep.subr.mxu0 0.0
        %4625 = vmatpush1.msra.mxu0 0.0
        %4626 = vmatprep.subr.mxu0 0.0
        %4627 = vmatpush1.msra.mxu0 0.0
        %4628 = vmatprep.subr.mxu0 0.0
        %4629 = vmatpush1.msra.mxu0 0.0
        %4630 = vmatprep.subr.mxu0 0.0
        %4631 = vmatpush1.msra.mxu0 0.0
        %4632 = vmatprep.subr.mxu0 0.0
        %4633 = vmatpush1.msra.mxu0 0.0
        %4634 = vmatprep.subr.mxu0 0.0
        %4635 = vmatpush1.msra.mxu0 0.0
        %4636 = vmatprep.subr.mxu0 0.0
        %4637 = vmatpush1.msra.mxu0 0.0
        %4638 = vmatprep.subr.mxu0 0.0
        %4639 = vmatpush1.msra.mxu0 0.0
        %4640 = vmatprep.mubr.f32.mxu0 0.0
        %4641 = vmatmul.mubr.f32.gmra.mrb[0].mxu0 %v4574
        %v4642 = vpop.f32.mrb[0].mxu0
        %v4643 = vadd.f32 0.0, %v4642
        %v4644 = vpop.f32.mrb[0].mxu0
        %4645 = vdwg.mxu0
        %v4646 = vadd.f32 %v4554, %v4643
        %v4647 = vld [vmem:[#allocation4 + $0x9] sm:$0x1]
        %s4648 = scalar_lea.vmem %s5, 288
        %v4649 = vld [vmem:[%s4648] sm:$0xf]
        %v4650 = vld [vmem:[%s4648 + $0x4] sm:$0xf]
        %v4651 = vld [vmem:[%s4648 + $0x8] sm:$0xf]
        %v4652 = vld [vmem:[%s4648 + $0xc] sm:$0xf]
        %v4653 = vld [vmem:[%s4648 + $0x10] sm:$0xf]
        %v4654 = vld [vmem:[%s4648 + $0x14] sm:$0xf]
        %v4655 = vld [vmem:[%s4648 + $0x18] sm:$0xf]
        %v4656 = vld [vmem:[%s4648 + $0x1c] sm:$0xf]
        %v4657 = vunpack.c.l.bf16 %v4649
        %v4658 = vunpack.c.l.bf16 %v4650
        %v4659 = vunpack.c.l.bf16 %v4651
        %v4660 = vunpack.c.l.bf16 %v4652
        %v4661 = vunpack.c.l.bf16 %v4653
        %v4662 = vunpack.c.l.bf16 %v4654
        %v4663 = vunpack.c.l.bf16 %v4655
        %v4664 = vunpack.c.l.bf16 %v4656
        %v4666 = vsel %vm3782, %v4647, 0
        %4668 = vmatprep.subr.mxu0 0.0
        %4669 = vmatpush1.msra.mxu0 %v4657
        %4670 = vmatprep.subr.mxu0 0.0
        %4671 = vmatpush1.msra.mxu0 %v4658
        %4672 = vmatprep.subr.mxu0 0.0
        %4673 = vmatpush1.msra.mxu0 %v4659
        %4674 = vmatprep.subr.mxu0 0.0
        %4675 = vmatpush1.msra.mxu0 %v4660
        %4676 = vmatprep.subr.mxu0 0.0
        %4677 = vmatpush1.msra.mxu0 %v4661
        %4678 = vmatprep.subr.mxu0 0.0
        %4679 = vmatpush1.msra.mxu0 %v4662
        %4680 = vmatprep.subr.mxu0 0.0
        %4681 = vmatpush1.msra.mxu0 %v4663
        %4682 = vmatprep.subr.mxu0 0.0
        %4683 = vmatpush1.msra.mxu0 %v4664
        %4684 = vmatprep.subr.mxu0 0.0
        %4685 = vmatpush1.msra.mxu0 0.0
        %4686 = vmatprep.subr.mxu0 0.0
        %4687 = vmatpush1.msra.mxu0 0.0
        %4688 = vmatprep.subr.mxu0 0.0
        %4689 = vmatpush1.msra.mxu0 0.0
        %4690 = vmatprep.subr.mxu0 0.0
        %4691 = vmatpush1.msra.mxu0 0.0
        %4692 = vmatprep.subr.mxu0 0.0
        %4693 = vmatpush1.msra.mxu0 0.0
        %4694 = vmatprep.subr.mxu0 0.0
        %4695 = vmatpush1.msra.mxu0 0.0
        %4696 = vmatprep.subr.mxu0 0.0
        %4697 = vmatpush1.msra.mxu0 0.0
        %4698 = vmatprep.subr.mxu0 0.0
        %4699 = vmatpush1.msra.mxu0 0.0
        %4700 = vmatprep.subr.mxu0 0.0
        %4701 = vmatpush1.msra.mxu0 0.0
        %4702 = vmatprep.subr.mxu0 0.0
        %4703 = vmatpush1.msra.mxu0 0.0
        %4704 = vmatprep.subr.mxu0 0.0
        %4705 = vmatpush1.msra.mxu0 0.0
        %4706 = vmatprep.subr.mxu0 0.0
        %4707 = vmatpush1.msra.mxu0 0.0
        %4708 = vmatprep.subr.mxu0 0.0
        %4709 = vmatpush1.msra.mxu0 0.0
        %4710 = vmatprep.subr.mxu0 0.0
        %4711 = vmatpush1.msra.mxu0 0.0
        %4712 = vmatprep.subr.mxu0 0.0
        %4713 = vmatpush1.msra.mxu0 0.0
        %4714 = vmatprep.subr.mxu0 0.0
        %4715 = vmatpush1.msra.mxu0 0.0
        %4716 = vmatprep.subr.mxu0 0.0
        %4717 = vmatpush1.msra.mxu0 0.0
        %4718 = vmatprep.subr.mxu0 0.0
        %4719 = vmatpush1.msra.mxu0 0.0
        %4720 = vmatprep.subr.mxu0 0.0
        %4721 = vmatpush1.msra.mxu0 0.0
        %4722 = vmatprep.subr.mxu0 0.0
        %4723 = vmatpush1.msra.mxu0 0.0
        %4724 = vmatprep.subr.mxu0 0.0
        %4725 = vmatpush1.msra.mxu0 0.0
        %4726 = vmatprep.subr.mxu0 0.0
        %4727 = vmatpush1.msra.mxu0 0.0
        %4728 = vmatprep.subr.mxu0 0.0
        %4729 = vmatpush1.msra.mxu0 0.0
        %4730 = vmatprep.subr.mxu0 0.0
        %4731 = vmatpush1.msra.mxu0 0.0
        %4732 = vmatprep.mubr.f32.mxu0 0.0
        %4733 = vmatmul.mubr.f32.gmra.mrb[0].mxu0 %v4666
        %v4734 = vpop.f32.mrb[0].mxu0
        %v4735 = vadd.f32 0.0, %v4734
        %v4736 = vpop.f32.mrb[0].mxu0
        %4737 = vdwg.mxu0
        %v4738 = vadd.f32 %v4646, %v4735
        %v4739 = vld [vmem:[#allocation4 + $0xa] sm:$0x1]
        %s4740 = scalar_lea.vmem %s5, 320
        %v4741 = vld [vmem:[%s4740] sm:$0xf]
        %v4742 = vld [vmem:[%s4740 + $0x4] sm:$0xf]
        %v4743 = vld [vmem:[%s4740 + $0x8] sm:$0xf]
        %v4744 = vld [vmem:[%s4740 + $0xc] sm:$0xf]
        %v4745 = vld [vmem:[%s4740 + $0x10] sm:$0xf]
        %v4746 = vld [vmem:[%s4740 + $0x14] sm:$0xf]
        %v4747 = vld [vmem:[%s4740 + $0x18] sm:$0xf]
        %v4748 = vld [vmem:[%s4740 + $0x1c] sm:$0xf]
        %v4749 = vunpack.c.l.bf16 %v4741
        %v4750 = vunpack.c.l.bf16 %v4742
        %v4751 = vunpack.c.l.bf16 %v4743
        %v4752 = vunpack.c.l.bf16 %v4744
        %v4753 = vunpack.c.l.bf16 %v4745
        %v4754 = vunpack.c.l.bf16 %v4746
        %v4755 = vunpack.c.l.bf16 %v4747
        %v4756 = vunpack.c.l.bf16 %v4748
        %v4758 = vsel %vm3782, %v4739, 0
        %4760 = vmatprep.subr.mxu0 0.0
        %4761 = vmatpush1.msra.mxu0 %v4749
        %4762 = vmatprep.subr.mxu0 0.0
        %4763 = vmatpush1.msra.mxu0 %v4750
        %4764 = vmatprep.subr.mxu0 0.0
        %4765 = vmatpush1.msra.mxu0 %v4751
        %4766 = vmatprep.subr.mxu0 0.0
        %4767 = vmatpush1.msra.mxu0 %v4752
        %4768 = vmatprep.subr.mxu0 0.0
        %4769 = vmatpush1.msra.mxu0 %v4753
        %4770 = vmatprep.subr.mxu0 0.0
        %4771 = vmatpush1.msra.mxu0 %v4754
        %4772 = vmatprep.subr.mxu0 0.0
        %4773 = vmatpush1.msra.mxu0 %v4755
        %4774 = vmatprep.subr.mxu0 0.0
        %4775 = vmatpush1.msra.mxu0 %v4756
        %4776 = vmatprep.subr.mxu0 0.0
        %4777 = vmatpush1.msra.mxu0 0.0
        %4778 = vmatprep.subr.mxu0 0.0
        %4779 = vmatpush1.msra.mxu0 0.0
        %4780 = vmatprep.subr.mxu0 0.0
        %4781 = vmatpush1.msra.mxu0 0.0
        %4782 = vmatprep.subr.mxu0 0.0
        %4783 = vmatpush1.msra.mxu0 0.0
        %4784 = vmatprep.subr.mxu0 0.0
        %4785 = vmatpush1.msra.mxu0 0.0
        %4786 = vmatprep.subr.mxu0 0.0
        %4787 = vmatpush1.msra.mxu0 0.0
        %4788 = vmatprep.subr.mxu0 0.0
        %4789 = vmatpush1.msra.mxu0 0.0
        %4790 = vmatprep.subr.mxu0 0.0
        %4791 = vmatpush1.msra.mxu0 0.0
        %4792 = vmatprep.subr.mxu0 0.0
        %4793 = vmatpush1.msra.mxu0 0.0
        %4794 = vmatprep.subr.mxu0 0.0
        %4795 = vmatpush1.msra.mxu0 0.0
        %4796 = vmatprep.subr.mxu0 0.0
        %4797 = vmatpush1.msra.mxu0 0.0
        %4798 = vmatprep.subr.mxu0 0.0
        %4799 = vmatpush1.msra.mxu0 0.0
        %4800 = vmatprep.subr.mxu0 0.0
        %4801 = vmatpush1.msra.mxu0 0.0
        %4802 = vmatprep.subr.mxu0 0.0
        %4803 = vmatpush1.msra.mxu0 0.0
        %4804 = vmatprep.subr.mxu0 0.0
        %4805 = vmatpush1.msra.mxu0 0.0
        %4806 = vmatprep.subr.mxu0 0.0
        %4807 = vmatpush1.msra.mxu0 0.0
        %4808 = vmatprep.subr.mxu0 0.0
        %4809 = vmatpush1.msra.mxu0 0.0
        %4810 = vmatprep.subr.mxu0 0.0
        %4811 = vmatpush1.msra.mxu0 0.0
        %4812 = vmatprep.subr.mxu0 0.0
        %4813 = vmatpush1.msra.mxu0 0.0
        %4814 = vmatprep.subr.mxu0 0.0
        %4815 = vmatpush1.msra.mxu0 0.0
        %4816 = vmatprep.subr.mxu0 0.0
        %4817 = vmatpush1.msra.mxu0 0.0
        %4818 = vmatprep.subr.mxu0 0.0
        %4819 = vmatpush1.msra.mxu0 0.0
        %4820 = vmatprep.subr.mxu0 0.0
        %4821 = vmatpush1.msra.mxu0 0.0
        %4822 = vmatprep.subr.mxu0 0.0
        %4823 = vmatpush1.msra.mxu0 0.0
        %4824 = vmatprep.mubr.f32.mxu0 0.0
        %4825 = vmatmul.mubr.f32.gmra.mrb[0].mxu0 %v4758
        %v4826 = vpop.f32.mrb[0].mxu0
        %v4827 = vadd.f32 0.0, %v4826
        %v4828 = vpop.f32.mrb[0].mxu0
        %4829 = vdwg.mxu0
        %v4830 = vadd.f32 %v4738, %v4827
        %v4831 = vld [vmem:[#allocation4 + $0xb] sm:$0x1]
        %s4832 = scalar_lea.vmem %s5, 352
        %v4833 = vld [vmem:[%s4832] sm:$0xf]
        %v4834 = vld [vmem:[%s4832 + $0x4] sm:$0xf]
        %v4835 = vld [vmem:[%s4832 + $0x8] sm:$0xf]
        %v4836 = vld [vmem:[%s4832 + $0xc] sm:$0xf]
        %v4837 = vld [vmem:[%s4832 + $0x10] sm:$0xf]
        %v4838 = vld [vmem:[%s4832 + $0x14] sm:$0xf]
        %v4839 = vld [vmem:[%s4832 + $0x18] sm:$0xf]
        %v4840 = vld [vmem:[%s4832 + $0x1c] sm:$0xf]
        %v4841 = vunpack.c.l.bf16 %v4833
        %v4842 = vunpack.c.l.bf16 %v4834
        %v4843 = vunpack.c.l.bf16 %v4835
        %v4844 = vunpack.c.l.bf16 %v4836
        %v4845 = vunpack.c.l.bf16 %v4837
        %v4846 = vunpack.c.l.bf16 %v4838
        %v4847 = vunpack.c.l.bf16 %v4839
        %v4848 = vunpack.c.l.bf16 %v4840
        %v4850 = vsel %vm3782, %v4831, 0
        %4852 = vmatprep.subr.mxu0 0.0
        %4853 = vmatpush1.msra.mxu0 %v4841
        %4854 = vmatprep.subr.mxu0 0.0
        %4855 = vmatpush1.msra.mxu0 %v4842
        %4856 = vmatprep.subr.mxu0 0.0
        %4857 = vmatpush1.msra.mxu0 %v4843
        %4858 = vmatprep.subr.mxu0 0.0
        %4859 = vmatpush1.msra.mxu0 %v4844
        %4860 = vmatprep.subr.mxu0 0.0
        %4861 = vmatpush1.msra.mxu0 %v4845
        %4862 = vmatprep.subr.mxu0 0.0
        %4863 = vmatpush1.msra.mxu0 %v4846
        %4864 = vmatprep.subr.mxu0 0.0
        %4865 = vmatpush1.msra.mxu0 %v4847
        %4866 = vmatprep.subr.mxu0 0.0
        %4867 = vmatpush1.msra.mxu0 %v4848
        %4868 = vmatprep.subr.mxu0 0.0
        %4869 = vmatpush1.msra.mxu0 0.0
        %4870 = vmatprep.subr.mxu0 0.0
        %4871 = vmatpush1.msra.mxu0 0.0
        %4872 = vmatprep.subr.mxu0 0.0
        %4873 = vmatpush1.msra.mxu0 0.0
        %4874 = vmatprep.subr.mxu0 0.0
        %4875 = vmatpush1.msra.mxu0 0.0
        %4876 = vmatprep.subr.mxu0 0.0
        %4877 = vmatpush1.msra.mxu0 0.0
        %4878 = vmatprep.subr.mxu0 0.0
        %4879 = vmatpush1.msra.mxu0 0.0
        %4880 = vmatprep.subr.mxu0 0.0
        %4881 = vmatpush1.msra.mxu0 0.0
        %4882 = vmatprep.subr.mxu0 0.0
        %4883 = vmatpush1.msra.mxu0 0.0
        %4884 = vmatprep.subr.mxu0 0.0
        %4885 = vmatpush1.msra.mxu0 0.0
        %4886 = vmatprep.subr.mxu0 0.0
        %4887 = vmatpush1.msra.mxu0 0.0
        %4888 = vmatprep.subr.mxu0 0.0
        %4889 = vmatpush1.msra.mxu0 0.0
        %4890 = vmatprep.subr.mxu0 0.0
        %4891 = vmatpush1.msra.mxu0 0.0
        %4892 = vmatprep.subr.mxu0 0.0
        %4893 = vmatpush1.msra.mxu0 0.0
        %4894 = vmatprep.subr.mxu0 0.0
        %4895 = vmatpush1.msra.mxu0 0.0
        %4896 = vmatprep.subr.mxu0 0.0
        %4897 = vmatpush1.msra.mxu0 0.0
        %4898 = vmatprep.subr.mxu0 0.0
        %4899 = vmatpush1.msra.mxu0 0.0
        %4900 = vmatprep.subr.mxu0 0.0
        %4901 = vmatpush1.msra.mxu0 0.0
        %4902 = vmatprep.subr.mxu0 0.0
        %4903 = vmatpush1.msra.mxu0 0.0
        %4904 = vmatprep.subr.mxu0 0.0
        %4905 = vmatpush1.msra.mxu0 0.0
        %4906 = vmatprep.subr.mxu0 0.0
        %4907 = vmatpush1.msra.mxu0 0.0
        %4908 = vmatprep.subr.mxu0 0.0
        %4909 = vmatpush1.msra.mxu0 0.0
        %4910 = vmatprep.subr.mxu0 0.0
        %4911 = vmatpush1.msra.mxu0 0.0
        %4912 = vmatprep.subr.mxu0 0.0
        %4913 = vmatpush1.msra.mxu0 0.0
        %4914 = vmatprep.subr.mxu0 0.0
        %4915 = vmatpush1.msra.mxu0 0.0
        %4916 = vmatprep.mubr.f32.mxu0 0.0
        %4917 = vmatmul.mubr.f32.gmra.mrb[0].mxu0 %v4850
        %v4918 = vpop.f32.mrb[0].mxu0
        %v4919 = vadd.f32 0.0, %v4918
        %v4920 = vpop.f32.mrb[0].mxu0
        %4921 = vdwg.mxu0
        %v4922 = vadd.f32 %v4830, %v4919
        %v4923 = vld [vmem:[#allocation4 + $0xc] sm:$0x1]
        %s4924 = scalar_lea.vmem %s5, 384
        %v4925 = vld [vmem:[%s4924] sm:$0xf]
        %v4926 = vld [vmem:[%s4924 + $0x4] sm:$0xf]
        %v4927 = vld [vmem:[%s4924 + $0x8] sm:$0xf]
        %v4928 = vld [vmem:[%s4924 + $0xc] sm:$0xf]
        %v4929 = vld [vmem:[%s4924 + $0x10] sm:$0xf]
        %v4930 = vld [vmem:[%s4924 + $0x14] sm:$0xf]
        %v4931 = vld [vmem:[%s4924 + $0x18] sm:$0xf]
        %v4932 = vld [vmem:[%s4924 + $0x1c] sm:$0xf]
        %v4933 = vunpack.c.l.bf16 %v4925
        %v4934 = vunpack.c.l.bf16 %v4926
        %v4935 = vunpack.c.l.bf16 %v4927
        %v4936 = vunpack.c.l.bf16 %v4928
        %v4937 = vunpack.c.l.bf16 %v4929
        %v4938 = vunpack.c.l.bf16 %v4930
        %v4939 = vunpack.c.l.bf16 %v4931
        %v4940 = vunpack.c.l.bf16 %v4932
        %v4942 = vsel %vm3782, %v4923, 0
        %4944 = vmatprep.subr.mxu0 0.0
        %4945 = vmatpush1.msra.mxu0 %v4933
        %4946 = vmatprep.subr.mxu0 0.0
        %4947 = vmatpush1.msra.mxu0 %v4934
        %4948 = vmatprep.subr.mxu0 0.0
        %4949 = vmatpush1.msra.mxu0 %v4935
        %4950 = vmatprep.subr.mxu0 0.0
        %4951 = vmatpush1.msra.mxu0 %v4936
        %4952 = vmatprep.subr.mxu0 0.0
        %4953 = vmatpush1.msra.mxu0 %v4937
        %4954 = vmatprep.subr.mxu0 0.0
        %4955 = vmatpush1.msra.mxu0 %v4938
        %4956 = vmatprep.subr.mxu0 0.0
        %4957 = vmatpush1.msra.mxu0 %v4939
        %4958 = vmatprep.subr.mxu0 0.0
        %4959 = vmatpush1.msra.mxu0 %v4940
        %4960 = vmatprep.subr.mxu0 0.0
        %4961 = vmatpush1.msra.mxu0 0.0
        %4962 = vmatprep.subr.mxu0 0.0
        %4963 = vmatpush1.msra.mxu0 0.0
        %4964 = vmatprep.subr.mxu0 0.0
        %4965 = vmatpush1.msra.mxu0 0.0
        %4966 = vmatprep.subr.mxu0 0.0
        %4967 = vmatpush1.msra.mxu0 0.0
        %4968 = vmatprep.subr.mxu0 0.0
        %4969 = vmatpush1.msra.mxu0 0.0
        %4970 = vmatprep.subr.mxu0 0.0
        %4971 = vmatpush1.msra.mxu0 0.0
        %4972 = vmatprep.subr.mxu0 0.0
        %4973 = vmatpush1.msra.mxu0 0.0
        %4974 = vmatprep.subr.mxu0 0.0
        %4975 = vmatpush1.msra.mxu0 0.0
        %4976 = vmatprep.subr.mxu0 0.0
        %4977 = vmatpush1.msra.mxu0 0.0
        %4978 = vmatprep.subr.mxu0 0.0
        %4979 = vmatpush1.msra.mxu0 0.0
        %4980 = vmatprep.subr.mxu0 0.0
        %4981 = vmatpush1.msra.mxu0 0.0
        %4982 = vmatprep.subr.mxu0 0.0
        %4983 = vmatpush1.msra.mxu0 0.0
        %4984 = vmatprep.subr.mxu0 0.0
        %4985 = vmatpush1.msra.mxu0 0.0
        %4986 = vmatprep.subr.mxu0 0.0
        %4987 = vmatpush1.msra.mxu0 0.0
        %4988 = vmatprep.subr.mxu0 0.0
        %4989 = vmatpush1.msra.mxu0 0.0
        %4990 = vmatprep.subr.mxu0 0.0
        %4991 = vmatpush1.msra.mxu0 0.0
        %4992 = vmatprep.subr.mxu0 0.0
        %4993 = vmatpush1.msra.mxu0 0.0
        %4994 = vmatprep.subr.mxu0 0.0
        %4995 = vmatpush1.msra.mxu0 0.0
        %4996 = vmatprep.subr.mxu0 0.0
        %4997 = vmatpush1.msra.mxu0 0.0
        %4998 = vmatprep.subr.mxu0 0.0
        %4999 = vmatpush1.msra.mxu0 0.0
        %5000 = vmatprep.subr.mxu0 0.0
        %5001 = vmatpush1.msra.mxu0 0.0
        %5002 = vmatprep.subr.mxu0 0.0
        %5003 = vmatpush1.msra.mxu0 0.0
        %5004 = vmatprep.subr.mxu0 0.0
        %5005 = vmatpush1.msra.mxu0 0.0
        %5006 = vmatprep.subr.mxu0 0.0
        %5007 = vmatpush1.msra.mxu0 0.0
        %5008 = vmatprep.mubr.f32.mxu0 0.0
        %5009 = vmatmul.mubr.f32.gmra.mrb[0].mxu0 %v4942
        %v5010 = vpop.f32.mrb[0].mxu0
        %v5011 = vadd.f32 0.0, %v5010
        %v5012 = vpop.f32.mrb[0].mxu0
        %5013 = vdwg.mxu0
        %v5014 = vadd.f32 %v4922, %v5011
        %v5015 = vld [vmem:[#allocation4 + $0xd] sm:$0x1]
        %s5016 = scalar_lea.vmem %s5, 416
        %v5017 = vld [vmem:[%s5016] sm:$0xf]
        %v5018 = vld [vmem:[%s5016 + $0x4] sm:$0xf]
        %v5019 = vld [vmem:[%s5016 + $0x8] sm:$0xf]
        %v5020 = vld [vmem:[%s5016 + $0xc] sm:$0xf]
        %v5021 = vld [vmem:[%s5016 + $0x10] sm:$0xf]
        %v5022 = vld [vmem:[%s5016 + $0x14] sm:$0xf]
        %v5023 = vld [vmem:[%s5016 + $0x18] sm:$0xf]
        %v5024 = vld [vmem:[%s5016 + $0x1c] sm:$0xf]
        %v5025 = vunpack.c.l.bf16 %v5017
        %v5026 = vunpack.c.l.bf16 %v5018
        %v5027 = vunpack.c.l.bf16 %v5019
        %v5028 = vunpack.c.l.bf16 %v5020
        %v5029 = vunpack.c.l.bf16 %v5021
        %v5030 = vunpack.c.l.bf16 %v5022
        %v5031 = vunpack.c.l.bf16 %v5023
        %v5032 = vunpack.c.l.bf16 %v5024
        %v5034 = vsel %vm3782, %v5015, 0
        %5036 = vmatprep.subr.mxu0 0.0
        %5037 = vmatpush1.msra.mxu0 %v5025
        %5038 = vmatprep.subr.mxu0 0.0
        %5039 = vmatpush1.msra.mxu0 %v5026
        %5040 = vmatprep.subr.mxu0 0.0
        %5041 = vmatpush1.msra.mxu0 %v5027
        %5042 = vmatprep.subr.mxu0 0.0
        %5043 = vmatpush1.msra.mxu0 %v5028
        %5044 = vmatprep.subr.mxu0 0.0
        %5045 = vmatpush1.msra.mxu0 %v5029
        %5046 = vmatprep.subr.mxu0 0.0
        %5047 = vmatpush1.msra.mxu0 %v5030
        %5048 = vmatprep.subr.mxu0 0.0
        %5049 = vmatpush1.msra.mxu0 %v5031
        %5050 = vmatprep.subr.mxu0 0.0
        %5051 = vmatpush1.msra.mxu0 %v5032
        %5052 = vmatprep.subr.mxu0 0.0
        %5053 = vmatpush1.msra.mxu0 0.0
        %5054 = vmatprep.subr.mxu0 0.0
        %5055 = vmatpush1.msra.mxu0 0.0
        %5056 = vmatprep.subr.mxu0 0.0
        %5057 = vmatpush1.msra.mxu0 0.0
        %5058 = vmatprep.subr.mxu0 0.0
        %5059 = vmatpush1.msra.mxu0 0.0
        %5060 = vmatprep.subr.mxu0 0.0
        %5061 = vmatpush1.msra.mxu0 0.0
        %5062 = vmatprep.subr.mxu0 0.0
        %5063 = vmatpush1.msra.mxu0 0.0
        %5064 = vmatprep.subr.mxu0 0.0
        %5065 = vmatpush1.msra.mxu0 0.0
        %5066 = vmatprep.subr.mxu0 0.0
        %5067 = vmatpush1.msra.mxu0 0.0
        %5068 = vmatprep.subr.mxu0 0.0
        %5069 = vmatpush1.msra.mxu0 0.0
        %5070 = vmatprep.subr.mxu0 0.0
        %5071 = vmatpush1.msra.mxu0 0.0
        %5072 = vmatprep.subr.mxu0 0.0
        %5073 = vmatpush1.msra.mxu0 0.0
        %5074 = vmatprep.subr.mxu0 0.0
        %5075 = vmatpush1.msra.mxu0 0.0
        %5076 = vmatprep.subr.mxu0 0.0
        %5077 = vmatpush1.msra.mxu0 0.0
        %5078 = vmatprep.subr.mxu0 0.0
        %5079 = vmatpush1.msra.mxu0 0.0
        %5080 = vmatprep.subr.mxu0 0.0
        %5081 = vmatpush1.msra.mxu0 0.0
        %5082 = vmatprep.subr.mxu0 0.0
        %5083 = vmatpush1.msra.mxu0 0.0
        %5084 = vmatprep.subr.mxu0 0.0
        %5085 = vmatpush1.msra.mxu0 0.0
        %5086 = vmatprep.subr.mxu0 0.0
        %5087 = vmatpush1.msra.mxu0 0.0
        %5088 = vmatprep.subr.mxu0 0.0
        %5089 = vmatpush1.msra.mxu0 0.0
        %5090 = vmatprep.subr.mxu0 0.0
        %5091 = vmatpush1.msra.mxu0 0.0
        %5092 = vmatprep.subr.mxu0 0.0
        %5093 = vmatpush1.msra.mxu0 0.0
        %5094 = vmatprep.subr.mxu0 0.0
        %5095 = vmatpush1.msra.mxu0 0.0
        %5096 = vmatprep.subr.mxu0 0.0
        %5097 = vmatpush1.msra.mxu0 0.0
        %5098 = vmatprep.subr.mxu0 0.0
        %5099 = vmatpush1.msra.mxu0 0.0
        %5100 = vmatprep.mubr.f32.mxu0 0.0
        %5101 = vmatmul.mubr.f32.gmra.mrb[0].mxu0 %v5034
        %v5102 = vpop.f32.mrb[0].mxu0
        %v5103 = vadd.f32 0.0, %v5102
        %v5104 = vpop.f32.mrb[0].mxu0
        %5105 = vdwg.mxu0
        %v5106 = vadd.f32 %v5014, %v5103
        %v5107 = vld [vmem:[#allocation4 + $0xe] sm:$0x1]
        %s5108 = scalar_lea.vmem %s5, 448
        %v5109 = vld [vmem:[%s5108] sm:$0xf]
        %v5110 = vld [vmem:[%s5108 + $0x4] sm:$0xf]
        %v5111 = vld [vmem:[%s5108 + $0x8] sm:$0xf]
        %v5112 = vld [vmem:[%s5108 + $0xc] sm:$0xf]
        %v5113 = vld [vmem:[%s5108 + $0x10] sm:$0xf]
        %v5114 = vld [vmem:[%s5108 + $0x14] sm:$0xf]
        %v5115 = vld [vmem:[%s5108 + $0x18] sm:$0xf]
        %v5116 = vld [vmem:[%s5108 + $0x1c] sm:$0xf]
        %v5117 = vunpack.c.l.bf16 %v5109
        %v5118 = vunpack.c.l.bf16 %v5110
        %v5119 = vunpack.c.l.bf16 %v5111
        %v5120 = vunpack.c.l.bf16 %v5112
        %v5121 = vunpack.c.l.bf16 %v5113
        %v5122 = vunpack.c.l.bf16 %v5114
        %v5123 = vunpack.c.l.bf16 %v5115
        %v5124 = vunpack.c.l.bf16 %v5116
        %v5126 = vsel %vm3782, %v5107, 0
        %5128 = vmatprep.subr.mxu0 0.0
        %5129 = vmatpush1.msra.mxu0 %v5117
        %5130 = vmatprep.subr.mxu0 0.0
        %5131 = vmatpush1.msra.mxu0 %v5118
        %5132 = vmatprep.subr.mxu0 0.0
        %5133 = vmatpush1.msra.mxu0 %v5119
        %5134 = vmatprep.subr.mxu0 0.0
        %5135 = vmatpush1.msra.mxu0 %v5120
        %5136 = vmatprep.subr.mxu0 0.0
        %5137 = vmatpush1.msra.mxu0 %v5121
        %5138 = vmatprep.subr.mxu0 0.0
        %5139 = vmatpush1.msra.mxu0 %v5122
        %5140 = vmatprep.subr.mxu0 0.0
        %5141 = vmatpush1.msra.mxu0 %v5123
        %5142 = vmatprep.subr.mxu0 0.0
        %5143 = vmatpush1.msra.mxu0 %v5124
        %5144 = vmatprep.subr.mxu0 0.0
        %5145 = vmatpush1.msra.mxu0 0.0
        %5146 = vmatprep.subr.mxu0 0.0
        %5147 = vmatpush1.msra.mxu0 0.0
        %5148 = vmatprep.subr.mxu0 0.0
        %5149 = vmatpush1.msra.mxu0 0.0
        %5150 = vmatprep.subr.mxu0 0.0
        %5151 = vmatpush1.msra.mxu0 0.0
        %5152 = vmatprep.subr.mxu0 0.0
        %5153 = vmatpush1.msra.mxu0 0.0
        %5154 = vmatprep.subr.mxu0 0.0
        %5155 = vmatpush1.msra.mxu0 0.0
        %5156 = vmatprep.subr.mxu0 0.0
        %5157 = vmatpush1.msra.mxu0 0.0
        %5158 = vmatprep.subr.mxu0 0.0
        %5159 = vmatpush1.msra.mxu0 0.0
        %5160 = vmatprep.subr.mxu0 0.0
        %5161 = vmatpush1.msra.mxu0 0.0
        %5162 = vmatprep.subr.mxu0 0.0
        %5163 = vmatpush1.msra.mxu0 0.0
        %5164 = vmatprep.subr.mxu0 0.0
        %5165 = vmatpush1.msra.mxu0 0.0
        %5166 = vmatprep.subr.mxu0 0.0
        %5167 = vmatpush1.msra.mxu0 0.0
        %5168 = vmatprep.subr.mxu0 0.0
        %5169 = vmatpush1.msra.mxu0 0.0
        %5170 = vmatprep.subr.mxu0 0.0
        %5171 = vmatpush1.msra.mxu0 0.0
        %5172 = vmatprep.subr.mxu0 0.0
        %5173 = vmatpush1.msra.mxu0 0.0
        %5174 = vmatprep.subr.mxu0 0.0
        %5175 = vmatpush1.msra.mxu0 0.0
        %5176 = vmatprep.subr.mxu0 0.0
        %5177 = vmatpush1.msra.mxu0 0.0
        %5178 = vmatprep.subr.mxu0 0.0
        %5179 = vmatpush1.msra.mxu0 0.0
        %5180 = vmatprep.subr.mxu0 0.0
        %5181 = vmatpush1.msra.mxu0 0.0
        %5182 = vmatprep.subr.mxu0 0.0
        %5183 = vmatpush1.msra.mxu0 0.0
        %5184 = vmatprep.subr.mxu0 0.0
        %5185 = vmatpush1.msra.mxu0 0.0
        %5186 = vmatprep.subr.mxu0 0.0
        %5187 = vmatpush1.msra.mxu0 0.0
        %5188 = vmatprep.subr.mxu0 0.0
        %5189 = vmatpush1.msra.mxu0 0.0
        %5190 = vmatprep.subr.mxu0 0.0
        %5191 = vmatpush1.msra.mxu0 0.0
        %5192 = vmatprep.mubr.f32.mxu0 0.0
        %5193 = vmatmul.mubr.f32.gmra.mrb[0].mxu0 %v5126
        %v5194 = vpop.f32.mrb[0].mxu0
        %v5195 = vadd.f32 0.0, %v5194
        %v5196 = vpop.f32.mrb[0].mxu0
        %5197 = vdwg.mxu0
        %v5198 = vadd.f32 %v5106, %v5195
        %v5199 = vld [vmem:[#allocation4 + $0xf] sm:$0x1]
        %s5200 = scalar_lea.vmem %s5, 480
        %v5201 = vld [vmem:[%s5200] sm:$0xf]
        %v5202 = vld [vmem:[%s5200 + $0x4] sm:$0xf]
        %v5203 = vld [vmem:[%s5200 + $0x8] sm:$0xf]
        %v5204 = vld [vmem:[%s5200 + $0xc] sm:$0xf]
        %v5205 = vld [vmem:[%s5200 + $0x10] sm:$0xf]
        %v5206 = vld [vmem:[%s5200 + $0x14] sm:$0xf]
        %v5207 = vld [vmem:[%s5200 + $0x18] sm:$0xf]
        %v5208 = vld [vmem:[%s5200 + $0x1c] sm:$0xf]
        %v5209 = vunpack.c.l.bf16 %v5201
        %v5210 = vunpack.c.l.bf16 %v5202
        %v5211 = vunpack.c.l.bf16 %v5203
        %v5212 = vunpack.c.l.bf16 %v5204
        %v5213 = vunpack.c.l.bf16 %v5205
        %v5214 = vunpack.c.l.bf16 %v5206
        %v5215 = vunpack.c.l.bf16 %v5207
        %v5216 = vunpack.c.l.bf16 %v5208
        %v5218 = vsel %vm3782, %v5199, 0
        %5220 = vmatprep.subr.mxu0 0.0
        %5221 = vmatpush1.msra.mxu0 %v5209
        %5222 = vmatprep.subr.mxu0 0.0
        %5223 = vmatpush1.msra.mxu0 %v5210
        %5224 = vmatprep.subr.mxu0 0.0
        %5225 = vmatpush1.msra.mxu0 %v5211
        %5226 = vmatprep.subr.mxu0 0.0
        %5227 = vmatpush1.msra.mxu0 %v5212
        %5228 = vmatprep.subr.mxu0 0.0
        %5229 = vmatpush1.msra.mxu0 %v5213
        %5230 = vmatprep.subr.mxu0 0.0
        %5231 = vmatpush1.msra.mxu0 %v5214
        %5232 = vmatprep.subr.mxu0 0.0
        %5233 = vmatpush1.msra.mxu0 %v5215
        %5234 = vmatprep.subr.mxu0 0.0
        %5235 = vmatpush1.msra.mxu0 %v5216
        %5236 = vmatprep.subr.mxu0 0.0
        %5237 = vmatpush1.msra.mxu0 0.0
        %5238 = vmatprep.subr.mxu0 0.0
        %5239 = vmatpush1.msra.mxu0 0.0
        %5240 = vmatprep.subr.mxu0 0.0
        %5241 = vmatpush1.msra.mxu0 0.0
        %5242 = vmatprep.subr.mxu0 0.0
        %5243 = vmatpush1.msra.mxu0 0.0
        %5244 = vmatprep.subr.mxu0 0.0
        %5245 = vmatpush1.msra.mxu0 0.0
        %5246 = vmatprep.subr.mxu0 0.0
        %5247 = vmatpush1.msra.mxu0 0.0
        %5248 = vmatprep.subr.mxu0 0.0
        %5249 = vmatpush1.msra.mxu0 0.0
        %5250 = vmatprep.subr.mxu0 0.0
        %5251 = vmatpush1.msra.mxu0 0.0
        %5252 = vmatprep.subr.mxu0 0.0
        %5253 = vmatpush1.msra.mxu0 0.0
        %5254 = vmatprep.subr.mxu0 0.0
        %5255 = vmatpush1.msra.mxu0 0.0
        %5256 = vmatprep.subr.mxu0 0.0
        %5257 = vmatpush1.msra.mxu0 0.0
        %5258 = vmatprep.subr.mxu0 0.0
        %5259 = vmatpush1.msra.mxu0 0.0
        %5260 = vmatprep.subr.mxu0 0.0
        %5261 = vmatpush1.msra.mxu0 0.0
        %5262 = vmatprep.subr.mxu0 0.0
        %5263 = vmatpush1.msra.mxu0 0.0
        %5264 = vmatprep.subr.mxu0 0.0
        %5265 = vmatpush1.msra.mxu0 0.0
        %5266 = vmatprep.subr.mxu0 0.0
        %5267 = vmatpush1.msra.mxu0 0.0
        %5268 = vmatprep.subr.mxu0 0.0
        %5269 = vmatpush1.msra.mxu0 0.0
        %5270 = vmatprep.subr.mxu0 0.0
        %5271 = vmatpush1.msra.mxu0 0.0
        %5272 = vmatprep.subr.mxu0 0.0
        %5273 = vmatpush1.msra.mxu0 0.0
        %5274 = vmatprep.subr.mxu0 0.0
        %5275 = vmatpush1.msra.mxu0 0.0
        %5276 = vmatprep.subr.mxu0 0.0
        %5277 = vmatpush1.msra.mxu0 0.0
        %5278 = vmatprep.subr.mxu0 0.0
        %5279 = vmatpush1.msra.mxu0 0.0
        %5280 = vmatprep.subr.mxu0 0.0
        %5281 = vmatpush1.msra.mxu0 0.0
        %5282 = vmatprep.subr.mxu0 0.0
        %5283 = vmatpush1.msra.mxu0 0.0
        %5284 = vmatprep.mubr.f32.mxu0 0.0
        %5285 = vmatmul.mubr.f32.gmra.mrb[0].mxu0 %v5218
        %v5286 = vpop.f32.mrb[0].mxu0
        %v5287 = vadd.f32 0.0, %v5286
        %v5288 = vpop.f32.mrb[0].mxu0
        %5289 = vdwg.mxu0
        %v5290 = vadd.f32 %v5198, %v5287
        %v5291 = vld [vmem:[#allocation4 + $0x10] sm:$0x1]
        %s5292 = scalar_lea.vmem %s5, 512
        %v5293 = vld [vmem:[%s5292] sm:$0xf]
        %v5294 = vld [vmem:[%s5292 + $0x4] sm:$0xf]
        %v5295 = vld [vmem:[%s5292 + $0x8] sm:$0xf]
        %v5296 = vld [vmem:[%s5292 + $0xc] sm:$0xf]
        %v5297 = vld [vmem:[%s5292 + $0x10] sm:$0xf]
        %v5298 = vld [vmem:[%s5292 + $0x14] sm:$0xf]
        %v5299 = vld [vmem:[%s5292 + $0x18] sm:$0xf]
        %v5300 = vld [vmem:[%s5292 + $0x1c] sm:$0xf]
        %v5301 = vunpack.c.l.bf16 %v5293
        %v5302 = vunpack.c.l.bf16 %v5294
        %v5303 = vunpack.c.l.bf16 %v5295
        %v5304 = vunpack.c.l.bf16 %v5296
        %v5305 = vunpack.c.l.bf16 %v5297
        %v5306 = vunpack.c.l.bf16 %v5298
        %v5307 = vunpack.c.l.bf16 %v5299
        %v5308 = vunpack.c.l.bf16 %v5300
        %v5310 = vsel %vm3782, %v5291, 0
        %5312 = vmatprep.subr.mxu0 0.0
        %5313 = vmatpush1.msra.mxu0 %v5301
        %5314 = vmatprep.subr.mxu0 0.0
        %5315 = vmatpush1.msra.mxu0 %v5302
        %5316 = vmatprep.subr.mxu0 0.0
        %5317 = vmatpush1.msra.mxu0 %v5303
        %5318 = vmatprep.subr.mxu0 0.0
        %5319 = vmatpush1.msra.mxu0 %v5304
        %5320 = vmatprep.subr.mxu0 0.0
        %5321 = vmatpush1.msra.mxu0 %v5305
        %5322 = vmatprep.subr.mxu0 0.0
        %5323 = vmatpush1.msra.mxu0 %v5306
        %5324 = vmatprep.subr.mxu0 0.0
        %5325 = vmatpush1.msra.mxu0 %v5307
        %5326 = vmatprep.subr.mxu0 0.0
        %5327 = vmatpush1.msra.mxu0 %v5308
        %5328 = vmatprep.subr.mxu0 0.0
        %5329 = vmatpush1.msra.mxu0 0.0
        %5330 = vmatprep.subr.mxu0 0.0
        %5331 = vmatpush1.msra.mxu0 0.0
        %5332 = vmatprep.subr.mxu0 0.0
        %5333 = vmatpush1.msra.mxu0 0.0
        %5334 = vmatprep.subr.mxu0 0.0
        %5335 = vmatpush1.msra.mxu0 0.0
        %5336 = vmatprep.subr.mxu0 0.0
        %5337 = vmatpush1.msra.mxu0 0.0
        %5338 = vmatprep.subr.mxu0 0.0
        %5339 = vmatpush1.msra.mxu0 0.0
        %5340 = vmatprep.subr.mxu0 0.0
        %5341 = vmatpush1.msra.mxu0 0.0
        %5342 = vmatprep.subr.mxu0 0.0
        %5343 = vmatpush1.msra.mxu0 0.0
        %5344 = vmatprep.subr.mxu0 0.0
        %5345 = vmatpush1.msra.mxu0 0.0
        %5346 = vmatprep.subr.mxu0 0.0
        %5347 = vmatpush1.msra.mxu0 0.0
        %5348 = vmatprep.subr.mxu0 0.0
        %5349 = vmatpush1.msra.mxu0 0.0
        %5350 = vmatprep.subr.mxu0 0.0
        %5351 = vmatpush1.msra.mxu0 0.0
        %5352 = vmatprep.subr.mxu0 0.0
        %5353 = vmatpush1.msra.mxu0 0.0
        %5354 = vmatprep.subr.mxu0 0.0
        %5355 = vmatpush1.msra.mxu0 0.0
        %5356 = vmatprep.subr.mxu0 0.0
        %5357 = vmatpush1.msra.mxu0 0.0
        %5358 = vmatprep.subr.mxu0 0.0
        %5359 = vmatpush1.msra.mxu0 0.0
        %5360 = vmatprep.subr.mxu0 0.0
        %5361 = vmatpush1.msra.mxu0 0.0
        %5362 = vmatprep.subr.mxu0 0.0
        %5363 = vmatpush1.msra.mxu0 0.0
        %5364 = vmatprep.subr.mxu0 0.0
        %5365 = vmatpush1.msra.mxu0 0.0
        %5366 = vmatprep.subr.mxu0 0.0
        %5367 = vmatpush1.msra.mxu0 0.0
        %5368 = vmatprep.subr.mxu0 0.0
        %5369 = vmatpush1.msra.mxu0 0.0
        %5370 = vmatprep.subr.mxu0 0.0
        %5371 = vmatpush1.msra.mxu0 0.0
        %5372 = vmatprep.subr.mxu0 0.0
        %5373 = vmatpush1.msra.mxu0 0.0
        %5374 = vmatprep.subr.mxu0 0.0
        %5375 = vmatpush1.msra.mxu0 0.0
        %5376 = vmatprep.mubr.f32.mxu0 0.0
        %5377 = vmatmul.mubr.f32.gmra.mrb[0].mxu0 %v5310
        %v5378 = vpop.f32.mrb[0].mxu0
        %v5379 = vadd.f32 0.0, %v5378
        %v5380 = vpop.f32.mrb[0].mxu0
        %5381 = vdwg.mxu0
        %v5382 = vadd.f32 %v5290, %v5379
        %v5383 = vld [vmem:[#allocation4 + $0x11] sm:$0x1]
        %s5384 = scalar_lea.vmem %s5, 544
        %v5385 = vld [vmem:[%s5384] sm:$0xf]
        %v5386 = vld [vmem:[%s5384 + $0x4] sm:$0xf]
        %v5387 = vld [vmem:[%s5384 + $0x8] sm:$0xf]
        %v5388 = vld [vmem:[%s5384 + $0xc] sm:$0xf]
        %v5389 = vld [vmem:[%s5384 + $0x10] sm:$0xf]
        %v5390 = vld [vmem:[%s5384 + $0x14] sm:$0xf]
        %v5391 = vld [vmem:[%s5384 + $0x18] sm:$0xf]
        %v5392 = vld [vmem:[%s5384 + $0x1c] sm:$0xf]
        %v5393 = vunpack.c.l.bf16 %v5385
        %v5394 = vunpack.c.l.bf16 %v5386
        %v5395 = vunpack.c.l.bf16 %v5387
        %v5396 = vunpack.c.l.bf16 %v5388
        %v5397 = vunpack.c.l.bf16 %v5389
        %v5398 = vunpack.c.l.bf16 %v5390
        %v5399 = vunpack.c.l.bf16 %v5391
        %v5400 = vunpack.c.l.bf16 %v5392
        %v5402 = vsel %vm3782, %v5383, 0
        %5404 = vmatprep.subr.mxu0 0.0
        %5405 = vmatpush1.msra.mxu0 %v5393
        %5406 = vmatprep.subr.mxu0 0.0
        %5407 = vmatpush1.msra.mxu0 %v5394
        %5408 = vmatprep.subr.mxu0 0.0
        %5409 = vmatpush1.msra.mxu0 %v5395
        %5410 = vmatprep.subr.mxu0 0.0
        %5411 = vmatpush1.msra.mxu0 %v5396
        %5412 = vmatprep.subr.mxu0 0.0
        %5413 = vmatpush1.msra.mxu0 %v5397
        %5414 = vmatprep.subr.mxu0 0.0
        %5415 = vmatpush1.msra.mxu0 %v5398
        %5416 = vmatprep.subr.mxu0 0.0
        %5417 = vmatpush1.msra.mxu0 %v5399
        %5418 = vmatprep.subr.mxu0 0.0
        %5419 = vmatpush1.msra.mxu0 %v5400
        %5420 = vmatprep.subr.mxu0 0.0
        %5421 = vmatpush1.msra.mxu0 0.0
        %5422 = vmatprep.subr.mxu0 0.0
        %5423 = vmatpush1.msra.mxu0 0.0
        %5424 = vmatprep.subr.mxu0 0.0
        %5425 = vmatpush1.msra.mxu0 0.0
        %5426 = vmatprep.subr.mxu0 0.0
        %5427 = vmatpush1.msra.mxu0 0.0
        %5428 = vmatprep.subr.mxu0 0.0
        %5429 = vmatpush1.msra.mxu0 0.0
        %5430 = vmatprep.subr.mxu0 0.0
        %5431 = vmatpush1.msra.mxu0 0.0
        %5432 = vmatprep.subr.mxu0 0.0
        %5433 = vmatpush1.msra.mxu0 0.0
        %5434 = vmatprep.subr.mxu0 0.0
        %5435 = vmatpush1.msra.mxu0 0.0
        %5436 = vmatprep.subr.mxu0 0.0
        %5437 = vmatpush1.msra.mxu0 0.0
        %5438 = vmatprep.subr.mxu0 0.0
        %5439 = vmatpush1.msra.mxu0 0.0
        %5440 = vmatprep.subr.mxu0 0.0
        %5441 = vmatpush1.msra.mxu0 0.0
        %5442 = vmatprep.subr.mxu0 0.0
        %5443 = vmatpush1.msra.mxu0 0.0
        %5444 = vmatprep.subr.mxu0 0.0
        %5445 = vmatpush1.msra.mxu0 0.0
        %5446 = vmatprep.subr.mxu0 0.0
        %5447 = vmatpush1.msra.mxu0 0.0
        %5448 = vmatprep.subr.mxu0 0.0
        %5449 = vmatpush1.msra.mxu0 0.0
        %5450 = vmatprep.subr.mxu0 0.0
        %5451 = vmatpush1.msra.mxu0 0.0
        %5452 = vmatprep.subr.mxu0 0.0
        %5453 = vmatpush1.msra.mxu0 0.0
        %5454 = vmatprep.subr.mxu0 0.0
        %5455 = vmatpush1.msra.mxu0 0.0
        %5456 = vmatprep.subr.mxu0 0.0
        %5457 = vmatpush1.msra.mxu0 0.0
        %5458 = vmatprep.subr.mxu0 0.0
        %5459 = vmatpush1.msra.mxu0 0.0
        %5460 = vmatprep.subr.mxu0 0.0
        %5461 = vmatpush1.msra.mxu0 0.0
        %5462 = vmatprep.subr.mxu0 0.0
        %5463 = vmatpush1.msra.mxu0 0.0
        %5464 = vmatprep.subr.mxu0 0.0
        %5465 = vmatpush1.msra.mxu0 0.0
        %5466 = vmatprep.subr.mxu0 0.0
        %5467 = vmatpush1.msra.mxu0 0.0
        %5468 = vmatprep.mubr.f32.mxu0 0.0
        %5469 = vmatmul.mubr.f32.gmra.mrb[0].mxu0 %v5402
        %v5470 = vpop.f32.mrb[0].mxu0
        %v5471 = vadd.f32 0.0, %v5470
        %v5472 = vpop.f32.mrb[0].mxu0
        %5473 = vdwg.mxu0
        %v5474 = vadd.f32 %v5382, %v5471
        %v5475 = vld [vmem:[#allocation4 + $0x12] sm:$0x1]
        %s5476 = scalar_lea.vmem %s5, 576
        %v5477 = vld [vmem:[%s5476] sm:$0xf]
        %v5478 = vld [vmem:[%s5476 + $0x4] sm:$0xf]
        %v5479 = vld [vmem:[%s5476 + $0x8] sm:$0xf]
        %v5480 = vld [vmem:[%s5476 + $0xc] sm:$0xf]
        %v5481 = vld [vmem:[%s5476 + $0x10] sm:$0xf]
        %v5482 = vld [vmem:[%s5476 + $0x14] sm:$0xf]
        %v5483 = vld [vmem:[%s5476 + $0x18] sm:$0xf]
        %v5484 = vld [vmem:[%s5476 + $0x1c] sm:$0xf]
        %v5485 = vunpack.c.l.bf16 %v5477
        %v5486 = vunpack.c.l.bf16 %v5478
        %v5487 = vunpack.c.l.bf16 %v5479
        %v5488 = vunpack.c.l.bf16 %v5480
        %v5489 = vunpack.c.l.bf16 %v5481
        %v5490 = vunpack.c.l.bf16 %v5482
        %v5491 = vunpack.c.l.bf16 %v5483
        %v5492 = vunpack.c.l.bf16 %v5484
        %v5494 = vsel %vm3782, %v5475, 0
        %5496 = vmatprep.subr.mxu0 0.0
        %5497 = vmatpush1.msra.mxu0 %v5485
        %5498 = vmatprep.subr.mxu0 0.0
        %5499 = vmatpush1.msra.mxu0 %v5486
        %5500 = vmatprep.subr.mxu0 0.0
        %5501 = vmatpush1.msra.mxu0 %v5487
        %5502 = vmatprep.subr.mxu0 0.0
        %5503 = vmatpush1.msra.mxu0 %v5488
        %5504 = vmatprep.subr.mxu0 0.0
        %5505 = vmatpush1.msra.mxu0 %v5489
        %5506 = vmatprep.subr.mxu0 0.0
        %5507 = vmatpush1.msra.mxu0 %v5490
        %5508 = vmatprep.subr.mxu0 0.0
        %5509 = vmatpush1.msra.mxu0 %v5491
        %5510 = vmatprep.subr.mxu0 0.0
        %5511 = vmatpush1.msra.mxu0 %v5492
        %5512 = vmatprep.subr.mxu0 0.0
        %5513 = vmatpush1.msra.mxu0 0.0
        %5514 = vmatprep.subr.mxu0 0.0
        %5515 = vmatpush1.msra.mxu0 0.0
        %5516 = vmatprep.subr.mxu0 0.0
        %5517 = vmatpush1.msra.mxu0 0.0
        %5518 = vmatprep.subr.mxu0 0.0
        %5519 = vmatpush1.msra.mxu0 0.0
        %5520 = vmatprep.subr.mxu0 0.0
        %5521 = vmatpush1.msra.mxu0 0.0
        %5522 = vmatprep.subr.mxu0 0.0
        %5523 = vmatpush1.msra.mxu0 0.0
        %5524 = vmatprep.subr.mxu0 0.0
        %5525 = vmatpush1.msra.mxu0 0.0
        %5526 = vmatprep.subr.mxu0 0.0
        %5527 = vmatpush1.msra.mxu0 0.0
        %5528 = vmatprep.subr.mxu0 0.0
        %5529 = vmatpush1.msra.mxu0 0.0
        %5530 = vmatprep.subr.mxu0 0.0
        %5531 = vmatpush1.msra.mxu0 0.0
        %5532 = vmatprep.subr.mxu0 0.0
        %5533 = vmatpush1.msra.mxu0 0.0
        %5534 = vmatprep.subr.mxu0 0.0
        %5535 = vmatpush1.msra.mxu0 0.0
        %5536 = vmatprep.subr.mxu0 0.0
        %5537 = vmatpush1.msra.mxu0 0.0
        %5538 = vmatprep.subr.mxu0 0.0
        %5539 = vmatpush1.msra.mxu0 0.0
        %5540 = vmatprep.subr.mxu0 0.0
        %5541 = vmatpush1.msra.mxu0 0.0
        %5542 = vmatprep.subr.mxu0 0.0
        %5543 = vmatpush1.msra.mxu0 0.0
        %5544 = vmatprep.subr.mxu0 0.0
        %5545 = vmatpush1.msra.mxu0 0.0
        %5546 = vmatprep.subr.mxu0 0.0
        %5547 = vmatpush1.msra.mxu0 0.0
        %5548 = vmatprep.subr.mxu0 0.0
        %5549 = vmatpush1.msra.mxu0 0.0
        %5550 = vmatprep.subr.mxu0 0.0
        %5551 = vmatpush1.msra.mxu0 0.0
        %5552 = vmatprep.subr.mxu0 0.0
        %5553 = vmatpush1.msra.mxu0 0.0
        %5554 = vmatprep.subr.mxu0 0.0
        %5555 = vmatpush1.msra.mxu0 0.0
        %5556 = vmatprep.subr.mxu0 0.0
        %5557 = vmatpush1.msra.mxu0 0.0
        %5558 = vmatprep.subr.mxu0 0.0
        %5559 = vmatpush1.msra.mxu0 0.0
        %5560 = vmatprep.mubr.f32.mxu0 0.0
        %5561 = vmatmul.mubr.f32.gmra.mrb[0].mxu0 %v5494
        %v5562 = vpop.f32.mrb[0].mxu0
        %v5563 = vadd.f32 0.0, %v5562
        %v5564 = vpop.f32.mrb[0].mxu0
        %5565 = vdwg.mxu0
        %v5566 = vadd.f32 %v5474, %v5563
        %v5567 = vld [vmem:[#allocation4 + $0x13] sm:$0x1]
        %s5568 = scalar_lea.vmem %s5, 608
        %v5569 = vld [vmem:[%s5568] sm:$0xf]
        %v5570 = vld [vmem:[%s5568 + $0x4] sm:$0xf]
        %v5571 = vld [vmem:[%s5568 + $0x8] sm:$0xf]
        %v5572 = vld [vmem:[%s5568 + $0xc] sm:$0xf]
        %v5573 = vld [vmem:[%s5568 + $0x10] sm:$0xf]
        %v5574 = vld [vmem:[%s5568 + $0x14] sm:$0xf]
        %v5575 = vld [vmem:[%s5568 + $0x18] sm:$0xf]
        %v5576 = vld [vmem:[%s5568 + $0x1c] sm:$0xf]
        %v5577 = vunpack.c.l.bf16 %v5569
        %v5578 = vunpack.c.l.bf16 %v5570
        %v5579 = vunpack.c.l.bf16 %v5571
        %v5580 = vunpack.c.l.bf16 %v5572
        %v5581 = vunpack.c.l.bf16 %v5573
        %v5582 = vunpack.c.l.bf16 %v5574
        %v5583 = vunpack.c.l.bf16 %v5575
        %v5584 = vunpack.c.l.bf16 %v5576
        %v5586 = vsel %vm3782, %v5567, 0
        %5588 = vmatprep.subr.mxu0 0.0
        %5589 = vmatpush1.msra.mxu0 %v5577
        %5590 = vmatprep.subr.mxu0 0.0
        %5591 = vmatpush1.msra.mxu0 %v5578
        %5592 = vmatprep.subr.mxu0 0.0
        %5593 = vmatpush1.msra.mxu0 %v5579
        %5594 = vmatprep.subr.mxu0 0.0
        %5595 = vmatpush1.msra.mxu0 %v5580
        %5596 = vmatprep.subr.mxu0 0.0
        %5597 = vmatpush1.msra.mxu0 %v5581
        %5598 = vmatprep.subr.mxu0 0.0
        %5599 = vmatpush1.msra.mxu0 %v5582
        %5600 = vmatprep.subr.mxu0 0.0
        %5601 = vmatpush1.msra.mxu0 %v5583
        %5602 = vmatprep.subr.mxu0 0.0
        %5603 = vmatpush1.msra.mxu0 %v5584
        %5604 = vmatprep.subr.mxu0 0.0
        %5605 = vmatpush1.msra.mxu0 0.0
        %5606 = vmatprep.subr.mxu0 0.0
        %5607 = vmatpush1.msra.mxu0 0.0
        %5608 = vmatprep.subr.mxu0 0.0
        %5609 = vmatpush1.msra.mxu0 0.0
        %5610 = vmatprep.subr.mxu0 0.0
        %5611 = vmatpush1.msra.mxu0 0.0
        %5612 = vmatprep.subr.mxu0 0.0
        %5613 = vmatpush1.msra.mxu0 0.0
        %5614 = vmatprep.subr.mxu0 0.0
        %5615 = vmatpush1.msra.mxu0 0.0
        %5616 = vmatprep.subr.mxu0 0.0
        %5617 = vmatpush1.msra.mxu0 0.0
        %5618 = vmatprep.subr.mxu0 0.0
        %5619 = vmatpush1.msra.mxu0 0.0
        %5620 = vmatprep.subr.mxu0 0.0
        %5621 = vmatpush1.msra.mxu0 0.0
        %5622 = vmatprep.subr.mxu0 0.0
        %5623 = vmatpush1.msra.mxu0 0.0
        %5624 = vmatprep.subr.mxu0 0.0
        %5625 = vmatpush1.msra.mxu0 0.0
        %5626 = vmatprep.subr.mxu0 0.0
        %5627 = vmatpush1.msra.mxu0 0.0
        %5628 = vmatprep.subr.mxu0 0.0
        %5629 = vmatpush1.msra.mxu0 0.0
        %5630 = vmatprep.subr.mxu0 0.0
        %5631 = vmatpush1.msra.mxu0 0.0
        %5632 = vmatprep.subr.mxu0 0.0
        %5633 = vmatpush1.msra.mxu0 0.0
        %5634 = vmatprep.subr.mxu0 0.0
        %5635 = vmatpush1.msra.mxu0 0.0
        %5636 = vmatprep.subr.mxu0 0.0
        %5637 = vmatpush1.msra.mxu0 0.0
        %5638 = vmatprep.subr.mxu0 0.0
        %5639 = vmatpush1.msra.mxu0 0.0
        %5640 = vmatprep.subr.mxu0 0.0
        %5641 = vmatpush1.msra.mxu0 0.0
        %5642 = vmatprep.subr.mxu0 0.0
        %5643 = vmatpush1.msra.mxu0 0.0
        %5644 = vmatprep.subr.mxu0 0.0
        %5645 = vmatpush1.msra.mxu0 0.0
        %5646 = vmatprep.subr.mxu0 0.0
        %5647 = vmatpush1.msra.mxu0 0.0
        %5648 = vmatprep.subr.mxu0 0.0
        %5649 = vmatpush1.msra.mxu0 0.0
        %5650 = vmatprep.subr.mxu0 0.0
        %5651 = vmatpush1.msra.mxu0 0.0
        %5652 = vmatprep.mubr.f32.mxu0 0.0
        %5653 = vmatmul.mubr.f32.gmra.mrb[0].mxu0 %v5586
        %v5654 = vpop.f32.mrb[0].mxu0
        %v5655 = vadd.f32 0.0, %v5654
        %v5656 = vpop.f32.mrb[0].mxu0
        %5657 = vdwg.mxu0
        %v5658 = vadd.f32 %v5566, %v5655
        %v5659 = vld [vmem:[#allocation4 + $0x14] sm:$0x1]
        %s5660 = scalar_lea.vmem %s5, 640
        %v5661 = vld [vmem:[%s5660] sm:$0xf]
        %v5662 = vld [vmem:[%s5660 + $0x4] sm:$0xf]
        %v5663 = vld [vmem:[%s5660 + $0x8] sm:$0xf]
        %v5664 = vld [vmem:[%s5660 + $0xc] sm:$0xf]
        %v5665 = vld [vmem:[%s5660 + $0x10] sm:$0xf]
        %v5666 = vld [vmem:[%s5660 + $0x14] sm:$0xf]
        %v5667 = vld [vmem:[%s5660 + $0x18] sm:$0xf]
        %v5668 = vld [vmem:[%s5660 + $0x1c] sm:$0xf]
        %v5669 = vunpack.c.l.bf16 %v5661
        %v5670 = vunpack.c.l.bf16 %v5662
        %v5671 = vunpack.c.l.bf16 %v5663
        %v5672 = vunpack.c.l.bf16 %v5664
        %v5673 = vunpack.c.l.bf16 %v5665
        %v5674 = vunpack.c.l.bf16 %v5666
        %v5675 = vunpack.c.l.bf16 %v5667
        %v5676 = vunpack.c.l.bf16 %v5668
        %v5678 = vsel %vm3782, %v5659, 0
        %5680 = vmatprep.subr.mxu0 0.0
        %5681 = vmatpush1.msra.mxu0 %v5669
        %5682 = vmatprep.subr.mxu0 0.0
        %5683 = vmatpush1.msra.mxu0 %v5670
        %5684 = vmatprep.subr.mxu0 0.0
        %5685 = vmatpush1.msra.mxu0 %v5671
        %5686 = vmatprep.subr.mxu0 0.0
        %5687 = vmatpush1.msra.mxu0 %v5672
        %5688 = vmatprep.subr.mxu0 0.0
        %5689 = vmatpush1.msra.mxu0 %v5673
        %5690 = vmatprep.subr.mxu0 0.0
        %5691 = vmatpush1.msra.mxu0 %v5674
        %5692 = vmatprep.subr.mxu0 0.0
        %5693 = vmatpush1.msra.mxu0 %v5675
        %5694 = vmatprep.subr.mxu0 0.0
        %5695 = vmatpush1.msra.mxu0 %v5676
        %5696 = vmatprep.subr.mxu0 0.0
        %5697 = vmatpush1.msra.mxu0 0.0
        %5698 = vmatprep.subr.mxu0 0.0
        %5699 = vmatpush1.msra.mxu0 0.0
        %5700 = vmatprep.subr.mxu0 0.0
        %5701 = vmatpush1.msra.mxu0 0.0
        %5702 = vmatprep.subr.mxu0 0.0
        %5703 = vmatpush1.msra.mxu0 0.0
        %5704 = vmatprep.subr.mxu0 0.0
        %5705 = vmatpush1.msra.mxu0 0.0
        %5706 = vmatprep.subr.mxu0 0.0
        %5707 = vmatpush1.msra.mxu0 0.0
        %5708 = vmatprep.subr.mxu0 0.0
        %5709 = vmatpush1.msra.mxu0 0.0
        %5710 = vmatprep.subr.mxu0 0.0
        %5711 = vmatpush1.msra.mxu0 0.0
        %5712 = vmatprep.subr.mxu0 0.0
        %5713 = vmatpush1.msra.mxu0 0.0
        %5714 = vmatprep.subr.mxu0 0.0
        %5715 = vmatpush1.msra.mxu0 0.0
        %5716 = vmatprep.subr.mxu0 0.0
        %5717 = vmatpush1.msra.mxu0 0.0
        %5718 = vmatprep.subr.mxu0 0.0
        %5719 = vmatpush1.msra.mxu0 0.0
        %5720 = vmatprep.subr.mxu0 0.0
        %5721 = vmatpush1.msra.mxu0 0.0
        %5722 = vmatprep.subr.mxu0 0.0
        %5723 = vmatpush1.msra.mxu0 0.0
        %5724 = vmatprep.subr.mxu0 0.0
        %5725 = vmatpush1.msra.mxu0 0.0
        %5726 = vmatprep.subr.mxu0 0.0
        %5727 = vmatpush1.msra.mxu0 0.0
        %5728 = vmatprep.subr.mxu0 0.0
        %5729 = vmatpush1.msra.mxu0 0.0
        %5730 = vmatprep.subr.mxu0 0.0
        %5731 = vmatpush1.msra.mxu0 0.0
        %5732 = vmatprep.subr.mxu0 0.0
        %5733 = vmatpush1.msra.mxu0 0.0
        %5734 = vmatprep.subr.mxu0 0.0
        %5735 = vmatpush1.msra.mxu0 0.0
        %5736 = vmatprep.subr.mxu0 0.0
        %5737 = vmatpush1.msra.mxu0 0.0
        %5738 = vmatprep.subr.mxu0 0.0
        %5739 = vmatpush1.msra.mxu0 0.0
        %5740 = vmatprep.subr.mxu0 0.0
        %5741 = vmatpush1.msra.mxu0 0.0
        %5742 = vmatprep.subr.mxu0 0.0
        %5743 = vmatpush1.msra.mxu0 0.0
        %5744 = vmatprep.mubr.f32.mxu0 0.0
        %5745 = vmatmul.mubr.f32.gmra.mrb[0].mxu0 %v5678
        %v5746 = vpop.f32.mrb[0].mxu0
        %v5747 = vadd.f32 0.0, %v5746
        %v5748 = vpop.f32.mrb[0].mxu0
        %5749 = vdwg.mxu0
        %v5750 = vadd.f32 %v5658, %v5747
        %v5751 = vld [vmem:[#allocation4 + $0x15] sm:$0x1]
        %s5752 = scalar_lea.vmem %s5, 672
        %v5753 = vld [vmem:[%s5752] sm:$0xf]
        %v5754 = vld [vmem:[%s5752 + $0x4] sm:$0xf]
        %v5755 = vld [vmem:[%s5752 + $0x8] sm:$0xf]
        %v5756 = vld [vmem:[%s5752 + $0xc] sm:$0xf]
        %v5757 = vld [vmem:[%s5752 + $0x10] sm:$0xf]
        %v5758 = vld [vmem:[%s5752 + $0x14] sm:$0xf]
        %v5759 = vld [vmem:[%s5752 + $0x18] sm:$0xf]
        %v5760 = vld [vmem:[%s5752 + $0x1c] sm:$0xf]
        %v5761 = vunpack.c.l.bf16 %v5753
        %v5762 = vunpack.c.l.bf16 %v5754
        %v5763 = vunpack.c.l.bf16 %v5755
        %v5764 = vunpack.c.l.bf16 %v5756
        %v5765 = vunpack.c.l.bf16 %v5757
        %v5766 = vunpack.c.l.bf16 %v5758
        %v5767 = vunpack.c.l.bf16 %v5759
        %v5768 = vunpack.c.l.bf16 %v5760
        %v5770 = vsel %vm3782, %v5751, 0
        %5772 = vmatprep.subr.mxu0 0.0
        %5773 = vmatpush1.msra.mxu0 %v5761
        %5774 = vmatprep.subr.mxu0 0.0
        %5775 = vmatpush1.msra.mxu0 %v5762
        %5776 = vmatprep.subr.mxu0 0.0
        %5777 = vmatpush1.msra.mxu0 %v5763
        %5778 = vmatprep.subr.mxu0 0.0
        %5779 = vmatpush1.msra.mxu0 %v5764
        %5780 = vmatprep.subr.mxu0 0.0
        %5781 = vmatpush1.msra.mxu0 %v5765
        %5782 = vmatprep.subr.mxu0 0.0
        %5783 = vmatpush1.msra.mxu0 %v5766
        %5784 = vmatprep.subr.mxu0 0.0
        %5785 = vmatpush1.msra.mxu0 %v5767
        %5786 = vmatprep.subr.mxu0 0.0
        %5787 = vmatpush1.msra.mxu0 %v5768
        %5788 = vmatprep.subr.mxu0 0.0
        %5789 = vmatpush1.msra.mxu0 0.0
        %5790 = vmatprep.subr.mxu0 0.0
        %5791 = vmatpush1.msra.mxu0 0.0
        %5792 = vmatprep.subr.mxu0 0.0
        %5793 = vmatpush1.msra.mxu0 0.0
        %5794 = vmatprep.subr.mxu0 0.0
        %5795 = vmatpush1.msra.mxu0 0.0
        %5796 = vmatprep.subr.mxu0 0.0
        %5797 = vmatpush1.msra.mxu0 0.0
        %5798 = vmatprep.subr.mxu0 0.0
        %5799 = vmatpush1.msra.mxu0 0.0
        %5800 = vmatprep.subr.mxu0 0.0
        %5801 = vmatpush1.msra.mxu0 0.0
        %5802 = vmatprep.subr.mxu0 0.0
        %5803 = vmatpush1.msra.mxu0 0.0
        %5804 = vmatprep.subr.mxu0 0.0
        %5805 = vmatpush1.msra.mxu0 0.0
        %5806 = vmatprep.subr.mxu0 0.0
        %5807 = vmatpush1.msra.mxu0 0.0
        %5808 = vmatprep.subr.mxu0 0.0
        %5809 = vmatpush1.msra.mxu0 0.0
        %5810 = vmatprep.subr.mxu0 0.0
        %5811 = vmatpush1.msra.mxu0 0.0
        %5812 = vmatprep.subr.mxu0 0.0
        %5813 = vmatpush1.msra.mxu0 0.0
        %5814 = vmatprep.subr.mxu0 0.0
        %5815 = vmatpush1.msra.mxu0 0.0
        %5816 = vmatprep.subr.mxu0 0.0
        %5817 = vmatpush1.msra.mxu0 0.0
        %5818 = vmatprep.subr.mxu0 0.0
        %5819 = vmatpush1.msra.mxu0 0.0
        %5820 = vmatprep.subr.mxu0 0.0
        %5821 = vmatpush1.msra.mxu0 0.0
        %5822 = vmatprep.subr.mxu0 0.0
        %5823 = vmatpush1.msra.mxu0 0.0
        %5824 = vmatprep.subr.mxu0 0.0
        %5825 = vmatpush1.msra.mxu0 0.0
        %5826 = vmatprep.subr.mxu0 0.0
        %5827 = vmatpush1.msra.mxu0 0.0
        %5828 = vmatprep.subr.mxu0 0.0
        %5829 = vmatpush1.msra.mxu0 0.0
        %5830 = vmatprep.subr.mxu0 0.0
        %5831 = vmatpush1.msra.mxu0 0.0
        %5832 = vmatprep.subr.mxu0 0.0
        %5833 = vmatpush1.msra.mxu0 0.0
        %5834 = vmatprep.subr.mxu0 0.0
        %5835 = vmatpush1.msra.mxu0 0.0
        %5836 = vmatprep.mubr.f32.mxu0 0.0
        %5837 = vmatmul.mubr.f32.gmra.mrb[0].mxu0 %v5770
        %v5838 = vpop.f32.mrb[0].mxu0
        %v5839 = vadd.f32 0.0, %v5838
        %v5840 = vpop.f32.mrb[0].mxu0
        %5841 = vdwg.mxu0
        %v5842 = vadd.f32 %v5750, %v5839
        %v5843 = vld [vmem:[#allocation4 + $0x16] sm:$0x1]
        %s5844 = scalar_lea.vmem %s5, 704
        %v5845 = vld [vmem:[%s5844] sm:$0xf]
        %v5846 = vld [vmem:[%s5844 + $0x4] sm:$0xf]
        %v5847 = vld [vmem:[%s5844 + $0x8] sm:$0xf]
        %v5848 = vld [vmem:[%s5844 + $0xc] sm:$0xf]
        %v5849 = vld [vmem:[%s5844 + $0x10] sm:$0xf]
        %v5850 = vld [vmem:[%s5844 + $0x14] sm:$0xf]
        %v5851 = vld [vmem:[%s5844 + $0x18] sm:$0xf]
        %v5852 = vld [vmem:[%s5844 + $0x1c] sm:$0xf]
        %v5853 = vunpack.c.l.bf16 %v5845
        %v5854 = vunpack.c.l.bf16 %v5846
        %v5855 = vunpack.c.l.bf16 %v5847
        %v5856 = vunpack.c.l.bf16 %v5848
        %v5857 = vunpack.c.l.bf16 %v5849
        %v5858 = vunpack.c.l.bf16 %v5850
        %v5859 = vunpack.c.l.bf16 %v5851
        %v5860 = vunpack.c.l.bf16 %v5852
        %v5862 = vsel %vm3782, %v5843, 0
        %5864 = vmatprep.subr.mxu0 0.0
        %5865 = vmatpush1.msra.mxu0 %v5853
        %5866 = vmatprep.subr.mxu0 0.0
        %5867 = vmatpush1.msra.mxu0 %v5854
        %5868 = vmatprep.subr.mxu0 0.0
        %5869 = vmatpush1.msra.mxu0 %v5855
        %5870 = vmatprep.subr.mxu0 0.0
        %5871 = vmatpush1.msra.mxu0 %v5856
        %5872 = vmatprep.subr.mxu0 0.0
        %5873 = vmatpush1.msra.mxu0 %v5857
        %5874 = vmatprep.subr.mxu0 0.0
        %5875 = vmatpush1.msra.mxu0 %v5858
        %5876 = vmatprep.subr.mxu0 0.0
        %5877 = vmatpush1.msra.mxu0 %v5859
        %5878 = vmatprep.subr.mxu0 0.0
        %5879 = vmatpush1.msra.mxu0 %v5860
        %5880 = vmatprep.subr.mxu0 0.0
        %5881 = vmatpush1.msra.mxu0 0.0
        %5882 = vmatprep.subr.mxu0 0.0
        %5883 = vmatpush1.msra.mxu0 0.0
        %5884 = vmatprep.subr.mxu0 0.0
        %5885 = vmatpush1.msra.mxu0 0.0
        %5886 = vmatprep.subr.mxu0 0.0
        %5887 = vmatpush1.msra.mxu0 0.0
        %5888 = vmatprep.subr.mxu0 0.0
        %5889 = vmatpush1.msra.mxu0 0.0
        %5890 = vmatprep.subr.mxu0 0.0
        %5891 = vmatpush1.msra.mxu0 0.0
        %5892 = vmatprep.subr.mxu0 0.0
        %5893 = vmatpush1.msra.mxu0 0.0
        %5894 = vmatprep.subr.mxu0 0.0
        %5895 = vmatpush1.msra.mxu0 0.0
        %5896 = vmatprep.subr.mxu0 0.0
        %5897 = vmatpush1.msra.mxu0 0.0
        %5898 = vmatprep.subr.mxu0 0.0
        %5899 = vmatpush1.msra.mxu0 0.0
        %5900 = vmatprep.subr.mxu0 0.0
        %5901 = vmatpush1.msra.mxu0 0.0
        %5902 = vmatprep.subr.mxu0 0.0
        %5903 = vmatpush1.msra.mxu0 0.0
        %5904 = vmatprep.subr.mxu0 0.0
        %5905 = vmatpush1.msra.mxu0 0.0
        %5906 = vmatprep.subr.mxu0 0.0
        %5907 = vmatpush1.msra.mxu0 0.0
        %5908 = vmatprep.subr.mxu0 0.0
        %5909 = vmatpush1.msra.mxu0 0.0
        %5910 = vmatprep.subr.mxu0 0.0
        %5911 = vmatpush1.msra.mxu0 0.0
        %5912 = vmatprep.subr.mxu0 0.0
        %5913 = vmatpush1.msra.mxu0 0.0
        %5914 = vmatprep.subr.mxu0 0.0
        %5915 = vmatpush1.msra.mxu0 0.0
        %5916 = vmatprep.subr.mxu0 0.0
        %5917 = vmatpush1.msra.mxu0 0.0
        %5918 = vmatprep.subr.mxu0 0.0
        %5919 = vmatpush1.msra.mxu0 0.0
        %5920 = vmatprep.subr.mxu0 0.0
        %5921 = vmatpush1.msra.mxu0 0.0
        %5922 = vmatprep.subr.mxu0 0.0
        %5923 = vmatpush1.msra.mxu0 0.0
        %5924 = vmatprep.subr.mxu0 0.0
        %5925 = vmatpush1.msra.mxu0 0.0
        %5926 = vmatprep.subr.mxu0 0.0
        %5927 = vmatpush1.msra.mxu0 0.0
        %5928 = vmatprep.mubr.f32.mxu0 0.0
        %5929 = vmatmul.mubr.f32.gmra.mrb[0].mxu0 %v5862
        %v5930 = vpop.f32.mrb[0].mxu0
        %v5931 = vadd.f32 0.0, %v5930
        %v5932 = vpop.f32.mrb[0].mxu0
        %5933 = vdwg.mxu0
        %v5934 = vadd.f32 %v5842, %v5931
        %v5935 = vld [vmem:[#allocation4 + $0x17] sm:$0x1]
        %s5936 = scalar_lea.vmem %s5, 736
        %v5937 = vld [vmem:[%s5936] sm:$0xf]
        %v5938 = vld [vmem:[%s5936 + $0x4] sm:$0xf]
        %v5939 = vld [vmem:[%s5936 + $0x8] sm:$0xf]
        %v5940 = vld [vmem:[%s5936 + $0xc] sm:$0xf]
        %v5941 = vld [vmem:[%s5936 + $0x10] sm:$0xf]
        %v5942 = vld [vmem:[%s5936 + $0x14] sm:$0xf]
        %v5943 = vld [vmem:[%s5936 + $0x18] sm:$0xf]
        %v5944 = vld [vmem:[%s5936 + $0x1c] sm:$0xf]
        %v5945 = vunpack.c.l.bf16 %v5937
        %v5946 = vunpack.c.l.bf16 %v5938
        %v5947 = vunpack.c.l.bf16 %v5939
        %v5948 = vunpack.c.l.bf16 %v5940
        %v5949 = vunpack.c.l.bf16 %v5941
        %v5950 = vunpack.c.l.bf16 %v5942
        %v5951 = vunpack.c.l.bf16 %v5943
        %v5952 = vunpack.c.l.bf16 %v5944
        %v5954 = vsel %vm3782, %v5935, 0
        %5956 = vmatprep.subr.mxu0 0.0
        %5957 = vmatpush1.msra.mxu0 %v5945
        %5958 = vmatprep.subr.mxu0 0.0
        %5959 = vmatpush1.msra.mxu0 %v5946
        %5960 = vmatprep.subr.mxu0 0.0
        %5961 = vmatpush1.msra.mxu0 %v5947
        %5962 = vmatprep.subr.mxu0 0.0
        %5963 = vmatpush1.msra.mxu0 %v5948
        %5964 = vmatprep.subr.mxu0 0.0
        %5965 = vmatpush1.msra.mxu0 %v5949
        %5966 = vmatprep.subr.mxu0 0.0
        %5967 = vmatpush1.msra.mxu0 %v5950
        %5968 = vmatprep.subr.mxu0 0.0
        %5969 = vmatpush1.msra.mxu0 %v5951
        %5970 = vmatprep.subr.mxu0 0.0
        %5971 = vmatpush1.msra.mxu0 %v5952
        %5972 = vmatprep.subr.mxu0 0.0
        %5973 = vmatpush1.msra.mxu0 0.0
        %5974 = vmatprep.subr.mxu0 0.0
        %5975 = vmatpush1.msra.mxu0 0.0
        %5976 = vmatprep.subr.mxu0 0.0
        %5977 = vmatpush1.msra.mxu0 0.0
        %5978 = vmatprep.subr.mxu0 0.0
        %5979 = vmatpush1.msra.mxu0 0.0
        %5980 = vmatprep.subr.mxu0 0.0
        %5981 = vmatpush1.msra.mxu0 0.0
        %5982 = vmatprep.subr.mxu0 0.0
        %5983 = vmatpush1.msra.mxu0 0.0
        %5984 = vmatprep.subr.mxu0 0.0
        %5985 = vmatpush1.msra.mxu0 0.0
        %5986 = vmatprep.subr.mxu0 0.0
        %5987 = vmatpush1.msra.mxu0 0.0
        %5988 = vmatprep.subr.mxu0 0.0
        %5989 = vmatpush1.msra.mxu0 0.0
        %5990 = vmatprep.subr.mxu0 0.0
        %5991 = vmatpush1.msra.mxu0 0.0
        %5992 = vmatprep.subr.mxu0 0.0
        %5993 = vmatpush1.msra.mxu0 0.0
        %5994 = vmatprep.subr.mxu0 0.0
        %5995 = vmatpush1.msra.mxu0 0.0
        %5996 = vmatprep.subr.mxu0 0.0
        %5997 = vmatpush1.msra.mxu0 0.0
        %5998 = vmatprep.subr.mxu0 0.0
        %5999 = vmatpush1.msra.mxu0 0.0
        %6000 = vmatprep.subr.mxu0 0.0
        %6001 = vmatpush1.msra.mxu0 0.0
        %6002 = vmatprep.subr.mxu0 0.0
        %6003 = vmatpush1.msra.mxu0 0.0
        %6004 = vmatprep.subr.mxu0 0.0
        %6005 = vmatpush1.msra.mxu0 0.0
        %6006 = vmatprep.subr.mxu0 0.0
        %6007 = vmatpush1.msra.mxu0 0.0
        %6008 = vmatprep.subr.mxu0 0.0
        %6009 = vmatpush1.msra.mxu0 0.0
        %6010 = vmatprep.subr.mxu0 0.0
        %6011 = vmatpush1.msra.mxu0 0.0
        %6012 = vmatprep.subr.mxu0 0.0
        %6013 = vmatpush1.msra.mxu0 0.0
        %6014 = vmatprep.subr.mxu0 0.0
        %6015 = vmatpush1.msra.mxu0 0.0
        %6016 = vmatprep.subr.mxu0 0.0
        %6017 = vmatpush1.msra.mxu0 0.0
        %6018 = vmatprep.subr.mxu0 0.0
        %6019 = vmatpush1.msra.mxu0 0.0
        %6020 = vmatprep.mubr.f32.mxu0 0.0
        %6021 = vmatmul.mubr.f32.gmra.mrb[0].mxu0 %v5954
        %v6022 = vpop.f32.mrb[0].mxu0
        %v6023 = vadd.f32 0.0, %v6022
        %v6024 = vpop.f32.mrb[0].mxu0
        %6025 = vdwg.mxu0
        %v6026 = vadd.f32 %v5934, %v6023
        %v6027 = vld [vmem:[#allocation4 + $0x18] sm:$0x1]
        %s6028 = scalar_lea.vmem %s5, 768
        %v6029 = vld [vmem:[%s6028] sm:$0xf]
        %v6030 = vld [vmem:[%s6028 + $0x4] sm:$0xf]
        %v6031 = vld [vmem:[%s6028 + $0x8] sm:$0xf]
        %v6032 = vld [vmem:[%s6028 + $0xc] sm:$0xf]
        %v6033 = vld [vmem:[%s6028 + $0x10] sm:$0xf]
        %v6034 = vld [vmem:[%s6028 + $0x14] sm:$0xf]
        %v6035 = vld [vmem:[%s6028 + $0x18] sm:$0xf]
        %v6036 = vld [vmem:[%s6028 + $0x1c] sm:$0xf]
        %v6037 = vunpack.c.l.bf16 %v6029
        %v6038 = vunpack.c.l.bf16 %v6030
        %v6039 = vunpack.c.l.bf16 %v6031
        %v6040 = vunpack.c.l.bf16 %v6032
        %v6041 = vunpack.c.l.bf16 %v6033
        %v6042 = vunpack.c.l.bf16 %v6034
        %v6043 = vunpack.c.l.bf16 %v6035
        %v6044 = vunpack.c.l.bf16 %v6036
        %v6046 = vsel %vm3782, %v6027, 0
        %6048 = vmatprep.subr.mxu0 0.0
        %6049 = vmatpush1.msra.mxu0 %v6037
        %6050 = vmatprep.subr.mxu0 0.0
        %6051 = vmatpush1.msra.mxu0 %v6038
        %6052 = vmatprep.subr.mxu0 0.0
        %6053 = vmatpush1.msra.mxu0 %v6039
        %6054 = vmatprep.subr.mxu0 0.0
        %6055 = vmatpush1.msra.mxu0 %v6040
        %6056 = vmatprep.subr.mxu0 0.0
        %6057 = vmatpush1.msra.mxu0 %v6041
        %6058 = vmatprep.subr.mxu0 0.0
        %6059 = vmatpush1.msra.mxu0 %v6042
        %6060 = vmatprep.subr.mxu0 0.0
        %6061 = vmatpush1.msra.mxu0 %v6043
        %6062 = vmatprep.subr.mxu0 0.0
        %6063 = vmatpush1.msra.mxu0 %v6044
        %6064 = vmatprep.subr.mxu0 0.0
        %6065 = vmatpush1.msra.mxu0 0.0
        %6066 = vmatprep.subr.mxu0 0.0
        %6067 = vmatpush1.msra.mxu0 0.0
        %6068 = vmatprep.subr.mxu0 0.0
        %6069 = vmatpush1.msra.mxu0 0.0
        %6070 = vmatprep.subr.mxu0 0.0
        %6071 = vmatpush1.msra.mxu0 0.0
        %6072 = vmatprep.subr.mxu0 0.0
        %6073 = vmatpush1.msra.mxu0 0.0
        %6074 = vmatprep.subr.mxu0 0.0
        %6075 = vmatpush1.msra.mxu0 0.0
        %6076 = vmatprep.subr.mxu0 0.0
        %6077 = vmatpush1.msra.mxu0 0.0
        %6078 = vmatprep.subr.mxu0 0.0
        %6079 = vmatpush1.msra.mxu0 0.0
        %6080 = vmatprep.subr.mxu0 0.0
        %6081 = vmatpush1.msra.mxu0 0.0
        %6082 = vmatprep.subr.mxu0 0.0
        %6083 = vmatpush1.msra.mxu0 0.0
        %6084 = vmatprep.subr.mxu0 0.0
        %6085 = vmatpush1.msra.mxu0 0.0
        %6086 = vmatprep.subr.mxu0 0.0
        %6087 = vmatpush1.msra.mxu0 0.0
        %6088 = vmatprep.subr.mxu0 0.0
        %6089 = vmatpush1.msra.mxu0 0.0
        %6090 = vmatprep.subr.mxu0 0.0
        %6091 = vmatpush1.msra.mxu0 0.0
        %6092 = vmatprep.subr.mxu0 0.0
        %6093 = vmatpush1.msra.mxu0 0.0
        %6094 = vmatprep.subr.mxu0 0.0
        %6095 = vmatpush1.msra.mxu0 0.0
        %6096 = vmatprep.subr.mxu0 0.0
        %6097 = vmatpush1.msra.mxu0 0.0
        %6098 = vmatprep.subr.mxu0 0.0
        %6099 = vmatpush1.msra.mxu0 0.0
        %6100 = vmatprep.subr.mxu0 0.0
        %6101 = vmatpush1.msra.mxu0 0.0
        %6102 = vmatprep.subr.mxu0 0.0
        %6103 = vmatpush1.msra.mxu0 0.0
        %6104 = vmatprep.subr.mxu0 0.0
        %6105 = vmatpush1.msra.mxu0 0.0
        %6106 = vmatprep.subr.mxu0 0.0
        %6107 = vmatpush1.msra.mxu0 0.0
        %6108 = vmatprep.subr.mxu0 0.0
        %6109 = vmatpush1.msra.mxu0 0.0
        %6110 = vmatprep.subr.mxu0 0.0
        %6111 = vmatpush1.msra.mxu0 0.0
        %6112 = vmatprep.mubr.f32.mxu0 0.0
        %6113 = vmatmul.mubr.f32.gmra.mrb[0].mxu0 %v6046
        %v6114 = vpop.f32.mrb[0].mxu0
        %v6115 = vadd.f32 0.0, %v6114
        %v6116 = vpop.f32.mrb[0].mxu0
        %6117 = vdwg.mxu0
        %v6118 = vadd.f32 %v6026, %v6115
        %v6119 = vld [vmem:[#allocation4 + $0x19] sm:$0x1]
        %s6120 = scalar_lea.vmem %s5, 800
        %v6121 = vld [vmem:[%s6120] sm:$0xf]
        %v6122 = vld [vmem:[%s6120 + $0x4] sm:$0xf]
        %v6123 = vld [vmem:[%s6120 + $0x8] sm:$0xf]
        %v6124 = vld [vmem:[%s6120 + $0xc] sm:$0xf]
        %v6125 = vld [vmem:[%s6120 + $0x10] sm:$0xf]
        %v6126 = vld [vmem:[%s6120 + $0x14] sm:$0xf]
        %v6127 = vld [vmem:[%s6120 + $0x18] sm:$0xf]
        %v6128 = vld [vmem:[%s6120 + $0x1c] sm:$0xf]
        %v6129 = vunpack.c.l.bf16 %v6121
        %v6130 = vunpack.c.l.bf16 %v6122
        %v6131 = vunpack.c.l.bf16 %v6123
        %v6132 = vunpack.c.l.bf16 %v6124
        %v6133 = vunpack.c.l.bf16 %v6125
        %v6134 = vunpack.c.l.bf16 %v6126
        %v6135 = vunpack.c.l.bf16 %v6127
        %v6136 = vunpack.c.l.bf16 %v6128
        %v6138 = vsel %vm3782, %v6119, 0
        %6140 = vmatprep.subr.mxu0 0.0
        %6141 = vmatpush1.msra.mxu0 %v6129
        %6142 = vmatprep.subr.mxu0 0.0
        %6143 = vmatpush1.msra.mxu0 %v6130
        %6144 = vmatprep.subr.mxu0 0.0
        %6145 = vmatpush1.msra.mxu0 %v6131
        %6146 = vmatprep.subr.mxu0 0.0
        %6147 = vmatpush1.msra.mxu0 %v6132
        %6148 = vmatprep.subr.mxu0 0.0
        %6149 = vmatpush1.msra.mxu0 %v6133
        %6150 = vmatprep.subr.mxu0 0.0
        %6151 = vmatpush1.msra.mxu0 %v6134
        %6152 = vmatprep.subr.mxu0 0.0
        %6153 = vmatpush1.msra.mxu0 %v6135
        %6154 = vmatprep.subr.mxu0 0.0
        %6155 = vmatpush1.msra.mxu0 %v6136
        %6156 = vmatprep.subr.mxu0 0.0
        %6157 = vmatpush1.msra.mxu0 0.0
        %6158 = vmatprep.subr.mxu0 0.0
        %6159 = vmatpush1.msra.mxu0 0.0
        %6160 = vmatprep.subr.mxu0 0.0
        %6161 = vmatpush1.msra.mxu0 0.0
        %6162 = vmatprep.subr.mxu0 0.0
        %6163 = vmatpush1.msra.mxu0 0.0
        %6164 = vmatprep.subr.mxu0 0.0
        %6165 = vmatpush1.msra.mxu0 0.0
        %6166 = vmatprep.subr.mxu0 0.0
        %6167 = vmatpush1.msra.mxu0 0.0
        %6168 = vmatprep.subr.mxu0 0.0
        %6169 = vmatpush1.msra.mxu0 0.0
        %6170 = vmatprep.subr.mxu0 0.0
        %6171 = vmatpush1.msra.mxu0 0.0
        %6172 = vmatprep.subr.mxu0 0.0
        %6173 = vmatpush1.msra.mxu0 0.0
        %6174 = vmatprep.subr.mxu0 0.0
        %6175 = vmatpush1.msra.mxu0 0.0
        %6176 = vmatprep.subr.mxu0 0.0
        %6177 = vmatpush1.msra.mxu0 0.0
        %6178 = vmatprep.subr.mxu0 0.0
        %6179 = vmatpush1.msra.mxu0 0.0
        %6180 = vmatprep.subr.mxu0 0.0
        %6181 = vmatpush1.msra.mxu0 0.0
        %6182 = vmatprep.subr.mxu0 0.0
        %6183 = vmatpush1.msra.mxu0 0.0
        %6184 = vmatprep.subr.mxu0 0.0
        %6185 = vmatpush1.msra.mxu0 0.0
        %6186 = vmatprep.subr.mxu0 0.0
        %6187 = vmatpush1.msra.mxu0 0.0
        %6188 = vmatprep.subr.mxu0 0.0
        %6189 = vmatpush1.msra.mxu0 0.0
        %6190 = vmatprep.subr.mxu0 0.0
        %6191 = vmatpush1.msra.mxu0 0.0
        %6192 = vmatprep.subr.mxu0 0.0
        %6193 = vmatpush1.msra.mxu0 0.0
        %6194 = vmatprep.subr.mxu0 0.0
        %6195 = vmatpush1.msra.mxu0 0.0
        %6196 = vmatprep.subr.mxu0 0.0
        %6197 = vmatpush1.msra.mxu0 0.0
        %6198 = vmatprep.subr.mxu0 0.0
        %6199 = vmatpush1.msra.mxu0 0.0
        %6200 = vmatprep.subr.mxu0 0.0
        %6201 = vmatpush1.msra.mxu0 0.0
        %6202 = vmatprep.subr.mxu0 0.0
        %6203 = vmatpush1.msra.mxu0 0.0
        %6204 = vmatprep.mubr.f32.mxu0 0.0
        %6205 = vmatmul.mubr.f32.gmra.mrb[0].mxu0 %v6138
        %v6206 = vpop.f32.mrb[0].mxu0
        %v6207 = vadd.f32 0.0, %v6206
        %v6208 = vpop.f32.mrb[0].mxu0
        %6209 = vdwg.mxu0
        %v6210 = vadd.f32 %v6118, %v6207
        %v6211 = vld [vmem:[#allocation4 + $0x1a] sm:$0x1]
        %s6212 = scalar_lea.vmem %s5, 832
        %v6213 = vld [vmem:[%s6212] sm:$0xf]
        %v6214 = vld [vmem:[%s6212 + $0x4] sm:$0xf]
        %v6215 = vld [vmem:[%s6212 + $0x8] sm:$0xf]
        %v6216 = vld [vmem:[%s6212 + $0xc] sm:$0xf]
        %v6217 = vld [vmem:[%s6212 + $0x10] sm:$0xf]
        %v6218 = vld [vmem:[%s6212 + $0x14] sm:$0xf]
        %v6219 = vld [vmem:[%s6212 + $0x18] sm:$0xf]
        %v6220 = vld [vmem:[%s6212 + $0x1c] sm:$0xf]
        %v6221 = vunpack.c.l.bf16 %v6213
        %v6222 = vunpack.c.l.bf16 %v6214
        %v6223 = vunpack.c.l.bf16 %v6215
        %v6224 = vunpack.c.l.bf16 %v6216
        %v6225 = vunpack.c.l.bf16 %v6217
        %v6226 = vunpack.c.l.bf16 %v6218
        %v6227 = vunpack.c.l.bf16 %v6219
        %v6228 = vunpack.c.l.bf16 %v6220
        %v6230 = vsel %vm3782, %v6211, 0
        %6232 = vmatprep.subr.mxu0 0.0
        %6233 = vmatpush1.msra.mxu0 %v6221
        %6234 = vmatprep.subr.mxu0 0.0
        %6235 = vmatpush1.msra.mxu0 %v6222
        %6236 = vmatprep.subr.mxu0 0.0
        %6237 = vmatpush1.msra.mxu0 %v6223
        %6238 = vmatprep.subr.mxu0 0.0
        %6239 = vmatpush1.msra.mxu0 %v6224
        %6240 = vmatprep.subr.mxu0 0.0
        %6241 = vmatpush1.msra.mxu0 %v6225
        %6242 = vmatprep.subr.mxu0 0.0
        %6243 = vmatpush1.msra.mxu0 %v6226
        %6244 = vmatprep.subr.mxu0 0.0
        %6245 = vmatpush1.msra.mxu0 %v6227
        %6246 = vmatprep.subr.mxu0 0.0
        %6247 = vmatpush1.msra.mxu0 %v6228
        %6248 = vmatprep.subr.mxu0 0.0
        %6249 = vmatpush1.msra.mxu0 0.0
        %6250 = vmatprep.subr.mxu0 0.0
        %6251 = vmatpush1.msra.mxu0 0.0
        %6252 = vmatprep.subr.mxu0 0.0
        %6253 = vmatpush1.msra.mxu0 0.0
        %6254 = vmatprep.subr.mxu0 0.0
        %6255 = vmatpush1.msra.mxu0 0.0
        %6256 = vmatprep.subr.mxu0 0.0
        %6257 = vmatpush1.msra.mxu0 0.0
        %6258 = vmatprep.subr.mxu0 0.0
        %6259 = vmatpush1.msra.mxu0 0.0
        %6260 = vmatprep.subr.mxu0 0.0
        %6261 = vmatpush1.msra.mxu0 0.0
        %6262 = vmatprep.subr.mxu0 0.0
        %6263 = vmatpush1.msra.mxu0 0.0
        %6264 = vmatprep.subr.mxu0 0.0
        %6265 = vmatpush1.msra.mxu0 0.0
        %6266 = vmatprep.subr.mxu0 0.0
        %6267 = vmatpush1.msra.mxu0 0.0
        %6268 = vmatprep.subr.mxu0 0.0
        %6269 = vmatpush1.msra.mxu0 0.0
        %6270 = vmatprep.subr.mxu0 0.0
        %6271 = vmatpush1.msra.mxu0 0.0
        %6272 = vmatprep.subr.mxu0 0.0
        %6273 = vmatpush1.msra.mxu0 0.0
        %6274 = vmatprep.subr.mxu0 0.0
        %6275 = vmatpush1.msra.mxu0 0.0
        %6276 = vmatprep.subr.mxu0 0.0
        %6277 = vmatpush1.msra.mxu0 0.0
        %6278 = vmatprep.subr.mxu0 0.0
        %6279 = vmatpush1.msra.mxu0 0.0
        %6280 = vmatprep.subr.mxu0 0.0
        %6281 = vmatpush1.msra.mxu0 0.0
        %6282 = vmatprep.subr.mxu0 0.0
        %6283 = vmatpush1.msra.mxu0 0.0
        %6284 = vmatprep.subr.mxu0 0.0
        %6285 = vmatpush1.msra.mxu0 0.0
        %6286 = vmatprep.subr.mxu0 0.0
        %6287 = vmatpush1.msra.mxu0 0.0
        %6288 = vmatprep.subr.mxu0 0.0
        %6289 = vmatpush1.msra.mxu0 0.0
        %6290 = vmatprep.subr.mxu0 0.0
        %6291 = vmatpush1.msra.mxu0 0.0
        %6292 = vmatprep.subr.mxu0 0.0
        %6293 = vmatpush1.msra.mxu0 0.0
        %6294 = vmatprep.subr.mxu0 0.0
        %6295 = vmatpush1.msra.mxu0 0.0
        %6296 = vmatprep.mubr.f32.mxu0 0.0
        %6297 = vmatmul.mubr.f32.gmra.mrb[0].mxu0 %v6230
        %v6298 = vpop.f32.mrb[0].mxu0
        %v6299 = vadd.f32 0.0, %v6298
        %v6300 = vpop.f32.mrb[0].mxu0
        %6301 = vdwg.mxu0
        %v6302 = vadd.f32 %v6210, %v6299
        %v6303 = vld [vmem:[#allocation4 + $0x1b] sm:$0x1]
        %s6304 = scalar_lea.vmem %s5, 864
        %v6305 = vld [vmem:[%s6304] sm:$0xf]
        %v6306 = vld [vmem:[%s6304 + $0x4] sm:$0xf]
        %v6307 = vld [vmem:[%s6304 + $0x8] sm:$0xf]
        %v6308 = vld [vmem:[%s6304 + $0xc] sm:$0xf]
        %v6309 = vld [vmem:[%s6304 + $0x10] sm:$0xf]
        %v6310 = vld [vmem:[%s6304 + $0x14] sm:$0xf]
        %v6311 = vld [vmem:[%s6304 + $0x18] sm:$0xf]
        %v6312 = vld [vmem:[%s6304 + $0x1c] sm:$0xf]
        %v6313 = vunpack.c.l.bf16 %v6305
        %v6314 = vunpack.c.l.bf16 %v6306
        %v6315 = vunpack.c.l.bf16 %v6307
        %v6316 = vunpack.c.l.bf16 %v6308
        %v6317 = vunpack.c.l.bf16 %v6309
        %v6318 = vunpack.c.l.bf16 %v6310
        %v6319 = vunpack.c.l.bf16 %v6311
        %v6320 = vunpack.c.l.bf16 %v6312
        %v6322 = vsel %vm3782, %v6303, 0
        %6324 = vmatprep.subr.mxu0 0.0
        %6325 = vmatpush1.msra.mxu0 %v6313
        %6326 = vmatprep.subr.mxu0 0.0
        %6327 = vmatpush1.msra.mxu0 %v6314
        %6328 = vmatprep.subr.mxu0 0.0
        %6329 = vmatpush1.msra.mxu0 %v6315
        %6330 = vmatprep.subr.mxu0 0.0
        %6331 = vmatpush1.msra.mxu0 %v6316
        %6332 = vmatprep.subr.mxu0 0.0
        %6333 = vmatpush1.msra.mxu0 %v6317
        %6334 = vmatprep.subr.mxu0 0.0
        %6335 = vmatpush1.msra.mxu0 %v6318
        %6336 = vmatprep.subr.mxu0 0.0
        %6337 = vmatpush1.msra.mxu0 %v6319
        %6338 = vmatprep.subr.mxu0 0.0
        %6339 = vmatpush1.msra.mxu0 %v6320
        %6340 = vmatprep.subr.mxu0 0.0
        %6341 = vmatpush1.msra.mxu0 0.0
        %6342 = vmatprep.subr.mxu0 0.0
        %6343 = vmatpush1.msra.mxu0 0.0
        %6344 = vmatprep.subr.mxu0 0.0
        %6345 = vmatpush1.msra.mxu0 0.0
        %6346 = vmatprep.subr.mxu0 0.0
        %6347 = vmatpush1.msra.mxu0 0.0
        %6348 = vmatprep.subr.mxu0 0.0
        %6349 = vmatpush1.msra.mxu0 0.0
        %6350 = vmatprep.subr.mxu0 0.0
        %6351 = vmatpush1.msra.mxu0 0.0
        %6352 = vmatprep.subr.mxu0 0.0
        %6353 = vmatpush1.msra.mxu0 0.0
        %6354 = vmatprep.subr.mxu0 0.0
        %6355 = vmatpush1.msra.mxu0 0.0
        %6356 = vmatprep.subr.mxu0 0.0
        %6357 = vmatpush1.msra.mxu0 0.0
        %6358 = vmatprep.subr.mxu0 0.0
        %6359 = vmatpush1.msra.mxu0 0.0
        %6360 = vmatprep.subr.mxu0 0.0
        %6361 = vmatpush1.msra.mxu0 0.0
        %6362 = vmatprep.subr.mxu0 0.0
        %6363 = vmatpush1.msra.mxu0 0.0
        %6364 = vmatprep.subr.mxu0 0.0
        %6365 = vmatpush1.msra.mxu0 0.0
        %6366 = vmatprep.subr.mxu0 0.0
        %6367 = vmatpush1.msra.mxu0 0.0
        %6368 = vmatprep.subr.mxu0 0.0
        %6369 = vmatpush1.msra.mxu0 0.0
        %6370 = vmatprep.subr.mxu0 0.0
        %6371 = vmatpush1.msra.mxu0 0.0
        %6372 = vmatprep.subr.mxu0 0.0
        %6373 = vmatpush1.msra.mxu0 0.0
        %6374 = vmatprep.subr.mxu0 0.0
        %6375 = vmatpush1.msra.mxu0 0.0
        %6376 = vmatprep.subr.mxu0 0.0
        %6377 = vmatpush1.msra.mxu0 0.0
        %6378 = vmatprep.subr.mxu0 0.0
        %6379 = vmatpush1.msra.mxu0 0.0
        %6380 = vmatprep.subr.mxu0 0.0
        %6381 = vmatpush1.msra.mxu0 0.0
        %6382 = vmatprep.subr.mxu0 0.0
        %6383 = vmatpush1.msra.mxu0 0.0
        %6384 = vmatprep.subr.mxu0 0.0
        %6385 = vmatpush1.msra.mxu0 0.0
        %6386 = vmatprep.subr.mxu0 0.0
        %6387 = vmatpush1.msra.mxu0 0.0
        %6388 = vmatprep.mubr.f32.mxu0 0.0
        %6389 = vmatmul.mubr.f32.gmra.mrb[0].mxu0 %v6322
        %v6390 = vpop.f32.mrb[0].mxu0
        %v6391 = vadd.f32 0.0, %v6390
        %v6392 = vpop.f32.mrb[0].mxu0
        %6393 = vdwg.mxu0
        %v6394 = vadd.f32 %v6302, %v6391
        %v6395 = vld [vmem:[#allocation4 + $0x1c] sm:$0x1]
        %s6396 = scalar_lea.vmem %s5, 896
        %v6397 = vld [vmem:[%s6396] sm:$0xf]
        %v6398 = vld [vmem:[%s6396 + $0x4] sm:$0xf]
        %v6399 = vld [vmem:[%s6396 + $0x8] sm:$0xf]
        %v6400 = vld [vmem:[%s6396 + $0xc] sm:$0xf]
        %v6401 = vld [vmem:[%s6396 + $0x10] sm:$0xf]
        %v6402 = vld [vmem:[%s6396 + $0x14] sm:$0xf]
        %v6403 = vld [vmem:[%s6396 + $0x18] sm:$0xf]
        %v6404 = vld [vmem:[%s6396 + $0x1c] sm:$0xf]
        %v6405 = vunpack.c.l.bf16 %v6397
        %v6406 = vunpack.c.l.bf16 %v6398
        %v6407 = vunpack.c.l.bf16 %v6399
        %v6408 = vunpack.c.l.bf16 %v6400
        %v6409 = vunpack.c.l.bf16 %v6401
        %v6410 = vunpack.c.l.bf16 %v6402
        %v6411 = vunpack.c.l.bf16 %v6403
        %v6412 = vunpack.c.l.bf16 %v6404
        %v6414 = vsel %vm3782, %v6395, 0
        %6416 = vmatprep.subr.mxu0 0.0
        %6417 = vmatpush1.msra.mxu0 %v6405
        %6418 = vmatprep.subr.mxu0 0.0
        %6419 = vmatpush1.msra.mxu0 %v6406
        %6420 = vmatprep.subr.mxu0 0.0
        %6421 = vmatpush1.msra.mxu0 %v6407
        %6422 = vmatprep.subr.mxu0 0.0
        %6423 = vmatpush1.msra.mxu0 %v6408
        %6424 = vmatprep.subr.mxu0 0.0
        %6425 = vmatpush1.msra.mxu0 %v6409
        %6426 = vmatprep.subr.mxu0 0.0
        %6427 = vmatpush1.msra.mxu0 %v6410
        %6428 = vmatprep.subr.mxu0 0.0
        %6429 = vmatpush1.msra.mxu0 %v6411
        %6430 = vmatprep.subr.mxu0 0.0
        %6431 = vmatpush1.msra.mxu0 %v6412
        %6432 = vmatprep.subr.mxu0 0.0
        %6433 = vmatpush1.msra.mxu0 0.0
        %6434 = vmatprep.subr.mxu0 0.0
        %6435 = vmatpush1.msra.mxu0 0.0
        %6436 = vmatprep.subr.mxu0 0.0
        %6437 = vmatpush1.msra.mxu0 0.0
        %6438 = vmatprep.subr.mxu0 0.0
        %6439 = vmatpush1.msra.mxu0 0.0
        %6440 = vmatprep.subr.mxu0 0.0
        %6441 = vmatpush1.msra.mxu0 0.0
        %6442 = vmatprep.subr.mxu0 0.0
        %6443 = vmatpush1.msra.mxu0 0.0
        %6444 = vmatprep.subr.mxu0 0.0
        %6445 = vmatpush1.msra.mxu0 0.0
        %6446 = vmatprep.subr.mxu0 0.0
        %6447 = vmatpush1.msra.mxu0 0.0
        %6448 = vmatprep.subr.mxu0 0.0
        %6449 = vmatpush1.msra.mxu0 0.0
        %6450 = vmatprep.subr.mxu0 0.0
        %6451 = vmatpush1.msra.mxu0 0.0
        %6452 = vmatprep.subr.mxu0 0.0
        %6453 = vmatpush1.msra.mxu0 0.0
        %6454 = vmatprep.subr.mxu0 0.0
        %6455 = vmatpush1.msra.mxu0 0.0
        %6456 = vmatprep.subr.mxu0 0.0
        %6457 = vmatpush1.msra.mxu0 0.0
        %6458 = vmatprep.subr.mxu0 0.0
        %6459 = vmatpush1.msra.mxu0 0.0
        %6460 = vmatprep.subr.mxu0 0.0
        %6461 = vmatpush1.msra.mxu0 0.0
        %6462 = vmatprep.subr.mxu0 0.0
        %6463 = vmatpush1.msra.mxu0 0.0
        %6464 = vmatprep.subr.mxu0 0.0
        %6465 = vmatpush1.msra.mxu0 0.0
        %6466 = vmatprep.subr.mxu0 0.0
        %6467 = vmatpush1.msra.mxu0 0.0
        %6468 = vmatprep.subr.mxu0 0.0
        %6469 = vmatpush1.msra.mxu0 0.0
        %6470 = vmatprep.subr.mxu0 0.0
        %6471 = vmatpush1.msra.mxu0 0.0
        %6472 = vmatprep.subr.mxu0 0.0
        %6473 = vmatpush1.msra.mxu0 0.0
        %6474 = vmatprep.subr.mxu0 0.0
        %6475 = vmatpush1.msra.mxu0 0.0
        %6476 = vmatprep.subr.mxu0 0.0
        %6477 = vmatpush1.msra.mxu0 0.0
        %6478 = vmatprep.subr.mxu0 0.0
        %6479 = vmatpush1.msra.mxu0 0.0
        %6480 = vmatprep.mubr.f32.mxu0 0.0
        %6481 = vmatmul.mubr.f32.gmra.mrb[0].mxu0 %v6414
        %v6482 = vpop.f32.mrb[0].mxu0
        %v6483 = vadd.f32 0.0, %v6482
        %v6484 = vpop.f32.mrb[0].mxu0
        %6485 = vdwg.mxu0
        %v6486 = vadd.f32 %v6394, %v6483
        %v6487 = vld [vmem:[#allocation4 + $0x1d] sm:$0x1]
        %s6488 = scalar_lea.vmem %s5, 928
        %v6489 = vld [vmem:[%s6488] sm:$0xf]
        %v6490 = vld [vmem:[%s6488 + $0x4] sm:$0xf]
        %v6491 = vld [vmem:[%s6488 + $0x8] sm:$0xf]
        %v6492 = vld [vmem:[%s6488 + $0xc] sm:$0xf]
        %v6493 = vld [vmem:[%s6488 + $0x10] sm:$0xf]
        %v6494 = vld [vmem:[%s6488 + $0x14] sm:$0xf]
        %v6495 = vld [vmem:[%s6488 + $0x18] sm:$0xf]
        %v6496 = vld [vmem:[%s6488 + $0x1c] sm:$0xf]
        %v6497 = vunpack.c.l.bf16 %v6489
        %v6498 = vunpack.c.l.bf16 %v6490
        %v6499 = vunpack.c.l.bf16 %v6491
        %v6500 = vunpack.c.l.bf16 %v6492
        %v6501 = vunpack.c.l.bf16 %v6493
        %v6502 = vunpack.c.l.bf16 %v6494
        %v6503 = vunpack.c.l.bf16 %v6495
        %v6504 = vunpack.c.l.bf16 %v6496
        %v6506 = vsel %vm3782, %v6487, 0
        %6508 = vmatprep.subr.mxu0 0.0
        %6509 = vmatpush1.msra.mxu0 %v6497
        %6510 = vmatprep.subr.mxu0 0.0
        %6511 = vmatpush1.msra.mxu0 %v6498
        %6512 = vmatprep.subr.mxu0 0.0
        %6513 = vmatpush1.msra.mxu0 %v6499
        %6514 = vmatprep.subr.mxu0 0.0
        %6515 = vmatpush1.msra.mxu0 %v6500
        %6516 = vmatprep.subr.mxu0 0.0
        %6517 = vmatpush1.msra.mxu0 %v6501
        %6518 = vmatprep.subr.mxu0 0.0
        %6519 = vmatpush1.msra.mxu0 %v6502
        %6520 = vmatprep.subr.mxu0 0.0
        %6521 = vmatpush1.msra.mxu0 %v6503
        %6522 = vmatprep.subr.mxu0 0.0
        %6523 = vmatpush1.msra.mxu0 %v6504
        %6524 = vmatprep.subr.mxu0 0.0
        %6525 = vmatpush1.msra.mxu0 0.0
        %6526 = vmatprep.subr.mxu0 0.0
        %6527 = vmatpush1.msra.mxu0 0.0
        %6528 = vmatprep.subr.mxu0 0.0
        %6529 = vmatpush1.msra.mxu0 0.0
        %6530 = vmatprep.subr.mxu0 0.0
        %6531 = vmatpush1.msra.mxu0 0.0
        %6532 = vmatprep.subr.mxu0 0.0
        %6533 = vmatpush1.msra.mxu0 0.0
        %6534 = vmatprep.subr.mxu0 0.0
        %6535 = vmatpush1.msra.mxu0 0.0
        %6536 = vmatprep.subr.mxu0 0.0
        %6537 = vmatpush1.msra.mxu0 0.0
        %6538 = vmatprep.subr.mxu0 0.0
        %6539 = vmatpush1.msra.mxu0 0.0
        %6540 = vmatprep.subr.mxu0 0.0
        %6541 = vmatpush1.msra.mxu0 0.0
        %6542 = vmatprep.subr.mxu0 0.0
        %6543 = vmatpush1.msra.mxu0 0.0
        %6544 = vmatprep.subr.mxu0 0.0
        %6545 = vmatpush1.msra.mxu0 0.0
        %6546 = vmatprep.subr.mxu0 0.0
        %6547 = vmatpush1.msra.mxu0 0.0
        %6548 = vmatprep.subr.mxu0 0.0
        %6549 = vmatpush1.msra.mxu0 0.0
        %6550 = vmatprep.subr.mxu0 0.0
        %6551 = vmatpush1.msra.mxu0 0.0
        %6552 = vmatprep.subr.mxu0 0.0
        %6553 = vmatpush1.msra.mxu0 0.0
        %6554 = vmatprep.subr.mxu0 0.0
        %6555 = vmatpush1.msra.mxu0 0.0
        %6556 = vmatprep.subr.mxu0 0.0
        %6557 = vmatpush1.msra.mxu0 0.0
        %6558 = vmatprep.subr.mxu0 0.0
        %6559 = vmatpush1.msra.mxu0 0.0
        %6560 = vmatprep.subr.mxu0 0.0
        %6561 = vmatpush1.msra.mxu0 0.0
        %6562 = vmatprep.subr.mxu0 0.0
        %6563 = vmatpush1.msra.mxu0 0.0
        %6564 = vmatprep.subr.mxu0 0.0
        %6565 = vmatpush1.msra.mxu0 0.0
        %6566 = vmatprep.subr.mxu0 0.0
        %6567 = vmatpush1.msra.mxu0 0.0
        %6568 = vmatprep.subr.mxu0 0.0
        %6569 = vmatpush1.msra.mxu0 0.0
        %6570 = vmatprep.subr.mxu0 0.0
        %6571 = vmatpush1.msra.mxu0 0.0
        %6572 = vmatprep.mubr.f32.mxu0 0.0
        %6573 = vmatmul.mubr.f32.gmra.mrb[0].mxu0 %v6506
        %v6574 = vpop.f32.mrb[0].mxu0
        %v6575 = vadd.f32 0.0, %v6574
        %v6576 = vpop.f32.mrb[0].mxu0
        %6577 = vdwg.mxu0
        %v6578 = vadd.f32 %v6486, %v6575
        %v6579 = vld [vmem:[#allocation4 + $0x1e] sm:$0x1]
        %s6580 = scalar_lea.vmem %s5, 960
        %v6581 = vld [vmem:[%s6580] sm:$0xf]
        %v6582 = vld [vmem:[%s6580 + $0x4] sm:$0xf]
        %v6583 = vld [vmem:[%s6580 + $0x8] sm:$0xf]
        %v6584 = vld [vmem:[%s6580 + $0xc] sm:$0xf]
        %v6585 = vld [vmem:[%s6580 + $0x10] sm:$0xf]
        %v6586 = vld [vmem:[%s6580 + $0x14] sm:$0xf]
        %v6587 = vld [vmem:[%s6580 + $0x18] sm:$0xf]
        %v6588 = vld [vmem:[%s6580 + $0x1c] sm:$0xf]
        %v6589 = vunpack.c.l.bf16 %v6581
        %v6590 = vunpack.c.l.bf16 %v6582
        %v6591 = vunpack.c.l.bf16 %v6583
        %v6592 = vunpack.c.l.bf16 %v6584
        %v6593 = vunpack.c.l.bf16 %v6585
        %v6594 = vunpack.c.l.bf16 %v6586
        %v6595 = vunpack.c.l.bf16 %v6587
        %v6596 = vunpack.c.l.bf16 %v6588
        %v6598 = vsel %vm3782, %v6579, 0
        %6600 = vmatprep.subr.mxu0 0.0
        %6601 = vmatpush1.msra.mxu0 %v6589
        %6602 = vmatprep.subr.mxu0 0.0
        %6603 = vmatpush1.msra.mxu0 %v6590
        %6604 = vmatprep.subr.mxu0 0.0
        %6605 = vmatpush1.msra.mxu0 %v6591
        %6606 = vmatprep.subr.mxu0 0.0
        %6607 = vmatpush1.msra.mxu0 %v6592
        %6608 = vmatprep.subr.mxu0 0.0
        %6609 = vmatpush1.msra.mxu0 %v6593
        %6610 = vmatprep.subr.mxu0 0.0
        %6611 = vmatpush1.msra.mxu0 %v6594
        %6612 = vmatprep.subr.mxu0 0.0
        %6613 = vmatpush1.msra.mxu0 %v6595
        %6614 = vmatprep.subr.mxu0 0.0
        %6615 = vmatpush1.msra.mxu0 %v6596
        %6616 = vmatprep.subr.mxu0 0.0
        %6617 = vmatpush1.msra.mxu0 0.0
        %6618 = vmatprep.subr.mxu0 0.0
        %6619 = vmatpush1.msra.mxu0 0.0
        %6620 = vmatprep.subr.mxu0 0.0
        %6621 = vmatpush1.msra.mxu0 0.0
        %6622 = vmatprep.subr.mxu0 0.0
        %6623 = vmatpush1.msra.mxu0 0.0
        %6624 = vmatprep.subr.mxu0 0.0
        %6625 = vmatpush1.msra.mxu0 0.0
        %6626 = vmatprep.subr.mxu0 0.0
        %6627 = vmatpush1.msra.mxu0 0.0
        %6628 = vmatprep.subr.mxu0 0.0
        %6629 = vmatpush1.msra.mxu0 0.0
        %6630 = vmatprep.subr.mxu0 0.0
        %6631 = vmatpush1.msra.mxu0 0.0
        %6632 = vmatprep.subr.mxu0 0.0
        %6633 = vmatpush1.msra.mxu0 0.0
        %6634 = vmatprep.subr.mxu0 0.0
        %6635 = vmatpush1.msra.mxu0 0.0
        %6636 = vmatprep.subr.mxu0 0.0
        %6637 = vmatpush1.msra.mxu0 0.0
        %6638 = vmatprep.subr.mxu0 0.0
        %6639 = vmatpush1.msra.mxu0 0.0
        %6640 = vmatprep.subr.mxu0 0.0
        %6641 = vmatpush1.msra.mxu0 0.0
        %6642 = vmatprep.subr.mxu0 0.0
        %6643 = vmatpush1.msra.mxu0 0.0
        %6644 = vmatprep.subr.mxu0 0.0
        %6645 = vmatpush1.msra.mxu0 0.0
        %6646 = vmatprep.subr.mxu0 0.0
        %6647 = vmatpush1.msra.mxu0 0.0
        %6648 = vmatprep.subr.mxu0 0.0
        %6649 = vmatpush1.msra.mxu0 0.0
        %6650 = vmatprep.subr.mxu0 0.0
        %6651 = vmatpush1.msra.mxu0 0.0
        %6652 = vmatprep.subr.mxu0 0.0
        %6653 = vmatpush1.msra.mxu0 0.0
        %6654 = vmatprep.subr.mxu0 0.0
        %6655 = vmatpush1.msra.mxu0 0.0
        %6656 = vmatprep.subr.mxu0 0.0
        %6657 = vmatpush1.msra.mxu0 0.0
        %6658 = vmatprep.subr.mxu0 0.0
        %6659 = vmatpush1.msra.mxu0 0.0
        %6660 = vmatprep.subr.mxu0 0.0
        %6661 = vmatpush1.msra.mxu0 0.0
        %6662 = vmatprep.subr.mxu0 0.0
        %6663 = vmatpush1.msra.mxu0 0.0
        %6664 = vmatprep.mubr.f32.mxu0 0.0
        %6665 = vmatmul.mubr.f32.gmra.mrb[0].mxu0 %v6598
        %v6666 = vpop.f32.mrb[0].mxu0
        %v6667 = vadd.f32 0.0, %v6666
        %v6668 = vpop.f32.mrb[0].mxu0
        %6669 = vdwg.mxu0
        %v6670 = vadd.f32 %v6578, %v6667
        %v6671 = vld [vmem:[#allocation4 + $0x1f] sm:$0x1]
        %s6672 = scalar_lea.vmem %s5, 992
        %v6673 = vld [vmem:[%s6672] sm:$0xf]
        %v6674 = vld [vmem:[%s6672 + $0x4] sm:$0xf]
        %v6675 = vld [vmem:[%s6672 + $0x8] sm:$0xf]
        %v6676 = vld [vmem:[%s6672 + $0xc] sm:$0xf]
        %v6677 = vld [vmem:[%s6672 + $0x10] sm:$0xf]
        %v6678 = vld [vmem:[%s6672 + $0x14] sm:$0xf]
        %v6679 = vld [vmem:[%s6672 + $0x18] sm:$0xf]
        %v6680 = vld [vmem:[%s6672 + $0x1c] sm:$0xf]
        %v6681 = vunpack.c.l.bf16 %v6673
        %v6682 = vunpack.c.l.bf16 %v6674
        %v6683 = vunpack.c.l.bf16 %v6675
        %v6684 = vunpack.c.l.bf16 %v6676
        %v6685 = vunpack.c.l.bf16 %v6677
        %v6686 = vunpack.c.l.bf16 %v6678
        %v6687 = vunpack.c.l.bf16 %v6679
        %v6688 = vunpack.c.l.bf16 %v6680
        %v6690 = vsel %vm3782, %v6671, 0
        %6692 = vmatprep.subr.mxu0 0.0
        %6693 = vmatpush1.msra.mxu0 %v6681
        %6694 = vmatprep.subr.mxu0 0.0
        %6695 = vmatpush1.msra.mxu0 %v6682
        %6696 = vmatprep.subr.mxu0 0.0
        %6697 = vmatpush1.msra.mxu0 %v6683
        %6698 = vmatprep.subr.mxu0 0.0
        %6699 = vmatpush1.msra.mxu0 %v6684
        %6700 = vmatprep.subr.mxu0 0.0
        %6701 = vmatpush1.msra.mxu0 %v6685
        %6702 = vmatprep.subr.mxu0 0.0
        %6703 = vmatpush1.msra.mxu0 %v6686
        %6704 = vmatprep.subr.mxu0 0.0
        %6705 = vmatpush1.msra.mxu0 %v6687
        %6706 = vmatprep.subr.mxu0 0.0
        %6707 = vmatpush1.msra.mxu0 %v6688
        %6708 = vmatprep.subr.mxu0 0.0
        %6709 = vmatpush1.msra.mxu0 0.0
        %6710 = vmatprep.subr.mxu0 0.0
        %6711 = vmatpush1.msra.mxu0 0.0
        %6712 = vmatprep.subr.mxu0 0.0
        %6713 = vmatpush1.msra.mxu0 0.0
        %6714 = vmatprep.subr.mxu0 0.0
        %6715 = vmatpush1.msra.mxu0 0.0
        %6716 = vmatprep.subr.mxu0 0.0
        %6717 = vmatpush1.msra.mxu0 0.0
        %6718 = vmatprep.subr.mxu0 0.0
        %6719 = vmatpush1.msra.mxu0 0.0
        %6720 = vmatprep.subr.mxu0 0.0
        %6721 = vmatpush1.msra.mxu0 0.0
        %6722 = vmatprep.subr.mxu0 0.0
        %6723 = vmatpush1.msra.mxu0 0.0
        %6724 = vmatprep.subr.mxu0 0.0
        %6725 = vmatpush1.msra.mxu0 0.0
        %6726 = vmatprep.subr.mxu0 0.0
        %6727 = vmatpush1.msra.mxu0 0.0
        %6728 = vmatprep.subr.mxu0 0.0
        %6729 = vmatpush1.msra.mxu0 0.0
        %6730 = vmatprep.subr.mxu0 0.0
        %6731 = vmatpush1.msra.mxu0 0.0
        %6732 = vmatprep.subr.mxu0 0.0
        %6733 = vmatpush1.msra.mxu0 0.0
        %6734 = vmatprep.subr.mxu0 0.0
        %6735 = vmatpush1.msra.mxu0 0.0
        %6736 = vmatprep.subr.mxu0 0.0
        %6737 = vmatpush1.msra.mxu0 0.0
        %6738 = vmatprep.subr.mxu0 0.0
        %6739 = vmatpush1.msra.mxu0 0.0
        %6740 = vmatprep.subr.mxu0 0.0
        %6741 = vmatpush1.msra.mxu0 0.0
        %6742 = vmatprep.subr.mxu0 0.0
        %6743 = vmatpush1.msra.mxu0 0.0
        %6744 = vmatprep.subr.mxu0 0.0
        %6745 = vmatpush1.msra.mxu0 0.0
        %6746 = vmatprep.subr.mxu0 0.0
        %6747 = vmatpush1.msra.mxu0 0.0
        %6748 = vmatprep.subr.mxu0 0.0
        %6749 = vmatpush1.msra.mxu0 0.0
        %6750 = vmatprep.subr.mxu0 0.0
        %6751 = vmatpush1.msra.mxu0 0.0
        %6752 = vmatprep.subr.mxu0 0.0
        %6753 = vmatpush1.msra.mxu0 0.0
        %6754 = vmatprep.subr.mxu0 0.0
        %6755 = vmatpush1.msra.mxu0 0.0
        %6756 = vmatprep.mubr.f32.mxu0 0.0
        %6757 = vmatmul.mubr.f32.gmra.mrb[0].mxu0 %v6690
        %v6758 = vpop.f32.mrb[0].mxu0
        %v6759 = vadd.f32 0.0, %v6758
        %v6760 = vpop.f32.mrb[0].mxu0
        %6761 = vdwg.mxu0
        %v6762 = vadd.f32 %v6670, %v6759
        %v6763 = vld [vmem:[#allocation4 + $0x20] sm:$0x1]
        %s6764 = scalar_lea.vmem %s5, 1024
        %v6765 = vld [vmem:[%s6764] sm:$0xf]
        %v6766 = vld [vmem:[%s6764 + $0x4] sm:$0xf]
        %v6767 = vld [vmem:[%s6764 + $0x8] sm:$0xf]
        %v6768 = vld [vmem:[%s6764 + $0xc] sm:$0xf]
        %v6769 = vld [vmem:[%s6764 + $0x10] sm:$0xf]
        %v6770 = vld [vmem:[%s6764 + $0x14] sm:$0xf]
        %v6771 = vld [vmem:[%s6764 + $0x18] sm:$0xf]
        %v6772 = vld [vmem:[%s6764 + $0x1c] sm:$0xf]
        %v6773 = vunpack.c.l.bf16 %v6765
        %v6774 = vunpack.c.l.bf16 %v6766
        %v6775 = vunpack.c.l.bf16 %v6767
        %v6776 = vunpack.c.l.bf16 %v6768
        %v6777 = vunpack.c.l.bf16 %v6769
        %v6778 = vunpack.c.l.bf16 %v6770
        %v6779 = vunpack.c.l.bf16 %v6771
        %v6780 = vunpack.c.l.bf16 %v6772
        %v6782 = vsel %vm3782, %v6763, 0
        %6784 = vmatprep.subr.mxu0 0.0
        %6785 = vmatpush1.msra.mxu0 %v6773
        %6786 = vmatprep.subr.mxu0 0.0
        %6787 = vmatpush1.msra.mxu0 %v6774
        %6788 = vmatprep.subr.mxu0 0.0
        %6789 = vmatpush1.msra.mxu0 %v6775
        %6790 = vmatprep.subr.mxu0 0.0
        %6791 = vmatpush1.msra.mxu0 %v6776
        %6792 = vmatprep.subr.mxu0 0.0
        %6793 = vmatpush1.msra.mxu0 %v6777
        %6794 = vmatprep.subr.mxu0 0.0
        %6795 = vmatpush1.msra.mxu0 %v6778
        %6796 = vmatprep.subr.mxu0 0.0
        %6797 = vmatpush1.msra.mxu0 %v6779
        %6798 = vmatprep.subr.mxu0 0.0
        %6799 = vmatpush1.msra.mxu0 %v6780
        %6800 = vmatprep.subr.mxu0 0.0
        %6801 = vmatpush1.msra.mxu0 0.0
        %6802 = vmatprep.subr.mxu0 0.0
        %6803 = vmatpush1.msra.mxu0 0.0
        %6804 = vmatprep.subr.mxu0 0.0
        %6805 = vmatpush1.msra.mxu0 0.0
        %6806 = vmatprep.subr.mxu0 0.0
        %6807 = vmatpush1.msra.mxu0 0.0
        %6808 = vmatprep.subr.mxu0 0.0
        %6809 = vmatpush1.msra.mxu0 0.0
        %6810 = vmatprep.subr.mxu0 0.0
        %6811 = vmatpush1.msra.mxu0 0.0
        %6812 = vmatprep.subr.mxu0 0.0
        %6813 = vmatpush1.msra.mxu0 0.0
        %6814 = vmatprep.subr.mxu0 0.0
        %6815 = vmatpush1.msra.mxu0 0.0
        %6816 = vmatprep.subr.mxu0 0.0
        %6817 = vmatpush1.msra.mxu0 0.0
        %6818 = vmatprep.subr.mxu0 0.0
        %6819 = vmatpush1.msra.mxu0 0.0
        %6820 = vmatprep.subr.mxu0 0.0
        %6821 = vmatpush1.msra.mxu0 0.0
        %6822 = vmatprep.subr.mxu0 0.0
        %6823 = vmatpush1.msra.mxu0 0.0
        %6824 = vmatprep.subr.mxu0 0.0
        %6825 = vmatpush1.msra.mxu0 0.0
        %6826 = vmatprep.subr.mxu0 0.0
        %6827 = vmatpush1.msra.mxu0 0.0
        %6828 = vmatprep.subr.mxu0 0.0
        %6829 = vmatpush1.msra.mxu0 0.0
        %6830 = vmatprep.subr.mxu0 0.0
        %6831 = vmatpush1.msra.mxu0 0.0
        %6832 = vmatprep.subr.mxu0 0.0
        %6833 = vmatpush1.msra.mxu0 0.0
        %6834 = vmatprep.subr.mxu0 0.0
        %6835 = vmatpush1.msra.mxu0 0.0
        %6836 = vmatprep.subr.mxu0 0.0
        %6837 = vmatpush1.msra.mxu0 0.0
        %6838 = vmatprep.subr.mxu0 0.0
        %6839 = vmatpush1.msra.mxu0 0.0
        %6840 = vmatprep.subr.mxu0 0.0
        %6841 = vmatpush1.msra.mxu0 0.0
        %6842 = vmatprep.subr.mxu0 0.0
        %6843 = vmatpush1.msra.mxu0 0.0
        %6844 = vmatprep.subr.mxu0 0.0
        %6845 = vmatpush1.msra.mxu0 0.0
        %6846 = vmatprep.subr.mxu0 0.0
        %6847 = vmatpush1.msra.mxu0 0.0
        %6848 = vmatprep.mubr.f32.mxu0 0.0
        %6849 = vmatmul.mubr.f32.gmra.mrb[0].mxu0 %v6782
        %v6850 = vpop.f32.mrb[0].mxu0
        %v6851 = vadd.f32 0.0, %v6850
        %v6852 = vpop.f32.mrb[0].mxu0
        %6853 = vdwg.mxu0
        %v6854 = vadd.f32 %v6762, %v6851
        %v6855 = vld [vmem:[#allocation4 + $0x21] sm:$0x1]
        %s6856 = scalar_lea.vmem %s5, 1056
        %v6857 = vld [vmem:[%s6856] sm:$0xf]
        %v6858 = vld [vmem:[%s6856 + $0x4] sm:$0xf]
        %v6859 = vld [vmem:[%s6856 + $0x8] sm:$0xf]
        %v6860 = vld [vmem:[%s6856 + $0xc] sm:$0xf]
        %v6861 = vld [vmem:[%s6856 + $0x10] sm:$0xf]
        %v6862 = vld [vmem:[%s6856 + $0x14] sm:$0xf]
        %v6863 = vld [vmem:[%s6856 + $0x18] sm:$0xf]
        %v6864 = vld [vmem:[%s6856 + $0x1c] sm:$0xf]
        %v6865 = vunpack.c.l.bf16 %v6857
        %v6866 = vunpack.c.l.bf16 %v6858
        %v6867 = vunpack.c.l.bf16 %v6859
        %v6868 = vunpack.c.l.bf16 %v6860
        %v6869 = vunpack.c.l.bf16 %v6861
        %v6870 = vunpack.c.l.bf16 %v6862
        %v6871 = vunpack.c.l.bf16 %v6863
        %v6872 = vunpack.c.l.bf16 %v6864
        %v6874 = vsel %vm3782, %v6855, 0
        %6876 = vmatprep.subr.mxu0 0.0
        %6877 = vmatpush1.msra.mxu0 %v6865
        %6878 = vmatprep.subr.mxu0 0.0
        %6879 = vmatpush1.msra.mxu0 %v6866
        %6880 = vmatprep.subr.mxu0 0.0
        %6881 = vmatpush1.msra.mxu0 %v6867
        %6882 = vmatprep.subr.mxu0 0.0
        %6883 = vmatpush1.msra.mxu0 %v6868
        %6884 = vmatprep.subr.mxu0 0.0
        %6885 = vmatpush1.msra.mxu0 %v6869
        %6886 = vmatprep.subr.mxu0 0.0
        %6887 = vmatpush1.msra.mxu0 %v6870
        %6888 = vmatprep.subr.mxu0 0.0
        %6889 = vmatpush1.msra.mxu0 %v6871
        %6890 = vmatprep.subr.mxu0 0.0
        %6891 = vmatpush1.msra.mxu0 %v6872
        %6892 = vmatprep.subr.mxu0 0.0
        %6893 = vmatpush1.msra.mxu0 0.0
        %6894 = vmatprep.subr.mxu0 0.0
        %6895 = vmatpush1.msra.mxu0 0.0
        %6896 = vmatprep.subr.mxu0 0.0
        %6897 = vmatpush1.msra.mxu0 0.0
        %6898 = vmatprep.subr.mxu0 0.0
        %6899 = vmatpush1.msra.mxu0 0.0
        %6900 = vmatprep.subr.mxu0 0.0
        %6901 = vmatpush1.msra.mxu0 0.0
        %6902 = vmatprep.subr.mxu0 0.0
        %6903 = vmatpush1.msra.mxu0 0.0
        %6904 = vmatprep.subr.mxu0 0.0
        %6905 = vmatpush1.msra.mxu0 0.0
        %6906 = vmatprep.subr.mxu0 0.0
        %6907 = vmatpush1.msra.mxu0 0.0
        %6908 = vmatprep.subr.mxu0 0.0
        %6909 = vmatpush1.msra.mxu0 0.0
        %6910 = vmatprep.subr.mxu0 0.0
        %6911 = vmatpush1.msra.mxu0 0.0
        %6912 = vmatprep.subr.mxu0 0.0
        %6913 = vmatpush1.msra.mxu0 0.0
        %6914 = vmatprep.subr.mxu0 0.0
        %6915 = vmatpush1.msra.mxu0 0.0
        %6916 = vmatprep.subr.mxu0 0.0
        %6917 = vmatpush1.msra.mxu0 0.0
        %6918 = vmatprep.subr.mxu0 0.0
        %6919 = vmatpush1.msra.mxu0 0.0
        %6920 = vmatprep.subr.mxu0 0.0
        %6921 = vmatpush1.msra.mxu0 0.0
        %6922 = vmatprep.subr.mxu0 0.0
        %6923 = vmatpush1.msra.mxu0 0.0
        %6924 = vmatprep.subr.mxu0 0.0
        %6925 = vmatpush1.msra.mxu0 0.0
        %6926 = vmatprep.subr.mxu0 0.0
        %6927 = vmatpush1.msra.mxu0 0.0
        %6928 = vmatprep.subr.mxu0 0.0
        %6929 = vmatpush1.msra.mxu0 0.0
        %6930 = vmatprep.subr.mxu0 0.0
        %6931 = vmatpush1.msra.mxu0 0.0
        %6932 = vmatprep.subr.mxu0 0.0
        %6933 = vmatpush1.msra.mxu0 0.0
        %6934 = vmatprep.subr.mxu0 0.0
        %6935 = vmatpush1.msra.mxu0 0.0
        %6936 = vmatprep.subr.mxu0 0.0
        %6937 = vmatpush1.msra.mxu0 0.0
        %6938 = vmatprep.subr.mxu0 0.0
        %6939 = vmatpush1.msra.mxu0 0.0
        %6940 = vmatprep.mubr.f32.mxu0 0.0
        %6941 = vmatmul.mubr.f32.gmra.mrb[0].mxu0 %v6874
        %v6942 = vpop.f32.mrb[0].mxu0
        %v6943 = vadd.f32 0.0, %v6942
        %v6944 = vpop.f32.mrb[0].mxu0
        %6945 = vdwg.mxu0
        %v6946 = vadd.f32 %v6854, %v6943
        %v6947 = vld [vmem:[#allocation4 + $0x22] sm:$0x1]
        %s6948 = scalar_lea.vmem %s5, 1088
        %v6949 = vld [vmem:[%s6948] sm:$0xf]
        %v6950 = vld [vmem:[%s6948 + $0x4] sm:$0xf]
        %v6951 = vld [vmem:[%s6948 + $0x8] sm:$0xf]
        %v6952 = vld [vmem:[%s6948 + $0xc] sm:$0xf]
        %v6953 = vld [vmem:[%s6948 + $0x10] sm:$0xf]
        %v6954 = vld [vmem:[%s6948 + $0x14] sm:$0xf]
        %v6955 = vld [vmem:[%s6948 + $0x18] sm:$0xf]
        %v6956 = vld [vmem:[%s6948 + $0x1c] sm:$0xf]
        %v6957 = vunpack.c.l.bf16 %v6949
        %v6958 = vunpack.c.l.bf16 %v6950
        %v6959 = vunpack.c.l.bf16 %v6951
        %v6960 = vunpack.c.l.bf16 %v6952
        %v6961 = vunpack.c.l.bf16 %v6953
        %v6962 = vunpack.c.l.bf16 %v6954
        %v6963 = vunpack.c.l.bf16 %v6955
        %v6964 = vunpack.c.l.bf16 %v6956
        %v6966 = vsel %vm3782, %v6947, 0
        %6968 = vmatprep.subr.mxu0 0.0
        %6969 = vmatpush1.msra.mxu0 %v6957
        %6970 = vmatprep.subr.mxu0 0.0
        %6971 = vmatpush1.msra.mxu0 %v6958
        %6972 = vmatprep.subr.mxu0 0.0
        %6973 = vmatpush1.msra.mxu0 %v6959
        %6974 = vmatprep.subr.mxu0 0.0
        %6975 = vmatpush1.msra.mxu0 %v6960
        %6976 = vmatprep.subr.mxu0 0.0
        %6977 = vmatpush1.msra.mxu0 %v6961
        %6978 = vmatprep.subr.mxu0 0.0
        %6979 = vmatpush1.msra.mxu0 %v6962
        %6980 = vmatprep.subr.mxu0 0.0
        %6981 = vmatpush1.msra.mxu0 %v6963
        %6982 = vmatprep.subr.mxu0 0.0
        %6983 = vmatpush1.msra.mxu0 %v6964
        %6984 = vmatprep.subr.mxu0 0.0
        %6985 = vmatpush1.msra.mxu0 0.0
        %6986 = vmatprep.subr.mxu0 0.0
        %6987 = vmatpush1.msra.mxu0 0.0
        %6988 = vmatprep.subr.mxu0 0.0
        %6989 = vmatpush1.msra.mxu0 0.0
        %6990 = vmatprep.subr.mxu0 0.0
        %6991 = vmatpush1.msra.mxu0 0.0
        %6992 = vmatprep.subr.mxu0 0.0
        %6993 = vmatpush1.msra.mxu0 0.0
        %6994 = vmatprep.subr.mxu0 0.0
        %6995 = vmatpush1.msra.mxu0 0.0
        %6996 = vmatprep.subr.mxu0 0.0
        %6997 = vmatpush1.msra.mxu0 0.0
        %6998 = vmatprep.subr.mxu0 0.0
        %6999 = vmatpush1.msra.mxu0 0.0
        %7000 = vmatprep.subr.mxu0 0.0
        %7001 = vmatpush1.msra.mxu0 0.0
        %7002 = vmatprep.subr.mxu0 0.0
        %7003 = vmatpush1.msra.mxu0 0.0
        %7004 = vmatprep.subr.mxu0 0.0
        %7005 = vmatpush1.msra.mxu0 0.0
        %7006 = vmatprep.subr.mxu0 0.0
        %7007 = vmatpush1.msra.mxu0 0.0
        %7008 = vmatprep.subr.mxu0 0.0
        %7009 = vmatpush1.msra.mxu0 0.0
        %7010 = vmatprep.subr.mxu0 0.0
        %7011 = vmatpush1.msra.mxu0 0.0
        %7012 = vmatprep.subr.mxu0 0.0
        %7013 = vmatpush1.msra.mxu0 0.0
        %7014 = vmatprep.subr.mxu0 0.0
        %7015 = vmatpush1.msra.mxu0 0.0
        %7016 = vmatprep.subr.mxu0 0.0
        %7017 = vmatpush1.msra.mxu0 0.0
        %7018 = vmatprep.subr.mxu0 0.0
        %7019 = vmatpush1.msra.mxu0 0.0
        %7020 = vmatprep.subr.mxu0 0.0
        %7021 = vmatpush1.msra.mxu0 0.0
        %7022 = vmatprep.subr.mxu0 0.0
        %7023 = vmatpush1.msra.mxu0 0.0
        %7024 = vmatprep.subr.mxu0 0.0
        %7025 = vmatpush1.msra.mxu0 0.0
        %7026 = vmatprep.subr.mxu0 0.0
        %7027 = vmatpush1.msra.mxu0 0.0
        %7028 = vmatprep.subr.mxu0 0.0
        %7029 = vmatpush1.msra.mxu0 0.0
        %7030 = vmatprep.subr.mxu0 0.0
        %7031 = vmatpush1.msra.mxu0 0.0
        %7032 = vmatprep.mubr.f32.mxu0 0.0
        %7033 = vmatmul.mubr.f32.gmra.mrb[0].mxu0 %v6966
        %v7034 = vpop.f32.mrb[0].mxu0
        %v7035 = vadd.f32 0.0, %v7034
        %v7036 = vpop.f32.mrb[0].mxu0
        %7037 = vdwg.mxu0
        %v7038 = vadd.f32 %v6946, %v7035
        %v7039 = vld [vmem:[#allocation4 + $0x23] sm:$0x1]
        %s7040 = scalar_lea.vmem %s5, 1120
        %v7041 = vld [vmem:[%s7040] sm:$0xf]
        %v7042 = vld [vmem:[%s7040 + $0x4] sm:$0xf]
        %v7043 = vld [vmem:[%s7040 + $0x8] sm:$0xf]
        %v7044 = vld [vmem:[%s7040 + $0xc] sm:$0xf]
        %v7045 = vld [vmem:[%s7040 + $0x10] sm:$0xf]
        %v7046 = vld [vmem:[%s7040 + $0x14] sm:$0xf]
        %v7047 = vld [vmem:[%s7040 + $0x18] sm:$0xf]
        %v7048 = vld [vmem:[%s7040 + $0x1c] sm:$0xf]
        %v7049 = vunpack.c.l.bf16 %v7041
        %v7050 = vunpack.c.l.bf16 %v7042
        %v7051 = vunpack.c.l.bf16 %v7043
        %v7052 = vunpack.c.l.bf16 %v7044
        %v7053 = vunpack.c.l.bf16 %v7045
        %v7054 = vunpack.c.l.bf16 %v7046
        %v7055 = vunpack.c.l.bf16 %v7047
        %v7056 = vunpack.c.l.bf16 %v7048
        %v7058 = vsel %vm3782, %v7039, 0
        %7060 = vmatprep.subr.mxu0 0.0
        %7061 = vmatpush1.msra.mxu0 %v7049
        %7062 = vmatprep.subr.mxu0 0.0
        %7063 = vmatpush1.msra.mxu0 %v7050
        %7064 = vmatprep.subr.mxu0 0.0
        %7065 = vmatpush1.msra.mxu0 %v7051
        %7066 = vmatprep.subr.mxu0 0.0
        %7067 = vmatpush1.msra.mxu0 %v7052
        %7068 = vmatprep.subr.mxu0 0.0
        %7069 = vmatpush1.msra.mxu0 %v7053
        %7070 = vmatprep.subr.mxu0 0.0
        %7071 = vmatpush1.msra.mxu0 %v7054
        %7072 = vmatprep.subr.mxu0 0.0
        %7073 = vmatpush1.msra.mxu0 %v7055
        %7074 = vmatprep.subr.mxu0 0.0
        %7075 = vmatpush1.msra.mxu0 %v7056
        %7076 = vmatprep.subr.mxu0 0.0
        %7077 = vmatpush1.msra.mxu0 0.0
        %7078 = vmatprep.subr.mxu0 0.0
        %7079 = vmatpush1.msra.mxu0 0.0
        %7080 = vmatprep.subr.mxu0 0.0
        %7081 = vmatpush1.msra.mxu0 0.0
        %7082 = vmatprep.subr.mxu0 0.0
        %7083 = vmatpush1.msra.mxu0 0.0
        %7084 = vmatprep.subr.mxu0 0.0
        %7085 = vmatpush1.msra.mxu0 0.0
        %7086 = vmatprep.subr.mxu0 0.0
        %7087 = vmatpush1.msra.mxu0 0.0
        %7088 = vmatprep.subr.mxu0 0.0
        %7089 = vmatpush1.msra.mxu0 0.0
        %7090 = vmatprep.subr.mxu0 0.0
        %7091 = vmatpush1.msra.mxu0 0.0
        %7092 = vmatprep.subr.mxu0 0.0
        %7093 = vmatpush1.msra.mxu0 0.0
        %7094 = vmatprep.subr.mxu0 0.0
        %7095 = vmatpush1.msra.mxu0 0.0
        %7096 = vmatprep.subr.mxu0 0.0
        %7097 = vmatpush1.msra.mxu0 0.0
        %7098 = vmatprep.subr.mxu0 0.0
        %7099 = vmatpush1.msra.mxu0 0.0
        %7100 = vmatprep.subr.mxu0 0.0
        %7101 = vmatpush1.msra.mxu0 0.0
        %7102 = vmatprep.subr.mxu0 0.0
        %7103 = vmatpush1.msra.mxu0 0.0
        %7104 = vmatprep.subr.mxu0 0.0
        %7105 = vmatpush1.msra.mxu0 0.0
        %7106 = vmatprep.subr.mxu0 0.0
        %7107 = vmatpush1.msra.mxu0 0.0
        %7108 = vmatprep.subr.mxu0 0.0
        %7109 = vmatpush1.msra.mxu0 0.0
        %7110 = vmatprep.subr.mxu0 0.0
        %7111 = vmatpush1.msra.mxu0 0.0
        %7112 = vmatprep.subr.mxu0 0.0
        %7113 = vmatpush1.msra.mxu0 0.0
        %7114 = vmatprep.subr.mxu0 0.0
        %7115 = vmatpush1.msra.mxu0 0.0
        %7116 = vmatprep.subr.mxu0 0.0
        %7117 = vmatpush1.msra.mxu0 0.0
        %7118 = vmatprep.subr.mxu0 0.0
        %7119 = vmatpush1.msra.mxu0 0.0
        %7120 = vmatprep.subr.mxu0 0.0
        %7121 = vmatpush1.msra.mxu0 0.0
        %7122 = vmatprep.subr.mxu0 0.0
        %7123 = vmatpush1.msra.mxu0 0.0
        %7124 = vmatprep.mubr.f32.mxu0 0.0
        %7125 = vmatmul.mubr.f32.gmra.mrb[0].mxu0 %v7058
        %v7126 = vpop.f32.mrb[0].mxu0
        %v7127 = vadd.f32 0.0, %v7126
        %v7128 = vpop.f32.mrb[0].mxu0
        %7129 = vdwg.mxu0
        %v7130 = vadd.f32 %v7038, %v7127
        %v7131 = vld [vmem:[#allocation4 + $0x24] sm:$0x1]
        %s7132 = scalar_lea.vmem %s5, 1152
        %v7133 = vld [vmem:[%s7132] sm:$0xf]
        %v7134 = vld [vmem:[%s7132 + $0x4] sm:$0xf]
        %v7135 = vld [vmem:[%s7132 + $0x8] sm:$0xf]
        %v7136 = vld [vmem:[%s7132 + $0xc] sm:$0xf]
        %v7137 = vld [vmem:[%s7132 + $0x10] sm:$0xf]
        %v7138 = vld [vmem:[%s7132 + $0x14] sm:$0xf]
        %v7139 = vld [vmem:[%s7132 + $0x18] sm:$0xf]
        %v7140 = vld [vmem:[%s7132 + $0x1c] sm:$0xf]
        %v7141 = vunpack.c.l.bf16 %v7133
        %v7142 = vunpack.c.l.bf16 %v7134
        %v7143 = vunpack.c.l.bf16 %v7135
        %v7144 = vunpack.c.l.bf16 %v7136
        %v7145 = vunpack.c.l.bf16 %v7137
        %v7146 = vunpack.c.l.bf16 %v7138
        %v7147 = vunpack.c.l.bf16 %v7139
        %v7148 = vunpack.c.l.bf16 %v7140
        %v7150 = vsel %vm3782, %v7131, 0
        %7152 = vmatprep.subr.mxu0 0.0
        %7153 = vmatpush1.msra.mxu0 %v7141
        %7154 = vmatprep.subr.mxu0 0.0
        %7155 = vmatpush1.msra.mxu0 %v7142
        %7156 = vmatprep.subr.mxu0 0.0
        %7157 = vmatpush1.msra.mxu0 %v7143
        %7158 = vmatprep.subr.mxu0 0.0
        %7159 = vmatpush1.msra.mxu0 %v7144
        %7160 = vmatprep.subr.mxu0 0.0
        %7161 = vmatpush1.msra.mxu0 %v7145
        %7162 = vmatprep.subr.mxu0 0.0
        %7163 = vmatpush1.msra.mxu0 %v7146
        %7164 = vmatprep.subr.mxu0 0.0
        %7165 = vmatpush1.msra.mxu0 %v7147
        %7166 = vmatprep.subr.mxu0 0.0
        %7167 = vmatpush1.msra.mxu0 %v7148
        %7168 = vmatprep.subr.mxu0 0.0
        %7169 = vmatpush1.msra.mxu0 0.0
        %7170 = vmatprep.subr.mxu0 0.0
        %7171 = vmatpush1.msra.mxu0 0.0
        %7172 = vmatprep.subr.mxu0 0.0
        %7173 = vmatpush1.msra.mxu0 0.0
        %7174 = vmatprep.subr.mxu0 0.0
        %7175 = vmatpush1.msra.mxu0 0.0
        %7176 = vmatprep.subr.mxu0 0.0
        %7177 = vmatpush1.msra.mxu0 0.0
        %7178 = vmatprep.subr.mxu0 0.0
        %7179 = vmatpush1.msra.mxu0 0.0
        %7180 = vmatprep.subr.mxu0 0.0
        %7181 = vmatpush1.msra.mxu0 0.0
        %7182 = vmatprep.subr.mxu0 0.0
        %7183 = vmatpush1.msra.mxu0 0.0
        %7184 = vmatprep.subr.mxu0 0.0
        %7185 = vmatpush1.msra.mxu0 0.0
        %7186 = vmatprep.subr.mxu0 0.0
        %7187 = vmatpush1.msra.mxu0 0.0
        %7188 = vmatprep.subr.mxu0 0.0
        %7189 = vmatpush1.msra.mxu0 0.0
        %7190 = vmatprep.subr.mxu0 0.0
        %7191 = vmatpush1.msra.mxu0 0.0
        %7192 = vmatprep.subr.mxu0 0.0
        %7193 = vmatpush1.msra.mxu0 0.0
        %7194 = vmatprep.subr.mxu0 0.0
        %7195 = vmatpush1.msra.mxu0 0.0
        %7196 = vmatprep.subr.mxu0 0.0
        %7197 = vmatpush1.msra.mxu0 0.0
        %7198 = vmatprep.subr.mxu0 0.0
        %7199 = vmatpush1.msra.mxu0 0.0
        %7200 = vmatprep.subr.mxu0 0.0
        %7201 = vmatpush1.msra.mxu0 0.0
        %7202 = vmatprep.subr.mxu0 0.0
        %7203 = vmatpush1.msra.mxu0 0.0
        %7204 = vmatprep.subr.mxu0 0.0
        %7205 = vmatpush1.msra.mxu0 0.0
        %7206 = vmatprep.subr.mxu0 0.0
        %7207 = vmatpush1.msra.mxu0 0.0
        %7208 = vmatprep.subr.mxu0 0.0
        %7209 = vmatpush1.msra.mxu0 0.0
        %7210 = vmatprep.subr.mxu0 0.0
        %7211 = vmatpush1.msra.mxu0 0.0
        %7212 = vmatprep.subr.mxu0 0.0
        %7213 = vmatpush1.msra.mxu0 0.0
        %7214 = vmatprep.subr.mxu0 0.0
        %7215 = vmatpush1.msra.mxu0 0.0
        %7216 = vmatprep.mubr.f32.mxu0 0.0
        %7217 = vmatmul.mubr.f32.gmra.mrb[0].mxu0 %v7150
        %v7218 = vpop.f32.mrb[0].mxu0
        %v7219 = vadd.f32 0.0, %v7218
        %v7220 = vpop.f32.mrb[0].mxu0
        %7221 = vdwg.mxu0
        %v7222 = vadd.f32 %v7130, %v7219
        %v7223 = vld [vmem:[#allocation4 + $0x25] sm:$0x1]
        %s7224 = scalar_lea.vmem %s5, 1184
        %v7225 = vld [vmem:[%s7224] sm:$0xf]
        %v7226 = vld [vmem:[%s7224 + $0x4] sm:$0xf]
        %v7227 = vld [vmem:[%s7224 + $0x8] sm:$0xf]
        %v7228 = vld [vmem:[%s7224 + $0xc] sm:$0xf]
        %v7229 = vld [vmem:[%s7224 + $0x10] sm:$0xf]
        %v7230 = vld [vmem:[%s7224 + $0x14] sm:$0xf]
        %v7231 = vld [vmem:[%s7224 + $0x18] sm:$0xf]
        %v7232 = vld [vmem:[%s7224 + $0x1c] sm:$0xf]
        %v7233 = vunpack.c.l.bf16 %v7225
        %v7234 = vunpack.c.l.bf16 %v7226
        %v7235 = vunpack.c.l.bf16 %v7227
        %v7236 = vunpack.c.l.bf16 %v7228
        %v7237 = vunpack.c.l.bf16 %v7229
        %v7238 = vunpack.c.l.bf16 %v7230
        %v7239 = vunpack.c.l.bf16 %v7231
        %v7240 = vunpack.c.l.bf16 %v7232
        %v7242 = vsel %vm3782, %v7223, 0
        %7244 = vmatprep.subr.mxu0 0.0
        %7245 = vmatpush1.msra.mxu0 %v7233
        %7246 = vmatprep.subr.mxu0 0.0
        %7247 = vmatpush1.msra.mxu0 %v7234
        %7248 = vmatprep.subr.mxu0 0.0
        %7249 = vmatpush1.msra.mxu0 %v7235
        %7250 = vmatprep.subr.mxu0 0.0
        %7251 = vmatpush1.msra.mxu0 %v7236
        %7252 = vmatprep.subr.mxu0 0.0
        %7253 = vmatpush1.msra.mxu0 %v7237
        %7254 = vmatprep.subr.mxu0 0.0
        %7255 = vmatpush1.msra.mxu0 %v7238
        %7256 = vmatprep.subr.mxu0 0.0
        %7257 = vmatpush1.msra.mxu0 %v7239
        %7258 = vmatprep.subr.mxu0 0.0
        %7259 = vmatpush1.msra.mxu0 %v7240
        %7260 = vmatprep.subr.mxu0 0.0
        %7261 = vmatpush1.msra.mxu0 0.0
        %7262 = vmatprep.subr.mxu0 0.0
        %7263 = vmatpush1.msra.mxu0 0.0
        %7264 = vmatprep.subr.mxu0 0.0
        %7265 = vmatpush1.msra.mxu0 0.0
        %7266 = vmatprep.subr.mxu0 0.0
        %7267 = vmatpush1.msra.mxu0 0.0
        %7268 = vmatprep.subr.mxu0 0.0
        %7269 = vmatpush1.msra.mxu0 0.0
        %7270 = vmatprep.subr.mxu0 0.0
        %7271 = vmatpush1.msra.mxu0 0.0
        %7272 = vmatprep.subr.mxu0 0.0
        %7273 = vmatpush1.msra.mxu0 0.0
        %7274 = vmatprep.subr.mxu0 0.0
        %7275 = vmatpush1.msra.mxu0 0.0
        %7276 = vmatprep.subr.mxu0 0.0
        %7277 = vmatpush1.msra.mxu0 0.0
        %7278 = vmatprep.subr.mxu0 0.0
        %7279 = vmatpush1.msra.mxu0 0.0
        %7280 = vmatprep.subr.mxu0 0.0
        %7281 = vmatpush1.msra.mxu0 0.0
        %7282 = vmatprep.subr.mxu0 0.0
        %7283 = vmatpush1.msra.mxu0 0.0
        %7284 = vmatprep.subr.mxu0 0.0
        %7285 = vmatpush1.msra.mxu0 0.0
        %7286 = vmatprep.subr.mxu0 0.0
        %7287 = vmatpush1.msra.mxu0 0.0
        %7288 = vmatprep.subr.mxu0 0.0
        %7289 = vmatpush1.msra.mxu0 0.0
        %7290 = vmatprep.subr.mxu0 0.0
        %7291 = vmatpush1.msra.mxu0 0.0
        %7292 = vmatprep.subr.mxu0 0.0
        %7293 = vmatpush1.msra.mxu0 0.0
        %7294 = vmatprep.subr.mxu0 0.0
        %7295 = vmatpush1.msra.mxu0 0.0
        %7296 = vmatprep.subr.mxu0 0.0
        %7297 = vmatpush1.msra.mxu0 0.0
        %7298 = vmatprep.subr.mxu0 0.0
        %7299 = vmatpush1.msra.mxu0 0.0
        %7300 = vmatprep.subr.mxu0 0.0
        %7301 = vmatpush1.msra.mxu0 0.0
        %7302 = vmatprep.subr.mxu0 0.0
        %7303 = vmatpush1.msra.mxu0 0.0
        %7304 = vmatprep.subr.mxu0 0.0
        %7305 = vmatpush1.msra.mxu0 0.0
        %7306 = vmatprep.subr.mxu0 0.0
        %7307 = vmatpush1.msra.mxu0 0.0
        %7308 = vmatprep.mubr.f32.mxu0 0.0
        %7309 = vmatmul.mubr.f32.gmra.mrb[0].mxu0 %v7242
        %v7310 = vpop.f32.mrb[0].mxu0
        %v7311 = vadd.f32 0.0, %v7310
        %v7312 = vpop.f32.mrb[0].mxu0
        %7313 = vdwg.mxu0
        %v7314 = vadd.f32 %v7222, %v7311
        %v7315 = vld [vmem:[#allocation4 + $0x26] sm:$0x1]
        %s7316 = scalar_lea.vmem %s5, 1216
        %v7317 = vld [vmem:[%s7316] sm:$0xf]
        %v7318 = vld [vmem:[%s7316 + $0x4] sm:$0xf]
        %v7319 = vld [vmem:[%s7316 + $0x8] sm:$0xf]
        %v7320 = vld [vmem:[%s7316 + $0xc] sm:$0xf]
        %v7321 = vld [vmem:[%s7316 + $0x10] sm:$0xf]
        %v7322 = vld [vmem:[%s7316 + $0x14] sm:$0xf]
        %v7323 = vld [vmem:[%s7316 + $0x18] sm:$0xf]
        %v7324 = vld [vmem:[%s7316 + $0x1c] sm:$0xf]
        %v7325 = vunpack.c.l.bf16 %v7317
        %v7326 = vunpack.c.l.bf16 %v7318
        %v7327 = vunpack.c.l.bf16 %v7319
        %v7328 = vunpack.c.l.bf16 %v7320
        %v7329 = vunpack.c.l.bf16 %v7321
        %v7330 = vunpack.c.l.bf16 %v7322
        %v7331 = vunpack.c.l.bf16 %v7323
        %v7332 = vunpack.c.l.bf16 %v7324
        %v7334 = vsel %vm3782, %v7315, 0
        %7336 = vmatprep.subr.mxu0 0.0
        %7337 = vmatpush1.msra.mxu0 %v7325
        %7338 = vmatprep.subr.mxu0 0.0
        %7339 = vmatpush1.msra.mxu0 %v7326
        %7340 = vmatprep.subr.mxu0 0.0
        %7341 = vmatpush1.msra.mxu0 %v7327
        %7342 = vmatprep.subr.mxu0 0.0
        %7343 = vmatpush1.msra.mxu0 %v7328
        %7344 = vmatprep.subr.mxu0 0.0
        %7345 = vmatpush1.msra.mxu0 %v7329
        %7346 = vmatprep.subr.mxu0 0.0
        %7347 = vmatpush1.msra.mxu0 %v7330
        %7348 = vmatprep.subr.mxu0 0.0
        %7349 = vmatpush1.msra.mxu0 %v7331
        %7350 = vmatprep.subr.mxu0 0.0
        %7351 = vmatpush1.msra.mxu0 %v7332
        %7352 = vmatprep.subr.mxu0 0.0
        %7353 = vmatpush1.msra.mxu0 0.0
        %7354 = vmatprep.subr.mxu0 0.0
        %7355 = vmatpush1.msra.mxu0 0.0
        %7356 = vmatprep.subr.mxu0 0.0
        %7357 = vmatpush1.msra.mxu0 0.0
        %7358 = vmatprep.subr.mxu0 0.0
        %7359 = vmatpush1.msra.mxu0 0.0
        %7360 = vmatprep.subr.mxu0 0.0
        %7361 = vmatpush1.msra.mxu0 0.0
        %7362 = vmatprep.subr.mxu0 0.0
        %7363 = vmatpush1.msra.mxu0 0.0
        %7364 = vmatprep.subr.mxu0 0.0
        %7365 = vmatpush1.msra.mxu0 0.0
        %7366 = vmatprep.subr.mxu0 0.0
        %7367 = vmatpush1.msra.mxu0 0.0
        %7368 = vmatprep.subr.mxu0 0.0
        %7369 = vmatpush1.msra.mxu0 0.0
        %7370 = vmatprep.subr.mxu0 0.0
        %7371 = vmatpush1.msra.mxu0 0.0
        %7372 = vmatprep.subr.mxu0 0.0
        %7373 = vmatpush1.msra.mxu0 0.0
        %7374 = vmatprep.subr.mxu0 0.0
        %7375 = vmatpush1.msra.mxu0 0.0
        %7376 = vmatprep.subr.mxu0 0.0
        %7377 = vmatpush1.msra.mxu0 0.0
        %7378 = vmatprep.subr.mxu0 0.0
        %7379 = vmatpush1.msra.mxu0 0.0
        %7380 = vmatprep.subr.mxu0 0.0
        %7381 = vmatpush1.msra.mxu0 0.0
        %7382 = vmatprep.subr.mxu0 0.0
        %7383 = vmatpush1.msra.mxu0 0.0
        %7384 = vmatprep.subr.mxu0 0.0
        %7385 = vmatpush1.msra.mxu0 0.0
        %7386 = vmatprep.subr.mxu0 0.0
        %7387 = vmatpush1.msra.mxu0 0.0
        %7388 = vmatprep.subr.mxu0 0.0
        %7389 = vmatpush1.msra.mxu0 0.0
        %7390 = vmatprep.subr.mxu0 0.0
        %7391 = vmatpush1.msra.mxu0 0.0
        %7392 = vmatprep.subr.mxu0 0.0
        %7393 = vmatpush1.msra.mxu0 0.0
        %7394 = vmatprep.subr.mxu0 0.0
        %7395 = vmatpush1.msra.mxu0 0.0
        %7396 = vmatprep.subr.mxu0 0.0
        %7397 = vmatpush1.msra.mxu0 0.0
        %7398 = vmatprep.subr.mxu0 0.0
        %7399 = vmatpush1.msra.mxu0 0.0
        %7400 = vmatprep.mubr.f32.mxu0 0.0
        %7401 = vmatmul.mubr.f32.gmra.mrb[0].mxu0 %v7334
        %v7402 = vpop.f32.mrb[0].mxu0
        %v7403 = vadd.f32 0.0, %v7402
        %v7404 = vpop.f32.mrb[0].mxu0
        %7405 = vdwg.mxu0
        %v7406 = vadd.f32 %v7314, %v7403
        %v7407 = vld [vmem:[#allocation4 + $0x27] sm:$0x1]
        %s7408 = scalar_lea.vmem %s5, 1248
        %v7409 = vld [vmem:[%s7408] sm:$0xf]
        %v7410 = vld [vmem:[%s7408 + $0x4] sm:$0xf]
        %v7411 = vld [vmem:[%s7408 + $0x8] sm:$0xf]
        %v7412 = vld [vmem:[%s7408 + $0xc] sm:$0xf]
        %v7413 = vld [vmem:[%s7408 + $0x10] sm:$0xf]
        %v7414 = vld [vmem:[%s7408 + $0x14] sm:$0xf]
        %v7415 = vld [vmem:[%s7408 + $0x18] sm:$0xf]
        %v7416 = vld [vmem:[%s7408 + $0x1c] sm:$0xf]
        %v7417 = vunpack.c.l.bf16 %v7409
        %v7418 = vunpack.c.l.bf16 %v7410
        %v7419 = vunpack.c.l.bf16 %v7411
        %v7420 = vunpack.c.l.bf16 %v7412
        %v7421 = vunpack.c.l.bf16 %v7413
        %v7422 = vunpack.c.l.bf16 %v7414
        %v7423 = vunpack.c.l.bf16 %v7415
        %v7424 = vunpack.c.l.bf16 %v7416
        %v7426 = vsel %vm3782, %v7407, 0
        %7428 = vmatprep.subr.mxu0 0.0
        %7429 = vmatpush1.msra.mxu0 %v7417
        %7430 = vmatprep.subr.mxu0 0.0
        %7431 = vmatpush1.msra.mxu0 %v7418
        %7432 = vmatprep.subr.mxu0 0.0
        %7433 = vmatpush1.msra.mxu0 %v7419
        %7434 = vmatprep.subr.mxu0 0.0
        %7435 = vmatpush1.msra.mxu0 %v7420
        %7436 = vmatprep.subr.mxu0 0.0
        %7437 = vmatpush1.msra.mxu0 %v7421
        %7438 = vmatprep.subr.mxu0 0.0
        %7439 = vmatpush1.msra.mxu0 %v7422
        %7440 = vmatprep.subr.mxu0 0.0
        %7441 = vmatpush1.msra.mxu0 %v7423
        %7442 = vmatprep.subr.mxu0 0.0
        %7443 = vmatpush1.msra.mxu0 %v7424
        %7444 = vmatprep.subr.mxu0 0.0
        %7445 = vmatpush1.msra.mxu0 0.0
        %7446 = vmatprep.subr.mxu0 0.0
        %7447 = vmatpush1.msra.mxu0 0.0
        %7448 = vmatprep.subr.mxu0 0.0
        %7449 = vmatpush1.msra.mxu0 0.0
        %7450 = vmatprep.subr.mxu0 0.0
        %7451 = vmatpush1.msra.mxu0 0.0
        %7452 = vmatprep.subr.mxu0 0.0
        %7453 = vmatpush1.msra.mxu0 0.0
        %7454 = vmatprep.subr.mxu0 0.0
        %7455 = vmatpush1.msra.mxu0 0.0
        %7456 = vmatprep.subr.mxu0 0.0
        %7457 = vmatpush1.msra.mxu0 0.0
        %7458 = vmatprep.subr.mxu0 0.0
        %7459 = vmatpush1.msra.mxu0 0.0
        %7460 = vmatprep.subr.mxu0 0.0
        %7461 = vmatpush1.msra.mxu0 0.0
        %7462 = vmatprep.subr.mxu0 0.0
        %7463 = vmatpush1.msra.mxu0 0.0
        %7464 = vmatprep.subr.mxu0 0.0
        %7465 = vmatpush1.msra.mxu0 0.0
        %7466 = vmatprep.subr.mxu0 0.0
        %7467 = vmatpush1.msra.mxu0 0.0
        %7468 = vmatprep.subr.mxu0 0.0
        %7469 = vmatpush1.msra.mxu0 0.0
        %7470 = vmatprep.subr.mxu0 0.0
        %7471 = vmatpush1.msra.mxu0 0.0
        %7472 = vmatprep.subr.mxu0 0.0
        %7473 = vmatpush1.msra.mxu0 0.0
        %7474 = vmatprep.subr.mxu0 0.0
        %7475 = vmatpush1.msra.mxu0 0.0
        %7476 = vmatprep.subr.mxu0 0.0
        %7477 = vmatpush1.msra.mxu0 0.0
        %7478 = vmatprep.subr.mxu0 0.0
        %7479 = vmatpush1.msra.mxu0 0.0
        %7480 = vmatprep.subr.mxu0 0.0
        %7481 = vmatpush1.msra.mxu0 0.0
        %7482 = vmatprep.subr.mxu0 0.0
        %7483 = vmatpush1.msra.mxu0 0.0
        %7484 = vmatprep.subr.mxu0 0.0
        %7485 = vmatpush1.msra.mxu0 0.0
        %7486 = vmatprep.subr.mxu0 0.0
        %7487 = vmatpush1.msra.mxu0 0.0
        %7488 = vmatprep.subr.mxu0 0.0
        %7489 = vmatpush1.msra.mxu0 0.0
        %7490 = vmatprep.subr.mxu0 0.0
        %7491 = vmatpush1.msra.mxu0 0.0
        %7492 = vmatprep.mubr.f32.mxu0 0.0
        %7493 = vmatmul.mubr.f32.gmra.mrb[0].mxu0 %v7426
        %v7494 = vpop.f32.mrb[0].mxu0
        %v7495 = vadd.f32 0.0, %v7494
        %v7496 = vpop.f32.mrb[0].mxu0
        %7497 = vdwg.mxu0
        %v7498 = vadd.f32 %v7406, %v7495
        %v7499 = vld [vmem:[%s6] sm:$0x1]
        %v7500 = vadd.f32 %v7498, %v7499
        %v7501 = vmax.f32 %v7500, 0.0
        %v7502 = vld [vmem:[%s7] sm:$0xff]
        %v7503 = vld [vmem:[%s7 + $0x8] sm:$0xff]
        %v7504 = vld [vmem:[%s7 + $0x10] sm:$0xff]
        %v7505 = vld [vmem:[%s7 + $0x18] sm:$0xff]
        %v7506 = vld [vmem:[%s7 + $0x20] sm:$0xff]
        %v7507 = vld [vmem:[%s7 + $0x28] sm:$0xff]
        %v7508 = vld [vmem:[%s7 + $0x30] sm:$0xff]
        %v7509 = vld [vmem:[%s7 + $0x38] sm:$0xff]
        %v7510 = vld [vmem:[%s7 + $0x40] sm:$0xff]
        %v7511 = vld [vmem:[%s7 + $0x48] sm:$0xff]
        %v7512 = vld [vmem:[%s7 + $0x50] sm:$0xff]
        %v7513 = vld [vmem:[%s7 + $0x58] sm:$0xff]
        %v7514 = vld [vmem:[%s7 + $0x60] sm:$0xff]
        %v7515 = vld [vmem:[%s7 + $0x68] sm:$0xff]
        %v7516 = vld [vmem:[%s7 + $0x70] sm:$0xff]
        %v7517 = vld [vmem:[%s7 + $0x78] sm:$0xff]
        %v7518 = vld [vmem:[%s8] sm:$0x1]
        %7519 = vmatprep.subr.mxu0 0.0
        %7520 = vmatpush1.msra.mxu0 %v7502
        %7521 = vmatprep.subr.mxu0 0.0
        %7522 = vmatpush1.msra.mxu0 %v7503
        %7523 = vmatprep.subr.mxu0 0.0
        %7524 = vmatpush1.msra.mxu0 %v7504
        %7525 = vmatprep.subr.mxu0 0.0
        %7526 = vmatpush1.msra.mxu0 %v7505
        %7527 = vmatprep.subr.mxu0 0.0
        %7528 = vmatpush1.msra.mxu0 %v7506
        %7529 = vmatprep.subr.mxu0 0.0
        %7530 = vmatpush1.msra.mxu0 %v7507
        %7531 = vmatprep.subr.mxu0 0.0
        %7532 = vmatpush1.msra.mxu0 %v7508
        %7533 = vmatprep.subr.mxu0 0.0
        %7534 = vmatpush1.msra.mxu0 %v7509
        %7535 = vmatprep.subr.mxu0 0.0
        %7536 = vmatpush1.msra.mxu0 %v7510
        %7537 = vmatprep.subr.mxu0 0.0
        %7538 = vmatpush1.msra.mxu0 %v7511
        %7539 = vmatprep.subr.mxu0 0.0
        %7540 = vmatpush1.msra.mxu0 %v7512
        %7541 = vmatprep.subr.mxu0 0.0
        %7542 = vmatpush1.msra.mxu0 %v7513
        %7543 = vmatprep.subr.mxu0 0.0
        %7544 = vmatpush1.msra.mxu0 %v7514
        %7545 = vmatprep.subr.mxu0 0.0
        %7546 = vmatpush1.msra.mxu0 %v7515
        %7547 = vmatprep.subr.mxu0 0.0
        %7548 = vmatpush1.msra.mxu0 %v7516
        %7549 = vmatprep.subr.mxu0 0.0
        %7550 = vmatpush1.msra.mxu0 %v7517
        %7551 = vmatprep.subr.mxu0 0.0
        %7552 = vmatpush1.msra.mxu0 0.0
        %7553 = vmatprep.subr.mxu0 0.0
        %7554 = vmatpush1.msra.mxu0 0.0
        %7555 = vmatprep.subr.mxu0 0.0
        %7556 = vmatpush1.msra.mxu0 0.0
        %7557 = vmatprep.subr.mxu0 0.0
        %7558 = vmatpush1.msra.mxu0 0.0
        %7559 = vmatprep.subr.mxu0 0.0
        %7560 = vmatpush1.msra.mxu0 0.0
        %7561 = vmatprep.subr.mxu0 0.0
        %7562 = vmatpush1.msra.mxu0 0.0
        %7563 = vmatprep.subr.mxu0 0.0
        %7564 = vmatpush1.msra.mxu0 0.0
        %7565 = vmatprep.subr.mxu0 0.0
        %7566 = vmatpush1.msra.mxu0 0.0
        %7567 = vmatprep.subr.mxu0 0.0
        %7568 = vmatpush1.msra.mxu0 0.0
        %7569 = vmatprep.subr.mxu0 0.0
        %7570 = vmatpush1.msra.mxu0 0.0
        %7571 = vmatprep.subr.mxu0 0.0
        %7572 = vmatpush1.msra.mxu0 0.0
        %7573 = vmatprep.subr.mxu0 0.0
        %7574 = vmatpush1.msra.mxu0 0.0
        %7575 = vmatprep.subr.mxu0 0.0
        %7576 = vmatpush1.msra.mxu0 0.0
        %7577 = vmatprep.subr.mxu0 0.0
        %7578 = vmatpush1.msra.mxu0 0.0
        %7579 = vmatprep.subr.mxu0 0.0
        %7580 = vmatpush1.msra.mxu0 0.0
        %7581 = vmatprep.subr.mxu0 0.0
        %7582 = vmatpush1.msra.mxu0 0.0
        %7583 = vmatprep.mubr.f32.mxu0 0.0
        %7584 = vmatmul.mubr.f32.gmra.mrb[0].mxu0 %v7501
        %v7585 = vpop.f32.mrb[0].mxu0
        %v7586 = vadd.f32 %v7518, %v7585
        %v7587 = vpop.f32.mrb[0].mxu0
        %7588 = vdwg.mxu0
        %v7589 = vmax.f32 %v7586, 0.0
        %v7590 = vld [vmem:[%s9] sm:$0xff]
        %v7591 = vld [vmem:[%s9 + $0x8] sm:$0xff]
        %v7592 = vld [vmem:[%s9 + $0x10] sm:$0xff]
        %v7593 = vld [vmem:[%s9 + $0x18] sm:$0xff]
        %v7594 = vld [vmem:[%s9 + $0x20] sm:$0xff]
        %v7595 = vld [vmem:[%s9 + $0x28] sm:$0xff]
        %v7596 = vld [vmem:[%s9 + $0x30] sm:$0xff]
        %v7597 = vld [vmem:[%s9 + $0x38] sm:$0xff]
        %v7598 = vld [vmem:[%s9 + $0x40] sm:$0xff]
        %v7599 = vld [vmem:[%s9 + $0x48] sm:$0xff]
        %v7600 = vld [vmem:[%s9 + $0x50] sm:$0xff]
        %v7601 = vld [vmem:[%s9 + $0x58] sm:$0xff]
        %v7602 = vld [vmem:[%s9 + $0x60] sm:$0xff]
        %v7603 = vld [vmem:[%s9 + $0x68] sm:$0xff]
        %v7604 = vld [vmem:[%s9 + $0x70] sm:$0xff]
        %v7605 = vld [vmem:[%s9 + $0x78] sm:$0xff]
        %v7606 = vld [vmem:[%s10] sm:$0x1]
        %7607 = vmatprep.subr.mxu0 0.0
        %7608 = vmatpush1.msra.mxu0 %v7590
        %7609 = vmatprep.subr.mxu0 0.0
        %7610 = vmatpush1.msra.mxu0 %v7591
        %7611 = vmatprep.subr.mxu0 0.0
        %7612 = vmatpush1.msra.mxu0 %v7592
        %7613 = vmatprep.subr.mxu0 0.0
        %7614 = vmatpush1.msra.mxu0 %v7593
        %7615 = vmatprep.subr.mxu0 0.0
        %7616 = vmatpush1.msra.mxu0 %v7594
        %7617 = vmatprep.subr.mxu0 0.0
        %7618 = vmatpush1.msra.mxu0 %v7595
        %7619 = vmatprep.subr.mxu0 0.0
        %7620 = vmatpush1.msra.mxu0 %v7596
        %7621 = vmatprep.subr.mxu0 0.0
        %7622 = vmatpush1.msra.mxu0 %v7597
        %7623 = vmatprep.subr.mxu0 0.0
        %7624 = vmatpush1.msra.mxu0 %v7598
        %7625 = vmatprep.subr.mxu0 0.0
        %7626 = vmatpush1.msra.mxu0 %v7599
        %7627 = vmatprep.subr.mxu0 0.0
        %7628 = vmatpush1.msra.mxu0 %v7600
        %7629 = vmatprep.subr.mxu0 0.0
        %7630 = vmatpush1.msra.mxu0 %v7601
        %7631 = vmatprep.subr.mxu0 0.0
        %7632 = vmatpush1.msra.mxu0 %v7602
        %7633 = vmatprep.subr.mxu0 0.0
        %7634 = vmatpush1.msra.mxu0 %v7603
        %7635 = vmatprep.subr.mxu0 0.0
        %7636 = vmatpush1.msra.mxu0 %v7604
        %7637 = vmatprep.subr.mxu0 0.0
        %7638 = vmatpush1.msra.mxu0 %v7605
        %7639 = vmatprep.subr.mxu0 0.0
        %7640 = vmatpush1.msra.mxu0 0.0
        %7641 = vmatprep.subr.mxu0 0.0
        %7642 = vmatpush1.msra.mxu0 0.0
        %7643 = vmatprep.subr.mxu0 0.0
        %7644 = vmatpush1.msra.mxu0 0.0
        %7645 = vmatprep.subr.mxu0 0.0
        %7646 = vmatpush1.msra.mxu0 0.0
        %7647 = vmatprep.subr.mxu0 0.0
        %7648 = vmatpush1.msra.mxu0 0.0
        %7649 = vmatprep.subr.mxu0 0.0
        %7650 = vmatpush1.msra.mxu0 0.0
        %7651 = vmatprep.subr.mxu0 0.0
        %7652 = vmatpush1.msra.mxu0 0.0
        %7653 = vmatprep.subr.mxu0 0.0
        %7654 = vmatpush1.msra.mxu0 0.0
        %7655 = vmatprep.subr.mxu0 0.0
        %7656 = vmatpush1.msra.mxu0 0.0
        %7657 = vmatprep.subr.mxu0 0.0
        %7658 = vmatpush1.msra.mxu0 0.0
        %7659 = vmatprep.subr.mxu0 0.0
        %7660 = vmatpush1.msra.mxu0 0.0
        %7661 = vmatprep.subr.mxu0 0.0
        %7662 = vmatpush1.msra.mxu0 0.0
        %7663 = vmatprep.subr.mxu0 0.0
        %7664 = vmatpush1.msra.mxu0 0.0
        %7665 = vmatprep.subr.mxu0 0.0
        %7666 = vmatpush1.msra.mxu0 0.0
        %7667 = vmatprep.subr.mxu0 0.0
        %7668 = vmatpush1.msra.mxu0 0.0
        %7669 = vmatprep.subr.mxu0 0.0
        %7670 = vmatpush1.msra.mxu0 0.0
        %7671 = vmatprep.mubr.f32.mxu0 0.0
        %7672 = vmatmul.mubr.f32.gmra.mrb[0].mxu0 %v7589
        %v7673 = vpop.f32.mrb[0].mxu0
        %v7674 = vadd.f32 %v7606, %v7673
        %v7675 = vpop.f32.mrb[0].mxu0
        %7676 = vdwg.mxu0
        %vm7677 = vcmask 16384
        %7678 = vst.msk [vmem:[%s378] sm:$0x1] %vm7677, %v7674
        %s7679 = sand.u32 %s269, 1
        %s7680 = scalar_lea.sflag [#allocation6], %s7679
        %s7681 = sand.u32 %s269, 1
        %s7682 = scalar_lea.vmem [#allocation5], %s7681
        // Predicated region
        $region65: #{simple_cnn_forward.1} parent=63 // pred_check
          %p7683 = pneg %p279
        $region66: #{simple_cnn_forward.1} parent=63 // pred_check_branch
          %7685 = sbr.rel (%p7683) target = $region68
        $region67: #{simple_cnn_forward.1} parent=63 // pred_region
          %s7687 = ssub.s32 16, 16
          %7688 = vsyncadd %s7680, %s7687
          %s7689 = smul.addr %s25, 16
          %s7690 = scalar_lea.hbm %s11, %s7689
          %s7692 = sshll.u32 %s7682, 4
          %s7693 = int_to_ptr.vmem [resolvable:$true] %s7692
          %7695 = dma.vmem_to_hbm [thread:$0]  %s7693, 16, %s7690, %s7680
        $region68: #{simple_cnn_forward.1} parent=63 // pred_fallthru
          _
      $region64: #{simple_cnn_forward.1} parent=5 // pred_fallthru
        _
      %p7696 = scmp.le.s32.totalorder 2, %s20
      // Predicated region
      $region69: #{simple_cnn_forward.1} parent=5 // pred_check
        %p7697 = pneg %p7696
      $region70: #{simple_cnn_forward.1} parent=5 // pred_check_branch
        %7699 = sbr.rel (%p7697) target = $region72
      $region71: #{simple_cnn_forward.1} parent=5 // pred_region
        %s7700 = ssub.s32 %s20, 2
        // Predicated region
        $region73: #{simple_cnn_forward.1} parent=71 // pred_check
          %p7701 = pneg %p285
        $region74: #{simple_cnn_forward.1} parent=71 // pred_check_branch
          %7703 = sbr.rel (%p7701) target = $region76
        $region75: #{simple_cnn_forward.1} parent=71 // pred_region
          %s7704 = sand.u32 %s270, 1
          %s7705 = scalar_lea.sflag [#allocation6], %s7704
          %s7706 = sand.u32 %s270, 1
          %s7707 = scalar_lea.vmem [#allocation5], %s7706
          %7708 = dma.done %s7705, 16
        $region76: #{simple_cnn_forward.1} parent=71 // pred_fallthru
          _
      $region72: #{simple_cnn_forward.1} parent=5 // pred_fallthru
        _
    $region6: #{simple_cnn_forward.1} parent=1 // loop_footer
      %s24 = sadd.s32 1, %s20
    $region7: #{simple_cnn_forward.1} parent=1 // loop_footer_branch
      %19 = sbr.rel target = $region3
    $region8: #{simple_cnn_forward.1} parent=1 // loop_exit
      _
    %7709 = vsyncpa [#allocation6], 1
    %s7710 = scalar_lea.sflag [#allocation6], 1
    %7711 = vsyncpa %s7710, 1

</llo_original>
